<compile_context>
chip_gen: v7x
topology: tpu7x:2x2x1
jax: 0.10.0
libtpu: 0.0.40
codegen_flags: <defaults>
</compile_context>

<pallas_src>
import functools

import numpy as np

import jax
import jax.numpy as jnp
from jax import lax
from jax.experimental import pallas as pl
from jax.experimental.pallas import tpu as pltpu

FORMANT_LEN = 32
SHAPES_LEN = 51
LEAKY_SLOPE = 0.01   # nn.LeakyReLU default negative_slope
BN_EPS = 1e-5        # nn.BatchNorm2d default eps

FA_LANES = 128       # padded lane width of the formantAnalysis block operands
# All weight operands travel as bf16 (native MXU input dtype on v5e/v6e/v7x);
# accumulation stays f32.  TODO(synk): optional fp8 (v7x) / int8 (v5e) MLP-weight
# quantization would roughly halve DMA bytes again.
WEIGHT_DTYPE = jnp.bfloat16


def _leaky(y):
    return jnp.where(y >= 0, y, LEAKY_SLOPE * y)


def _sigmoid(y):
    # numerically stable sigmoid (exp runs on the EUP slot -> effectively free)
    z = jnp.exp(-jnp.abs(y))
    return jnp.where(y >= 0, 1.0 / (1.0 + z), z / (1.0 + z))


# ----------------------------------------------------------------------------
# The single fused kernel: formantAnalysis -> articulation -> output MLP
# ----------------------------------------------------------------------------
def _model_kernel(*refs, meta):
    (batch, height, width, cdim, n_fa, art_kh, art_hin, art_hout, n_mlp) = meta
    n_art = len(art_kh)

    it = iter(refs)
    x_ref = next(it)
    fa_w0_ref = next(it)
    fa_w_ref = next(it)
    fa_b_ref = next(it)
    art_p_refs = [next(it) for _ in range(n_art)]
    art_bw_ref = next(it)
    art_b_ref = next(it)
    mlp_w_refs = [next(it) for _ in range(n_mlp)]
    mlp_b_ref = next(it)
    out_ref = next(it)

    f32 = jnp.float32
    wdt = WEIGHT_DTYPE

    # ---- formantAnalysis: n_fa fused block matmuls, rows = batch*height -----
    fab = fa_b_ref[...]                                   # (>=8, FA_LANES) f32
    a = x_ref[...]                                        # (batch*H, W) f32
    # layer 0: K = W (first-layer block matrix has exactly W rows -> no padding)
    y = jnp.dot(a.astype(wdt), fa_w0_ref[...], preferred_element_type=f32)
    a = _leaky(y + fab[0:1, :])
    for l in range(1, n_fa):
        y = jnp.dot(a.astype(wdt), fa_w_ref[l - 1], preferred_element_type=f32)
        y = y + fab[l:l + 1, :]
        a = _leaky(y) if l + 1 < n_fa else y              # last FA conv: no act

    # ---- articulation: activation stays (batch*h, C); per layer one exact-size
    # tap-gather matmul + kh tiny (C,C) channel mixes.  No concats, no re-pads.
    act = a[:, :cdim]                                     # (batch*height, C) f32
    artb = art_b_ref[...]                                 # (>=8, C) f32
    off = 0
    for l in range(n_art):
        kh, h_out = art_kh[l], art_hout[l]
        rows_out = batch * h_out
        # row gather (also applies the conv's zero padding); 0/1 matrix, bf16-exact
        y = jnp.dot(art_p_refs[l][...], act.astype(wdt),
                    preferred_element_type=f32)           # (kh*rows_out, C)
        yb = y.astype(wdt)                                # exact: values already bf16
        s = jnp.dot(yb[0:rows_out, :], art_bw_ref[off], preferred_element_type=f32)
        for k in range(1, kh):
            s = s + jnp.dot(yb[k * rows_out:(k + 1) * rows_out, :],
                            art_bw_ref[off + k], preferred_element_type=f32)
        s = s + artb[l:l + 1, :]
        off += kh
        act = _leaky(s) if l + 1 < n_art else s           # last conv: no act

    # ---- output MLP: rows = batch --------------------------------------------
    h = act                                               # (batch, C) f32
    mlpb = mlp_b_ref[...]
    for i in range(n_mlp):
        wm = mlp_w_refs[i][...]
        nw = wm.shape[1]
        h = jnp.dot(h.astype(wm.dtype), wm, preferred_element_type=f32)
        h = h + mlpb[i:i + 1, :nw]
        h = _leaky(h) if i + 1 < n_mlp else _sigmoid(h)
    out_ref[...] = h.astype(out_ref.dtype)


def _full_spec(shape):
    nd = len(shape)
    return pl.BlockSpec(shape, lambda i: (0,) * nd)


# ----------------------------------------------------------------------------
# One-time host-side parameter packing (BN folding, conv->matmul lowering,
# lane padding, bias tiling, bf16 cast).  Done ONCE, outside jit.
# ----------------------------------------------------------------------------
def _fold_bn(w, b, bn):
    gamma, beta, mean, var = (np.asarray(t, np.float32) for t in bn)
    w = np.asarray(w, np.float32)
    b = np.asarray(b, np.float32)
    s = gamma / np.sqrt(var + BN_EPS)
    return w * s[:, None, None, None], (b - mean) * s + beta


def prepare_params(params, batch, height, width):
    C = FORMANT_LEN

    # ---- formantAnalysis: per-layer (W_in*C_in, W_out*C_out) block matrices --
    fa_layers = []
    for (w, b, bn) in params["fa"]:
        wf, bf = _fold_bn(w, b, bn)
        fa_layers.append((wf, bf, 2, 1))                      # stride, pad
    w, b = params["fa_last"]
    fa_layers.append((np.asarray(w, np.float32), np.asarray(b, np.float32), 2, 0))
    n_fa = len(fa_layers)
    assert fa_layers[0][0].shape[1] == 1, "first conv must have 1 input channel"

    fa_b = np.zeros((max(8, n_fa), FA_LANES), np.float32)
    fa_blocks = []
    w_cur = width
    for l, (wt, bt, stride, pad) in enumerate(fa_layers):
        cout, cin, kh, kw = wt.shape
        assert kh == 1
        w_out = (w_cur + 2 * pad - kw) // stride + 1
        assert w_cur * cin <= FA_LANES and w_out * cout <= FA_LANES
        k_in = w_cur * cin if l == 0 else FA_LANES            # layer 0: exact K = W
        blk = np.zeros((k_in, FA_LANES), np.float32)
        for wo in range(w_out):
            for k in range(kw):
                wi = stride * wo - pad + k
                if 0 <= wi < w_cur:
                    blk[wi * cin:(wi + 1) * cin,
                        wo * cout:(wo + 1) * cout] = wt[:, :, 0, k].T
        fa_blocks.append(blk)
        fa_b[l, :w_out * cout] = np.tile(bt, w_out)
        w_cur = w_out
    assert w_cur == 1, "formantAnalysis must reduce W to 1 for this input width"
    fa_w0 = fa_blocks[0]
    fa_w = np.stack(fa_blocks[1:], axis=0)

    # ---- articulation: exact-size tap-gather matrices + per-tap (C,C) mixes --
    art_defs = [(3, 2, 1)] * 5 + [(4, 4, 1)]                  # (kh, stride, pad)
    art_weights = list(params["art"]) + [params["art_last"]]
    h_ins, h_outs = [], []
    h_cur = height
    for (kh, stride, pad) in art_defs:
        h_out = (h_cur + 2 * pad - kh) // stride + 1
        h_ins.append(h_cur)
        h_outs.append(h_out)
        h_cur = h_out
    assert h_cur == 1, "articulation must reduce H to 1 for this input height"

    n_art = len(art_defs)
    art_p = []
    art_bw = np.zeros((sum(d[0] for d in art_defs), C, C), np.float32)
    art_b = np.zeros((max(8, n_art), C), np.float32)
    off = 0
    for l, ((wt, bt), (kh, stride, pad)) in enumerate(zip(art_weights, art_defs)):
        wt = np.asarray(wt, np.float32)
        bt = np.asarray(bt, np.float32)
        cout, cin, kh2, kw = wt.shape
        assert kh2 == kh and kw == 1 and cin == C and cout == C
        h_in, h_out = h_ins[l], h_outs[l]
        # P rows ordered (tap k, batch n, output row ho); columns (batch n, input row hi)
        P = np.zeros((kh * batch * h_out, batch * h_in), np.float32)
        for n in range(batch):
            for ho in range(h_out):
                for k in range(kh):
                    hi = stride * ho - pad + k
                    if 0 <= hi < h_in:
                        P[k * batch * h_out + n * h_out + ho, n * h_in + hi] = 1.0
        art_p.append(jnp.asarray(P, WEIGHT_DTYPE))
        for k in range(kh):
            art_bw[off + k] = wt[:, :, k, 0].T                 # (cin, cout)
        art_b[l, :] = bt
        off += kh

    # ---- output MLP: lane-pad weights once, store bf16 ----------------------
    n_mlp = len(params["mlp"])
    max_out = max(((np.asarray(w).shape[1] + 127) // 128) * 128
                  for w, _ in params["mlp"])
    mlp_b = np.zeros((max(8, n_mlp), max_out), np.float32)
    mlp_w, mlp_dims = [], []
    for i, (wt, bt) in enumerate(params["mlp"]):
        wt = np.asarray(wt, np.float32)
        bt = np.asarray(bt, np.float32)
        fin, fout = wt.shape
        fout_p = ((fout + 127) // 128) * 128
        wp = np.zeros((fin, fout_p), np.float32)
        wp[:, :fout] = wt
        mlp_w.append(jnp.asarray(wp, WEIGHT_DTYPE))
        mlp_b[i, :fout] = bt
        mlp_dims.append((fin, fout_p))
    assert np.asarray(params["mlp"][0][0]).shape[0] == C

    # ---- advisory FLOP count for the scheduler (DMA bytes dominate anyway) ---
    rows = batch * height
    flops = 2 * rows * (width * FA_LANES + (n_fa - 1) * FA_LANES * FA_LANES)
    for l, (kh, _, _) in enumerate(art_defs):
        flops += 2 * (kh * batch * h_outs[l]) * (batch * h_ins[l]) * C
        flops += 2 * kh * (batch * h_outs[l]) * C * C
    flops += 2 * batch * sum(fi * fo for fi, fo in mlp_dims)

    meta = (batch, height, width, C, n_fa,
            tuple(d[0] for d in art_defs), tuple(h_ins), tuple(h_outs), n_mlp)
    return dict(
        meta=meta, out_width=int(mlp_dims[-1][1]), flops=int(flops),
        fa_w0=jnp.asarray(fa_w0, WEIGHT_DTYPE),
        fa_w=jnp.asarray(fa_w, WEIGHT_DTYPE),
        fa_b=jnp.asarray(fa_b),
        art_p=tuple(art_p),
        art_bw=jnp.asarray(art_bw, WEIGHT_DTYPE),
        art_b=jnp.asarray(art_b),
        mlp_w=tuple(mlp_w),
        mlp_b=jnp.asarray(mlp_b),
    )


# ----------------------------------------------------------------------------
# Forward pass: one fused pallas_call per forward
# ----------------------------------------------------------------------------
def forward(prep, x):
    batch, height, width, cdim, n_fa, art_kh, art_hin, art_hout, n_mlp = prep["meta"]
    n, cin, h, w = x.shape
    assert cin == 1 and n == batch and h == height and w == width, (
        "input shape must match the shapes the parameters were prepared for")

    x2d = x.reshape(n * h, w).astype(jnp.float32)          # rows = (n, h), lanes = w
    inputs = [x2d, prep["fa_w0"], prep["fa_w"], prep["fa_b"],
              *prep["art_p"], prep["art_bw"], prep["art_b"],
              *prep["mlp_w"], prep["mlp_b"]]

    out_shape = (batch, prep["out_width"])
    bytes_accessed = int(sum(int(np.prod(v.shape)) * v.dtype.itemsize for v in inputs)
                         + int(np.prod(out_shape)) * 4)

    out = pl.pallas_call(
        functools.partial(_model_kernel, meta=prep["meta"]),
        out_shape=jax.ShapeDtypeStruct(out_shape, jnp.float32),
        grid=(1,),
        in_specs=[_full_spec(v.shape) for v in inputs],
        out_specs=_full_spec(out_shape),
        compiler_params=pltpu.CompilerParams(dimension_semantics=("arbitrary",)),
        cost_estimate=pl.CostEstimate(
            flops=prep["flops"],
            transcendentals=int(batch * prep["out_width"]),
            bytes_accessed=bytes_accessed),
    )(*inputs)
    return out[:, :SHAPES_LEN]


# ----------------------------------------------------------------------------
# Pure-JAX reference (same inference-mode BN semantics) for self-checking
# ----------------------------------------------------------------------------
def reference_forward(params, x):
    def conv2d(x, w, b, stride, padding):
        y = lax.conv_general_dilated(
            x, w, window_strides=stride, padding=padding,
            dimension_numbers=("NCHW", "OIHW", "NCHW"))
        return y + b[None, :, None, None]

    out = x
    for w, b, (gamma, beta, mean, var) in params["fa"]:
        out = conv2d(out, w, b, (1, 2), ((0, 0), (1, 1)))
        out = (out - mean[None, :, None, None]) * (
            gamma[None, :, None, None] /
            jnp.sqrt(var[None, :, None, None] + BN_EPS)) + beta[None, :, None, None]
        out = _leaky(out)
    w, b = params["fa_last"]
    out = conv2d(out, w, b, (1, 2), ((0, 0), (0, 0)))
    for w, b in params["art"]:
        out = _leaky(conv2d(out, w, b, (2, 1), ((1, 1), (0, 0))))
    w, b = params["art_last"]
    out = conv2d(out, w, b, (4, 1), ((1, 1), (0, 0)))
    out = out.reshape(-1, FORMANT_LEN)
    for w, b in params["mlp"][:-1]:
        out = _leaky(out @ w + b)
    w, b = params["mlp"][-1]
    out = jax.nn.sigmoid(out @ w + b)
    return out.reshape(-1, SHAPES_LEN)


# ----------------------------------------------------------------------------
# Deterministic parameter init (mimics PyTorch default fan-in uniform init)
# ----------------------------------------------------------------------------
def _uniform(key, shape, bound):
    return jax.random.uniform(key, shape, jnp.float32, -bound, bound)


def init_conv(key, cout, cin, kh, kw):
    k1, k2 = jax.random.split(key)
    bound = (cin * kh * kw) ** -0.5
    return _uniform(k1, (cout, cin, kh, kw), bound), _uniform(k2, (cout,), bound)


def init_linear(key, fin, fout):
    k1, k2 = jax.random.split(key)
    bound = fin ** -0.5
    return _uniform(k1, (fin, fout), bound), _uniform(k2, (fout,), bound)


def init_bn(key, c):
    k1, k2, k3, k4 = jax.random.split(key, 4)
    gamma = jax.random.uniform(k1, (c,), jnp.float32, 0.5, 1.5)
    beta = jax.random.uniform(k2, (c,), jnp.float32, -0.1, 0.1)
    mean = 0.1 * jax.random.normal(k3, (c,), jnp.float32)
    var = jax.random.uniform(k4, (c,), jnp.float32, 0.5, 1.5)
    return gamma, beta, mean, var


def init_params(key):
    keys = iter(jax.random.split(key, 32))
    p = {}
    p["fa"] = []
    for cin, cout in [(1, 7), (7, 13), (13, 23), (23, 27)]:
        w, b = init_conv(next(keys), cout, cin, 1, 3)
        bn = init_bn(next(keys), cout)
        p["fa"].append((w, b, bn))
    p["fa_last"] = init_conv(next(keys), FORMANT_LEN, 27, 1, 2)
    p["art"] = [init_conv(next(keys), FORMANT_LEN, FORMANT_LEN, 3, 1) for _ in range(5)]
    p["art_last"] = init_conv(next(keys), FORMANT_LEN, FORMANT_LEN, 4, 1)
    dims = [(FORMANT_LEN, 512)] + [(512, 512)] * 4 + [(512, SHAPES_LEN)]
    p["mlp"] = [init_linear(next(keys), fi, fo) for fi, fo in dims]
    return p


if __name__ == "__main__":
    key = jax.random.PRNGKey(0)
    pkey, xkey = jax.random.split(key)
    params = init_params(pkey)

    # Input NCHW: batch=2, 1 channel, H(time)=64, W(freq)=32.
    # formantAnalysis reduces W: 32 -> 16 -> 8 -> 4 -> 2 -> 1,
    # articulation reduces H:   64 -> 32 -> 16 -> 8 -> 4 -> 2 -> 1.
    N, H, W = 2, 64, 32
    x = jax.random.normal(xkey, (N, 1, H, W), jnp.float32)

    prep = prepare_params(params, batch=N, height=H, width=W)
    fwd = jax.jit(lambda inp: forward(prep, inp))
    y = jax.block_until_ready(fwd(x))

    assert y.shape == (N, SHAPES_LEN), y.shape
    assert bool(jnp.all((y >= 0.0) & (y <= 1.0)))     # sigmoid output range

    # Numerical self-check against a pure-JAX (XLA, f32) reference of the module.
    # Weights travel as bf16 (f32 accumulation), so tolerances allow for that.
    y_ref = jax.block_until_ready(jax.jit(lambda inp: reference_forward(params, inp))(x))
    np.testing.assert_allclose(np.asarray(y), np.asarray(y_ref), rtol=2e-2, atol=2e-2)

    print("KERNEL_OK")
</pallas_src>

<mosaic_0001>
module attributes {stable_mosaic.version = 11 : i64} {
  func.func @_model_kernel(%arg0: i32, %arg1: memref<128x32xf32, #tpu.memory_space<vmem>>, %arg2: memref<32x128xbf16, #tpu.memory_space<vmem>>, %arg3: memref<4x128x128xbf16, #tpu.memory_space<vmem>>, %arg4: memref<8x128xf32, #tpu.memory_space<vmem>>, %arg5: memref<192x128xbf16, #tpu.memory_space<vmem>>, %arg6: memref<96x64xbf16, #tpu.memory_space<vmem>>, %arg7: memref<48x32xbf16, #tpu.memory_space<vmem>>, %arg8: memref<24x16xbf16, #tpu.memory_space<vmem>>, %arg9: memref<12x8xbf16, #tpu.memory_space<vmem>>, %arg10: memref<8x4xbf16, #tpu.memory_space<vmem>>, %arg11: memref<19x32x32xbf16, #tpu.memory_space<vmem>>, %arg12: memref<8x32xf32, #tpu.memory_space<vmem>>, %arg13: memref<32x512xbf16, #tpu.memory_space<vmem>>, %arg14: memref<512x512xbf16, #tpu.memory_space<vmem>>, %arg15: memref<512x512xbf16, #tpu.memory_space<vmem>>, %arg16: memref<512x512xbf16, #tpu.memory_space<vmem>>, %arg17: memref<512x512xbf16, #tpu.memory_space<vmem>>, %arg18: memref<512x128xbf16, #tpu.memory_space<vmem>>, %arg19: memref<8x512xf32, #tpu.memory_space<vmem>>, %arg20: memref<2x128xf32, #tpu.memory_space<vmem>>) attributes {dimension_semantics = [#tpu.dimension_semantics<arbitrary>], iteration_bounds = array<i64: 1>, scalar_prefetch = 0 : i64, scratch_operands = 0 : i64, tpu.core_type = #tpu.core_type<tc>, window_params = [{pipeline_mode = #tpu.pipeline_mode<synchronous>, transform_indices = @transform_0, window_bounds = array<i64: 128, 32>}, {pipeline_mode = #tpu.pipeline_mode<synchronous>, transform_indices = @transform_1, window_bounds = array<i64: 32, 128>}, {pipeline_mode = #tpu.pipeline_mode<synchronous>, transform_indices = @transform_2, window_bounds = array<i64: 4, 128, 128>}, {pipeline_mode = #tpu.pipeline_mode<synchronous>, transform_indices = @transform_3, window_bounds = array<i64: 8, 128>}, {pipeline_mode = #tpu.pipeline_mode<synchronous>, transform_indices = @transform_4, window_bounds = array<i64: 192, 128>}, {pipeline_mode = #tpu.pipeline_mode<synchronous>, transform_indices = @transform_5, window_bounds = array<i64: 96, 64>}, {pipeline_mode = #tpu.pipeline_mode<synchronous>, transform_indices = @transform_6, window_bounds = array<i64: 48, 32>}, {pipeline_mode = #tpu.pipeline_mode<synchronous>, transform_indices = @transform_7, window_bounds = array<i64: 24, 16>}, {pipeline_mode = #tpu.pipeline_mode<synchronous>, transform_indices = @transform_8, window_bounds = array<i64: 12, 8>}, {pipeline_mode = #tpu.pipeline_mode<synchronous>, transform_indices = @transform_9, window_bounds = array<i64: 8, 4>}, {pipeline_mode = #tpu.pipeline_mode<synchronous>, transform_indices = @transform_10, window_bounds = array<i64: 19, 32, 32>}, {pipeline_mode = #tpu.pipeline_mode<synchronous>, transform_indices = @transform_11, window_bounds = array<i64: 8, 32>}, {pipeline_mode = #tpu.pipeline_mode<synchronous>, transform_indices = @transform_12, window_bounds = array<i64: 32, 512>}, {pipeline_mode = #tpu.pipeline_mode<synchronous>, transform_indices = @transform_13, window_bounds = array<i64: 512, 512>}, {pipeline_mode = #tpu.pipeline_mode<synchronous>, transform_indices = @transform_14, window_bounds = array<i64: 512, 512>}, {pipeline_mode = #tpu.pipeline_mode<synchronous>, transform_indices = @transform_15, window_bounds = array<i64: 512, 512>}, {pipeline_mode = #tpu.pipeline_mode<synchronous>, transform_indices = @transform_16, window_bounds = array<i64: 512, 512>}, {pipeline_mode = #tpu.pipeline_mode<synchronous>, transform_indices = @transform_17, window_bounds = array<i64: 512, 128>}, {pipeline_mode = #tpu.pipeline_mode<synchronous>, transform_indices = @transform_18, window_bounds = array<i64: 8, 512>}, {pipeline_mode = #tpu.pipeline_mode<synchronous>, transform_indices = @transform_19, window_bounds = array<i64: 2, 128>}]} {
    %c0 = arith.constant 0 : index
    %c0_0 = arith.constant 0 : index
    %0 = vector.load %arg4[%c0, %c0_0] : memref<8x128xf32, #tpu.memory_space<vmem>>, vector<8x128xf32>
    %c0_1 = arith.constant 0 : index
    %c0_2 = arith.constant 0 : index
    %1 = vector.load %arg1[%c0_1, %c0_2] : memref<128x32xf32, #tpu.memory_space<vmem>>, vector<128x32xf32>
    %2 = arith.truncf %1 : vector<128x32xf32> to vector<128x32xbf16>
    %c0_3 = arith.constant 0 : index
    %c0_4 = arith.constant 0 : index
    %3 = vector.load %arg2[%c0_3, %c0_4] : memref<32x128xbf16, #tpu.memory_space<vmem>>, vector<32x128xbf16>
    %cst = arith.constant dense<0.000000e+00> : vector<128x128xf32>
    %4 = tpu.matmul %2, %3, %cst {dimension_numbers = #tpu.dot_dimension_numbers<[1], [0], [0], [1], [0, 0, 1, 1], [], []>} : vector<128x32xbf16>, vector<32x128xbf16>, vector<128x128xf32> -> vector<128x128xf32>
    %5 = vector.extract_strided_slice %0 {offsets = [0, 0], sizes = [1, 128], strides = [1, 1]} : vector<8x128xf32> to vector<1x128xf32>
    %6 = vector.broadcast %5 : vector<1x128xf32> to vector<128x128xf32>
    %7 = arith.addf %4, %6 : vector<128x128xf32>
    %cst_5 = arith.constant 0.000000e+00 : f32
    %8 = vector.broadcast %cst_5 : f32 to vector<128x128xf32>
    %9 = arith.cmpf oge, %7, %8 : vector<128x128xf32>
    %cst_6 = arith.constant 0.00999999977 : f32
    %10 = vector.broadcast %cst_6 : f32 to vector<128x128xf32>
    %11 = arith.mulf %10, %7 : vector<128x128xf32>
    %12 = arith.select %9, %7, %11 : vector<128x128xi1>, vector<128x128xf32>
    %13 = arith.truncf %12 : vector<128x128xf32> to vector<128x128xbf16>
    %c0_7 = arith.constant 0 : index
    %c0_8 = arith.constant 0 : index
    %c0_9 = arith.constant 0 : index
    %14 = vector.load %arg3[%c0_7, %c0_8, %c0_9] : memref<4x128x128xbf16, #tpu.memory_space<vmem>>, vector<1x128x128xbf16>
    %15 = vector.shape_cast %14 : vector<1x128x128xbf16> to vector<128x128xbf16>
    %cst_10 = arith.constant dense<0.000000e+00> : vector<128x128xf32>
    %16 = tpu.matmul %13, %15, %cst_10 {dimension_numbers = #tpu.dot_dimension_numbers<[1], [0], [0], [1], [0, 0, 1, 1], [], []>} : vector<128x128xbf16>, vector<128x128xbf16>, vector<128x128xf32> -> vector<128x128xf32>
    %17 = vector.extract_strided_slice %0 {offsets = [1, 0], sizes = [1, 128], strides = [1, 1]} : vector<8x128xf32> to vector<1x128xf32>
    %18 = vector.broadcast %17 : vector<1x128xf32> to vector<128x128xf32>
    %19 = arith.addf %16, %18 : vector<128x128xf32>
    %cst_11 = arith.constant 0.000000e+00 : f32
    %20 = vector.broadcast %cst_11 : f32 to vector<128x128xf32>
    %21 = arith.cmpf oge, %19, %20 : vector<128x128xf32>
    %cst_12 = arith.constant 0.00999999977 : f32
    %22 = vector.broadcast %cst_12 : f32 to vector<128x128xf32>
    %23 = arith.mulf %22, %19 : vector<128x128xf32>
    %24 = arith.select %21, %19, %23 : vector<128x128xi1>, vector<128x128xf32>
    %25 = arith.truncf %24 : vector<128x128xf32> to vector<128x128xbf16>
    %c1 = arith.constant 1 : index
    %c0_13 = arith.constant 0 : index
    %c0_14 = arith.constant 0 : index
    %26 = vector.load %arg3[%c1, %c0_13, %c0_14] : memref<4x128x128xbf16, #tpu.memory_space<vmem>>, vector<1x128x128xbf16>
    %27 = vector.shape_cast %26 : vector<1x128x128xbf16> to vector<128x128xbf16>
    %cst_15 = arith.constant dense<0.000000e+00> : vector<128x128xf32>
    %28 = tpu.matmul %25, %27, %cst_15 {dimension_numbers = #tpu.dot_dimension_numbers<[1], [0], [0], [1], [0, 0, 1, 1], [], []>} : vector<128x128xbf16>, vector<128x128xbf16>, vector<128x128xf32> -> vector<128x128xf32>
    %29 = vector.extract_strided_slice %0 {offsets = [2, 0], sizes = [1, 128], strides = [1, 1]} : vector<8x128xf32> to vector<1x128xf32>
    %30 = vector.broadcast %29 : vector<1x128xf32> to vector<128x128xf32>
    %31 = arith.addf %28, %30 : vector<128x128xf32>
    %cst_16 = arith.constant 0.000000e+00 : f32
    %32 = vector.broadcast %cst_16 : f32 to vector<128x128xf32>
    %33 = arith.cmpf oge, %31, %32 : vector<128x128xf32>
    %cst_17 = arith.constant 0.00999999977 : f32
    %34 = vector.broadcast %cst_17 : f32 to vector<128x128xf32>
    %35 = arith.mulf %34, %31 : vector<128x128xf32>
    %36 = arith.select %33, %31, %35 : vector<128x128xi1>, vector<128x128xf32>
    %37 = arith.truncf %36 : vector<128x128xf32> to vector<128x128xbf16>
    %c2 = arith.constant 2 : index
    %c0_18 = arith.constant 0 : index
    %c0_19 = arith.constant 0 : index
    %38 = vector.load %arg3[%c2, %c0_18, %c0_19] : memref<4x128x128xbf16, #tpu.memory_space<vmem>>, vector<1x128x128xbf16>
    %39 = vector.shape_cast %38 : vector<1x128x128xbf16> to vector<128x128xbf16>
    %cst_20 = arith.constant dense<0.000000e+00> : vector<128x128xf32>
    %40 = tpu.matmul %37, %39, %cst_20 {dimension_numbers = #tpu.dot_dimension_numbers<[1], [0], [0], [1], [0, 0, 1, 1], [], []>} : vector<128x128xbf16>, vector<128x128xbf16>, vector<128x128xf32> -> vector<128x128xf32>
    %41 = vector.extract_strided_slice %0 {offsets = [3, 0], sizes = [1, 128], strides = [1, 1]} : vector<8x128xf32> to vector<1x128xf32>
    %42 = vector.broadcast %41 : vector<1x128xf32> to vector<128x128xf32>
    %43 = arith.addf %40, %42 : vector<128x128xf32>
    %cst_21 = arith.constant 0.000000e+00 : f32
    %44 = vector.broadcast %cst_21 : f32 to vector<128x128xf32>
    %45 = arith.cmpf oge, %43, %44 : vector<128x128xf32>
    %cst_22 = arith.constant 0.00999999977 : f32
    %46 = vector.broadcast %cst_22 : f32 to vector<128x128xf32>
    %47 = arith.mulf %46, %43 : vector<128x128xf32>
    %48 = arith.select %45, %43, %47 : vector<128x128xi1>, vector<128x128xf32>
    %49 = arith.truncf %48 : vector<128x128xf32> to vector<128x128xbf16>
    %c3 = arith.constant 3 : index
    %c0_23 = arith.constant 0 : index
    %c0_24 = arith.constant 0 : index
    %50 = vector.load %arg3[%c3, %c0_23, %c0_24] : memref<4x128x128xbf16, #tpu.memory_space<vmem>>, vector<1x128x128xbf16>
    %51 = vector.shape_cast %50 : vector<1x128x128xbf16> to vector<128x128xbf16>
    %cst_25 = arith.constant dense<0.000000e+00> : vector<128x128xf32>
    %52 = tpu.matmul %49, %51, %cst_25 {dimension_numbers = #tpu.dot_dimension_numbers<[1], [0], [0], [1], [0, 0, 1, 1], [], []>} : vector<128x128xbf16>, vector<128x128xbf16>, vector<128x128xf32> -> vector<128x128xf32>
    %53 = vector.extract_strided_slice %0 {offsets = [4, 0], sizes = [1, 128], strides = [1, 1]} : vector<8x128xf32> to vector<1x128xf32>
    %54 = vector.broadcast %53 : vector<1x128xf32> to vector<128x128xf32>
    %55 = arith.addf %52, %54 : vector<128x128xf32>
    %56 = vector.extract_strided_slice %55 {offsets = [0, 0], sizes = [128, 32], strides = [1, 1]} : vector<128x128xf32> to vector<128x32xf32>
    %c0_26 = arith.constant 0 : index
    %c0_27 = arith.constant 0 : index
    %57 = vector.load %arg12[%c0_26, %c0_27] : memref<8x32xf32, #tpu.memory_space<vmem>>, vector<8x32xf32>
    %c0_28 = arith.constant 0 : index
    %c0_29 = arith.constant 0 : index
    %58 = vector.load %arg5[%c0_28, %c0_29] : memref<192x128xbf16, #tpu.memory_space<vmem>>, vector<192x128xbf16>
    %59 = arith.truncf %56 : vector<128x32xf32> to vector<128x32xbf16>
    %cst_30 = arith.constant dense<0.000000e+00> : vector<192x32xf32>
    %60 = tpu.matmul %58, %59, %cst_30 {dimension_numbers = #tpu.dot_dimension_numbers<[1], [0], [0], [1], [0, 0, 1, 1], [], []>} : vector<192x128xbf16>, vector<128x32xbf16>, vector<192x32xf32> -> vector<192x32xf32>
    %61 = arith.truncf %60 : vector<192x32xf32> to vector<192x32xbf16>
    %62 = vector.extract_strided_slice %61 {offsets = [0, 0], sizes = [64, 32], strides = [1, 1]} : vector<192x32xbf16> to vector<64x32xbf16>
    %c0_31 = arith.constant 0 : index
    %c0_32 = arith.constant 0 : index
    %c0_33 = arith.constant 0 : index
    %63 = vector.load %arg11[%c0_31, %c0_32, %c0_33] : memref<19x32x32xbf16, #tpu.memory_space<vmem>>, vector<1x32x32xbf16>
    %64 = vector.shape_cast %63 : vector<1x32x32xbf16> to vector<32x32xbf16>
    %cst_34 = arith.constant dense<0.000000e+00> : vector<64x32xf32>
    %65 = tpu.matmul %62, %64, %cst_34 {dimension_numbers = #tpu.dot_dimension_numbers<[1], [0], [0], [1], [0, 0, 1, 1], [], []>} : vector<64x32xbf16>, vector<32x32xbf16>, vector<64x32xf32> -> vector<64x32xf32>
    %66 = vector.extract_strided_slice %61 {offsets = [64, 0], sizes = [64, 32], strides = [1, 1]} : vector<192x32xbf16> to vector<64x32xbf16>
    %c1_35 = arith.constant 1 : index
    %c0_36 = arith.constant 0 : index
    %c0_37 = arith.constant 0 : index
    %67 = vector.load %arg11[%c1_35, %c0_36, %c0_37] : memref<19x32x32xbf16, #tpu.memory_space<vmem>>, vector<1x32x32xbf16>
    %68 = vector.shape_cast %67 : vector<1x32x32xbf16> to vector<32x32xbf16>
    %cst_38 = arith.constant dense<0.000000e+00> : vector<64x32xf32>
    %69 = tpu.matmul %66, %68, %cst_38 {dimension_numbers = #tpu.dot_dimension_numbers<[1], [0], [0], [1], [0, 0, 1, 1], [], []>} : vector<64x32xbf16>, vector<32x32xbf16>, vector<64x32xf32> -> vector<64x32xf32>
    %70 = arith.addf %65, %69 : vector<64x32xf32>
    %71 = vector.extract_strided_slice %61 {offsets = [128, 0], sizes = [64, 32], strides = [1, 1]} : vector<192x32xbf16> to vector<64x32xbf16>
    %c2_39 = arith.constant 2 : index
    %c0_40 = arith.constant 0 : index
    %c0_41 = arith.constant 0 : index
    %72 = vector.load %arg11[%c2_39, %c0_40, %c0_41] : memref<19x32x32xbf16, #tpu.memory_space<vmem>>, vector<1x32x32xbf16>
    %73 = vector.shape_cast %72 : vector<1x32x32xbf16> to vector<32x32xbf16>
    %cst_42 = arith.constant dense<0.000000e+00> : vector<64x32xf32>
    %74 = tpu.matmul %71, %73, %cst_42 {dimension_numbers = #tpu.dot_dimension_numbers<[1], [0], [0], [1], [0, 0, 1, 1], [], []>} : vector<64x32xbf16>, vector<32x32xbf16>, vector<64x32xf32> -> vector<64x32xf32>
    %75 = arith.addf %70, %74 : vector<64x32xf32>
    %76 = vector.extract_strided_slice %57 {offsets = [0, 0], sizes = [1, 32], strides = [1, 1]} : vector<8x32xf32> to vector<1x32xf32>
    %77 = vector.broadcast %76 : vector<1x32xf32> to vector<64x32xf32>
    %78 = arith.addf %75, %77 : vector<64x32xf32>
    %cst_43 = arith.constant 0.000000e+00 : f32
    %79 = vector.broadcast %cst_43 : f32 to vector<64x32xf32>
    %80 = arith.cmpf oge, %78, %79 : vector<64x32xf32>
    %cst_44 = arith.constant 0.00999999977 : f32
    %81 = vector.broadcast %cst_44 : f32 to vector<64x32xf32>
    %82 = arith.mulf %81, %78 : vector<64x32xf32>
    %83 = arith.select %80, %78, %82 : vector<64x32xi1>, vector<64x32xf32>
    %c0_45 = arith.constant 0 : index
    %c0_46 = arith.constant 0 : index
    %84 = vector.load %arg6[%c0_45, %c0_46] : memref<96x64xbf16, #tpu.memory_space<vmem>>, vector<96x64xbf16>
    %85 = arith.truncf %83 : vector<64x32xf32> to vector<64x32xbf16>
    %cst_47 = arith.constant dense<0.000000e+00> : vector<96x32xf32>
    %86 = tpu.matmul %84, %85, %cst_47 {dimension_numbers = #tpu.dot_dimension_numbers<[1], [0], [0], [1], [0, 0, 1, 1], [], []>} : vector<96x64xbf16>, vector<64x32xbf16>, vector<96x32xf32> -> vector<96x32xf32>
    %87 = arith.truncf %86 : vector<96x32xf32> to vector<96x32xbf16>
    %88 = vector.extract_strided_slice %87 {offsets = [0, 0], sizes = [32, 32], strides = [1, 1]} : vector<96x32xbf16> to vector<32x32xbf16>
    %c3_48 = arith.constant 3 : index
    %c0_49 = arith.constant 0 : index
    %c0_50 = arith.constant 0 : index
    %89 = vector.load %arg11[%c3_48, %c0_49, %c0_50] : memref<19x32x32xbf16, #tpu.memory_space<vmem>>, vector<1x32x32xbf16>
    %90 = vector.shape_cast %89 : vector<1x32x32xbf16> to vector<32x32xbf16>
    %cst_51 = arith.constant dense<0.000000e+00> : vector<32x32xf32>
    %91 = tpu.matmul %88, %90, %cst_51 {dimension_numbers = #tpu.dot_dimension_numbers<[1], [0], [0], [1], [0, 0, 1, 1], [], []>} : vector<32x32xbf16>, vector<32x32xbf16>, vector<32x32xf32> -> vector<32x32xf32>
    %92 = vector.extract_strided_slice %87 {offsets = [32, 0], sizes = [32, 32], strides = [1, 1]} : vector<96x32xbf16> to vector<32x32xbf16>
    %c4 = arith.constant 4 : index
    %c0_52 = arith.constant 0 : index
    %c0_53 = arith.constant 0 : index
    %93 = vector.load %arg11[%c4, %c0_52, %c0_53] : memref<19x32x32xbf16, #tpu.memory_space<vmem>>, vector<1x32x32xbf16>
    %94 = vector.shape_cast %93 : vector<1x32x32xbf16> to vector<32x32xbf16>
    %cst_54 = arith.constant dense<0.000000e+00> : vector<32x32xf32>
    %95 = tpu.matmul %92, %94, %cst_54 {dimension_numbers = #tpu.dot_dimension_numbers<[1], [0], [0], [1], [0, 0, 1, 1], [], []>} : vector<32x32xbf16>, vector<32x32xbf16>, vector<32x32xf32> -> vector<32x32xf32>
    %96 = arith.addf %91, %95 : vector<32x32xf32>
    %97 = vector.extract_strided_slice %87 {offsets = [64, 0], sizes = [32, 32], strides = [1, 1]} : vector<96x32xbf16> to vector<32x32xbf16>
    %c5 = arith.constant 5 : index
    %c0_55 = arith.constant 0 : index
    %c0_56 = arith.constant 0 : index
    %98 = vector.load %arg11[%c5, %c0_55, %c0_56] : memref<19x32x32xbf16, #tpu.memory_space<vmem>>, vector<1x32x32xbf16>
    %99 = vector.shape_cast %98 : vector<1x32x32xbf16> to vector<32x32xbf16>
    %cst_57 = arith.constant dense<0.000000e+00> : vector<32x32xf32>
    %100 = tpu.matmul %97, %99, %cst_57 {dimension_numbers = #tpu.dot_dimension_numbers<[1], [0], [0], [1], [0, 0, 1, 1], [], []>} : vector<32x32xbf16>, vector<32x32xbf16>, vector<32x32xf32> -> vector<32x32xf32>
    %101 = arith.addf %96, %100 : vector<32x32xf32>
    %102 = vector.extract_strided_slice %57 {offsets = [1, 0], sizes = [1, 32], strides = [1, 1]} : vector<8x32xf32> to vector<1x32xf32>
    %103 = vector.broadcast %102 : vector<1x32xf32> to vector<32x32xf32>
    %104 = arith.addf %101, %103 : vector<32x32xf32>
    %cst_58 = arith.constant 0.000000e+00 : f32
    %105 = vector.broadcast %cst_58 : f32 to vector<32x32xf32>
    %106 = arith.cmpf oge, %104, %105 : vector<32x32xf32>
    %cst_59 = arith.constant 0.00999999977 : f32
    %107 = vector.broadcast %cst_59 : f32 to vector<32x32xf32>
    %108 = arith.mulf %107, %104 : vector<32x32xf32>
    %109 = arith.select %106, %104, %108 : vector<32x32xi1>, vector<32x32xf32>
    %c0_60 = arith.constant 0 : index
    %c0_61 = arith.constant 0 : index
    %110 = vector.load %arg7[%c0_60, %c0_61] : memref<48x32xbf16, #tpu.memory_space<vmem>>, vector<48x32xbf16>
    %111 = arith.truncf %109 : vector<32x32xf32> to vector<32x32xbf16>
    %cst_62 = arith.constant dense<0.000000e+00> : vector<48x32xf32>
    %112 = tpu.matmul %110, %111, %cst_62 {dimension_numbers = #tpu.dot_dimension_numbers<[1], [0], [0], [1], [0, 0, 1, 1], [], []>} : vector<48x32xbf16>, vector<32x32xbf16>, vector<48x32xf32> -> vector<48x32xf32>
    %113 = arith.truncf %112 : vector<48x32xf32> to vector<48x32xbf16>
    %114 = vector.extract_strided_slice %113 {offsets = [0, 0], sizes = [16, 32], strides = [1, 1]} : vector<48x32xbf16> to vector<16x32xbf16>
    %c6 = arith.constant 6 : index
    %c0_63 = arith.constant 0 : index
    %c0_64 = arith.constant 0 : index
    %115 = vector.load %arg11[%c6, %c0_63, %c0_64] : memref<19x32x32xbf16, #tpu.memory_space<vmem>>, vector<1x32x32xbf16>
    %116 = vector.shape_cast %115 : vector<1x32x32xbf16> to vector<32x32xbf16>
    %cst_65 = arith.constant dense<0.000000e+00> : vector<16x32xf32>
    %117 = tpu.matmul %114, %116, %cst_65 {dimension_numbers = #tpu.dot_dimension_numbers<[1], [0], [0], [1], [0, 0, 1, 1], [], []>} : vector<16x32xbf16>, vector<32x32xbf16>, vector<16x32xf32> -> vector<16x32xf32>
    %118 = vector.extract_strided_slice %113 {offsets = [16, 0], sizes = [16, 32], strides = [1, 1]} : vector<48x32xbf16> to vector<16x32xbf16>
    %c7 = arith.constant 7 : index
    %c0_66 = arith.constant 0 : index
    %c0_67 = arith.constant 0 : index
    %119 = vector.load %arg11[%c7, %c0_66, %c0_67] : memref<19x32x32xbf16, #tpu.memory_space<vmem>>, vector<1x32x32xbf16>
    %120 = vector.shape_cast %119 : vector<1x32x32xbf16> to vector<32x32xbf16>
    %cst_68 = arith.constant dense<0.000000e+00> : vector<16x32xf32>
    %121 = tpu.matmul %118, %120, %cst_68 {dimension_numbers = #tpu.dot_dimension_numbers<[1], [0], [0], [1], [0, 0, 1, 1], [], []>} : vector<16x32xbf16>, vector<32x32xbf16>, vector<16x32xf32> -> vector<16x32xf32>
    %122 = arith.addf %117, %121 : vector<16x32xf32>
    %123 = vector.extract_strided_slice %113 {offsets = [32, 0], sizes = [16, 32], strides = [1, 1]} : vector<48x32xbf16> to vector<16x32xbf16>
    %c8 = arith.constant 8 : index
    %c0_69 = arith.constant 0 : index
    %c0_70 = arith.constant 0 : index
    %124 = vector.load %arg11[%c8, %c0_69, %c0_70] : memref<19x32x32xbf16, #tpu.memory_space<vmem>>, vector<1x32x32xbf16>
    %125 = vector.shape_cast %124 : vector<1x32x32xbf16> to vector<32x32xbf16>
    %cst_71 = arith.constant dense<0.000000e+00> : vector<16x32xf32>
    %126 = tpu.matmul %123, %125, %cst_71 {dimension_numbers = #tpu.dot_dimension_numbers<[1], [0], [0], [1], [0, 0, 1, 1], [], []>} : vector<16x32xbf16>, vector<32x32xbf16>, vector<16x32xf32> -> vector<16x32xf32>
    %127 = arith.addf %122, %126 : vector<16x32xf32>
    %128 = vector.extract_strided_slice %57 {offsets = [2, 0], sizes = [1, 32], strides = [1, 1]} : vector<8x32xf32> to vector<1x32xf32>
    %129 = vector.broadcast %128 : vector<1x32xf32> to vector<16x32xf32>
    %130 = arith.addf %127, %129 : vector<16x32xf32>
    %cst_72 = arith.constant 0.000000e+00 : f32
    %131 = vector.broadcast %cst_72 : f32 to vector<16x32xf32>
    %132 = arith.cmpf oge, %130, %131 : vector<16x32xf32>
    %cst_73 = arith.constant 0.00999999977 : f32
    %133 = vector.broadcast %cst_73 : f32 to vector<16x32xf32>
    %134 = arith.mulf %133, %130 : vector<16x32xf32>
    %135 = arith.select %132, %130, %134 : vector<16x32xi1>, vector<16x32xf32>
    %c0_74 = arith.constant 0 : index
    %c0_75 = arith.constant 0 : index
    %136 = vector.load %arg8[%c0_74, %c0_75] : memref<24x16xbf16, #tpu.memory_space<vmem>>, vector<24x16xbf16>
    %137 = arith.truncf %135 : vector<16x32xf32> to vector<16x32xbf16>
    %cst_76 = arith.constant dense<0.000000e+00> : vector<24x32xf32>
    %138 = tpu.matmul %136, %137, %cst_76 {dimension_numbers = #tpu.dot_dimension_numbers<[1], [0], [0], [1], [0, 0, 1, 1], [], []>} : vector<24x16xbf16>, vector<16x32xbf16>, vector<24x32xf32> -> vector<24x32xf32>
    %139 = arith.truncf %138 : vector<24x32xf32> to vector<24x32xbf16>
    %140 = vector.extract_strided_slice %139 {offsets = [0, 0], sizes = [8, 32], strides = [1, 1]} : vector<24x32xbf16> to vector<8x32xbf16>
    %c9 = arith.constant 9 : index
    %c0_77 = arith.constant 0 : index
    %c0_78 = arith.constant 0 : index
    %141 = vector.load %arg11[%c9, %c0_77, %c0_78] : memref<19x32x32xbf16, #tpu.memory_space<vmem>>, vector<1x32x32xbf16>
    %142 = vector.shape_cast %141 : vector<1x32x32xbf16> to vector<32x32xbf16>
    %cst_79 = arith.constant dense<0.000000e+00> : vector<8x32xf32>
    %143 = tpu.matmul %140, %142, %cst_79 {dimension_numbers = #tpu.dot_dimension_numbers<[1], [0], [0], [1], [0, 0, 1, 1], [], []>} : vector<8x32xbf16>, vector<32x32xbf16>, vector<8x32xf32> -> vector<8x32xf32>
    %144 = vector.extract_strided_slice %139 {offsets = [8, 0], sizes = [8, 32], strides = [1, 1]} : vector<24x32xbf16> to vector<8x32xbf16>
    %c10 = arith.constant 10 : index
    %c0_80 = arith.constant 0 : index
    %c0_81 = arith.constant 0 : index
    %145 = vector.load %arg11[%c10, %c0_80, %c0_81] : memref<19x32x32xbf16, #tpu.memory_space<vmem>>, vector<1x32x32xbf16>
    %146 = vector.shape_cast %145 : vector<1x32x32xbf16> to vector<32x32xbf16>
    %cst_82 = arith.constant dense<0.000000e+00> : vector<8x32xf32>
    %147 = tpu.matmul %144, %146, %cst_82 {dimension_numbers = #tpu.dot_dimension_numbers<[1], [0], [0], [1], [0, 0, 1, 1], [], []>} : vector<8x32xbf16>, vector<32x32xbf16>, vector<8x32xf32> -> vector<8x32xf32>
    %148 = arith.addf %143, %147 : vector<8x32xf32>
    %149 = vector.extract_strided_slice %139 {offsets = [16, 0], sizes = [8, 32], strides = [1, 1]} : vector<24x32xbf16> to vector<8x32xbf16>
    %c11 = arith.constant 11 : index
    %c0_83 = arith.constant 0 : index
    %c0_84 = arith.constant 0 : index
    %150 = vector.load %arg11[%c11, %c0_83, %c0_84] : memref<19x32x32xbf16, #tpu.memory_space<vmem>>, vector<1x32x32xbf16>
    %151 = vector.shape_cast %150 : vector<1x32x32xbf16> to vector<32x32xbf16>
    %cst_85 = arith.constant dense<0.000000e+00> : vector<8x32xf32>
    %152 = tpu.matmul %149, %151, %cst_85 {dimension_numbers = #tpu.dot_dimension_numbers<[1], [0], [0], [1], [0, 0, 1, 1], [], []>} : vector<8x32xbf16>, vector<32x32xbf16>, vector<8x32xf32> -> vector<8x32xf32>
    %153 = arith.addf %148, %152 : vector<8x32xf32>
    %154 = vector.extract_strided_slice %57 {offsets = [3, 0], sizes = [1, 32], strides = [1, 1]} : vector<8x32xf32> to vector<1x32xf32>
    %155 = vector.broadcast %154 : vector<1x32xf32> to vector<8x32xf32>
    %156 = arith.addf %153, %155 : vector<8x32xf32>
    %cst_86 = arith.constant 0.000000e+00 : f32
    %157 = vector.broadcast %cst_86 : f32 to vector<8x32xf32>
    %158 = arith.cmpf oge, %156, %157 : vector<8x32xf32>
    %cst_87 = arith.constant 0.00999999977 : f32
    %159 = vector.broadcast %cst_87 : f32 to vector<8x32xf32>
    %160 = arith.mulf %159, %156 : vector<8x32xf32>
    %161 = arith.select %158, %156, %160 : vector<8x32xi1>, vector<8x32xf32>
    %c0_88 = arith.constant 0 : index
    %c0_89 = arith.constant 0 : index
    %162 = vector.load %arg9[%c0_88, %c0_89] : memref<12x8xbf16, #tpu.memory_space<vmem>>, vector<12x8xbf16>
    %163 = arith.truncf %161 : vector<8x32xf32> to vector<8x32xbf16>
    %cst_90 = arith.constant dense<0.000000e+00> : vector<12x32xf32>
    %164 = tpu.matmul %162, %163, %cst_90 {dimension_numbers = #tpu.dot_dimension_numbers<[1], [0], [0], [1], [0, 0, 1, 1], [], []>} : vector<12x8xbf16>, vector<8x32xbf16>, vector<12x32xf32> -> vector<12x32xf32>
    %165 = arith.truncf %164 : vector<12x32xf32> to vector<12x32xbf16>
    %166 = vector.extract_strided_slice %165 {offsets = [0, 0], sizes = [4, 32], strides = [1, 1]} : vector<12x32xbf16> to vector<4x32xbf16>
    %c12 = arith.constant 12 : index
    %c0_91 = arith.constant 0 : index
    %c0_92 = arith.constant 0 : index
    %167 = vector.load %arg11[%c12, %c0_91, %c0_92] : memref<19x32x32xbf16, #tpu.memory_space<vmem>>, vector<1x32x32xbf16>
    %168 = vector.shape_cast %167 : vector<1x32x32xbf16> to vector<32x32xbf16>
    %cst_93 = arith.constant dense<0.000000e+00> : vector<4x32xf32>
    %169 = tpu.matmul %166, %168, %cst_93 {dimension_numbers = #tpu.dot_dimension_numbers<[1], [0], [0], [1], [0, 0, 1, 1], [], []>} : vector<4x32xbf16>, vector<32x32xbf16>, vector<4x32xf32> -> vector<4x32xf32>
    %170 = vector.extract_strided_slice %165 {offsets = [4, 0], sizes = [4, 32], strides = [1, 1]} : vector<12x32xbf16> to vector<4x32xbf16>
    %c13 = arith.constant 13 : index
    %c0_94 = arith.constant 0 : index
    %c0_95 = arith.constant 0 : index
    %171 = vector.load %arg11[%c13, %c0_94, %c0_95] : memref<19x32x32xbf16, #tpu.memory_space<vmem>>, vector<1x32x32xbf16>
    %172 = vector.shape_cast %171 : vector<1x32x32xbf16> to vector<32x32xbf16>
    %cst_96 = arith.constant dense<0.000000e+00> : vector<4x32xf32>
    %173 = tpu.matmul %170, %172, %cst_96 {dimension_numbers = #tpu.dot_dimension_numbers<[1], [0], [0], [1], [0, 0, 1, 1], [], []>} : vector<4x32xbf16>, vector<32x32xbf16>, vector<4x32xf32> -> vector<4x32xf32>
    %174 = arith.addf %169, %173 : vector<4x32xf32>
    %175 = vector.extract_strided_slice %165 {offsets = [8, 0], sizes = [4, 32], strides = [1, 1]} : vector<12x32xbf16> to vector<4x32xbf16>
    %c14 = arith.constant 14 : index
    %c0_97 = arith.constant 0 : index
    %c0_98 = arith.constant 0 : index
    %176 = vector.load %arg11[%c14, %c0_97, %c0_98] : memref<19x32x32xbf16, #tpu.memory_space<vmem>>, vector<1x32x32xbf16>
    %177 = vector.shape_cast %176 : vector<1x32x32xbf16> to vector<32x32xbf16>
    %cst_99 = arith.constant dense<0.000000e+00> : vector<4x32xf32>
    %178 = tpu.matmul %175, %177, %cst_99 {dimension_numbers = #tpu.dot_dimension_numbers<[1], [0], [0], [1], [0, 0, 1, 1], [], []>} : vector<4x32xbf16>, vector<32x32xbf16>, vector<4x32xf32> -> vector<4x32xf32>
    %179 = arith.addf %174, %178 : vector<4x32xf32>
    %180 = vector.extract_strided_slice %57 {offsets = [4, 0], sizes = [1, 32], strides = [1, 1]} : vector<8x32xf32> to vector<1x32xf32>
    %181 = vector.broadcast %180 : vector<1x32xf32> to vector<4x32xf32>
    %182 = arith.addf %179, %181 : vector<4x32xf32>
    %cst_100 = arith.constant 0.000000e+00 : f32
    %183 = vector.broadcast %cst_100 : f32 to vector<4x32xf32>
    %184 = arith.cmpf oge, %182, %183 : vector<4x32xf32>
    %cst_101 = arith.constant 0.00999999977 : f32
    %185 = vector.broadcast %cst_101 : f32 to vector<4x32xf32>
    %186 = arith.mulf %185, %182 : vector<4x32xf32>
    %187 = arith.select %184, %182, %186 : vector<4x32xi1>, vector<4x32xf32>
    %c0_102 = arith.constant 0 : index
    %c0_103 = arith.constant 0 : index
    %188 = vector.load %arg10[%c0_102, %c0_103] : memref<8x4xbf16, #tpu.memory_space<vmem>>, vector<8x4xbf16>
    %189 = arith.truncf %187 : vector<4x32xf32> to vector<4x32xbf16>
    %cst_104 = arith.constant dense<0.000000e+00> : vector<8x32xf32>
    %190 = tpu.matmul %188, %189, %cst_104 {dimension_numbers = #tpu.dot_dimension_numbers<[1], [0], [0], [1], [0, 0, 1, 1], [], []>} : vector<8x4xbf16>, vector<4x32xbf16>, vector<8x32xf32> -> vector<8x32xf32>
    %191 = arith.truncf %190 : vector<8x32xf32> to vector<8x32xbf16>
    %192 = vector.extract_strided_slice %191 {offsets = [0, 0], sizes = [2, 32], strides = [1, 1]} : vector<8x32xbf16> to vector<2x32xbf16>
    %c15 = arith.constant 15 : index
    %c0_105 = arith.constant 0 : index
    %c0_106 = arith.constant 0 : index
    %193 = vector.load %arg11[%c15, %c0_105, %c0_106] : memref<19x32x32xbf16, #tpu.memory_space<vmem>>, vector<1x32x32xbf16>
    %194 = vector.shape_cast %193 : vector<1x32x32xbf16> to vector<32x32xbf16>
    %cst_107 = arith.constant dense<0.000000e+00> : vector<2x32xf32>
    %195 = tpu.matmul %192, %194, %cst_107 {dimension_numbers = #tpu.dot_dimension_numbers<[1], [0], [0], [1], [0, 0, 1, 1], [], []>} : vector<2x32xbf16>, vector<32x32xbf16>, vector<2x32xf32> -> vector<2x32xf32>
    %196 = vector.extract_strided_slice %191 {offsets = [2, 0], sizes = [2, 32], strides = [1, 1]} : vector<8x32xbf16> to vector<2x32xbf16>
    %c16 = arith.constant 16 : index
    %c0_108 = arith.constant 0 : index
    %c0_109 = arith.constant 0 : index
    %197 = vector.load %arg11[%c16, %c0_108, %c0_109] : memref<19x32x32xbf16, #tpu.memory_space<vmem>>, vector<1x32x32xbf16>
    %198 = vector.shape_cast %197 : vector<1x32x32xbf16> to vector<32x32xbf16>
    %cst_110 = arith.constant dense<0.000000e+00> : vector<2x32xf32>
    %199 = tpu.matmul %196, %198, %cst_110 {dimension_numbers = #tpu.dot_dimension_numbers<[1], [0], [0], [1], [0, 0, 1, 1], [], []>} : vector<2x32xbf16>, vector<32x32xbf16>, vector<2x32xf32> -> vector<2x32xf32>
    %200 = arith.addf %195, %199 : vector<2x32xf32>
    %201 = vector.extract_strided_slice %191 {offsets = [4, 0], sizes = [2, 32], strides = [1, 1]} : vector<8x32xbf16> to vector<2x32xbf16>
    %c17 = arith.constant 17 : index
    %c0_111 = arith.constant 0 : index
    %c0_112 = arith.constant 0 : index
    %202 = vector.load %arg11[%c17, %c0_111, %c0_112] : memref<19x32x32xbf16, #tpu.memory_space<vmem>>, vector<1x32x32xbf16>
    %203 = vector.shape_cast %202 : vector<1x32x32xbf16> to vector<32x32xbf16>
    %cst_113 = arith.constant dense<0.000000e+00> : vector<2x32xf32>
    %204 = tpu.matmul %201, %203, %cst_113 {dimension_numbers = #tpu.dot_dimension_numbers<[1], [0], [0], [1], [0, 0, 1, 1], [], []>} : vector<2x32xbf16>, vector<32x32xbf16>, vector<2x32xf32> -> vector<2x32xf32>
    %205 = arith.addf %200, %204 : vector<2x32xf32>
    %206 = vector.extract_strided_slice %191 {offsets = [6, 0], sizes = [2, 32], strides = [1, 1]} : vector<8x32xbf16> to vector<2x32xbf16>
    %c18 = arith.constant 18 : index
    %c0_114 = arith.constant 0 : index
    %c0_115 = arith.constant 0 : index
    %207 = vector.load %arg11[%c18, %c0_114, %c0_115] : memref<19x32x32xbf16, #tpu.memory_space<vmem>>, vector<1x32x32xbf16>
    %208 = vector.shape_cast %207 : vector<1x32x32xbf16> to vector<32x32xbf16>
    %cst_116 = arith.constant dense<0.000000e+00> : vector<2x32xf32>
    %209 = tpu.matmul %206, %208, %cst_116 {dimension_numbers = #tpu.dot_dimension_numbers<[1], [0], [0], [1], [0, 0, 1, 1], [], []>} : vector<2x32xbf16>, vector<32x32xbf16>, vector<2x32xf32> -> vector<2x32xf32>
    %210 = arith.addf %205, %209 : vector<2x32xf32>
    %211 = vector.extract_strided_slice %57 {offsets = [5, 0], sizes = [1, 32], strides = [1, 1]} : vector<8x32xf32> to vector<1x32xf32>
    %212 = vector.broadcast %211 : vector<1x32xf32> to vector<2x32xf32>
    %213 = arith.addf %210, %212 : vector<2x32xf32>
    %c0_117 = arith.constant 0 : index
    %c0_118 = arith.constant 0 : index
    %214 = vector.load %arg19[%c0_117, %c0_118] : memref<8x512xf32, #tpu.memory_space<vmem>>, vector<8x512xf32>
    %c0_119 = arith.constant 0 : index
    %c0_120 = arith.constant 0 : index
    %215 = vector.load %arg13[%c0_119, %c0_120] : memref<32x512xbf16, #tpu.memory_space<vmem>>, vector<32x512xbf16>
    %216 = arith.truncf %213 : vector<2x32xf32> to vector<2x32xbf16>
    %cst_121 = arith.constant dense<0.000000e+00> : vector<2x512xf32>
    %217 = tpu.matmul %216, %215, %cst_121 {dimension_numbers = #tpu.dot_dimension_numbers<[1], [0], [0], [1], [0, 0, 1, 1], [], []>} : vector<2x32xbf16>, vector<32x512xbf16>, vector<2x512xf32> -> vector<2x512xf32>
    %218 = vector.extract_strided_slice %214 {offsets = [0, 0], sizes = [1, 512], strides = [1, 1]} : vector<8x512xf32> to vector<1x512xf32>
    %219 = vector.broadcast %218 : vector<1x512xf32> to vector<2x512xf32>
    %220 = arith.addf %217, %219 : vector<2x512xf32>
    %cst_122 = arith.constant 0.000000e+00 : f32
    %221 = vector.broadcast %cst_122 : f32 to vector<2x512xf32>
    %222 = arith.cmpf oge, %220, %221 : vector<2x512xf32>
    %cst_123 = arith.constant 0.00999999977 : f32
    %223 = vector.broadcast %cst_123 : f32 to vector<2x512xf32>
    %224 = arith.mulf %223, %220 : vector<2x512xf32>
    %225 = arith.select %222, %220, %224 : vector<2x512xi1>, vector<2x512xf32>
    %c0_124 = arith.constant 0 : index
    %c0_125 = arith.constant 0 : index
    %226 = vector.load %arg14[%c0_124, %c0_125] : memref<512x512xbf16, #tpu.memory_space<vmem>>, vector<512x512xbf16>
    %227 = arith.truncf %225 : vector<2x512xf32> to vector<2x512xbf16>
    %cst_126 = arith.constant dense<0.000000e+00> : vector<2x512xf32>
    %228 = tpu.matmul %227, %226, %cst_126 {dimension_numbers = #tpu.dot_dimension_numbers<[1], [0], [0], [1], [0, 0, 1, 1], [], []>} : vector<2x512xbf16>, vector<512x512xbf16>, vector<2x512xf32> -> vector<2x512xf32>
    %229 = vector.extract_strided_slice %214 {offsets = [1, 0], sizes = [1, 512], strides = [1, 1]} : vector<8x512xf32> to vector<1x512xf32>
    %230 = vector.broadcast %229 : vector<1x512xf32> to vector<2x512xf32>
    %231 = arith.addf %228, %230 : vector<2x512xf32>
    %cst_127 = arith.constant 0.000000e+00 : f32
    %232 = vector.broadcast %cst_127 : f32 to vector<2x512xf32>
    %233 = arith.cmpf oge, %231, %232 : vector<2x512xf32>
    %cst_128 = arith.constant 0.00999999977 : f32
    %234 = vector.broadcast %cst_128 : f32 to vector<2x512xf32>
    %235 = arith.mulf %234, %231 : vector<2x512xf32>
    %236 = arith.select %233, %231, %235 : vector<2x512xi1>, vector<2x512xf32>
    %c0_129 = arith.constant 0 : index
    %c0_130 = arith.constant 0 : index
    %237 = vector.load %arg15[%c0_129, %c0_130] : memref<512x512xbf16, #tpu.memory_space<vmem>>, vector<512x512xbf16>
    %238 = arith.truncf %236 : vector<2x512xf32> to vector<2x512xbf16>
    %cst_131 = arith.constant dense<0.000000e+00> : vector<2x512xf32>
    %239 = tpu.matmul %238, %237, %cst_131 {dimension_numbers = #tpu.dot_dimension_numbers<[1], [0], [0], [1], [0, 0, 1, 1], [], []>} : vector<2x512xbf16>, vector<512x512xbf16>, vector<2x512xf32> -> vector<2x512xf32>
    %240 = vector.extract_strided_slice %214 {offsets = [2, 0], sizes = [1, 512], strides = [1, 1]} : vector<8x512xf32> to vector<1x512xf32>
    %241 = vector.broadcast %240 : vector<1x512xf32> to vector<2x512xf32>
    %242 = arith.addf %239, %241 : vector<2x512xf32>
    %cst_132 = arith.constant 0.000000e+00 : f32
    %243 = vector.broadcast %cst_132 : f32 to vector<2x512xf32>
    %244 = arith.cmpf oge, %242, %243 : vector<2x512xf32>
    %cst_133 = arith.constant 0.00999999977 : f32
    %245 = vector.broadcast %cst_133 : f32 to vector<2x512xf32>
    %246 = arith.mulf %245, %242 : vector<2x512xf32>
    %247 = arith.select %244, %242, %246 : vector<2x512xi1>, vector<2x512xf32>
    %c0_134 = arith.constant 0 : index
    %c0_135 = arith.constant 0 : index
    %248 = vector.load %arg16[%c0_134, %c0_135] : memref<512x512xbf16, #tpu.memory_space<vmem>>, vector<512x512xbf16>
    %249 = arith.truncf %247 : vector<2x512xf32> to vector<2x512xbf16>
    %cst_136 = arith.constant dense<0.000000e+00> : vector<2x512xf32>
    %250 = tpu.matmul %249, %248, %cst_136 {dimension_numbers = #tpu.dot_dimension_numbers<[1], [0], [0], [1], [0, 0, 1, 1], [], []>} : vector<2x512xbf16>, vector<512x512xbf16>, vector<2x512xf32> -> vector<2x512xf32>
    %251 = vector.extract_strided_slice %214 {offsets = [3, 0], sizes = [1, 512], strides = [1, 1]} : vector<8x512xf32> to vector<1x512xf32>
    %252 = vector.broadcast %251 : vector<1x512xf32> to vector<2x512xf32>
    %253 = arith.addf %250, %252 : vector<2x512xf32>
    %cst_137 = arith.constant 0.000000e+00 : f32
    %254 = vector.broadcast %cst_137 : f32 to vector<2x512xf32>
    %255 = arith.cmpf oge, %253, %254 : vector<2x512xf32>
    %cst_138 = arith.constant 0.00999999977 : f32
    %256 = vector.broadcast %cst_138 : f32 to vector<2x512xf32>
    %257 = arith.mulf %256, %253 : vector<2x512xf32>
    %258 = arith.select %255, %253, %257 : vector<2x512xi1>, vector<2x512xf32>
    %c0_139 = arith.constant 0 : index
    %c0_140 = arith.constant 0 : index
    %259 = vector.load %arg17[%c0_139, %c0_140] : memref<512x512xbf16, #tpu.memory_space<vmem>>, vector<512x512xbf16>
    %260 = arith.truncf %258 : vector<2x512xf32> to vector<2x512xbf16>
    %cst_141 = arith.constant dense<0.000000e+00> : vector<2x512xf32>
    %261 = tpu.matmul %260, %259, %cst_141 {dimension_numbers = #tpu.dot_dimension_numbers<[1], [0], [0], [1], [0, 0, 1, 1], [], []>} : vector<2x512xbf16>, vector<512x512xbf16>, vector<2x512xf32> -> vector<2x512xf32>
    %262 = vector.extract_strided_slice %214 {offsets = [4, 0], sizes = [1, 512], strides = [1, 1]} : vector<8x512xf32> to vector<1x512xf32>
    %263 = vector.broadcast %262 : vector<1x512xf32> to vector<2x512xf32>
    %264 = arith.addf %261, %263 : vector<2x512xf32>
    %cst_142 = arith.constant 0.000000e+00 : f32
    %265 = vector.broadcast %cst_142 : f32 to vector<2x512xf32>
    %266 = arith.cmpf oge, %264, %265 : vector<2x512xf32>
    %cst_143 = arith.constant 0.00999999977 : f32
    %267 = vector.broadcast %cst_143 : f32 to vector<2x512xf32>
    %268 = arith.mulf %267, %264 : vector<2x512xf32>
    %269 = arith.select %266, %264, %268 : vector<2x512xi1>, vector<2x512xf32>
    %c0_144 = arith.constant 0 : index
    %c0_145 = arith.constant 0 : index
    %270 = vector.load %arg18[%c0_144, %c0_145] : memref<512x128xbf16, #tpu.memory_space<vmem>>, vector<512x128xbf16>
    %271 = arith.truncf %269 : vector<2x512xf32> to vector<2x512xbf16>
    %cst_146 = arith.constant dense<0.000000e+00> : vector<2x128xf32>
    %272 = tpu.matmul %271, %270, %cst_146 {dimension_numbers = #tpu.dot_dimension_numbers<[1], [0], [0], [1], [0, 0, 1, 1], [], []>} : vector<2x512xbf16>, vector<512x128xbf16>, vector<2x128xf32> -> vector<2x128xf32>
    %273 = vector.extract_strided_slice %214 {offsets = [5, 0], sizes = [1, 128], strides = [1, 1]} : vector<8x512xf32> to vector<1x128xf32>
    %274 = vector.broadcast %273 : vector<1x128xf32> to vector<2x128xf32>
    %275 = arith.addf %272, %274 : vector<2x128xf32>
    %276 = math.absf %275 : vector<2x128xf32>
    %cst_147 = arith.constant 0.000000e+00 : f32
    %277 = vector.broadcast %cst_147 : f32 to vector<2x128xf32>
    %278 = arith.subf %277, %276 : vector<2x128xf32>
    %279 = math.exp %278 : vector<2x128xf32>
    %cst_148 = arith.constant 0.000000e+00 : f32
    %280 = vector.broadcast %cst_148 : f32 to vector<2x128xf32>
    %281 = arith.cmpf oge, %275, %280 : vector<2x128xf32>
    %cst_149 = arith.constant 1.000000e+00 : f32
    %282 = vector.broadcast %cst_149 : f32 to vector<2x128xf32>
    %283 = arith.addf %282, %279 : vector<2x128xf32>
    %cst_150 = arith.constant 1.000000e+00 : f32
    %284 = vector.broadcast %cst_150 : f32 to vector<2x128xf32>
    %285 = arith.divf %284, %283 : vector<2x128xf32>
    %cst_151 = arith.constant 1.000000e+00 : f32
    %286 = vector.broadcast %cst_151 : f32 to vector<2x128xf32>
    %287 = arith.addf %286, %279 : vector<2x128xf32>
    %288 = arith.divf %279, %287 : vector<2x128xf32>
    %289 = arith.select %281, %285, %288 : vector<2x128xi1>, vector<2x128xf32>
    %c0_152 = arith.constant 0 : index
    %c0_153 = arith.constant 0 : index
    %290 = vector.load %arg20[%c0_152, %c0_153] : memref<2x128xf32, #tpu.memory_space<vmem>>, vector<2x128xf32>
    tpu.vector_store %arg20[%c0_152, %c0_153], %289 {strides = array<i32>} : memref<2x128xf32, #tpu.memory_space<vmem>>, vector<2x128xf32>,
    return
  }
  func.func @transform_0(%arg0: i32) -> (i32, i32) {
    %c0_i32 = arith.constant 0 : i32
    %c0_i32_0 = arith.constant 0 : i32
    %c0_i32_1 = arith.constant 0 : i32
    return %c0_i32, %c0_i32_0 : i32, i32
  }
  func.func @transform_1(%arg0: i32) -> (i32, i32) {
    %c0_i32 = arith.constant 0 : i32
    %c0_i32_0 = arith.constant 0 : i32
    %c0_i32_1 = arith.constant 0 : i32
    return %c0_i32, %c0_i32_0 : i32, i32
  }
  func.func @transform_2(%arg0: i32) -> (i32, i32, i32) {
    %c0_i32 = arith.constant 0 : i32
    %c0_i32_0 = arith.constant 0 : i32
    %c0_i32_1 = arith.constant 0 : i32
    %c0_i32_2 = arith.constant 0 : i32
    return %c0_i32, %c0_i32_0, %c0_i32_1 : i32, i32, i32
  }
  func.func @transform_3(%arg0: i32) -> (i32, i32) {
    %c0_i32 = arith.constant 0 : i32
    %c0_i32_0 = arith.constant 0 : i32
    %c0_i32_1 = arith.constant 0 : i32
    return %c0_i32, %c0_i32_0 : i32, i32
  }
  func.func @transform_4(%arg0: i32) -> (i32, i32) {
    %c0_i32 = arith.constant 0 : i32
    %c0_i32_0 = arith.constant 0 : i32
    %c0_i32_1 = arith.constant 0 : i32
    return %c0_i32, %c0_i32_0 : i32, i32
  }
  func.func @transform_5(%arg0: i32) -> (i32, i32) {
    %c0_i32 = arith.constant 0 : i32
    %c0_i32_0 = arith.constant 0 : i32
    %c0_i32_1 = arith.constant 0 : i32
    return %c0_i32, %c0_i32_0 : i32, i32
  }
  func.func @transform_6(%arg0: i32) -> (i32, i32) {
    %c0_i32 = arith.constant 0 : i32
    %c0_i32_0 = arith.constant 0 : i32
    %c0_i32_1 = arith.constant 0 : i32
    return %c0_i32, %c0_i32_0 : i32, i32
  }
  func.func @transform_7(%arg0: i32) -> (i32, i32) {
    %c0_i32 = arith.constant 0 : i32
    %c0_i32_0 = arith.constant 0 : i32
    %c0_i32_1 = arith.constant 0 : i32
    return %c0_i32, %c0_i32_0 : i32, i32
  }
  func.func @transform_8(%arg0: i32) -> (i32, i32) {
    %c0_i32 = arith.constant 0 : i32
    %c0_i32_0 = arith.constant 0 : i32
    %c0_i32_1 = arith.constant 0 : i32
    return %c0_i32, %c0_i32_0 : i32, i32
  }
  func.func @transform_9(%arg0: i32) -> (i32, i32) {
    %c0_i32 = arith.constant 0 : i32
    %c0_i32_0 = arith.constant 0 : i32
    %c0_i32_1 = arith.constant 0 : i32
    return %c0_i32, %c0_i32_0 : i32, i32
  }
  func.func @transform_10(%arg0: i32) -> (i32, i32, i32) {
    %c0_i32 = arith.constant 0 : i32
    %c0_i32_0 = arith.constant 0 : i32
    %c0_i32_1 = arith.constant 0 : i32
    %c0_i32_2 = arith.constant 0 : i32
    return %c0_i32, %c0_i32_0, %c0_i32_1 : i32, i32, i32
  }
  func.func @transform_11(%arg0: i32) -> (i32, i32) {
    %c0_i32 = arith.constant 0 : i32
    %c0_i32_0 = arith.constant 0 : i32
    %c0_i32_1 = arith.constant 0 : i32
    return %c0_i32, %c0_i32_0 : i32, i32
  }
  func.func @transform_12(%arg0: i32) -> (i32, i32) {
    %c0_i32 = arith.constant 0 : i32
    %c0_i32_0 = arith.constant 0 : i32
    %c0_i32_1 = arith.constant 0 : i32
    return %c0_i32, %c0_i32_0 : i32, i32
  }
  func.func @transform_13(%arg0: i32) -> (i32, i32) {
    %c0_i32 = arith.constant 0 : i32
    %c0_i32_0 = arith.constant 0 : i32
    %c0_i32_1 = arith.constant 0 : i32
    return %c0_i32, %c0_i32_0 : i32, i32
  }
  func.func @transform_14(%arg0: i32) -> (i32, i32) {
    %c0_i32 = arith.constant 0 : i32
    %c0_i32_0 = arith.constant 0 : i32
    %c0_i32_1 = arith.constant 0 : i32
    return %c0_i32, %c0_i32_0 : i32, i32
  }
  func.func @transform_15(%arg0: i32) -> (i32, i32) {
    %c0_i32 = arith.constant 0 : i32
    %c0_i32_0 = arith.constant 0 : i32
    %c0_i32_1 = arith.constant 0 : i32
    return %c0_i32, %c0_i32_0 : i32, i32
  }
  func.func @transform_16(%arg0: i32) -> (i32, i32) {
    %c0_i32 = arith.constant 0 : i32
    %c0_i32_0 = arith.constant 0 : i32
    %c0_i32_1 = arith.constant 0 : i32
    return %c0_i32, %c0_i32_0 : i32, i32
  }
  func.func @transform_17(%arg0: i32) -> (i32, i32) {
    %c0_i32 = arith.constant 0 : i32
    %c0_i32_0 = arith.constant 0 : i32
    %c0_i32_1 = arith.constant 0 : i32
    return %c0_i32, %c0_i32_0 : i32, i32
  }
  func.func @transform_18(%arg0: i32) -> (i32, i32) {
    %c0_i32 = arith.constant 0 : i32
    %c0_i32_0 = arith.constant 0 : i32
    %c0_i32_1 = arith.constant 0 : i32
    return %c0_i32, %c0_i32_0 : i32, i32
  }
  func.func @transform_19(%arg0: i32) -> (i32, i32) {
    %c0_i32 = arith.constant 0 : i32
    %c0_i32_0 = arith.constant 0 : i32
    %c0_i32_1 = arith.constant 0 : i32
    return %c0_i32, %c0_i32_0 : i32, i32
  }
}

</mosaic_0001>

<llo_original>
// kernel: _lambda_.1
$region0: #{_lambda_.1}
  #allocation0 [shape = 'u32[]', space=smem, size = 0x4, offset = 0x4, fixed_abs, tag = 'smem constant byte address 0x4 - core index']
  #allocation1 [shape = 'u32[144,128]{1,0:T(1,128)}', space=vmem, size = 0x12000, scoped, tag = 'internal scratch']
  %s0 = inlined_call_operand.vmem [shape: f32[128,32], index: 0, kind: input, shape index: {}]
  %s1 = inlined_call_operand.vmem [shape: bf16[32,128], index: 1, kind: input, shape index: {}]
  %s2 = inlined_call_operand.vmem [shape: bf16[4,128,128], index: 2, kind: input, shape index: {}]
  %s3 = inlined_call_operand.vmem [shape: f32[8,128], index: 3, kind: input, shape index: {}]
  %s4 = inlined_call_operand.vmem [shape: bf16[192,128], index: 4, kind: input, shape index: {}]
  %s5 = inlined_call_operand.vmem [shape: bf16[96,64], index: 5, kind: input, shape index: {}]
  %s6 = inlined_call_operand.vmem [shape: bf16[48,32], index: 6, kind: input, shape index: {}]
  %s7 = inlined_call_operand.vmem [shape: bf16[24,16], index: 7, kind: input, shape index: {}]
  %s8 = inlined_call_operand.vmem [shape: bf16[12,8], index: 8, kind: input, shape index: {}]
  %s9 = inlined_call_operand.vmem [shape: bf16[8,4], index: 9, kind: input, shape index: {}]
  %s10 = inlined_call_operand.vmem [shape: bf16[19,32,32], index: 10, kind: input, shape index: {}]
  %s11 = inlined_call_operand.vmem [shape: f32[8,32], index: 11, kind: input, shape index: {}]
  %s12 = inlined_call_operand.vmem [shape: bf16[32,512], index: 12, kind: input, shape index: {}]
  %s13 = inlined_call_operand.vmem [shape: bf16[512,512], index: 13, kind: input, shape index: {}]
  %s14 = inlined_call_operand.vmem [shape: bf16[512,512], index: 14, kind: input, shape index: {}]
  %s15 = inlined_call_operand.vmem [shape: bf16[512,512], index: 15, kind: input, shape index: {}]
  %s16 = inlined_call_operand.vmem [shape: bf16[512,512], index: 16, kind: input, shape index: {}]
  %s17 = inlined_call_operand.vmem [shape: bf16[512,128], index: 17, kind: input, shape index: {}]
  %s18 = inlined_call_operand.vmem [shape: f32[8,512], index: 18, kind: input, shape index: {}]
  %s19 = inlined_call_operand.hbm [shape: f32[2,128], index: 19, kind: output, shape index: {}]
  %s20 = sld [smem:[#allocation0]]
  $region86: #{_lambda_.1} parent=0
    _
  %s22 = ssub.s32 1, %s20
  %s23 = scalar_select 0, %s22, %s20
  $region1: #{_lambda_.1} parent=0
    #allocation2 [shape = 'u8[1024]{0}', space=vmem, size = 0x400, scoped, tag = 'output window, operand 0, single buffered']
    #allocation3 [shape = 's32[1]{0}', space=sflag, size = 0x4, scoped, tag = 'scoped memory for _lambda_.1']
    %24 = vsyncpa [#allocation3], 0
    // Predicated region
    $region2: #{_lambda_.1} parent=1 // pred_check
      _
    $region3: #{_lambda_.1} parent=1 // pred_check_branch
      %26 = sbr.rel (0) target = $region5
    $region4: #{_lambda_.1} parent=1 // pred_region
      _
    $region5: #{_lambda_.1} parent=1 // pred_fallthru
      _
    // Predicated region
    $region6: #{_lambda_.1} parent=1 // pred_check
      _
    $region7: #{_lambda_.1} parent=1 // pred_check_branch
      %28 = sbr.rel (0) target = $region9
    $region8: #{_lambda_.1} parent=1 // pred_region
      _
    $region9: #{_lambda_.1} parent=1 // pred_fallthru
      _
    // Predicated region
    $region10: #{_lambda_.1} parent=1 // pred_check
      _
    $region11: #{_lambda_.1} parent=1 // pred_check_branch
      %30 = sbr.rel (0) target = $region13
    $region12: #{_lambda_.1} parent=1 // pred_region
      _
    $region13: #{_lambda_.1} parent=1 // pred_fallthru
      _
    // Predicated region
    $region14: #{_lambda_.1} parent=1 // pred_check
      _
    $region15: #{_lambda_.1} parent=1 // pred_check_branch
      %32 = sbr.rel (0) target = $region17
    $region16: #{_lambda_.1} parent=1 // pred_region
      _
    $region17: #{_lambda_.1} parent=1 // pred_fallthru
      _
    // Predicated region
    $region18: #{_lambda_.1} parent=1 // pred_check
      _
    $region19: #{_lambda_.1} parent=1 // pred_check_branch
      %34 = sbr.rel (0) target = $region21
    $region20: #{_lambda_.1} parent=1 // pred_region
      _
    $region21: #{_lambda_.1} parent=1 // pred_fallthru
      _
    // Predicated region
    $region22: #{_lambda_.1} parent=1 // pred_check
      _
    $region23: #{_lambda_.1} parent=1 // pred_check_branch
      %36 = sbr.rel (0) target = $region25
    $region24: #{_lambda_.1} parent=1 // pred_region
      _
    $region25: #{_lambda_.1} parent=1 // pred_fallthru
      _
    // Predicated region
    $region26: #{_lambda_.1} parent=1 // pred_check
      _
    $region27: #{_lambda_.1} parent=1 // pred_check_branch
      %38 = sbr.rel (0) target = $region29
    $region28: #{_lambda_.1} parent=1 // pred_region
      _
    $region29: #{_lambda_.1} parent=1 // pred_fallthru
      _
    // Predicated region
    $region30: #{_lambda_.1} parent=1 // pred_check
      _
    $region31: #{_lambda_.1} parent=1 // pred_check_branch
      %40 = sbr.rel (0) target = $region33
    $region32: #{_lambda_.1} parent=1 // pred_region
      _
    $region33: #{_lambda_.1} parent=1 // pred_fallthru
      _
    // Predicated region
    $region34: #{_lambda_.1} parent=1 // pred_check
      _
    $region35: #{_lambda_.1} parent=1 // pred_check_branch
      %42 = sbr.rel (0) target = $region37
    $region36: #{_lambda_.1} parent=1 // pred_region
      _
    $region37: #{_lambda_.1} parent=1 // pred_fallthru
      _
    // Predicated region
    $region38: #{_lambda_.1} parent=1 // pred_check
      _
    $region39: #{_lambda_.1} parent=1 // pred_check_branch
      %44 = sbr.rel (0) target = $region41
    $region40: #{_lambda_.1} parent=1 // pred_region
      _
    $region41: #{_lambda_.1} parent=1 // pred_fallthru
      _
    // Predicated region
    $region42: #{_lambda_.1} parent=1 // pred_check
      _
    $region43: #{_lambda_.1} parent=1 // pred_check_branch
      %46 = sbr.rel (0) target = $region45
    $region44: #{_lambda_.1} parent=1 // pred_region
      _
    $region45: #{_lambda_.1} parent=1 // pred_fallthru
      _
    // Predicated region
    $region46: #{_lambda_.1} parent=1 // pred_check
      _
    $region47: #{_lambda_.1} parent=1 // pred_check_branch
      %48 = sbr.rel (0) target = $region49
    $region48: #{_lambda_.1} parent=1 // pred_region
      _
    $region49: #{_lambda_.1} parent=1 // pred_fallthru
      _
    // Predicated region
    $region50: #{_lambda_.1} parent=1 // pred_check
      _
    $region51: #{_lambda_.1} parent=1 // pred_check_branch
      %50 = sbr.rel (0) target = $region53
    $region52: #{_lambda_.1} parent=1 // pred_region
      _
    $region53: #{_lambda_.1} parent=1 // pred_fallthru
      _
    // Predicated region
    $region54: #{_lambda_.1} parent=1 // pred_check
      _
    $region55: #{_lambda_.1} parent=1 // pred_check_branch
      %52 = sbr.rel (0) target = $region57
    $region56: #{_lambda_.1} parent=1 // pred_region
      _
    $region57: #{_lambda_.1} parent=1 // pred_fallthru
      _
    // Predicated region
    $region58: #{_lambda_.1} parent=1 // pred_check
      _
    $region59: #{_lambda_.1} parent=1 // pred_check_branch
      %54 = sbr.rel (0) target = $region61
    $region60: #{_lambda_.1} parent=1 // pred_region
      _
    $region61: #{_lambda_.1} parent=1 // pred_fallthru
      _
    // Predicated region
    $region62: #{_lambda_.1} parent=1 // pred_check
      _
    $region63: #{_lambda_.1} parent=1 // pred_check_branch
      %56 = sbr.rel (0) target = $region65
    $region64: #{_lambda_.1} parent=1 // pred_region
      _
    $region65: #{_lambda_.1} parent=1 // pred_fallthru
      _
    // Predicated region
    $region66: #{_lambda_.1} parent=1 // pred_check
      _
    $region67: #{_lambda_.1} parent=1 // pred_check_branch
      %58 = sbr.rel (0) target = $region69
    $region68: #{_lambda_.1} parent=1 // pred_region
      _
    $region69: #{_lambda_.1} parent=1 // pred_fallthru
      _
    // Predicated region
    $region70: #{_lambda_.1} parent=1 // pred_check
      _
    $region71: #{_lambda_.1} parent=1 // pred_check_branch
      %60 = sbr.rel (0) target = $region73
    $region72: #{_lambda_.1} parent=1 // pred_region
      _
    $region73: #{_lambda_.1} parent=1 // pred_fallthru
      _
    // Predicated region
    $region74: #{_lambda_.1} parent=1 // pred_check
      _
    $region75: #{_lambda_.1} parent=1 // pred_check_branch
      %62 = sbr.rel (0) target = $region77
    $region76: #{_lambda_.1} parent=1 // pred_region
      _
    $region77: #{_lambda_.1} parent=1 // pred_fallthru
      _
    %v64 = vld [vmem:[%s3] sm:$0xff]
    %v65 = vld [vmem:[%s0] sm:$0xff]
    %v66 = vld [vmem:[%s0 + $0x8] sm:$0xff]
    %v67 = vld [vmem:[%s0 + $0x10] sm:$0xff]
    %v68 = vld [vmem:[%s0 + $0x18] sm:$0xff]
    %v69 = vld [vmem:[%s0 + $0x20] sm:$0xff]
    %v70 = vld [vmem:[%s0 + $0x28] sm:$0xff]
    %v71 = vld [vmem:[%s0 + $0x30] sm:$0xff]
    %v72 = vld [vmem:[%s0 + $0x38] sm:$0xff]
    %v73 = vld [vmem:[%s0 + $0x40] sm:$0xff]
    %v74 = vld [vmem:[%s0 + $0x48] sm:$0xff]
    %v75 = vld [vmem:[%s0 + $0x50] sm:$0xff]
    %v76 = vld [vmem:[%s0 + $0x58] sm:$0xff]
    %v77 = vld [vmem:[%s0 + $0x60] sm:$0xff]
    %v78 = vld [vmem:[%s0 + $0x68] sm:$0xff]
    %v79 = vld [vmem:[%s0 + $0x70] sm:$0xff]
    %v80 = vld [vmem:[%s0 + $0x78] sm:$0xff]
    %v81 = vpack.c.bf16 %v66, %v65
    %v82 = vpack.c.bf16 %v68, %v67
    %v83 = vpack.c.bf16 %v70, %v69
    %v84 = vpack.c.bf16 %v72, %v71
    %v85 = vpack.c.bf16 %v74, %v73
    %v86 = vpack.c.bf16 %v76, %v75
    %v87 = vpack.c.bf16 %v78, %v77
    %v88 = vpack.c.bf16 %v80, %v79
    %v89 = vld [vmem:[%s1] sm:$0xf]
    %v90 = vld [vmem:[%s1 + $0x4] sm:$0xf]
    %v91 = vld [vmem:[%s1 + $0x8] sm:$0xf]
    %v92 = vld [vmem:[%s1 + $0xc] sm:$0xf]
    %v93 = vlaneseq
    %v94 = vshrl.u32 %v93, 7
    %v95 = vsub.s32 0, %v94
    %v96 = vrot.slane %v64, %v95
    %v101 = vunpack.c.l.b16 %v89
    %v102 = vunpack.c.l.b16 %v90
    %v103 = vunpack.c.l.b16 %v91
    %v104 = vunpack.c.l.b16 %v92
    %v105 = vpack.c.b16 %v102, %v101
    %v106 = vpack.c.b16 %v104, %v103
    %vm109 = vcmask 261120
    %v111 = vsel %vm109, %v81, 0
    %v114 = vsel %vm109, %v82, 0
    %v117 = vsel %vm109, %v83, 0
    %v120 = vsel %vm109, %v84, 0
    %v123 = vsel %vm109, %v85, 0
    %v126 = vsel %vm109, %v86, 0
    %v129 = vsel %vm109, %v87, 0
    %v132 = vsel %vm109, %v88, 0
    %134 = vmatprep.subr.bf16.mxu0 0
    %135 = vmatpush1.bf16.msra.mxu0 %v105
    %136 = vmatprep.subr.bf16.mxu0 0
    %137 = vmatpush1.bf16.msra.mxu0 %v106
    %138 = vmatprep.subr.bf16.mxu0 0
    %139 = vmatpush1.bf16.msra.mxu0 0
    %140 = vmatprep.subr.bf16.mxu0 0
    %141 = vmatpush1.bf16.msra.mxu0 0
    %142 = vmatprep.subr.bf16.mxu0 0
    %143 = vmatpush1.bf16.msra.mxu0 0
    %144 = vmatprep.subr.bf16.mxu0 0
    %145 = vmatpush1.bf16.msra.mxu0 0
    %146 = vmatprep.subr.bf16.mxu0 0
    %147 = vmatpush1.bf16.msra.mxu0 0
    %148 = vmatprep.subr.bf16.mxu0 0
    %149 = vmatpush1.bf16.msra.mxu0 0
    %150 = vmatprep.subr.bf16.mxu0 0
    %151 = vmatpush1.bf16.msra.mxu0 0
    %152 = vmatprep.subr.bf16.mxu0 0
    %153 = vmatpush1.bf16.msra.mxu0 0
    %154 = vmatprep.subr.bf16.mxu0 0
    %155 = vmatpush1.bf16.msra.mxu0 0
    %156 = vmatprep.subr.bf16.mxu0 0
    %157 = vmatpush1.bf16.msra.mxu0 0
    %158 = vmatprep.subr.bf16.mxu0 0
    %159 = vmatpush1.bf16.msra.mxu0 0
    %160 = vmatprep.subr.bf16.mxu0 0
    %161 = vmatpush1.bf16.msra.mxu0 0
    %162 = vmatprep.subr.bf16.mxu0 0
    %163 = vmatpush1.bf16.msra.mxu0 0
    %164 = vmatprep.subr.bf16.mxu0 0
    %165 = vmatpush1.bf16.msra.mxu0 0
    %166 = vmatprep.mubr.bf16.mxu0 0
    %167 = vmatmul.mubr.bf16.gmra.mrb[0].mxu0 %v111
    %v168 = vpop.f32.mrb[0].mxu0
    %v169 = vadd.f32 %v96, %v168
    %v170 = vpop.f32.mrb[0].mxu0
    %v171 = vpop.f32.mrb[0].mxu0
    %v172 = vadd.f32 %v96, %v171
    %v173 = vpop.f32.mrb[0].mxu0
    %174 = vmatprep.mubr.bf16.mxu0 0
    %175 = vmatmul.mubr.bf16.gmra.mrb[0].mxu0 %v114
    %v176 = vpop.f32.mrb[0].mxu0
    %v177 = vadd.f32 %v96, %v176
    %v178 = vpop.f32.mrb[0].mxu0
    %v179 = vpop.f32.mrb[0].mxu0
    %v180 = vadd.f32 %v96, %v179
    %v181 = vpop.f32.mrb[0].mxu0
    %182 = vmatprep.mubr.bf16.mxu0 0
    %183 = vmatmul.mubr.bf16.gmra.mrb[0].mxu0 %v117
    %v184 = vpop.f32.mrb[0].mxu0
    %v185 = vadd.f32 %v96, %v184
    %v186 = vpop.f32.mrb[0].mxu0
    %v187 = vpop.f32.mrb[0].mxu0
    %v188 = vadd.f32 %v96, %v187
    %v189 = vpop.f32.mrb[0].mxu0
    %190 = vmatprep.mubr.bf16.mxu0 0
    %191 = vmatmul.mubr.bf16.gmra.mrb[0].mxu0 %v120
    %v192 = vpop.f32.mrb[0].mxu0
    %v193 = vadd.f32 %v96, %v192
    %v194 = vpop.f32.mrb[0].mxu0
    %v195 = vpop.f32.mrb[0].mxu0
    %v196 = vadd.f32 %v96, %v195
    %v197 = vpop.f32.mrb[0].mxu0
    %198 = vmatprep.mubr.bf16.mxu0 0
    %199 = vmatmul.mubr.bf16.gmra.mrb[0].mxu0 %v123
    %v200 = vpop.f32.mrb[0].mxu0
    %v201 = vadd.f32 %v96, %v200
    %v202 = vpop.f32.mrb[0].mxu0
    %v203 = vpop.f32.mrb[0].mxu0
    %v204 = vadd.f32 %v96, %v203
    %v205 = vpop.f32.mrb[0].mxu0
    %206 = vmatprep.mubr.bf16.mxu0 0
    %207 = vmatmul.mubr.bf16.gmra.mrb[0].mxu0 %v126
    %v208 = vpop.f32.mrb[0].mxu0
    %v209 = vadd.f32 %v96, %v208
    %v210 = vpop.f32.mrb[0].mxu0
    %v211 = vpop.f32.mrb[0].mxu0
    %v212 = vadd.f32 %v96, %v211
    %v213 = vpop.f32.mrb[0].mxu0
    %214 = vmatprep.mubr.bf16.mxu0 0
    %215 = vmatmul.mubr.bf16.gmra.mrb[0].mxu0 %v129
    %v216 = vpop.f32.mrb[0].mxu0
    %v217 = vadd.f32 %v96, %v216
    %v218 = vpop.f32.mrb[0].mxu0
    %v219 = vpop.f32.mrb[0].mxu0
    %v220 = vadd.f32 %v96, %v219
    %v221 = vpop.f32.mrb[0].mxu0
    %222 = vmatprep.mubr.bf16.mxu0 0
    %223 = vmatmul.mubr.bf16.gmra.mrb[0].mxu0 %v132
    %v224 = vpop.f32.mrb[0].mxu0
    %v225 = vadd.f32 %v96, %v224
    %v226 = vpop.f32.mrb[0].mxu0
    %v227 = vpop.f32.mrb[0].mxu0
    %v228 = vadd.f32 %v96, %v227
    %v229 = vpop.f32.mrb[0].mxu0
    %230 = vdwg.mxu0
    %vm231 = vcmp.ge.f32.partialorder %v169, 0.0
    %vm232 = vcmp.ge.f32.partialorder %v172, 0.0
    %vm233 = vcmp.ge.f32.partialorder %v177, 0.0
    %vm234 = vcmp.ge.f32.partialorder %v180, 0.0
    %vm235 = vcmp.ge.f32.partialorder %v185, 0.0
    %vm236 = vcmp.ge.f32.partialorder %v188, 0.0
    %vm237 = vcmp.ge.f32.partialorder %v193, 0.0
    %vm238 = vcmp.ge.f32.partialorder %v196, 0.0
    %vm239 = vcmp.ge.f32.partialorder %v201, 0.0
    %vm240 = vcmp.ge.f32.partialorder %v204, 0.0
    %vm241 = vcmp.ge.f32.partialorder %v209, 0.0
    %vm242 = vcmp.ge.f32.partialorder %v212, 0.0
    %vm243 = vcmp.ge.f32.partialorder %v217, 0.0
    %vm244 = vcmp.ge.f32.partialorder %v220, 0.0
    %vm245 = vcmp.ge.f32.partialorder %v225, 0.0
    %vm246 = vcmp.ge.f32.partialorder %v228, 0.0
    %v247 = vmul.f32 %v169, 0.01
    %v248 = vmul.f32 %v172, 0.01
    %v249 = vmul.f32 %v177, 0.01
    %v250 = vmul.f32 %v180, 0.01
    %v251 = vmul.f32 %v185, 0.01
    %v252 = vmul.f32 %v188, 0.01
    %v253 = vmul.f32 %v193, 0.01
    %v254 = vmul.f32 %v196, 0.01
    %v255 = vmul.f32 %v201, 0.01
    %v256 = vmul.f32 %v204, 0.01
    %v257 = vmul.f32 %v209, 0.01
    %v258 = vmul.f32 %v212, 0.01
    %v259 = vmul.f32 %v217, 0.01
    %v260 = vmul.f32 %v220, 0.01
    %v261 = vmul.f32 %v225, 0.01
    %v262 = vmul.f32 %v228, 0.01
    %v263 = vsel %vm231, %v169, %v247
    %v264 = vsel %vm232, %v172, %v248
    %v265 = vsel %vm233, %v177, %v249
    %v266 = vsel %vm234, %v180, %v250
    %v267 = vsel %vm235, %v185, %v251
    %v268 = vsel %vm236, %v188, %v252
    %v269 = vsel %vm237, %v193, %v253
    %v270 = vsel %vm238, %v196, %v254
    %v271 = vsel %vm239, %v201, %v255
    %v272 = vsel %vm240, %v204, %v256
    %v273 = vsel %vm241, %v209, %v257
    %v274 = vsel %vm242, %v212, %v258
    %v275 = vsel %vm243, %v217, %v259
    %v276 = vsel %vm244, %v220, %v260
    %v277 = vsel %vm245, %v225, %v261
    %v278 = vsel %vm246, %v228, %v262
    %v279 = vpack.c.bf16 %v264, %v263
    %v280 = vpack.c.bf16 %v266, %v265
    %v281 = vpack.c.bf16 %v268, %v267
    %v282 = vpack.c.bf16 %v270, %v269
    %v283 = vpack.c.bf16 %v272, %v271
    %v284 = vpack.c.bf16 %v274, %v273
    %v285 = vpack.c.bf16 %v276, %v275
    %v286 = vpack.c.bf16 %v278, %v277
    %v287 = vld [vmem:[%s2] sm:$0xf]
    %v288 = vld [vmem:[%s2 + $0x4] sm:$0xf]
    %v289 = vld [vmem:[%s2 + $0x8] sm:$0xf]
    %v290 = vld [vmem:[%s2 + $0xc] sm:$0xf]
    %v291 = vld [vmem:[%s2 + $0x10] sm:$0xf]
    %v292 = vld [vmem:[%s2 + $0x14] sm:$0xf]
    %v293 = vld [vmem:[%s2 + $0x18] sm:$0xf]
    %v294 = vld [vmem:[%s2 + $0x1c] sm:$0xf]
    %v295 = vld [vmem:[%s2 + $0x20] sm:$0xf]
    %v296 = vld [vmem:[%s2 + $0x24] sm:$0xf]
    %v297 = vld [vmem:[%s2 + $0x28] sm:$0xf]
    %v298 = vld [vmem:[%s2 + $0x2c] sm:$0xf]
    %v299 = vld [vmem:[%s2 + $0x30] sm:$0xf]
    %v300 = vld [vmem:[%s2 + $0x34] sm:$0xf]
    %v301 = vld [vmem:[%s2 + $0x38] sm:$0xf]
    %v302 = vld [vmem:[%s2 + $0x3c] sm:$0xf]
    %v303 = vlaneseq
    %v304 = vshrl.u32 %v303, 7
    %v305 = vsub.s32 1, %v304
    %v306 = vrot.slane %v64, %v305
    %v323 = vunpack.c.l.b16 %v287
    %v324 = vunpack.c.l.b16 %v288
    %v325 = vunpack.c.l.b16 %v289
    %v326 = vunpack.c.l.b16 %v290
    %v327 = vunpack.c.l.b16 %v291
    %v328 = vunpack.c.l.b16 %v292
    %v329 = vunpack.c.l.b16 %v293
    %v330 = vunpack.c.l.b16 %v294
    %v331 = vunpack.c.l.b16 %v295
    %v332 = vunpack.c.l.b16 %v296
    %v333 = vunpack.c.l.b16 %v297
    %v334 = vunpack.c.l.b16 %v298
    %v335 = vunpack.c.l.b16 %v299
    %v336 = vunpack.c.l.b16 %v300
    %v337 = vunpack.c.l.b16 %v301
    %v338 = vunpack.c.l.b16 %v302
    %v339 = vpack.c.b16 %v324, %v323
    %v340 = vpack.c.b16 %v326, %v325
    %v341 = vpack.c.b16 %v328, %v327
    %v342 = vpack.c.b16 %v330, %v329
    %v343 = vpack.c.b16 %v332, %v331
    %v344 = vpack.c.b16 %v334, %v333
    %v345 = vpack.c.b16 %v336, %v335
    %v346 = vpack.c.b16 %v338, %v337
    %355 = vmatprep.subr.bf16.mxu0 0
    %356 = vmatpush1.bf16.msra.mxu0 %v339
    %357 = vmatprep.subr.bf16.mxu0 0
    %358 = vmatpush1.bf16.msra.mxu0 %v340
    %359 = vmatprep.subr.bf16.mxu0 0
    %360 = vmatpush1.bf16.msra.mxu0 %v341
    %361 = vmatprep.subr.bf16.mxu0 0
    %362 = vmatpush1.bf16.msra.mxu0 %v342
    %363 = vmatprep.subr.bf16.mxu0 0
    %364 = vmatpush1.bf16.msra.mxu0 %v343
    %365 = vmatprep.subr.bf16.mxu0 0
    %366 = vmatpush1.bf16.msra.mxu0 %v344
    %367 = vmatprep.subr.bf16.mxu0 0
    %368 = vmatpush1.bf16.msra.mxu0 %v345
    %369 = vmatprep.subr.bf16.mxu0 0
    %370 = vmatpush1.bf16.msra.mxu0 %v346
    %371 = vmatprep.subr.bf16.mxu0 0
    %372 = vmatpush1.bf16.msra.mxu0 0
    %373 = vmatprep.subr.bf16.mxu0 0
    %374 = vmatpush1.bf16.msra.mxu0 0
    %375 = vmatprep.subr.bf16.mxu0 0
    %376 = vmatpush1.bf16.msra.mxu0 0
    %377 = vmatprep.subr.bf16.mxu0 0
    %378 = vmatpush1.bf16.msra.mxu0 0
    %379 = vmatprep.subr.bf16.mxu0 0
    %380 = vmatpush1.bf16.msra.mxu0 0
    %381 = vmatprep.subr.bf16.mxu0 0
    %382 = vmatpush1.bf16.msra.mxu0 0
    %383 = vmatprep.subr.bf16.mxu0 0
    %384 = vmatpush1.bf16.msra.mxu0 0
    %385 = vmatprep.subr.bf16.mxu0 0
    %386 = vmatpush1.bf16.msra.mxu0 0
    %387 = vmatprep.mubr.bf16.mxu0 0
    %388 = vmatmul.mubr.bf16.gmra.mrb[0].mxu0 %v279
    %v389 = vpop.f32.mrb[0].mxu0
    %v390 = vadd.f32 %v306, %v389
    %v391 = vpop.f32.mrb[0].mxu0
    %v392 = vpop.f32.mrb[0].mxu0
    %v393 = vadd.f32 %v306, %v392
    %v394 = vpop.f32.mrb[0].mxu0
    %395 = vmatprep.mubr.bf16.mxu0 0
    %396 = vmatmul.mubr.bf16.gmra.mrb[0].mxu0 %v280
    %v397 = vpop.f32.mrb[0].mxu0
    %v398 = vadd.f32 %v306, %v397
    %v399 = vpop.f32.mrb[0].mxu0
    %v400 = vpop.f32.mrb[0].mxu0
    %v401 = vadd.f32 %v306, %v400
    %v402 = vpop.f32.mrb[0].mxu0
    %403 = vmatprep.mubr.bf16.mxu0 0
    %404 = vmatmul.mubr.bf16.gmra.mrb[0].mxu0 %v281
    %v405 = vpop.f32.mrb[0].mxu0
    %v406 = vadd.f32 %v306, %v405
    %v407 = vpop.f32.mrb[0].mxu0
    %v408 = vpop.f32.mrb[0].mxu0
    %v409 = vadd.f32 %v306, %v408
    %v410 = vpop.f32.mrb[0].mxu0
    %411 = vmatprep.mubr.bf16.mxu0 0
    %412 = vmatmul.mubr.bf16.gmra.mrb[0].mxu0 %v282
    %v413 = vpop.f32.mrb[0].mxu0
    %v414 = vadd.f32 %v306, %v413
    %v415 = vpop.f32.mrb[0].mxu0
    %v416 = vpop.f32.mrb[0].mxu0
    %v417 = vadd.f32 %v306, %v416
    %v418 = vpop.f32.mrb[0].mxu0
    %419 = vmatprep.mubr.bf16.mxu0 0
    %420 = vmatmul.mubr.bf16.gmra.mrb[0].mxu0 %v283
    %v421 = vpop.f32.mrb[0].mxu0
    %v422 = vadd.f32 %v306, %v421
    %v423 = vpop.f32.mrb[0].mxu0
    %v424 = vpop.f32.mrb[0].mxu0
    %v425 = vadd.f32 %v306, %v424
    %v426 = vpop.f32.mrb[0].mxu0
    %427 = vmatprep.mubr.bf16.mxu0 0
    %428 = vmatmul.mubr.bf16.gmra.mrb[0].mxu0 %v284
    %v429 = vpop.f32.mrb[0].mxu0
    %v430 = vadd.f32 %v306, %v429
    %v431 = vpop.f32.mrb[0].mxu0
    %v432 = vpop.f32.mrb[0].mxu0
    %v433 = vadd.f32 %v306, %v432
    %v434 = vpop.f32.mrb[0].mxu0
    %435 = vmatprep.mubr.bf16.mxu0 0
    %436 = vmatmul.mubr.bf16.gmra.mrb[0].mxu0 %v285
    %v437 = vpop.f32.mrb[0].mxu0
    %v438 = vadd.f32 %v306, %v437
    %v439 = vpop.f32.mrb[0].mxu0
    %v440 = vpop.f32.mrb[0].mxu0
    %v441 = vadd.f32 %v306, %v440
    %v442 = vpop.f32.mrb[0].mxu0
    %443 = vmatprep.mubr.bf16.mxu0 0
    %444 = vmatmul.mubr.bf16.gmra.mrb[0].mxu0 %v286
    %v445 = vpop.f32.mrb[0].mxu0
    %v446 = vadd.f32 %v306, %v445
    %v447 = vpop.f32.mrb[0].mxu0
    %v448 = vpop.f32.mrb[0].mxu0
    %v449 = vadd.f32 %v306, %v448
    %v450 = vpop.f32.mrb[0].mxu0
    %451 = vdwg.mxu0
    %vm452 = vcmp.ge.f32.partialorder %v390, 0.0
    %vm453 = vcmp.ge.f32.partialorder %v393, 0.0
    %vm454 = vcmp.ge.f32.partialorder %v398, 0.0
    %vm455 = vcmp.ge.f32.partialorder %v401, 0.0
    %vm456 = vcmp.ge.f32.partialorder %v406, 0.0
    %vm457 = vcmp.ge.f32.partialorder %v409, 0.0
    %vm458 = vcmp.ge.f32.partialorder %v414, 0.0
    %vm459 = vcmp.ge.f32.partialorder %v417, 0.0
    %vm460 = vcmp.ge.f32.partialorder %v422, 0.0
    %vm461 = vcmp.ge.f32.partialorder %v425, 0.0
    %vm462 = vcmp.ge.f32.partialorder %v430, 0.0
    %vm463 = vcmp.ge.f32.partialorder %v433, 0.0
    %vm464 = vcmp.ge.f32.partialorder %v438, 0.0
    %vm465 = vcmp.ge.f32.partialorder %v441, 0.0
    %vm466 = vcmp.ge.f32.partialorder %v446, 0.0
    %vm467 = vcmp.ge.f32.partialorder %v449, 0.0
    %v468 = vmul.f32 %v390, 0.01
    %v469 = vmul.f32 %v393, 0.01
    %v470 = vmul.f32 %v398, 0.01
    %v471 = vmul.f32 %v401, 0.01
    %v472 = vmul.f32 %v406, 0.01
    %v473 = vmul.f32 %v409, 0.01
    %v474 = vmul.f32 %v414, 0.01
    %v475 = vmul.f32 %v417, 0.01
    %v476 = vmul.f32 %v422, 0.01
    %v477 = vmul.f32 %v425, 0.01
    %v478 = vmul.f32 %v430, 0.01
    %v479 = vmul.f32 %v433, 0.01
    %v480 = vmul.f32 %v438, 0.01
    %v481 = vmul.f32 %v441, 0.01
    %v482 = vmul.f32 %v446, 0.01
    %v483 = vmul.f32 %v449, 0.01
    %v484 = vsel %vm452, %v390, %v468
    %v485 = vsel %vm453, %v393, %v469
    %v486 = vsel %vm454, %v398, %v470
    %v487 = vsel %vm455, %v401, %v471
    %v488 = vsel %vm456, %v406, %v472
    %v489 = vsel %vm457, %v409, %v473
    %v490 = vsel %vm458, %v414, %v474
    %v491 = vsel %vm459, %v417, %v475
    %v492 = vsel %vm460, %v422, %v476
    %v493 = vsel %vm461, %v425, %v477
    %v494 = vsel %vm462, %v430, %v478
    %v495 = vsel %vm463, %v433, %v479
    %v496 = vsel %vm464, %v438, %v480
    %v497 = vsel %vm465, %v441, %v481
    %v498 = vsel %vm466, %v446, %v482
    %v499 = vsel %vm467, %v449, %v483
    %v500 = vpack.c.bf16 %v485, %v484
    %v501 = vpack.c.bf16 %v487, %v486
    %v502 = vpack.c.bf16 %v489, %v488
    %v503 = vpack.c.bf16 %v491, %v490
    %v504 = vpack.c.bf16 %v493, %v492
    %v505 = vpack.c.bf16 %v495, %v494
    %v506 = vpack.c.bf16 %v497, %v496
    %v507 = vpack.c.bf16 %v499, %v498
    %s508 = scalar_lea.vmem %s2, 64
    %v509 = vld [vmem:[%s508] sm:$0xf]
    %v510 = vld [vmem:[%s508 + $0x4] sm:$0xf]
    %v511 = vld [vmem:[%s508 + $0x8] sm:$0xf]
    %v512 = vld [vmem:[%s508 + $0xc] sm:$0xf]
    %v513 = vld [vmem:[%s508 + $0x10] sm:$0xf]
    %v514 = vld [vmem:[%s508 + $0x14] sm:$0xf]
    %v515 = vld [vmem:[%s508 + $0x18] sm:$0xf]
    %v516 = vld [vmem:[%s508 + $0x1c] sm:$0xf]
    %v517 = vld [vmem:[%s508 + $0x20] sm:$0xf]
    %v518 = vld [vmem:[%s508 + $0x24] sm:$0xf]
    %v519 = vld [vmem:[%s508 + $0x28] sm:$0xf]
    %v520 = vld [vmem:[%s508 + $0x2c] sm:$0xf]
    %v521 = vld [vmem:[%s508 + $0x30] sm:$0xf]
    %v522 = vld [vmem:[%s508 + $0x34] sm:$0xf]
    %v523 = vld [vmem:[%s508 + $0x38] sm:$0xf]
    %v524 = vld [vmem:[%s508 + $0x3c] sm:$0xf]
    %v525 = vlaneseq
    %v526 = vshrl.u32 %v525, 7
    %v527 = vsub.s32 2, %v526
    %v528 = vrot.slane %v64, %v527
    %v545 = vunpack.c.l.b16 %v509
    %v546 = vunpack.c.l.b16 %v510
    %v547 = vunpack.c.l.b16 %v511
    %v548 = vunpack.c.l.b16 %v512
    %v549 = vunpack.c.l.b16 %v513
    %v550 = vunpack.c.l.b16 %v514
    %v551 = vunpack.c.l.b16 %v515
    %v552 = vunpack.c.l.b16 %v516
    %v553 = vunpack.c.l.b16 %v517
    %v554 = vunpack.c.l.b16 %v518
    %v555 = vunpack.c.l.b16 %v519
    %v556 = vunpack.c.l.b16 %v520
    %v557 = vunpack.c.l.b16 %v521
    %v558 = vunpack.c.l.b16 %v522
    %v559 = vunpack.c.l.b16 %v523
    %v560 = vunpack.c.l.b16 %v524
    %v561 = vpack.c.b16 %v546, %v545
    %v562 = vpack.c.b16 %v548, %v547
    %v563 = vpack.c.b16 %v550, %v549
    %v564 = vpack.c.b16 %v552, %v551
    %v565 = vpack.c.b16 %v554, %v553
    %v566 = vpack.c.b16 %v556, %v555
    %v567 = vpack.c.b16 %v558, %v557
    %v568 = vpack.c.b16 %v560, %v559
    %577 = vmatprep.subr.bf16.mxu0 0
    %578 = vmatpush1.bf16.msra.mxu0 %v561
    %579 = vmatprep.subr.bf16.mxu0 0
    %580 = vmatpush1.bf16.msra.mxu0 %v562
    %581 = vmatprep.subr.bf16.mxu0 0
    %582 = vmatpush1.bf16.msra.mxu0 %v563
    %583 = vmatprep.subr.bf16.mxu0 0
    %584 = vmatpush1.bf16.msra.mxu0 %v564
    %585 = vmatprep.subr.bf16.mxu0 0
    %586 = vmatpush1.bf16.msra.mxu0 %v565
    %587 = vmatprep.subr.bf16.mxu0 0
    %588 = vmatpush1.bf16.msra.mxu0 %v566
    %589 = vmatprep.subr.bf16.mxu0 0
    %590 = vmatpush1.bf16.msra.mxu0 %v567
    %591 = vmatprep.subr.bf16.mxu0 0
    %592 = vmatpush1.bf16.msra.mxu0 %v568
    %593 = vmatprep.subr.bf16.mxu0 0
    %594 = vmatpush1.bf16.msra.mxu0 0
    %595 = vmatprep.subr.bf16.mxu0 0
    %596 = vmatpush1.bf16.msra.mxu0 0
    %597 = vmatprep.subr.bf16.mxu0 0
    %598 = vmatpush1.bf16.msra.mxu0 0
    %599 = vmatprep.subr.bf16.mxu0 0
    %600 = vmatpush1.bf16.msra.mxu0 0
    %601 = vmatprep.subr.bf16.mxu0 0
    %602 = vmatpush1.bf16.msra.mxu0 0
    %603 = vmatprep.subr.bf16.mxu0 0
    %604 = vmatpush1.bf16.msra.mxu0 0
    %605 = vmatprep.subr.bf16.mxu0 0
    %606 = vmatpush1.bf16.msra.mxu0 0
    %607 = vmatprep.subr.bf16.mxu0 0
    %608 = vmatpush1.bf16.msra.mxu0 0
    %609 = vmatprep.mubr.bf16.mxu0 0
    %610 = vmatmul.mubr.bf16.gmra.mrb[0].mxu0 %v500
    %v611 = vpop.f32.mrb[0].mxu0
    %v612 = vadd.f32 %v528, %v611
    %v613 = vpop.f32.mrb[0].mxu0
    %v614 = vpop.f32.mrb[0].mxu0
    %v615 = vadd.f32 %v528, %v614
    %v616 = vpop.f32.mrb[0].mxu0
    %617 = vmatprep.mubr.bf16.mxu0 0
    %618 = vmatmul.mubr.bf16.gmra.mrb[0].mxu0 %v501
    %v619 = vpop.f32.mrb[0].mxu0
    %v620 = vadd.f32 %v528, %v619
    %v621 = vpop.f32.mrb[0].mxu0
    %v622 = vpop.f32.mrb[0].mxu0
    %v623 = vadd.f32 %v528, %v622
    %v624 = vpop.f32.mrb[0].mxu0
    %625 = vmatprep.mubr.bf16.mxu0 0
    %626 = vmatmul.mubr.bf16.gmra.mrb[0].mxu0 %v502
    %v627 = vpop.f32.mrb[0].mxu0
    %v628 = vadd.f32 %v528, %v627
    %v629 = vpop.f32.mrb[0].mxu0
    %v630 = vpop.f32.mrb[0].mxu0
    %v631 = vadd.f32 %v528, %v630
    %v632 = vpop.f32.mrb[0].mxu0
    %633 = vmatprep.mubr.bf16.mxu0 0
    %634 = vmatmul.mubr.bf16.gmra.mrb[0].mxu0 %v503
    %v635 = vpop.f32.mrb[0].mxu0
    %v636 = vadd.f32 %v528, %v635
    %v637 = vpop.f32.mrb[0].mxu0
    %v638 = vpop.f32.mrb[0].mxu0
    %v639 = vadd.f32 %v528, %v638
    %v640 = vpop.f32.mrb[0].mxu0
    %641 = vmatprep.mubr.bf16.mxu0 0
    %642 = vmatmul.mubr.bf16.gmra.mrb[0].mxu0 %v504
    %v643 = vpop.f32.mrb[0].mxu0
    %v644 = vadd.f32 %v528, %v643
    %v645 = vpop.f32.mrb[0].mxu0
    %v646 = vpop.f32.mrb[0].mxu0
    %v647 = vadd.f32 %v528, %v646
    %v648 = vpop.f32.mrb[0].mxu0
    %649 = vmatprep.mubr.bf16.mxu0 0
    %650 = vmatmul.mubr.bf16.gmra.mrb[0].mxu0 %v505
    %v651 = vpop.f32.mrb[0].mxu0
    %v652 = vadd.f32 %v528, %v651
    %v653 = vpop.f32.mrb[0].mxu0
    %v654 = vpop.f32.mrb[0].mxu0
    %v655 = vadd.f32 %v528, %v654
    %v656 = vpop.f32.mrb[0].mxu0
    %657 = vmatprep.mubr.bf16.mxu0 0
    %658 = vmatmul.mubr.bf16.gmra.mrb[0].mxu0 %v506
    %v659 = vpop.f32.mrb[0].mxu0
    %v660 = vadd.f32 %v528, %v659
    %v661 = vpop.f32.mrb[0].mxu0
    %v662 = vpop.f32.mrb[0].mxu0
    %v663 = vadd.f32 %v528, %v662
    %v664 = vpop.f32.mrb[0].mxu0
    %665 = vmatprep.mubr.bf16.mxu0 0
    %666 = vmatmul.mubr.bf16.gmra.mrb[0].mxu0 %v507
    %v667 = vpop.f32.mrb[0].mxu0
    %v668 = vadd.f32 %v528, %v667
    %v669 = vpop.f32.mrb[0].mxu0
    %v670 = vpop.f32.mrb[0].mxu0
    %v671 = vadd.f32 %v528, %v670
    %v672 = vpop.f32.mrb[0].mxu0
    %673 = vdwg.mxu0
    %vm674 = vcmp.ge.f32.partialorder %v612, 0.0
    %vm675 = vcmp.ge.f32.partialorder %v615, 0.0
    %vm676 = vcmp.ge.f32.partialorder %v620, 0.0
    %vm677 = vcmp.ge.f32.partialorder %v623, 0.0
    %vm678 = vcmp.ge.f32.partialorder %v628, 0.0
    %vm679 = vcmp.ge.f32.partialorder %v631, 0.0
    %vm680 = vcmp.ge.f32.partialorder %v636, 0.0
    %vm681 = vcmp.ge.f32.partialorder %v639, 0.0
    %vm682 = vcmp.ge.f32.partialorder %v644, 0.0
    %vm683 = vcmp.ge.f32.partialorder %v647, 0.0
    %vm684 = vcmp.ge.f32.partialorder %v652, 0.0
    %vm685 = vcmp.ge.f32.partialorder %v655, 0.0
    %vm686 = vcmp.ge.f32.partialorder %v660, 0.0
    %vm687 = vcmp.ge.f32.partialorder %v663, 0.0
    %vm688 = vcmp.ge.f32.partialorder %v668, 0.0
    %vm689 = vcmp.ge.f32.partialorder %v671, 0.0
    %v690 = vmul.f32 %v612, 0.01
    %v691 = vmul.f32 %v615, 0.01
    %v692 = vmul.f32 %v620, 0.01
    %v693 = vmul.f32 %v623, 0.01
    %v694 = vmul.f32 %v628, 0.01
    %v695 = vmul.f32 %v631, 0.01
    %v696 = vmul.f32 %v636, 0.01
    %v697 = vmul.f32 %v639, 0.01
    %v698 = vmul.f32 %v644, 0.01
    %v699 = vmul.f32 %v647, 0.01
    %v700 = vmul.f32 %v652, 0.01
    %v701 = vmul.f32 %v655, 0.01
    %v702 = vmul.f32 %v660, 0.01
    %v703 = vmul.f32 %v663, 0.01
    %v704 = vmul.f32 %v668, 0.01
    %v705 = vmul.f32 %v671, 0.01
    %v706 = vsel %vm674, %v612, %v690
    %v707 = vsel %vm675, %v615, %v691
    %v708 = vsel %vm676, %v620, %v692
    %v709 = vsel %vm677, %v623, %v693
    %v710 = vsel %vm678, %v628, %v694
    %v711 = vsel %vm679, %v631, %v695
    %v712 = vsel %vm680, %v636, %v696
    %v713 = vsel %vm681, %v639, %v697
    %v714 = vsel %vm682, %v644, %v698
    %v715 = vsel %vm683, %v647, %v699
    %v716 = vsel %vm684, %v652, %v700
    %v717 = vsel %vm685, %v655, %v701
    %v718 = vsel %vm686, %v660, %v702
    %v719 = vsel %vm687, %v663, %v703
    %v720 = vsel %vm688, %v668, %v704
    %v721 = vsel %vm689, %v671, %v705
    %v722 = vpack.c.bf16 %v707, %v706
    %v723 = vpack.c.bf16 %v709, %v708
    %v724 = vpack.c.bf16 %v711, %v710
    %v725 = vpack.c.bf16 %v713, %v712
    %v726 = vpack.c.bf16 %v715, %v714
    %v727 = vpack.c.bf16 %v717, %v716
    %v728 = vpack.c.bf16 %v719, %v718
    %v729 = vpack.c.bf16 %v721, %v720
    %s730 = scalar_lea.vmem %s2, 128
    %v731 = vld [vmem:[%s730] sm:$0xf]
    %v732 = vld [vmem:[%s730 + $0x4] sm:$0xf]
    %v733 = vld [vmem:[%s730 + $0x8] sm:$0xf]
    %v734 = vld [vmem:[%s730 + $0xc] sm:$0xf]
    %v735 = vld [vmem:[%s730 + $0x10] sm:$0xf]
    %v736 = vld [vmem:[%s730 + $0x14] sm:$0xf]
    %v737 = vld [vmem:[%s730 + $0x18] sm:$0xf]
    %v738 = vld [vmem:[%s730 + $0x1c] sm:$0xf]
    %v739 = vld [vmem:[%s730 + $0x20] sm:$0xf]
    %v740 = vld [vmem:[%s730 + $0x24] sm:$0xf]
    %v741 = vld [vmem:[%s730 + $0x28] sm:$0xf]
    %v742 = vld [vmem:[%s730 + $0x2c] sm:$0xf]
    %v743 = vld [vmem:[%s730 + $0x30] sm:$0xf]
    %v744 = vld [vmem:[%s730 + $0x34] sm:$0xf]
    %v745 = vld [vmem:[%s730 + $0x38] sm:$0xf]
    %v746 = vld [vmem:[%s730 + $0x3c] sm:$0xf]
    %v747 = vlaneseq
    %v748 = vshrl.u32 %v747, 7
    %v749 = vsub.s32 3, %v748
    %v750 = vrot.slane %v64, %v749
    %v767 = vunpack.c.l.b16 %v731
    %v768 = vunpack.c.l.b16 %v732
    %v769 = vunpack.c.l.b16 %v733
    %v770 = vunpack.c.l.b16 %v734
    %v771 = vunpack.c.l.b16 %v735
    %v772 = vunpack.c.l.b16 %v736
    %v773 = vunpack.c.l.b16 %v737
    %v774 = vunpack.c.l.b16 %v738
    %v775 = vunpack.c.l.b16 %v739
    %v776 = vunpack.c.l.b16 %v740
    %v777 = vunpack.c.l.b16 %v741
    %v778 = vunpack.c.l.b16 %v742
    %v779 = vunpack.c.l.b16 %v743
    %v780 = vunpack.c.l.b16 %v744
    %v781 = vunpack.c.l.b16 %v745
    %v782 = vunpack.c.l.b16 %v746
    %v783 = vpack.c.b16 %v768, %v767
    %v784 = vpack.c.b16 %v770, %v769
    %v785 = vpack.c.b16 %v772, %v771
    %v786 = vpack.c.b16 %v774, %v773
    %v787 = vpack.c.b16 %v776, %v775
    %v788 = vpack.c.b16 %v778, %v777
    %v789 = vpack.c.b16 %v780, %v779
    %v790 = vpack.c.b16 %v782, %v781
    %799 = vmatprep.subr.bf16.mxu0 0
    %800 = vmatpush1.bf16.msra.mxu0 %v783
    %801 = vmatprep.subr.bf16.mxu0 0
    %802 = vmatpush1.bf16.msra.mxu0 %v784
    %803 = vmatprep.subr.bf16.mxu0 0
    %804 = vmatpush1.bf16.msra.mxu0 %v785
    %805 = vmatprep.subr.bf16.mxu0 0
    %806 = vmatpush1.bf16.msra.mxu0 %v786
    %807 = vmatprep.subr.bf16.mxu0 0
    %808 = vmatpush1.bf16.msra.mxu0 %v787
    %809 = vmatprep.subr.bf16.mxu0 0
    %810 = vmatpush1.bf16.msra.mxu0 %v788
    %811 = vmatprep.subr.bf16.mxu0 0
    %812 = vmatpush1.bf16.msra.mxu0 %v789
    %813 = vmatprep.subr.bf16.mxu0 0
    %814 = vmatpush1.bf16.msra.mxu0 %v790
    %815 = vmatprep.subr.bf16.mxu0 0
    %816 = vmatpush1.bf16.msra.mxu0 0
    %817 = vmatprep.subr.bf16.mxu0 0
    %818 = vmatpush1.bf16.msra.mxu0 0
    %819 = vmatprep.subr.bf16.mxu0 0
    %820 = vmatpush1.bf16.msra.mxu0 0
    %821 = vmatprep.subr.bf16.mxu0 0
    %822 = vmatpush1.bf16.msra.mxu0 0
    %823 = vmatprep.subr.bf16.mxu0 0
    %824 = vmatpush1.bf16.msra.mxu0 0
    %825 = vmatprep.subr.bf16.mxu0 0
    %826 = vmatpush1.bf16.msra.mxu0 0
    %827 = vmatprep.subr.bf16.mxu0 0
    %828 = vmatpush1.bf16.msra.mxu0 0
    %829 = vmatprep.subr.bf16.mxu0 0
    %830 = vmatpush1.bf16.msra.mxu0 0
    %831 = vmatprep.mubr.bf16.mxu0 0
    %832 = vmatmul.mubr.bf16.gmra.mrb[0].mxu0 %v722
    %v833 = vpop.f32.mrb[0].mxu0
    %v834 = vadd.f32 %v750, %v833
    %v835 = vpop.f32.mrb[0].mxu0
    %v836 = vpop.f32.mrb[0].mxu0
    %v837 = vadd.f32 %v750, %v836
    %v838 = vpop.f32.mrb[0].mxu0
    %839 = vmatprep.mubr.bf16.mxu0 0
    %840 = vmatmul.mubr.bf16.gmra.mrb[0].mxu0 %v723
    %v841 = vpop.f32.mrb[0].mxu0
    %v842 = vadd.f32 %v750, %v841
    %v843 = vpop.f32.mrb[0].mxu0
    %v844 = vpop.f32.mrb[0].mxu0
    %v845 = vadd.f32 %v750, %v844
    %v846 = vpop.f32.mrb[0].mxu0
    %847 = vmatprep.mubr.bf16.mxu0 0
    %848 = vmatmul.mubr.bf16.gmra.mrb[0].mxu0 %v724
    %v849 = vpop.f32.mrb[0].mxu0
    %v850 = vadd.f32 %v750, %v849
    %v851 = vpop.f32.mrb[0].mxu0
    %v852 = vpop.f32.mrb[0].mxu0
    %v853 = vadd.f32 %v750, %v852
    %v854 = vpop.f32.mrb[0].mxu0
    %855 = vmatprep.mubr.bf16.mxu0 0
    %856 = vmatmul.mubr.bf16.gmra.mrb[0].mxu0 %v725
    %v857 = vpop.f32.mrb[0].mxu0
    %v858 = vadd.f32 %v750, %v857
    %v859 = vpop.f32.mrb[0].mxu0
    %v860 = vpop.f32.mrb[0].mxu0
    %v861 = vadd.f32 %v750, %v860
    %v862 = vpop.f32.mrb[0].mxu0
    %863 = vmatprep.mubr.bf16.mxu0 0
    %864 = vmatmul.mubr.bf16.gmra.mrb[0].mxu0 %v726
    %v865 = vpop.f32.mrb[0].mxu0
    %v866 = vadd.f32 %v750, %v865
    %v867 = vpop.f32.mrb[0].mxu0
    %v868 = vpop.f32.mrb[0].mxu0
    %v869 = vadd.f32 %v750, %v868
    %v870 = vpop.f32.mrb[0].mxu0
    %871 = vmatprep.mubr.bf16.mxu0 0
    %872 = vmatmul.mubr.bf16.gmra.mrb[0].mxu0 %v727
    %v873 = vpop.f32.mrb[0].mxu0
    %v874 = vadd.f32 %v750, %v873
    %v875 = vpop.f32.mrb[0].mxu0
    %v876 = vpop.f32.mrb[0].mxu0
    %v877 = vadd.f32 %v750, %v876
    %v878 = vpop.f32.mrb[0].mxu0
    %879 = vmatprep.mubr.bf16.mxu0 0
    %880 = vmatmul.mubr.bf16.gmra.mrb[0].mxu0 %v728
    %v881 = vpop.f32.mrb[0].mxu0
    %v882 = vadd.f32 %v750, %v881
    %v883 = vpop.f32.mrb[0].mxu0
    %v884 = vpop.f32.mrb[0].mxu0
    %v885 = vadd.f32 %v750, %v884
    %v886 = vpop.f32.mrb[0].mxu0
    %887 = vmatprep.mubr.bf16.mxu0 0
    %888 = vmatmul.mubr.bf16.gmra.mrb[0].mxu0 %v729
    %v889 = vpop.f32.mrb[0].mxu0
    %v890 = vadd.f32 %v750, %v889
    %v891 = vpop.f32.mrb[0].mxu0
    %v892 = vpop.f32.mrb[0].mxu0
    %v893 = vadd.f32 %v750, %v892
    %v894 = vpop.f32.mrb[0].mxu0
    %895 = vdwg.mxu0
    %vm896 = vcmp.ge.f32.partialorder %v834, 0.0
    %vm897 = vcmp.ge.f32.partialorder %v837, 0.0
    %vm898 = vcmp.ge.f32.partialorder %v842, 0.0
    %vm899 = vcmp.ge.f32.partialorder %v845, 0.0
    %vm900 = vcmp.ge.f32.partialorder %v850, 0.0
    %vm901 = vcmp.ge.f32.partialorder %v853, 0.0
    %vm902 = vcmp.ge.f32.partialorder %v858, 0.0
    %vm903 = vcmp.ge.f32.partialorder %v861, 0.0
    %vm904 = vcmp.ge.f32.partialorder %v866, 0.0
    %vm905 = vcmp.ge.f32.partialorder %v869, 0.0
    %vm906 = vcmp.ge.f32.partialorder %v874, 0.0
    %vm907 = vcmp.ge.f32.partialorder %v877, 0.0
    %vm908 = vcmp.ge.f32.partialorder %v882, 0.0
    %vm909 = vcmp.ge.f32.partialorder %v885, 0.0
    %vm910 = vcmp.ge.f32.partialorder %v890, 0.0
    %vm911 = vcmp.ge.f32.partialorder %v893, 0.0
    %v912 = vmul.f32 %v834, 0.01
    %v913 = vmul.f32 %v837, 0.01
    %v914 = vmul.f32 %v842, 0.01
    %v915 = vmul.f32 %v845, 0.01
    %v916 = vmul.f32 %v850, 0.01
    %v917 = vmul.f32 %v853, 0.01
    %v918 = vmul.f32 %v858, 0.01
    %v919 = vmul.f32 %v861, 0.01
    %v920 = vmul.f32 %v866, 0.01
    %v921 = vmul.f32 %v869, 0.01
    %v922 = vmul.f32 %v874, 0.01
    %v923 = vmul.f32 %v877, 0.01
    %v924 = vmul.f32 %v882, 0.01
    %v925 = vmul.f32 %v885, 0.01
    %v926 = vmul.f32 %v890, 0.01
    %v927 = vmul.f32 %v893, 0.01
    %v928 = vsel %vm896, %v834, %v912
    %v929 = vsel %vm897, %v837, %v913
    %v930 = vsel %vm898, %v842, %v914
    %v931 = vsel %vm899, %v845, %v915
    %v932 = vsel %vm900, %v850, %v916
    %v933 = vsel %vm901, %v853, %v917
    %v934 = vsel %vm902, %v858, %v918
    %v935 = vsel %vm903, %v861, %v919
    %v936 = vsel %vm904, %v866, %v920
    %v937 = vsel %vm905, %v869, %v921
    %v938 = vsel %vm906, %v874, %v922
    %v939 = vsel %vm907, %v877, %v923
    %v940 = vsel %vm908, %v882, %v924
    %v941 = vsel %vm909, %v885, %v925
    %v942 = vsel %vm910, %v890, %v926
    %v943 = vsel %vm911, %v893, %v927
    %v944 = vpack.c.bf16 %v929, %v928
    %v945 = vpack.c.bf16 %v931, %v930
    %v946 = vpack.c.bf16 %v933, %v932
    %v947 = vpack.c.bf16 %v935, %v934
    %v948 = vpack.c.bf16 %v937, %v936
    %v949 = vpack.c.bf16 %v939, %v938
    %v950 = vpack.c.bf16 %v941, %v940
    %v951 = vpack.c.bf16 %v943, %v942
    %s952 = scalar_lea.vmem %s2, 192
    %v953 = vld [vmem:[%s952] sm:$0xf]
    %v954 = vld [vmem:[%s952 + $0x4] sm:$0xf]
    %v955 = vld [vmem:[%s952 + $0x8] sm:$0xf]
    %v956 = vld [vmem:[%s952 + $0xc] sm:$0xf]
    %v957 = vld [vmem:[%s952 + $0x10] sm:$0xf]
    %v958 = vld [vmem:[%s952 + $0x14] sm:$0xf]
    %v959 = vld [vmem:[%s952 + $0x18] sm:$0xf]
    %v960 = vld [vmem:[%s952 + $0x1c] sm:$0xf]
    %v961 = vld [vmem:[%s952 + $0x20] sm:$0xf]
    %v962 = vld [vmem:[%s952 + $0x24] sm:$0xf]
    %v963 = vld [vmem:[%s952 + $0x28] sm:$0xf]
    %v964 = vld [vmem:[%s952 + $0x2c] sm:$0xf]
    %v965 = vld [vmem:[%s952 + $0x30] sm:$0xf]
    %v966 = vld [vmem:[%s952 + $0x34] sm:$0xf]
    %v967 = vld [vmem:[%s952 + $0x38] sm:$0xf]
    %v968 = vld [vmem:[%s952 + $0x3c] sm:$0xf]
    %v969 = vlaneseq
    %v970 = vshrl.u32 %v969, 7
    %v971 = vsub.s32 4, %v970
    %v972 = vrot.slane %v64, %v971
    %v989 = vunpack.c.l.b16 %v953
    %v990 = vunpack.c.l.b16 %v954
    %v991 = vunpack.c.l.b16 %v955
    %v992 = vunpack.c.l.b16 %v956
    %v993 = vunpack.c.l.b16 %v957
    %v994 = vunpack.c.l.b16 %v958
    %v995 = vunpack.c.l.b16 %v959
    %v996 = vunpack.c.l.b16 %v960
    %v997 = vunpack.c.l.b16 %v961
    %v998 = vunpack.c.l.b16 %v962
    %v999 = vunpack.c.l.b16 %v963
    %v1000 = vunpack.c.l.b16 %v964
    %v1001 = vunpack.c.l.b16 %v965
    %v1002 = vunpack.c.l.b16 %v966
    %v1003 = vunpack.c.l.b16 %v967
    %v1004 = vunpack.c.l.b16 %v968
    %v1005 = vpack.c.b16 %v990, %v989
    %v1006 = vpack.c.b16 %v992, %v991
    %v1007 = vpack.c.b16 %v994, %v993
    %v1008 = vpack.c.b16 %v996, %v995
    %v1009 = vpack.c.b16 %v998, %v997
    %v1010 = vpack.c.b16 %v1000, %v999
    %v1011 = vpack.c.b16 %v1002, %v1001
    %v1012 = vpack.c.b16 %v1004, %v1003
    %1021 = vmatprep.subr.bf16.mxu0 0
    %1022 = vmatpush1.bf16.msra.mxu0 %v1005
    %1023 = vmatprep.subr.bf16.mxu0 0
    %1024 = vmatpush1.bf16.msra.mxu0 %v1006
    %1025 = vmatprep.subr.bf16.mxu0 0
    %1026 = vmatpush1.bf16.msra.mxu0 %v1007
    %1027 = vmatprep.subr.bf16.mxu0 0
    %1028 = vmatpush1.bf16.msra.mxu0 %v1008
    %1029 = vmatprep.subr.bf16.mxu0 0
    %1030 = vmatpush1.bf16.msra.mxu0 %v1009
    %1031 = vmatprep.subr.bf16.mxu0 0
    %1032 = vmatpush1.bf16.msra.mxu0 %v1010
    %1033 = vmatprep.subr.bf16.mxu0 0
    %1034 = vmatpush1.bf16.msra.mxu0 %v1011
    %1035 = vmatprep.subr.bf16.mxu0 0
    %1036 = vmatpush1.bf16.msra.mxu0 %v1012
    %1037 = vmatprep.subr.bf16.mxu0 0
    %1038 = vmatpush1.bf16.msra.mxu0 0
    %1039 = vmatprep.subr.bf16.mxu0 0
    %1040 = vmatpush1.bf16.msra.mxu0 0
    %1041 = vmatprep.subr.bf16.mxu0 0
    %1042 = vmatpush1.bf16.msra.mxu0 0
    %1043 = vmatprep.subr.bf16.mxu0 0
    %1044 = vmatpush1.bf16.msra.mxu0 0
    %1045 = vmatprep.subr.bf16.mxu0 0
    %1046 = vmatpush1.bf16.msra.mxu0 0
    %1047 = vmatprep.subr.bf16.mxu0 0
    %1048 = vmatpush1.bf16.msra.mxu0 0
    %1049 = vmatprep.subr.bf16.mxu0 0
    %1050 = vmatpush1.bf16.msra.mxu0 0
    %1051 = vmatprep.subr.bf16.mxu0 0
    %1052 = vmatpush1.bf16.msra.mxu0 0
    %1053 = vmatprep.mubr.bf16.mxu0 0
    %1054 = vmatmul.mubr.bf16.gmra.mrb[0].mxu0 %v944
    %v1055 = vpop.f32.mrb[0].mxu0
    %v1056 = vadd.f32 %v972, %v1055
    %v1057 = vpop.f32.mrb[0].mxu0
    %v1058 = vpop.f32.mrb[0].mxu0
    %v1059 = vadd.f32 %v972, %v1058
    %v1060 = vpop.f32.mrb[0].mxu0
    %1061 = vmatprep.mubr.bf16.mxu0 0
    %1062 = vmatmul.mubr.bf16.gmra.mrb[0].mxu0 %v945
    %v1063 = vpop.f32.mrb[0].mxu0
    %v1064 = vadd.f32 %v972, %v1063
    %v1065 = vpop.f32.mrb[0].mxu0
    %v1066 = vpop.f32.mrb[0].mxu0
    %v1067 = vadd.f32 %v972, %v1066
    %v1068 = vpop.f32.mrb[0].mxu0
    %1069 = vmatprep.mubr.bf16.mxu0 0
    %1070 = vmatmul.mubr.bf16.gmra.mrb[0].mxu0 %v946
    %v1071 = vpop.f32.mrb[0].mxu0
    %v1072 = vadd.f32 %v972, %v1071
    %v1073 = vpop.f32.mrb[0].mxu0
    %v1074 = vpop.f32.mrb[0].mxu0
    %v1075 = vadd.f32 %v972, %v1074
    %v1076 = vpop.f32.mrb[0].mxu0
    %1077 = vmatprep.mubr.bf16.mxu0 0
    %1078 = vmatmul.mubr.bf16.gmra.mrb[0].mxu0 %v947
    %v1079 = vpop.f32.mrb[0].mxu0
    %v1080 = vadd.f32 %v972, %v1079
    %v1081 = vpop.f32.mrb[0].mxu0
    %v1082 = vpop.f32.mrb[0].mxu0
    %v1083 = vadd.f32 %v972, %v1082
    %v1084 = vpop.f32.mrb[0].mxu0
    %1085 = vmatprep.mubr.bf16.mxu0 0
    %1086 = vmatmul.mubr.bf16.gmra.mrb[0].mxu0 %v948
    %v1087 = vpop.f32.mrb[0].mxu0
    %v1088 = vadd.f32 %v972, %v1087
    %v1089 = vpop.f32.mrb[0].mxu0
    %v1090 = vpop.f32.mrb[0].mxu0
    %v1091 = vadd.f32 %v972, %v1090
    %v1092 = vpop.f32.mrb[0].mxu0
    %1093 = vmatprep.mubr.bf16.mxu0 0
    %1094 = vmatmul.mubr.bf16.gmra.mrb[0].mxu0 %v949
    %v1095 = vpop.f32.mrb[0].mxu0
    %v1096 = vadd.f32 %v972, %v1095
    %v1097 = vpop.f32.mrb[0].mxu0
    %v1098 = vpop.f32.mrb[0].mxu0
    %v1099 = vadd.f32 %v972, %v1098
    %v1100 = vpop.f32.mrb[0].mxu0
    %1101 = vmatprep.mubr.bf16.mxu0 0
    %1102 = vmatmul.mubr.bf16.gmra.mrb[0].mxu0 %v950
    %v1103 = vpop.f32.mrb[0].mxu0
    %v1104 = vadd.f32 %v972, %v1103
    %v1105 = vpop.f32.mrb[0].mxu0
    %v1106 = vpop.f32.mrb[0].mxu0
    %v1107 = vadd.f32 %v972, %v1106
    %v1108 = vpop.f32.mrb[0].mxu0
    %1109 = vmatprep.mubr.bf16.mxu0 0
    %1110 = vmatmul.mubr.bf16.gmra.mrb[0].mxu0 %v951
    %v1111 = vpop.f32.mrb[0].mxu0
    %v1112 = vadd.f32 %v972, %v1111
    %v1113 = vpop.f32.mrb[0].mxu0
    %v1114 = vpop.f32.mrb[0].mxu0
    %v1115 = vadd.f32 %v972, %v1114
    %v1116 = vpop.f32.mrb[0].mxu0
    %1117 = vdwg.mxu0
    %v1118 = vld [vmem:[%s11] sm:$0xff]
    %v1119 = vld [vmem:[%s4] sm:$0xf]
    %v1120 = vld [vmem:[%s4 + $0x4] sm:$0xf]
    %v1121 = vld [vmem:[%s4 + $0x8] sm:$0xf]
    %v1122 = vld [vmem:[%s4 + $0xc] sm:$0xf]
    %v1123 = vld [vmem:[%s4 + $0x10] sm:$0xf]
    %v1124 = vld [vmem:[%s4 + $0x14] sm:$0xf]
    %v1125 = vld [vmem:[%s4 + $0x18] sm:$0xf]
    %v1126 = vld [vmem:[%s4 + $0x1c] sm:$0xf]
    %v1127 = vld [vmem:[%s4 + $0x20] sm:$0xf]
    %v1128 = vld [vmem:[%s4 + $0x24] sm:$0xf]
    %v1129 = vld [vmem:[%s4 + $0x28] sm:$0xf]
    %v1130 = vld [vmem:[%s4 + $0x2c] sm:$0xf]
    %v1131 = vld [vmem:[%s4 + $0x30] sm:$0xf]
    %v1132 = vld [vmem:[%s4 + $0x34] sm:$0xf]
    %v1133 = vld [vmem:[%s4 + $0x38] sm:$0xf]
    %v1134 = vld [vmem:[%s4 + $0x3c] sm:$0xf]
    %v1135 = vld [vmem:[%s4 + $0x40] sm:$0xf]
    %v1136 = vld [vmem:[%s4 + $0x44] sm:$0xf]
    %v1137 = vld [vmem:[%s4 + $0x48] sm:$0xf]
    %v1138 = vld [vmem:[%s4 + $0x4c] sm:$0xf]
    %v1139 = vld [vmem:[%s4 + $0x50] sm:$0xf]
    %v1140 = vld [vmem:[%s4 + $0x54] sm:$0xf]
    %v1141 = vld [vmem:[%s4 + $0x58] sm:$0xf]
    %v1142 = vld [vmem:[%s4 + $0x5c] sm:$0xf]
    %v1143 = vpack.c.bf16 %v1059, %v1056
    %v1144 = vpack.c.bf16 %v1067, %v1064
    %v1145 = vpack.c.bf16 %v1075, %v1072
    %v1146 = vpack.c.bf16 %v1083, %v1080
    %v1147 = vpack.c.bf16 %v1091, %v1088
    %v1148 = vpack.c.bf16 %v1099, %v1096
    %v1149 = vpack.c.bf16 %v1107, %v1104
    %v1150 = vpack.c.bf16 %v1115, %v1112
    %v1175 = vunpack.c.l.b16 %v1119
    %v1176 = vunpack.c.l.b16 %v1120
    %v1177 = vunpack.c.l.b16 %v1121
    %v1178 = vunpack.c.l.b16 %v1122
    %v1179 = vunpack.c.l.b16 %v1123
    %v1180 = vunpack.c.l.b16 %v1124
    %v1181 = vunpack.c.l.b16 %v1125
    %v1182 = vunpack.c.l.b16 %v1126
    %v1183 = vunpack.c.l.b16 %v1127
    %v1184 = vunpack.c.l.b16 %v1128
    %v1185 = vunpack.c.l.b16 %v1129
    %v1186 = vunpack.c.l.b16 %v1130
    %v1187 = vunpack.c.l.b16 %v1131
    %v1188 = vunpack.c.l.b16 %v1132
    %v1189 = vunpack.c.l.b16 %v1133
    %v1190 = vunpack.c.l.b16 %v1134
    %v1191 = vunpack.c.l.b16 %v1135
    %v1192 = vunpack.c.l.b16 %v1136
    %v1193 = vunpack.c.l.b16 %v1137
    %v1194 = vunpack.c.l.b16 %v1138
    %v1195 = vunpack.c.l.b16 %v1139
    %v1196 = vunpack.c.l.b16 %v1140
    %v1197 = vunpack.c.l.b16 %v1141
    %v1198 = vunpack.c.l.b16 %v1142
    %v1199 = vpack.c.b16 %v1176, %v1175
    %v1200 = vpack.c.b16 %v1178, %v1177
    %v1201 = vpack.c.b16 %v1180, %v1179
    %v1202 = vpack.c.b16 %v1182, %v1181
    %v1203 = vpack.c.b16 %v1184, %v1183
    %v1204 = vpack.c.b16 %v1186, %v1185
    %v1205 = vpack.c.b16 %v1188, %v1187
    %v1206 = vpack.c.b16 %v1190, %v1189
    %v1207 = vpack.c.b16 %v1192, %v1191
    %v1208 = vpack.c.b16 %v1194, %v1193
    %v1209 = vpack.c.b16 %v1196, %v1195
    %v1210 = vpack.c.b16 %v1198, %v1197
    %1223 = vmatprep.subr.bf16.mxu0 0
    %1224 = vmatpush1.bf16.msra.mxu0 %v1143
    %1225 = vmatprep.subr.bf16.mxu0 0
    %1226 = vmatpush1.bf16.msra.mxu0 %v1144
    %1227 = vmatprep.subr.bf16.mxu0 0
    %1228 = vmatpush1.bf16.msra.mxu0 %v1145
    %1229 = vmatprep.subr.bf16.mxu0 0
    %1230 = vmatpush1.bf16.msra.mxu0 %v1146
    %1231 = vmatprep.subr.bf16.mxu0 0
    %1232 = vmatpush1.bf16.msra.mxu0 %v1147
    %1233 = vmatprep.subr.bf16.mxu0 0
    %1234 = vmatpush1.bf16.msra.mxu0 %v1148
    %1235 = vmatprep.subr.bf16.mxu0 0
    %1236 = vmatpush1.bf16.msra.mxu0 %v1149
    %1237 = vmatprep.subr.bf16.mxu0 0
    %1238 = vmatpush1.bf16.msra.mxu0 %v1150
    %1239 = vmatprep.subr.bf16.mxu0 0
    %1240 = vmatpush1.bf16.msra.mxu0 0
    %1241 = vmatprep.subr.bf16.mxu0 0
    %1242 = vmatpush1.bf16.msra.mxu0 0
    %1243 = vmatprep.subr.bf16.mxu0 0
    %1244 = vmatpush1.bf16.msra.mxu0 0
    %1245 = vmatprep.subr.bf16.mxu0 0
    %1246 = vmatpush1.bf16.msra.mxu0 0
    %1247 = vmatprep.subr.bf16.mxu0 0
    %1248 = vmatpush1.bf16.msra.mxu0 0
    %1249 = vmatprep.subr.bf16.mxu0 0
    %1250 = vmatpush1.bf16.msra.mxu0 0
    %1251 = vmatprep.subr.bf16.mxu0 0
    %1252 = vmatpush1.bf16.msra.mxu0 0
    %1253 = vmatprep.subr.bf16.mxu0 0
    %1254 = vmatpush1.bf16.msra.mxu0 0
    %1255 = vmatprep.mubr.bf16.mxu0 0
    %1256 = vmatmul.mubr.bf16.gmra.mrb[0].mxu0 %v1199
    %v1257 = vpop.f32.mrb[0].mxu0
    %v1258 = vadd.f32 0.0, %v1257
    %v1259 = vpop.f32.mrb[0].mxu0
    %v1260 = vpop.f32.mrb[0].mxu0
    %v1261 = vadd.f32 0.0, %v1260
    %v1262 = vpop.f32.mrb[0].mxu0
    %1263 = vmatprep.mubr.bf16.mxu0 0
    %1264 = vmatmul.mubr.bf16.gmra.mrb[0].mxu0 %v1200
    %v1265 = vpop.f32.mrb[0].mxu0
    %v1266 = vadd.f32 0.0, %v1265
    %v1267 = vpop.f32.mrb[0].mxu0
    %v1268 = vpop.f32.mrb[0].mxu0
    %v1269 = vadd.f32 0.0, %v1268
    %v1270 = vpop.f32.mrb[0].mxu0
    %1271 = vmatprep.mubr.bf16.mxu0 0
    %1272 = vmatmul.mubr.bf16.gmra.mrb[0].mxu0 %v1201
    %v1273 = vpop.f32.mrb[0].mxu0
    %v1274 = vadd.f32 0.0, %v1273
    %v1275 = vpop.f32.mrb[0].mxu0
    %v1276 = vpop.f32.mrb[0].mxu0
    %v1277 = vadd.f32 0.0, %v1276
    %v1278 = vpop.f32.mrb[0].mxu0
    %1279 = vmatprep.mubr.bf16.mxu0 0
    %1280 = vmatmul.mubr.bf16.gmra.mrb[0].mxu0 %v1202
    %v1281 = vpop.f32.mrb[0].mxu0
    %v1282 = vadd.f32 0.0, %v1281
    %v1283 = vpop.f32.mrb[0].mxu0
    %v1284 = vpop.f32.mrb[0].mxu0
    %v1285 = vadd.f32 0.0, %v1284
    %v1286 = vpop.f32.mrb[0].mxu0
    %1287 = vmatprep.mubr.bf16.mxu0 0
    %1288 = vmatmul.mubr.bf16.gmra.mrb[0].mxu0 %v1203
    %v1289 = vpop.f32.mrb[0].mxu0
    %v1290 = vadd.f32 0.0, %v1289
    %v1291 = vpop.f32.mrb[0].mxu0
    %v1292 = vpop.f32.mrb[0].mxu0
    %v1293 = vadd.f32 0.0, %v1292
    %v1294 = vpop.f32.mrb[0].mxu0
    %1295 = vmatprep.mubr.bf16.mxu0 0
    %1296 = vmatmul.mubr.bf16.gmra.mrb[0].mxu0 %v1204
    %v1297 = vpop.f32.mrb[0].mxu0
    %v1298 = vadd.f32 0.0, %v1297
    %v1299 = vpop.f32.mrb[0].mxu0
    %v1300 = vpop.f32.mrb[0].mxu0
    %v1301 = vadd.f32 0.0, %v1300
    %v1302 = vpop.f32.mrb[0].mxu0
    %1303 = vmatprep.mubr.bf16.mxu0 0
    %1304 = vmatmul.mubr.bf16.gmra.mrb[0].mxu0 %v1205
    %v1305 = vpop.f32.mrb[0].mxu0
    %v1306 = vadd.f32 0.0, %v1305
    %v1307 = vpop.f32.mrb[0].mxu0
    %v1308 = vpop.f32.mrb[0].mxu0
    %v1309 = vadd.f32 0.0, %v1308
    %v1310 = vpop.f32.mrb[0].mxu0
    %1311 = vmatprep.mubr.bf16.mxu0 0
    %1312 = vmatmul.mubr.bf16.gmra.mrb[0].mxu0 %v1206
    %v1313 = vpop.f32.mrb[0].mxu0
    %v1314 = vadd.f32 0.0, %v1313
    %v1315 = vpop.f32.mrb[0].mxu0
    %v1316 = vpop.f32.mrb[0].mxu0
    %v1317 = vadd.f32 0.0, %v1316
    %v1318 = vpop.f32.mrb[0].mxu0
    %1319 = vmatprep.mubr.bf16.mxu0 0
    %1320 = vmatmul.mubr.bf16.gmra.mrb[0].mxu0 %v1207
    %v1321 = vpop.f32.mrb[0].mxu0
    %v1322 = vadd.f32 0.0, %v1321
    %v1323 = vpop.f32.mrb[0].mxu0
    %v1324 = vpop.f32.mrb[0].mxu0
    %v1325 = vadd.f32 0.0, %v1324
    %v1326 = vpop.f32.mrb[0].mxu0
    %1327 = vmatprep.mubr.bf16.mxu0 0
    %1328 = vmatmul.mubr.bf16.gmra.mrb[0].mxu0 %v1208
    %v1329 = vpop.f32.mrb[0].mxu0
    %v1330 = vadd.f32 0.0, %v1329
    %v1331 = vpop.f32.mrb[0].mxu0
    %v1332 = vpop.f32.mrb[0].mxu0
    %v1333 = vadd.f32 0.0, %v1332
    %v1334 = vpop.f32.mrb[0].mxu0
    %1335 = vmatprep.mubr.bf16.mxu0 0
    %1336 = vmatmul.mubr.bf16.gmra.mrb[0].mxu0 %v1209
    %v1337 = vpop.f32.mrb[0].mxu0
    %v1338 = vadd.f32 0.0, %v1337
    %v1339 = vpop.f32.mrb[0].mxu0
    %v1340 = vpop.f32.mrb[0].mxu0
    %v1341 = vadd.f32 0.0, %v1340
    %v1342 = vpop.f32.mrb[0].mxu0
    %1343 = vmatprep.mubr.bf16.mxu0 0
    %1344 = vmatmul.mubr.bf16.gmra.mrb[0].mxu0 %v1210
    %v1345 = vpop.f32.mrb[0].mxu0
    %v1346 = vadd.f32 0.0, %v1345
    %v1347 = vpop.f32.mrb[0].mxu0
    %v1348 = vpop.f32.mrb[0].mxu0
    %v1349 = vadd.f32 0.0, %v1348
    %v1350 = vpop.f32.mrb[0].mxu0
    %1351 = vdwg.mxu0
    %v1352 = vpack.c.bf16 %v1261, %v1258
    %v1353 = vpack.c.bf16 %v1269, %v1266
    %v1354 = vpack.c.bf16 %v1277, %v1274
    %v1355 = vpack.c.bf16 %v1285, %v1282
    %v1356 = vpack.c.bf16 %v1293, %v1290
    %v1357 = vpack.c.bf16 %v1301, %v1298
    %v1358 = vpack.c.bf16 %v1309, %v1306
    %v1359 = vpack.c.bf16 %v1317, %v1314
    %v1360 = vpack.c.bf16 %v1325, %v1322
    %v1361 = vpack.c.bf16 %v1333, %v1330
    %v1362 = vpack.c.bf16 %v1341, %v1338
    %v1363 = vpack.c.bf16 %v1349, %v1346
    %v1364 = vld [vmem:[%s10] sm:$0xf]
    %v1365 = vld [vmem:[%s10 + $0x4] sm:$0xf]
    %v1366 = vld [vmem:[%s10 + $0x8] sm:$0xf]
    %v1367 = vld [vmem:[%s10 + $0xc] sm:$0xf]
    %s1368 = scalar_lea.vmem %s10, 16
    %v1369 = vld [vmem:[%s1368] sm:$0xf]
    %v1370 = vld [vmem:[%s1368 + $0x4] sm:$0xf]
    %v1371 = vld [vmem:[%s1368 + $0x8] sm:$0xf]
    %v1372 = vld [vmem:[%s1368 + $0xc] sm:$0xf]
    %v1377 = vunpack.c.l.b16 %v1369
    %v1378 = vunpack.c.l.b16 %v1370
    %v1379 = vunpack.c.l.b16 %v1371
    %v1380 = vunpack.c.l.b16 %v1372
    %v1381 = vpack.c.b16 %v1378, %v1377
    %v1382 = vpack.c.b16 %v1380, %v1379
    %v1386 = vsel %vm109, %v1356, 0
    %v1389 = vsel %vm109, %v1357, 0
    %v1392 = vsel %vm109, %v1358, 0
    %v1395 = vsel %vm109, %v1359, 0
    %1397 = vmatprep.subr.bf16.mxu0 0
    %1398 = vmatpush1.bf16.msra.mxu0 %v1381
    %1399 = vmatprep.subr.bf16.mxu0 0
    %1400 = vmatpush1.bf16.msra.mxu0 %v1382
    %1401 = vmatprep.subr.bf16.mxu0 0
    %1402 = vmatpush1.bf16.msra.mxu0 0
    %1403 = vmatprep.subr.bf16.mxu0 0
    %1404 = vmatpush1.bf16.msra.mxu0 0
    %1405 = vmatprep.subr.bf16.mxu0 0
    %1406 = vmatpush1.bf16.msra.mxu0 0
    %1407 = vmatprep.subr.bf16.mxu0 0
    %1408 = vmatpush1.bf16.msra.mxu0 0
    %1409 = vmatprep.subr.bf16.mxu0 0
    %1410 = vmatpush1.bf16.msra.mxu0 0
    %1411 = vmatprep.subr.bf16.mxu0 0
    %1412 = vmatpush1.bf16.msra.mxu0 0
    %1413 = vmatprep.subr.bf16.mxu0 0
    %1414 = vmatpush1.bf16.msra.mxu0 0
    %1415 = vmatprep.subr.bf16.mxu0 0
    %1416 = vmatpush1.bf16.msra.mxu0 0
    %1417 = vmatprep.subr.bf16.mxu0 0
    %1418 = vmatpush1.bf16.msra.mxu0 0
    %1419 = vmatprep.subr.bf16.mxu0 0
    %1420 = vmatpush1.bf16.msra.mxu0 0
    %1421 = vmatprep.subr.bf16.mxu0 0
    %1422 = vmatpush1.bf16.msra.mxu0 0
    %1423 = vmatprep.subr.bf16.mxu0 0
    %1424 = vmatpush1.bf16.msra.mxu0 0
    %1425 = vmatprep.subr.bf16.mxu0 0
    %1426 = vmatpush1.bf16.msra.mxu0 0
    %1427 = vmatprep.subr.bf16.mxu0 0
    %1428 = vmatpush1.bf16.msra.mxu0 0
    %1429 = vmatprep.mubr.bf16.mxu0 0
    %1430 = vmatmul.mubr.bf16.gmra.mrb[0].mxu0 %v1386
    %v1431 = vpop.f32.mrb[0].mxu0
    %v1432 = vadd.f32 0.0, %v1431
    %v1433 = vpop.f32.mrb[0].mxu0
    %v1434 = vpop.f32.mrb[0].mxu0
    %v1435 = vadd.f32 0.0, %v1434
    %v1436 = vpop.f32.mrb[0].mxu0
    %1437 = vmatprep.mubr.bf16.mxu0 0
    %1438 = vmatmul.mubr.bf16.gmra.mrb[0].mxu0 %v1389
    %v1439 = vpop.f32.mrb[0].mxu0
    %v1440 = vadd.f32 0.0, %v1439
    %v1441 = vpop.f32.mrb[0].mxu0
    %v1442 = vpop.f32.mrb[0].mxu0
    %v1443 = vadd.f32 0.0, %v1442
    %v1444 = vpop.f32.mrb[0].mxu0
    %1445 = vmatprep.mubr.bf16.mxu0 0
    %1446 = vmatmul.mubr.bf16.gmra.mrb[0].mxu0 %v1392
    %v1447 = vpop.f32.mrb[0].mxu0
    %v1448 = vadd.f32 0.0, %v1447
    %v1449 = vpop.f32.mrb[0].mxu0
    %v1450 = vpop.f32.mrb[0].mxu0
    %v1451 = vadd.f32 0.0, %v1450
    %v1452 = vpop.f32.mrb[0].mxu0
    %1453 = vmatprep.mubr.bf16.mxu0 0
    %1454 = vmatmul.mubr.bf16.gmra.mrb[0].mxu0 %v1395
    %v1455 = vpop.f32.mrb[0].mxu0
    %v1456 = vadd.f32 0.0, %v1455
    %v1457 = vpop.f32.mrb[0].mxu0
    %v1458 = vpop.f32.mrb[0].mxu0
    %v1459 = vadd.f32 0.0, %v1458
    %v1460 = vpop.f32.mrb[0].mxu0
    %1461 = vdwg.mxu0
    %v1466 = vunpack.c.l.b16 %v1364
    %v1467 = vunpack.c.l.b16 %v1365
    %v1468 = vunpack.c.l.b16 %v1366
    %v1469 = vunpack.c.l.b16 %v1367
    %v1470 = vpack.c.b16 %v1467, %v1466
    %v1471 = vpack.c.b16 %v1469, %v1468
    %v1475 = vsel %vm109, %v1352, 0
    %v1478 = vsel %vm109, %v1353, 0
    %v1481 = vsel %vm109, %v1354, 0
    %v1484 = vsel %vm109, %v1355, 0
    %1486 = vmatprep.subr.bf16.mxu0 0
    %1487 = vmatpush1.bf16.msra.mxu0 %v1470
    %1488 = vmatprep.subr.bf16.mxu0 0
    %1489 = vmatpush1.bf16.msra.mxu0 %v1471
    %1490 = vmatprep.subr.bf16.mxu0 0
    %1491 = vmatpush1.bf16.msra.mxu0 0
    %1492 = vmatprep.subr.bf16.mxu0 0
    %1493 = vmatpush1.bf16.msra.mxu0 0
    %1494 = vmatprep.subr.bf16.mxu0 0
    %1495 = vmatpush1.bf16.msra.mxu0 0
    %1496 = vmatprep.subr.bf16.mxu0 0
    %1497 = vmatpush1.bf16.msra.mxu0 0
    %1498 = vmatprep.subr.bf16.mxu0 0
    %1499 = vmatpush1.bf16.msra.mxu0 0
    %1500 = vmatprep.subr.bf16.mxu0 0
    %1501 = vmatpush1.bf16.msra.mxu0 0
    %1502 = vmatprep.subr.bf16.mxu0 0
    %1503 = vmatpush1.bf16.msra.mxu0 0
    %1504 = vmatprep.subr.bf16.mxu0 0
    %1505 = vmatpush1.bf16.msra.mxu0 0
    %1506 = vmatprep.subr.bf16.mxu0 0
    %1507 = vmatpush1.bf16.msra.mxu0 0
    %1508 = vmatprep.subr.bf16.mxu0 0
    %1509 = vmatpush1.bf16.msra.mxu0 0
    %1510 = vmatprep.subr.bf16.mxu0 0
    %1511 = vmatpush1.bf16.msra.mxu0 0
    %1512 = vmatprep.subr.bf16.mxu0 0
    %1513 = vmatpush1.bf16.msra.mxu0 0
    %1514 = vmatprep.subr.bf16.mxu0 0
    %1515 = vmatpush1.bf16.msra.mxu0 0
    %1516 = vmatprep.subr.bf16.mxu0 0
    %1517 = vmatpush1.bf16.msra.mxu0 0
    %1518 = vmatprep.mubr.bf16.mxu0 0
    %1519 = vmatmul.mubr.bf16.gmra.mrb[0].mxu0 %v1475
    %v1520 = vpop.f32.mrb[0].mxu0
    %v1521 = vadd.f32 %v1432, %v1520
    %v1522 = vpop.f32.mrb[0].mxu0
    %v1523 = vpop.f32.mrb[0].mxu0
    %v1524 = vadd.f32 %v1435, %v1523
    %v1525 = vpop.f32.mrb[0].mxu0
    %1526 = vmatprep.mubr.bf16.mxu0 0
    %1527 = vmatmul.mubr.bf16.gmra.mrb[0].mxu0 %v1478
    %v1528 = vpop.f32.mrb[0].mxu0
    %v1529 = vadd.f32 %v1440, %v1528
    %v1530 = vpop.f32.mrb[0].mxu0
    %v1531 = vpop.f32.mrb[0].mxu0
    %v1532 = vadd.f32 %v1443, %v1531
    %v1533 = vpop.f32.mrb[0].mxu0
    %1534 = vmatprep.mubr.bf16.mxu0 0
    %1535 = vmatmul.mubr.bf16.gmra.mrb[0].mxu0 %v1481
    %v1536 = vpop.f32.mrb[0].mxu0
    %v1537 = vadd.f32 %v1448, %v1536
    %v1538 = vpop.f32.mrb[0].mxu0
    %v1539 = vpop.f32.mrb[0].mxu0
    %v1540 = vadd.f32 %v1451, %v1539
    %v1541 = vpop.f32.mrb[0].mxu0
    %1542 = vmatprep.mubr.bf16.mxu0 0
    %1543 = vmatmul.mubr.bf16.gmra.mrb[0].mxu0 %v1484
    %v1544 = vpop.f32.mrb[0].mxu0
    %v1545 = vadd.f32 %v1456, %v1544
    %v1546 = vpop.f32.mrb[0].mxu0
    %v1547 = vpop.f32.mrb[0].mxu0
    %v1548 = vadd.f32 %v1459, %v1547
    %v1549 = vpop.f32.mrb[0].mxu0
    %1550 = vdwg.mxu0
    %s1551 = scalar_lea.vmem %s10, 32
    %v1552 = vld [vmem:[%s1551] sm:$0xf]
    %v1553 = vld [vmem:[%s1551 + $0x4] sm:$0xf]
    %v1554 = vld [vmem:[%s1551 + $0x8] sm:$0xf]
    %v1555 = vld [vmem:[%s1551 + $0xc] sm:$0xf]
    %v1560 = vunpack.c.l.b16 %v1552
    %v1561 = vunpack.c.l.b16 %v1553
    %v1562 = vunpack.c.l.b16 %v1554
    %v1563 = vunpack.c.l.b16 %v1555
    %v1564 = vpack.c.b16 %v1561, %v1560
    %v1565 = vpack.c.b16 %v1563, %v1562
    %v1569 = vsel %vm109, %v1360, 0
    %v1572 = vsel %vm109, %v1361, 0
    %v1575 = vsel %vm109, %v1362, 0
    %v1578 = vsel %vm109, %v1363, 0
    %1580 = vmatprep.subr.bf16.mxu0 0
    %1581 = vmatpush1.bf16.msra.mxu0 %v1564
    %1582 = vmatprep.subr.bf16.mxu0 0
    %1583 = vmatpush1.bf16.msra.mxu0 %v1565
    %1584 = vmatprep.subr.bf16.mxu0 0
    %1585 = vmatpush1.bf16.msra.mxu0 0
    %1586 = vmatprep.subr.bf16.mxu0 0
    %1587 = vmatpush1.bf16.msra.mxu0 0
    %1588 = vmatprep.subr.bf16.mxu0 0
    %1589 = vmatpush1.bf16.msra.mxu0 0
    %1590 = vmatprep.subr.bf16.mxu0 0
    %1591 = vmatpush1.bf16.msra.mxu0 0
    %1592 = vmatprep.subr.bf16.mxu0 0
    %1593 = vmatpush1.bf16.msra.mxu0 0
    %1594 = vmatprep.subr.bf16.mxu0 0
    %1595 = vmatpush1.bf16.msra.mxu0 0
    %1596 = vmatprep.subr.bf16.mxu0 0
    %1597 = vmatpush1.bf16.msra.mxu0 0
    %1598 = vmatprep.subr.bf16.mxu0 0
    %1599 = vmatpush1.bf16.msra.mxu0 0
    %1600 = vmatprep.subr.bf16.mxu0 0
    %1601 = vmatpush1.bf16.msra.mxu0 0
    %1602 = vmatprep.subr.bf16.mxu0 0
    %1603 = vmatpush1.bf16.msra.mxu0 0
    %1604 = vmatprep.subr.bf16.mxu0 0
    %1605 = vmatpush1.bf16.msra.mxu0 0
    %1606 = vmatprep.subr.bf16.mxu0 0
    %1607 = vmatpush1.bf16.msra.mxu0 0
    %1608 = vmatprep.subr.bf16.mxu0 0
    %1609 = vmatpush1.bf16.msra.mxu0 0
    %1610 = vmatprep.subr.bf16.mxu0 0
    %1611 = vmatpush1.bf16.msra.mxu0 0
    %1612 = vmatprep.mubr.bf16.mxu0 0
    %1613 = vmatmul.mubr.bf16.gmra.mrb[0].mxu0 %v1569
    %v1614 = vpop.f32.mrb[0].mxu0
    %v1615 = vadd.f32 0.0, %v1614
    %v1616 = vpop.f32.mrb[0].mxu0
    %v1617 = vpop.f32.mrb[0].mxu0
    %v1618 = vadd.f32 0.0, %v1617
    %v1619 = vpop.f32.mrb[0].mxu0
    %1620 = vmatprep.mubr.bf16.mxu0 0
    %1621 = vmatmul.mubr.bf16.gmra.mrb[0].mxu0 %v1572
    %v1622 = vpop.f32.mrb[0].mxu0
    %v1623 = vadd.f32 0.0, %v1622
    %v1624 = vpop.f32.mrb[0].mxu0
    %v1625 = vpop.f32.mrb[0].mxu0
    %v1626 = vadd.f32 0.0, %v1625
    %v1627 = vpop.f32.mrb[0].mxu0
    %1628 = vmatprep.mubr.bf16.mxu0 0
    %1629 = vmatmul.mubr.bf16.gmra.mrb[0].mxu0 %v1575
    %v1630 = vpop.f32.mrb[0].mxu0
    %v1631 = vadd.f32 0.0, %v1630
    %v1632 = vpop.f32.mrb[0].mxu0
    %v1633 = vpop.f32.mrb[0].mxu0
    %v1634 = vadd.f32 0.0, %v1633
    %v1635 = vpop.f32.mrb[0].mxu0
    %1636 = vmatprep.mubr.bf16.mxu0 0
    %1637 = vmatmul.mubr.bf16.gmra.mrb[0].mxu0 %v1578
    %v1638 = vpop.f32.mrb[0].mxu0
    %v1639 = vadd.f32 0.0, %v1638
    %v1640 = vpop.f32.mrb[0].mxu0
    %v1641 = vpop.f32.mrb[0].mxu0
    %v1642 = vadd.f32 0.0, %v1641
    %v1643 = vpop.f32.mrb[0].mxu0
    %1644 = vdwg.mxu0
    %v1645 = vadd.f32 %v1521, %v1615
    %v1646 = vadd.f32 %v1524, %v1618
    %v1647 = vadd.f32 %v1529, %v1623
    %v1648 = vadd.f32 %v1532, %v1626
    %v1649 = vadd.f32 %v1537, %v1631
    %v1650 = vadd.f32 %v1540, %v1634
    %v1651 = vadd.f32 %v1545, %v1639
    %v1652 = vadd.f32 %v1548, %v1642
    %v1653 = vlaneseq
    %v1654 = vshrl.u32 %v1653, 7
    %v1655 = vsub.s32 0, %v1654
    %v1656 = vrot.slane %v1118, %v1655
    %v1657 = vadd.f32 %v1645, %v1656
    %v1658 = vadd.f32 %v1646, %v1656
    %v1659 = vadd.f32 %v1647, %v1656
    %v1660 = vadd.f32 %v1648, %v1656
    %v1661 = vadd.f32 %v1649, %v1656
    %v1662 = vadd.f32 %v1650, %v1656
    %v1663 = vadd.f32 %v1651, %v1656
    %v1664 = vadd.f32 %v1652, %v1656
    %vm1665 = vcmp.ge.f32.partialorder %v1657, 0.0
    %vm1666 = vcmp.ge.f32.partialorder %v1658, 0.0
    %vm1667 = vcmp.ge.f32.partialorder %v1659, 0.0
    %vm1668 = vcmp.ge.f32.partialorder %v1660, 0.0
    %vm1669 = vcmp.ge.f32.partialorder %v1661, 0.0
    %vm1670 = vcmp.ge.f32.partialorder %v1662, 0.0
    %vm1671 = vcmp.ge.f32.partialorder %v1663, 0.0
    %vm1672 = vcmp.ge.f32.partialorder %v1664, 0.0
    %v1673 = vmul.f32 %v1657, 0.01
    %v1674 = vmul.f32 %v1658, 0.01
    %v1675 = vmul.f32 %v1659, 0.01
    %v1676 = vmul.f32 %v1660, 0.01
    %v1677 = vmul.f32 %v1661, 0.01
    %v1678 = vmul.f32 %v1662, 0.01
    %v1679 = vmul.f32 %v1663, 0.01
    %v1680 = vmul.f32 %v1664, 0.01
    %v1681 = vsel %vm1665, %v1657, %v1673
    %v1682 = vsel %vm1666, %v1658, %v1674
    %v1683 = vsel %vm1667, %v1659, %v1675
    %v1684 = vsel %vm1668, %v1660, %v1676
    %v1685 = vsel %vm1669, %v1661, %v1677
    %v1686 = vsel %vm1670, %v1662, %v1678
    %v1687 = vsel %vm1671, %v1663, %v1679
    %v1688 = vsel %vm1672, %v1664, %v1680
    %v1689 = vld [vmem:[%s5] sm:$0xf]
    %v1690 = vld [vmem:[%s5 + $0x4] sm:$0xf]
    %v1691 = vld [vmem:[%s5 + $0x8] sm:$0xf]
    %v1692 = vld [vmem:[%s5 + $0xc] sm:$0xf]
    %v1693 = vld [vmem:[%s5 + $0x10] sm:$0xf]
    %v1694 = vld [vmem:[%s5 + $0x14] sm:$0xf]
    %v1695 = vld [vmem:[%s5 + $0x18] sm:$0xf]
    %v1696 = vld [vmem:[%s5 + $0x1c] sm:$0xf]
    %v1697 = vld [vmem:[%s5 + $0x20] sm:$0xf]
    %v1698 = vld [vmem:[%s5 + $0x24] sm:$0xf]
    %v1699 = vld [vmem:[%s5 + $0x28] sm:$0xf]
    %v1700 = vld [vmem:[%s5 + $0x2c] sm:$0xf]
    %v1701 = vpack.c.bf16 %v1682, %v1681
    %v1702 = vpack.c.bf16 %v1684, %v1683
    %v1703 = vpack.c.bf16 %v1686, %v1685
    %v1704 = vpack.c.bf16 %v1688, %v1687
    %v1717 = vunpack.c.l.b16 %v1689
    %v1718 = vunpack.c.l.b16 %v1690
    %v1719 = vunpack.c.l.b16 %v1691
    %v1720 = vunpack.c.l.b16 %v1692
    %v1721 = vunpack.c.l.b16 %v1693
    %v1722 = vunpack.c.l.b16 %v1694
    %v1723 = vunpack.c.l.b16 %v1695
    %v1724 = vunpack.c.l.b16 %v1696
    %v1725 = vunpack.c.l.b16 %v1697
    %v1726 = vunpack.c.l.b16 %v1698
    %v1727 = vunpack.c.l.b16 %v1699
    %v1728 = vunpack.c.l.b16 %v1700
    %v1729 = vpack.c.b16 %v1718, %v1717
    %v1730 = vpack.c.b16 %v1720, %v1719
    %v1731 = vpack.c.b16 %v1722, %v1721
    %v1732 = vpack.c.b16 %v1724, %v1723
    %v1733 = vpack.c.b16 %v1726, %v1725
    %v1734 = vpack.c.b16 %v1728, %v1727
    %vm1735 = vcmask 523264
    %v1737 = vsel %vm1735, %v1729, 0
    %v1740 = vsel %vm1735, %v1730, 0
    %v1743 = vsel %vm1735, %v1731, 0
    %v1746 = vsel %vm1735, %v1732, 0
    %v1749 = vsel %vm1735, %v1733, 0
    %v1752 = vsel %vm1735, %v1734, 0
    %1754 = vmatprep.subr.bf16.mxu0 0
    %1755 = vmatpush1.bf16.msra.mxu0 %v1701
    %1756 = vmatprep.subr.bf16.mxu0 0
    %1757 = vmatpush1.bf16.msra.mxu0 %v1702
    %1758 = vmatprep.subr.bf16.mxu0 0
    %1759 = vmatpush1.bf16.msra.mxu0 %v1703
    %1760 = vmatprep.subr.bf16.mxu0 0
    %1761 = vmatpush1.bf16.msra.mxu0 %v1704
    %1762 = vmatprep.subr.bf16.mxu0 0
    %1763 = vmatpush1.bf16.msra.mxu0 0
    %1764 = vmatprep.subr.bf16.mxu0 0
    %1765 = vmatpush1.bf16.msra.mxu0 0
    %1766 = vmatprep.subr.bf16.mxu0 0
    %1767 = vmatpush1.bf16.msra.mxu0 0
    %1768 = vmatprep.subr.bf16.mxu0 0
    %1769 = vmatpush1.bf16.msra.mxu0 0
    %1770 = vmatprep.subr.bf16.mxu0 0
    %1771 = vmatpush1.bf16.msra.mxu0 0
    %1772 = vmatprep.subr.bf16.mxu0 0
    %1773 = vmatpush1.bf16.msra.mxu0 0
    %1774 = vmatprep.subr.bf16.mxu0 0
    %1775 = vmatpush1.bf16.msra.mxu0 0
    %1776 = vmatprep.subr.bf16.mxu0 0
    %1777 = vmatpush1.bf16.msra.mxu0 0
    %1778 = vmatprep.subr.bf16.mxu0 0
    %1779 = vmatpush1.bf16.msra.mxu0 0
    %1780 = vmatprep.subr.bf16.mxu0 0
    %1781 = vmatpush1.bf16.msra.mxu0 0
    %1782 = vmatprep.subr.bf16.mxu0 0
    %1783 = vmatpush1.bf16.msra.mxu0 0
    %1784 = vmatprep.subr.bf16.mxu0 0
    %1785 = vmatpush1.bf16.msra.mxu0 0
    %1786 = vmatprep.mubr.bf16.mxu0 0
    %1787 = vmatmul.mubr.bf16.gmra.mrb[0].mxu0 %v1737
    %v1788 = vpop.f32.mrb[0].mxu0
    %v1789 = vadd.f32 0.0, %v1788
    %v1790 = vpop.f32.mrb[0].mxu0
    %v1791 = vpop.f32.mrb[0].mxu0
    %v1792 = vadd.f32 0.0, %v1791
    %v1793 = vpop.f32.mrb[0].mxu0
    %1794 = vmatprep.mubr.bf16.mxu0 0
    %1795 = vmatmul.mubr.bf16.gmra.mrb[0].mxu0 %v1740
    %v1796 = vpop.f32.mrb[0].mxu0
    %v1797 = vadd.f32 0.0, %v1796
    %v1798 = vpop.f32.mrb[0].mxu0
    %v1799 = vpop.f32.mrb[0].mxu0
    %v1800 = vadd.f32 0.0, %v1799
    %v1801 = vpop.f32.mrb[0].mxu0
    %1802 = vmatprep.mubr.bf16.mxu0 0
    %1803 = vmatmul.mubr.bf16.gmra.mrb[0].mxu0 %v1743
    %v1804 = vpop.f32.mrb[0].mxu0
    %v1805 = vadd.f32 0.0, %v1804
    %v1806 = vpop.f32.mrb[0].mxu0
    %v1807 = vpop.f32.mrb[0].mxu0
    %v1808 = vadd.f32 0.0, %v1807
    %v1809 = vpop.f32.mrb[0].mxu0
    %1810 = vmatprep.mubr.bf16.mxu0 0
    %1811 = vmatmul.mubr.bf16.gmra.mrb[0].mxu0 %v1746
    %v1812 = vpop.f32.mrb[0].mxu0
    %v1813 = vadd.f32 0.0, %v1812
    %v1814 = vpop.f32.mrb[0].mxu0
    %v1815 = vpop.f32.mrb[0].mxu0
    %v1816 = vadd.f32 0.0, %v1815
    %v1817 = vpop.f32.mrb[0].mxu0
    %1818 = vmatprep.mubr.bf16.mxu0 0
    %1819 = vmatmul.mubr.bf16.gmra.mrb[0].mxu0 %v1749
    %v1820 = vpop.f32.mrb[0].mxu0
    %v1821 = vadd.f32 0.0, %v1820
    %v1822 = vpop.f32.mrb[0].mxu0
    %v1823 = vpop.f32.mrb[0].mxu0
    %v1824 = vadd.f32 0.0, %v1823
    %v1825 = vpop.f32.mrb[0].mxu0
    %1826 = vmatprep.mubr.bf16.mxu0 0
    %1827 = vmatmul.mubr.bf16.gmra.mrb[0].mxu0 %v1752
    %v1828 = vpop.f32.mrb[0].mxu0
    %v1829 = vadd.f32 0.0, %v1828
    %v1830 = vpop.f32.mrb[0].mxu0
    %v1831 = vpop.f32.mrb[0].mxu0
    %v1832 = vadd.f32 0.0, %v1831
    %v1833 = vpop.f32.mrb[0].mxu0
    %1834 = vdwg.mxu0
    %v1835 = vpack.c.bf16 %v1792, %v1789
    %v1836 = vpack.c.bf16 %v1800, %v1797
    %v1837 = vpack.c.bf16 %v1808, %v1805
    %v1838 = vpack.c.bf16 %v1816, %v1813
    %v1839 = vpack.c.bf16 %v1824, %v1821
    %v1840 = vpack.c.bf16 %v1832, %v1829
    %s1841 = scalar_lea.vmem %s10, 48
    %v1842 = vld [vmem:[%s1841] sm:$0xf]
    %v1843 = vld [vmem:[%s1841 + $0x4] sm:$0xf]
    %v1844 = vld [vmem:[%s1841 + $0x8] sm:$0xf]
    %v1845 = vld [vmem:[%s1841 + $0xc] sm:$0xf]
    %s1846 = scalar_lea.vmem %s10, 64
    %v1847 = vld [vmem:[%s1846] sm:$0xf]
    %v1848 = vld [vmem:[%s1846 + $0x4] sm:$0xf]
    %v1849 = vld [vmem:[%s1846 + $0x8] sm:$0xf]
    %v1850 = vld [vmem:[%s1846 + $0xc] sm:$0xf]
    %v1855 = vunpack.c.l.b16 %v1847
    %v1856 = vunpack.c.l.b16 %v1848
    %v1857 = vunpack.c.l.b16 %v1849
    %v1858 = vunpack.c.l.b16 %v1850
    %v1859 = vpack.c.b16 %v1856, %v1855
    %v1860 = vpack.c.b16 %v1858, %v1857
    %v1864 = vsel %vm109, %v1837, 0
    %v1867 = vsel %vm109, %v1838, 0
    %1869 = vmatprep.subr.bf16.mxu0 0
    %1870 = vmatpush1.bf16.msra.mxu0 %v1859
    %1871 = vmatprep.subr.bf16.mxu0 0
    %1872 = vmatpush1.bf16.msra.mxu0 %v1860
    %1873 = vmatprep.subr.bf16.mxu0 0
    %1874 = vmatpush1.bf16.msra.mxu0 0
    %1875 = vmatprep.subr.bf16.mxu0 0
    %1876 = vmatpush1.bf16.msra.mxu0 0
    %1877 = vmatprep.subr.bf16.mxu0 0
    %1878 = vmatpush1.bf16.msra.mxu0 0
    %1879 = vmatprep.subr.bf16.mxu0 0
    %1880 = vmatpush1.bf16.msra.mxu0 0
    %1881 = vmatprep.subr.bf16.mxu0 0
    %1882 = vmatpush1.bf16.msra.mxu0 0
    %1883 = vmatprep.subr.bf16.mxu0 0
    %1884 = vmatpush1.bf16.msra.mxu0 0
    %1885 = vmatprep.subr.bf16.mxu0 0
    %1886 = vmatpush1.bf16.msra.mxu0 0
    %1887 = vmatprep.subr.bf16.mxu0 0
    %1888 = vmatpush1.bf16.msra.mxu0 0
    %1889 = vmatprep.subr.bf16.mxu0 0
    %1890 = vmatpush1.bf16.msra.mxu0 0
    %1891 = vmatprep.subr.bf16.mxu0 0
    %1892 = vmatpush1.bf16.msra.mxu0 0
    %1893 = vmatprep.subr.bf16.mxu0 0
    %1894 = vmatpush1.bf16.msra.mxu0 0
    %1895 = vmatprep.subr.bf16.mxu0 0
    %1896 = vmatpush1.bf16.msra.mxu0 0
    %1897 = vmatprep.subr.bf16.mxu0 0
    %1898 = vmatpush1.bf16.msra.mxu0 0
    %1899 = vmatprep.subr.bf16.mxu0 0
    %1900 = vmatpush1.bf16.msra.mxu0 0
    %1901 = vmatprep.mubr.bf16.mxu0 0
    %1902 = vmatmul.mubr.bf16.gmra.mrb[0].mxu0 %v1864
    %v1903 = vpop.f32.mrb[0].mxu0
    %v1904 = vadd.f32 0.0, %v1903
    %v1905 = vpop.f32.mrb[0].mxu0
    %v1906 = vpop.f32.mrb[0].mxu0
    %v1907 = vadd.f32 0.0, %v1906
    %v1908 = vpop.f32.mrb[0].mxu0
    %1909 = vmatprep.mubr.bf16.mxu0 0
    %1910 = vmatmul.mubr.bf16.gmra.mrb[0].mxu0 %v1867
    %v1911 = vpop.f32.mrb[0].mxu0
    %v1912 = vadd.f32 0.0, %v1911
    %v1913 = vpop.f32.mrb[0].mxu0
    %v1914 = vpop.f32.mrb[0].mxu0
    %v1915 = vadd.f32 0.0, %v1914
    %v1916 = vpop.f32.mrb[0].mxu0
    %1917 = vdwg.mxu0
    %v1922 = vunpack.c.l.b16 %v1842
    %v1923 = vunpack.c.l.b16 %v1843
    %v1924 = vunpack.c.l.b16 %v1844
    %v1925 = vunpack.c.l.b16 %v1845
    %v1926 = vpack.c.b16 %v1923, %v1922
    %v1927 = vpack.c.b16 %v1925, %v1924
    %v1931 = vsel %vm109, %v1835, 0
    %v1934 = vsel %vm109, %v1836, 0
    %1936 = vmatprep.subr.bf16.mxu0 0
    %1937 = vmatpush1.bf16.msra.mxu0 %v1926
    %1938 = vmatprep.subr.bf16.mxu0 0
    %1939 = vmatpush1.bf16.msra.mxu0 %v1927
    %1940 = vmatprep.subr.bf16.mxu0 0
    %1941 = vmatpush1.bf16.msra.mxu0 0
    %1942 = vmatprep.subr.bf16.mxu0 0
    %1943 = vmatpush1.bf16.msra.mxu0 0
    %1944 = vmatprep.subr.bf16.mxu0 0
    %1945 = vmatpush1.bf16.msra.mxu0 0
    %1946 = vmatprep.subr.bf16.mxu0 0
    %1947 = vmatpush1.bf16.msra.mxu0 0
    %1948 = vmatprep.subr.bf16.mxu0 0
    %1949 = vmatpush1.bf16.msra.mxu0 0
    %1950 = vmatprep.subr.bf16.mxu0 0
    %1951 = vmatpush1.bf16.msra.mxu0 0
    %1952 = vmatprep.subr.bf16.mxu0 0
    %1953 = vmatpush1.bf16.msra.mxu0 0
    %1954 = vmatprep.subr.bf16.mxu0 0
    %1955 = vmatpush1.bf16.msra.mxu0 0
    %1956 = vmatprep.subr.bf16.mxu0 0
    %1957 = vmatpush1.bf16.msra.mxu0 0
    %1958 = vmatprep.subr.bf16.mxu0 0
    %1959 = vmatpush1.bf16.msra.mxu0 0
    %1960 = vmatprep.subr.bf16.mxu0 0
    %1961 = vmatpush1.bf16.msra.mxu0 0
    %1962 = vmatprep.subr.bf16.mxu0 0
    %1963 = vmatpush1.bf16.msra.mxu0 0
    %1964 = vmatprep.subr.bf16.mxu0 0
    %1965 = vmatpush1.bf16.msra.mxu0 0
    %1966 = vmatprep.subr.bf16.mxu0 0
    %1967 = vmatpush1.bf16.msra.mxu0 0
    %1968 = vmatprep.mubr.bf16.mxu0 0
    %1969 = vmatmul.mubr.bf16.gmra.mrb[0].mxu0 %v1931
    %v1970 = vpop.f32.mrb[0].mxu0
    %v1971 = vadd.f32 %v1904, %v1970
    %v1972 = vpop.f32.mrb[0].mxu0
    %v1973 = vpop.f32.mrb[0].mxu0
    %v1974 = vadd.f32 %v1907, %v1973
    %v1975 = vpop.f32.mrb[0].mxu0
    %1976 = vmatprep.mubr.bf16.mxu0 0
    %1977 = vmatmul.mubr.bf16.gmra.mrb[0].mxu0 %v1934
    %v1978 = vpop.f32.mrb[0].mxu0
    %v1979 = vadd.f32 %v1912, %v1978
    %v1980 = vpop.f32.mrb[0].mxu0
    %v1981 = vpop.f32.mrb[0].mxu0
    %v1982 = vadd.f32 %v1915, %v1981
    %v1983 = vpop.f32.mrb[0].mxu0
    %1984 = vdwg.mxu0
    %s1985 = scalar_lea.vmem %s10, 80
    %v1986 = vld [vmem:[%s1985] sm:$0xf]
    %v1987 = vld [vmem:[%s1985 + $0x4] sm:$0xf]
    %v1988 = vld [vmem:[%s1985 + $0x8] sm:$0xf]
    %v1989 = vld [vmem:[%s1985 + $0xc] sm:$0xf]
    %v1994 = vunpack.c.l.b16 %v1986
    %v1995 = vunpack.c.l.b16 %v1987
    %v1996 = vunpack.c.l.b16 %v1988
    %v1997 = vunpack.c.l.b16 %v1989
    %v1998 = vpack.c.b16 %v1995, %v1994
    %v1999 = vpack.c.b16 %v1997, %v1996
    %v2003 = vsel %vm109, %v1839, 0
    %v2006 = vsel %vm109, %v1840, 0
    %2008 = vmatprep.subr.bf16.mxu0 0
    %2009 = vmatpush1.bf16.msra.mxu0 %v1998
    %2010 = vmatprep.subr.bf16.mxu0 0
    %2011 = vmatpush1.bf16.msra.mxu0 %v1999
    %2012 = vmatprep.subr.bf16.mxu0 0
    %2013 = vmatpush1.bf16.msra.mxu0 0
    %2014 = vmatprep.subr.bf16.mxu0 0
    %2015 = vmatpush1.bf16.msra.mxu0 0
    %2016 = vmatprep.subr.bf16.mxu0 0
    %2017 = vmatpush1.bf16.msra.mxu0 0
    %2018 = vmatprep.subr.bf16.mxu0 0
    %2019 = vmatpush1.bf16.msra.mxu0 0
    %2020 = vmatprep.subr.bf16.mxu0 0
    %2021 = vmatpush1.bf16.msra.mxu0 0
    %2022 = vmatprep.subr.bf16.mxu0 0
    %2023 = vmatpush1.bf16.msra.mxu0 0
    %2024 = vmatprep.subr.bf16.mxu0 0
    %2025 = vmatpush1.bf16.msra.mxu0 0
    %2026 = vmatprep.subr.bf16.mxu0 0
    %2027 = vmatpush1.bf16.msra.mxu0 0
    %2028 = vmatprep.subr.bf16.mxu0 0
    %2029 = vmatpush1.bf16.msra.mxu0 0
    %2030 = vmatprep.subr.bf16.mxu0 0
    %2031 = vmatpush1.bf16.msra.mxu0 0
    %2032 = vmatprep.subr.bf16.mxu0 0
    %2033 = vmatpush1.bf16.msra.mxu0 0
    %2034 = vmatprep.subr.bf16.mxu0 0
    %2035 = vmatpush1.bf16.msra.mxu0 0
    %2036 = vmatprep.subr.bf16.mxu0 0
    %2037 = vmatpush1.bf16.msra.mxu0 0
    %2038 = vmatprep.subr.bf16.mxu0 0
    %2039 = vmatpush1.bf16.msra.mxu0 0
    %2040 = vmatprep.mubr.bf16.mxu0 0
    %2041 = vmatmul.mubr.bf16.gmra.mrb[0].mxu0 %v2003
    %v2042 = vpop.f32.mrb[0].mxu0
    %v2043 = vadd.f32 0.0, %v2042
    %v2044 = vpop.f32.mrb[0].mxu0
    %v2045 = vpop.f32.mrb[0].mxu0
    %v2046 = vadd.f32 0.0, %v2045
    %v2047 = vpop.f32.mrb[0].mxu0
    %2048 = vmatprep.mubr.bf16.mxu0 0
    %2049 = vmatmul.mubr.bf16.gmra.mrb[0].mxu0 %v2006
    %v2050 = vpop.f32.mrb[0].mxu0
    %v2051 = vadd.f32 0.0, %v2050
    %v2052 = vpop.f32.mrb[0].mxu0
    %v2053 = vpop.f32.mrb[0].mxu0
    %v2054 = vadd.f32 0.0, %v2053
    %v2055 = vpop.f32.mrb[0].mxu0
    %2056 = vdwg.mxu0
    %v2057 = vadd.f32 %v1971, %v2043
    %v2058 = vadd.f32 %v1974, %v2046
    %v2059 = vadd.f32 %v1979, %v2051
    %v2060 = vadd.f32 %v1982, %v2054
    %v2061 = vlaneseq
    %v2062 = vshrl.u32 %v2061, 7
    %v2063 = vsub.s32 1, %v2062
    %v2064 = vrot.slane %v1118, %v2063
    %v2065 = vadd.f32 %v2057, %v2064
    %v2066 = vadd.f32 %v2058, %v2064
    %v2067 = vadd.f32 %v2059, %v2064
    %v2068 = vadd.f32 %v2060, %v2064
    %vm2069 = vcmp.ge.f32.partialorder %v2065, 0.0
    %vm2070 = vcmp.ge.f32.partialorder %v2066, 0.0
    %vm2071 = vcmp.ge.f32.partialorder %v2067, 0.0
    %vm2072 = vcmp.ge.f32.partialorder %v2068, 0.0
    %v2073 = vmul.f32 %v2065, 0.01
    %v2074 = vmul.f32 %v2066, 0.01
    %v2075 = vmul.f32 %v2067, 0.01
    %v2076 = vmul.f32 %v2068, 0.01
    %v2077 = vsel %vm2069, %v2065, %v2073
    %v2078 = vsel %vm2070, %v2066, %v2074
    %v2079 = vsel %vm2071, %v2067, %v2075
    %v2080 = vsel %vm2072, %v2068, %v2076
    %v2081 = vld [vmem:[%s6] sm:$0xf]
    %v2082 = vld [vmem:[%s6 + $0x4] sm:$0xf]
    %v2083 = vld [vmem:[%s6 + $0x8] sm:$0xf]
    %v2084 = vld [vmem:[%s6 + $0xc] sm:$0xf]
    %v2085 = vld [vmem:[%s6 + $0x10] sm:$0xf]
    %v2086 = vld [vmem:[%s6 + $0x14] sm:$0xf]
    %v2087 = vpack.c.bf16 %v2078, %v2077
    %v2088 = vpack.c.bf16 %v2080, %v2079
    %v2095 = vunpack.c.l.b16 %v2081
    %v2096 = vunpack.c.l.b16 %v2082
    %v2097 = vunpack.c.l.b16 %v2083
    %v2098 = vunpack.c.l.b16 %v2084
    %v2099 = vunpack.c.l.b16 %v2085
    %v2100 = vunpack.c.l.b16 %v2086
    %v2101 = vpack.c.b16 %v2096, %v2095
    %v2102 = vpack.c.b16 %v2098, %v2097
    %v2103 = vpack.c.b16 %v2100, %v2099
    %v2105 = vsel %vm109, %v2101, 0
    %v2108 = vsel %vm109, %v2102, 0
    %v2111 = vsel %vm109, %v2103, 0
    %2113 = vmatprep.subr.bf16.mxu0 0
    %2114 = vmatpush1.bf16.msra.mxu0 %v2087
    %2115 = vmatprep.subr.bf16.mxu0 0
    %2116 = vmatpush1.bf16.msra.mxu0 %v2088
    %2117 = vmatprep.subr.bf16.mxu0 0
    %2118 = vmatpush1.bf16.msra.mxu0 0
    %2119 = vmatprep.subr.bf16.mxu0 0
    %2120 = vmatpush1.bf16.msra.mxu0 0
    %2121 = vmatprep.subr.bf16.mxu0 0
    %2122 = vmatpush1.bf16.msra.mxu0 0
    %2123 = vmatprep.subr.bf16.mxu0 0
    %2124 = vmatpush1.bf16.msra.mxu0 0
    %2125 = vmatprep.subr.bf16.mxu0 0
    %2126 = vmatpush1.bf16.msra.mxu0 0
    %2127 = vmatprep.subr.bf16.mxu0 0
    %2128 = vmatpush1.bf16.msra.mxu0 0
    %2129 = vmatprep.subr.bf16.mxu0 0
    %2130 = vmatpush1.bf16.msra.mxu0 0
    %2131 = vmatprep.subr.bf16.mxu0 0
    %2132 = vmatpush1.bf16.msra.mxu0 0
    %2133 = vmatprep.subr.bf16.mxu0 0
    %2134 = vmatpush1.bf16.msra.mxu0 0
    %2135 = vmatprep.subr.bf16.mxu0 0
    %2136 = vmatpush1.bf16.msra.mxu0 0
    %2137 = vmatprep.subr.bf16.mxu0 0
    %2138 = vmatpush1.bf16.msra.mxu0 0
    %2139 = vmatprep.subr.bf16.mxu0 0
    %2140 = vmatpush1.bf16.msra.mxu0 0
    %2141 = vmatprep.subr.bf16.mxu0 0
    %2142 = vmatpush1.bf16.msra.mxu0 0
    %2143 = vmatprep.subr.bf16.mxu0 0
    %2144 = vmatpush1.bf16.msra.mxu0 0
    %2145 = vmatprep.mubr.bf16.mxu0 0
    %2146 = vmatmul.mubr.bf16.gmra.mrb[0].mxu0 %v2105
    %v2147 = vpop.f32.mrb[0].mxu0
    %v2148 = vadd.f32 0.0, %v2147
    %v2149 = vpop.f32.mrb[0].mxu0
    %v2150 = vpop.f32.mrb[0].mxu0
    %v2151 = vadd.f32 0.0, %v2150
    %v2152 = vpop.f32.mrb[0].mxu0
    %2153 = vmatprep.mubr.bf16.mxu0 0
    %2154 = vmatmul.mubr.bf16.gmra.mrb[0].mxu0 %v2108
    %v2155 = vpop.f32.mrb[0].mxu0
    %v2156 = vadd.f32 0.0, %v2155
    %v2157 = vpop.f32.mrb[0].mxu0
    %v2158 = vpop.f32.mrb[0].mxu0
    %v2159 = vadd.f32 0.0, %v2158
    %v2160 = vpop.f32.mrb[0].mxu0
    %2161 = vmatprep.mubr.bf16.mxu0 0
    %2162 = vmatmul.mubr.bf16.gmra.mrb[0].mxu0 %v2111
    %v2163 = vpop.f32.mrb[0].mxu0
    %v2164 = vadd.f32 0.0, %v2163
    %v2165 = vpop.f32.mrb[0].mxu0
    %v2166 = vpop.f32.mrb[0].mxu0
    %v2167 = vadd.f32 0.0, %v2166
    %v2168 = vpop.f32.mrb[0].mxu0
    %2169 = vdwg.mxu0
    %v2170 = vpack.c.bf16 %v2151, %v2148
    %v2171 = vpack.c.bf16 %v2159, %v2156
    %v2172 = vpack.c.bf16 %v2167, %v2164
    %s2173 = scalar_lea.vmem %s10, 96
    %v2174 = vld [vmem:[%s2173] sm:$0xf]
    %v2175 = vld [vmem:[%s2173 + $0x4] sm:$0xf]
    %v2176 = vld [vmem:[%s2173 + $0x8] sm:$0xf]
    %v2177 = vld [vmem:[%s2173 + $0xc] sm:$0xf]
    %s2178 = scalar_lea.vmem %s10, 112
    %v2179 = vld [vmem:[%s2178] sm:$0xf]
    %v2180 = vld [vmem:[%s2178 + $0x4] sm:$0xf]
    %v2181 = vld [vmem:[%s2178 + $0x8] sm:$0xf]
    %v2182 = vld [vmem:[%s2178 + $0xc] sm:$0xf]
    %v2187 = vunpack.c.l.b16 %v2179
    %v2188 = vunpack.c.l.b16 %v2180
    %v2189 = vunpack.c.l.b16 %v2181
    %v2190 = vunpack.c.l.b16 %v2182
    %v2191 = vpack.c.b16 %v2188, %v2187
    %v2192 = vpack.c.b16 %v2190, %v2189
    %v2196 = vsel %vm109, %v2171, 0
    %2198 = vmatprep.subr.bf16.mxu0 0
    %2199 = vmatpush1.bf16.msra.mxu0 %v2191
    %2200 = vmatprep.subr.bf16.mxu0 0
    %2201 = vmatpush1.bf16.msra.mxu0 %v2192
    %2202 = vmatprep.subr.bf16.mxu0 0
    %2203 = vmatpush1.bf16.msra.mxu0 0
    %2204 = vmatprep.subr.bf16.mxu0 0
    %2205 = vmatpush1.bf16.msra.mxu0 0
    %2206 = vmatprep.subr.bf16.mxu0 0
    %2207 = vmatpush1.bf16.msra.mxu0 0
    %2208 = vmatprep.subr.bf16.mxu0 0
    %2209 = vmatpush1.bf16.msra.mxu0 0
    %2210 = vmatprep.subr.bf16.mxu0 0
    %2211 = vmatpush1.bf16.msra.mxu0 0
    %2212 = vmatprep.subr.bf16.mxu0 0
    %2213 = vmatpush1.bf16.msra.mxu0 0
    %2214 = vmatprep.subr.bf16.mxu0 0
    %2215 = vmatpush1.bf16.msra.mxu0 0
    %2216 = vmatprep.subr.bf16.mxu0 0
    %2217 = vmatpush1.bf16.msra.mxu0 0
    %2218 = vmatprep.subr.bf16.mxu0 0
    %2219 = vmatpush1.bf16.msra.mxu0 0
    %2220 = vmatprep.subr.bf16.mxu0 0
    %2221 = vmatpush1.bf16.msra.mxu0 0
    %2222 = vmatprep.subr.bf16.mxu0 0
    %2223 = vmatpush1.bf16.msra.mxu0 0
    %2224 = vmatprep.subr.bf16.mxu0 0
    %2225 = vmatpush1.bf16.msra.mxu0 0
    %2226 = vmatprep.subr.bf16.mxu0 0
    %2227 = vmatpush1.bf16.msra.mxu0 0
    %2228 = vmatprep.subr.bf16.mxu0 0
    %2229 = vmatpush1.bf16.msra.mxu0 0
    %2230 = vmatprep.mubr.bf16.mxu0 0
    %2231 = vmatmul.mubr.bf16.gmra.mrb[0].mxu0 %v2196
    %v2232 = vpop.f32.mrb[0].mxu0
    %v2233 = vadd.f32 0.0, %v2232
    %v2234 = vpop.f32.mrb[0].mxu0
    %v2235 = vpop.f32.mrb[0].mxu0
    %v2236 = vadd.f32 0.0, %v2235
    %v2237 = vpop.f32.mrb[0].mxu0
    %2238 = vdwg.mxu0
    %v2243 = vunpack.c.l.b16 %v2174
    %v2244 = vunpack.c.l.b16 %v2175
    %v2245 = vunpack.c.l.b16 %v2176
    %v2246 = vunpack.c.l.b16 %v2177
    %v2247 = vpack.c.b16 %v2244, %v2243
    %v2248 = vpack.c.b16 %v2246, %v2245
    %v2252 = vsel %vm109, %v2170, 0
    %2254 = vmatprep.subr.bf16.mxu0 0
    %2255 = vmatpush1.bf16.msra.mxu0 %v2247
    %2256 = vmatprep.subr.bf16.mxu0 0
    %2257 = vmatpush1.bf16.msra.mxu0 %v2248
    %2258 = vmatprep.subr.bf16.mxu0 0
    %2259 = vmatpush1.bf16.msra.mxu0 0
    %2260 = vmatprep.subr.bf16.mxu0 0
    %2261 = vmatpush1.bf16.msra.mxu0 0
    %2262 = vmatprep.subr.bf16.mxu0 0
    %2263 = vmatpush1.bf16.msra.mxu0 0
    %2264 = vmatprep.subr.bf16.mxu0 0
    %2265 = vmatpush1.bf16.msra.mxu0 0
    %2266 = vmatprep.subr.bf16.mxu0 0
    %2267 = vmatpush1.bf16.msra.mxu0 0
    %2268 = vmatprep.subr.bf16.mxu0 0
    %2269 = vmatpush1.bf16.msra.mxu0 0
    %2270 = vmatprep.subr.bf16.mxu0 0
    %2271 = vmatpush1.bf16.msra.mxu0 0
    %2272 = vmatprep.subr.bf16.mxu0 0
    %2273 = vmatpush1.bf16.msra.mxu0 0
    %2274 = vmatprep.subr.bf16.mxu0 0
    %2275 = vmatpush1.bf16.msra.mxu0 0
    %2276 = vmatprep.subr.bf16.mxu0 0
    %2277 = vmatpush1.bf16.msra.mxu0 0
    %2278 = vmatprep.subr.bf16.mxu0 0
    %2279 = vmatpush1.bf16.msra.mxu0 0
    %2280 = vmatprep.subr.bf16.mxu0 0
    %2281 = vmatpush1.bf16.msra.mxu0 0
    %2282 = vmatprep.subr.bf16.mxu0 0
    %2283 = vmatpush1.bf16.msra.mxu0 0
    %2284 = vmatprep.subr.bf16.mxu0 0
    %2285 = vmatpush1.bf16.msra.mxu0 0
    %2286 = vmatprep.mubr.bf16.mxu0 0
    %2287 = vmatmul.mubr.bf16.gmra.mrb[0].mxu0 %v2252
    %v2288 = vpop.f32.mrb[0].mxu0
    %v2289 = vadd.f32 %v2233, %v2288
    %v2290 = vpop.f32.mrb[0].mxu0
    %v2291 = vpop.f32.mrb[0].mxu0
    %v2292 = vadd.f32 %v2236, %v2291
    %v2293 = vpop.f32.mrb[0].mxu0
    %2294 = vdwg.mxu0
    %s2295 = scalar_lea.vmem %s10, 128
    %v2296 = vld [vmem:[%s2295] sm:$0xf]
    %v2297 = vld [vmem:[%s2295 + $0x4] sm:$0xf]
    %v2298 = vld [vmem:[%s2295 + $0x8] sm:$0xf]
    %v2299 = vld [vmem:[%s2295 + $0xc] sm:$0xf]
    %v2304 = vunpack.c.l.b16 %v2296
    %v2305 = vunpack.c.l.b16 %v2297
    %v2306 = vunpack.c.l.b16 %v2298
    %v2307 = vunpack.c.l.b16 %v2299
    %v2308 = vpack.c.b16 %v2305, %v2304
    %v2309 = vpack.c.b16 %v2307, %v2306
    %v2313 = vsel %vm109, %v2172, 0
    %2315 = vmatprep.subr.bf16.mxu0 0
    %2316 = vmatpush1.bf16.msra.mxu0 %v2308
    %2317 = vmatprep.subr.bf16.mxu0 0
    %2318 = vmatpush1.bf16.msra.mxu0 %v2309
    %2319 = vmatprep.subr.bf16.mxu0 0
    %2320 = vmatpush1.bf16.msra.mxu0 0
    %2321 = vmatprep.subr.bf16.mxu0 0
    %2322 = vmatpush1.bf16.msra.mxu0 0
    %2323 = vmatprep.subr.bf16.mxu0 0
    %2324 = vmatpush1.bf16.msra.mxu0 0
    %2325 = vmatprep.subr.bf16.mxu0 0
    %2326 = vmatpush1.bf16.msra.mxu0 0
    %2327 = vmatprep.subr.bf16.mxu0 0
    %2328 = vmatpush1.bf16.msra.mxu0 0
    %2329 = vmatprep.subr.bf16.mxu0 0
    %2330 = vmatpush1.bf16.msra.mxu0 0
    %2331 = vmatprep.subr.bf16.mxu0 0
    %2332 = vmatpush1.bf16.msra.mxu0 0
    %2333 = vmatprep.subr.bf16.mxu0 0
    %2334 = vmatpush1.bf16.msra.mxu0 0
    %2335 = vmatprep.subr.bf16.mxu0 0
    %2336 = vmatpush1.bf16.msra.mxu0 0
    %2337 = vmatprep.subr.bf16.mxu0 0
    %2338 = vmatpush1.bf16.msra.mxu0 0
    %2339 = vmatprep.subr.bf16.mxu0 0
    %2340 = vmatpush1.bf16.msra.mxu0 0
    %2341 = vmatprep.subr.bf16.mxu0 0
    %2342 = vmatpush1.bf16.msra.mxu0 0
    %2343 = vmatprep.subr.bf16.mxu0 0
    %2344 = vmatpush1.bf16.msra.mxu0 0
    %2345 = vmatprep.subr.bf16.mxu0 0
    %2346 = vmatpush1.bf16.msra.mxu0 0
    %2347 = vmatprep.mubr.bf16.mxu0 0
    %2348 = vmatmul.mubr.bf16.gmra.mrb[0].mxu0 %v2313
    %v2349 = vpop.f32.mrb[0].mxu0
    %v2350 = vadd.f32 0.0, %v2349
    %v2351 = vpop.f32.mrb[0].mxu0
    %v2352 = vpop.f32.mrb[0].mxu0
    %v2353 = vadd.f32 0.0, %v2352
    %v2354 = vpop.f32.mrb[0].mxu0
    %2355 = vdwg.mxu0
    %v2356 = vadd.f32 %v2289, %v2350
    %v2357 = vadd.f32 %v2292, %v2353
    %v2358 = vlaneseq
    %v2359 = vshrl.u32 %v2358, 7
    %v2360 = vsub.s32 2, %v2359
    %v2361 = vrot.slane %v1118, %v2360
    %v2362 = vadd.f32 %v2356, %v2361
    %v2363 = vadd.f32 %v2357, %v2361
    %vm2364 = vcmp.ge.f32.partialorder %v2362, 0.0
    %vm2365 = vcmp.ge.f32.partialorder %v2363, 0.0
    %v2366 = vmul.f32 %v2362, 0.01
    %v2367 = vmul.f32 %v2363, 0.01
    %v2368 = vsel %vm2364, %v2362, %v2366
    %v2369 = vsel %vm2365, %v2363, %v2367
    %v2370 = vld [vmem:[%s7] sm:$0xf]
    %v2371 = vld [vmem:[%s7 + $0x4] sm:$0xf]
    %v2372 = vld [vmem:[%s7 + $0x8] sm:$0xf]
    %v2373 = vpack.c.bf16 %v2369, %v2368
    %v2377 = vunpack.c.l.b16 %v2370
    %v2378 = vunpack.c.l.b16 %v2371
    %v2379 = vunpack.c.l.b16 %v2372
    %v2380 = vpack.c.b16 %v2378, %v2377
    %v2381 = vpack.c.b16 %v2379, %v2379
    %vm2382 = vcmask 130048
    %v2384 = vsel %vm2382, %v2380, 0
    %v2387 = vsel %vm2382, %v2381, 0
    %2389 = vmatprep.subr.bf16.mxu0 0
    %2390 = vmatpush1.bf16.msra.mxu0 %v2373
    %2391 = vmatprep.subr.bf16.mxu0 0
    %2392 = vmatpush1.bf16.msra.mxu0 0
    %2393 = vmatprep.subr.bf16.mxu0 0
    %2394 = vmatpush1.bf16.msra.mxu0 0
    %2395 = vmatprep.subr.bf16.mxu0 0
    %2396 = vmatpush1.bf16.msra.mxu0 0
    %2397 = vmatprep.subr.bf16.mxu0 0
    %2398 = vmatpush1.bf16.msra.mxu0 0
    %2399 = vmatprep.subr.bf16.mxu0 0
    %2400 = vmatpush1.bf16.msra.mxu0 0
    %2401 = vmatprep.subr.bf16.mxu0 0
    %2402 = vmatpush1.bf16.msra.mxu0 0
    %2403 = vmatprep.subr.bf16.mxu0 0
    %2404 = vmatpush1.bf16.msra.mxu0 0
    %2405 = vmatprep.subr.bf16.mxu0 0
    %2406 = vmatpush1.bf16.msra.mxu0 0
    %2407 = vmatprep.subr.bf16.mxu0 0
    %2408 = vmatpush1.bf16.msra.mxu0 0
    %2409 = vmatprep.subr.bf16.mxu0 0
    %2410 = vmatpush1.bf16.msra.mxu0 0
    %2411 = vmatprep.subr.bf16.mxu0 0
    %2412 = vmatpush1.bf16.msra.mxu0 0
    %2413 = vmatprep.subr.bf16.mxu0 0
    %2414 = vmatpush1.bf16.msra.mxu0 0
    %2415 = vmatprep.subr.bf16.mxu0 0
    %2416 = vmatpush1.bf16.msra.mxu0 0
    %2417 = vmatprep.subr.bf16.mxu0 0
    %2418 = vmatpush1.bf16.msra.mxu0 0
    %2419 = vmatprep.subr.bf16.mxu0 0
    %2420 = vmatpush1.bf16.msra.mxu0 0
    %2421 = vmatprep.mubr.bf16.mxu0 0
    %2422 = vmatmul.mubr.bf16.gmra.mrb[0].mxu0 %v2384
    %v2423 = vpop.f32.mrb[0].mxu0
    %v2424 = vadd.f32 0.0, %v2423
    %v2425 = vpop.f32.mrb[0].mxu0
    %v2426 = vpop.f32.mrb[0].mxu0
    %v2427 = vadd.f32 0.0, %v2426
    %v2428 = vpop.f32.mrb[0].mxu0
    %2429 = vmatprep.mubr.bf16.mxu0 0
    %2430 = vmatmul.mubr.bf16.gmra.mrb[0].mxu0 %v2387
    %v2431 = vpop.f32.mrb[0].mxu0
    %v2432 = vadd.f32 0.0, %v2431
    %v2433 = vpop.f32.mrb[0].mxu0
    %v2434 = vpop.f32.mrb[0].mxu0
    %v2435 = vpop.f32.mrb[0].mxu0
    %2436 = vdwg.mxu0
    %v2437 = vpack.c.bf16 %v2427, %v2424
    %v2438 = vpack.c.bf16 %v2432, %v2432
    %s2439 = scalar_lea.vmem %s10, 144
    %v2440 = vld [vmem:[%s2439] sm:$0xf]
    %v2441 = vld [vmem:[%s2439 + $0x4] sm:$0xf]
    %v2442 = vld [vmem:[%s2439 + $0x8] sm:$0xf]
    %v2443 = vld [vmem:[%s2439 + $0xc] sm:$0xf]
    %s2444 = scalar_lea.vmem %s10, 160
    %v2445 = vld [vmem:[%s2444] sm:$0xf]
    %v2446 = vld [vmem:[%s2444 + $0x4] sm:$0xf]
    %v2447 = vld [vmem:[%s2444 + $0x8] sm:$0xf]
    %v2448 = vld [vmem:[%s2444 + $0xc] sm:$0xf]
    %v2450 = vrot.slane %v2437, 4
    %v2455 = vunpack.c.l.b16 %v2445
    %v2456 = vunpack.c.l.b16 %v2446
    %v2457 = vunpack.c.l.b16 %v2447
    %v2458 = vunpack.c.l.b16 %v2448
    %v2459 = vpack.c.b16 %v2456, %v2455
    %v2460 = vpack.c.b16 %v2458, %v2457
    %v2464 = vsel %vm109, %v2450, 0
    %2466 = vmatprep.subr.bf16.mxu0 0
    %2467 = vmatpush1.bf16.msra.mxu0 %v2459
    %2468 = vmatprep.subr.bf16.mxu0 0
    %2469 = vmatpush1.bf16.msra.mxu0 %v2460
    %2470 = vmatprep.subr.bf16.mxu0 0
    %2471 = vmatpush1.bf16.msra.mxu0 0
    %2472 = vmatprep.subr.bf16.mxu0 0
    %2473 = vmatpush1.bf16.msra.mxu0 0
    %2474 = vmatprep.subr.bf16.mxu0 0
    %2475 = vmatpush1.bf16.msra.mxu0 0
    %2476 = vmatprep.subr.bf16.mxu0 0
    %2477 = vmatpush1.bf16.msra.mxu0 0
    %2478 = vmatprep.subr.bf16.mxu0 0
    %2479 = vmatpush1.bf16.msra.mxu0 0
    %2480 = vmatprep.subr.bf16.mxu0 0
    %2481 = vmatpush1.bf16.msra.mxu0 0
    %2482 = vmatprep.subr.bf16.mxu0 0
    %2483 = vmatpush1.bf16.msra.mxu0 0
    %2484 = vmatprep.subr.bf16.mxu0 0
    %2485 = vmatpush1.bf16.msra.mxu0 0
    %2486 = vmatprep.subr.bf16.mxu0 0
    %2487 = vmatpush1.bf16.msra.mxu0 0
    %2488 = vmatprep.subr.bf16.mxu0 0
    %2489 = vmatpush1.bf16.msra.mxu0 0
    %2490 = vmatprep.subr.bf16.mxu0 0
    %2491 = vmatpush1.bf16.msra.mxu0 0
    %2492 = vmatprep.subr.bf16.mxu0 0
    %2493 = vmatpush1.bf16.msra.mxu0 0
    %2494 = vmatprep.subr.bf16.mxu0 0
    %2495 = vmatpush1.bf16.msra.mxu0 0
    %2496 = vmatprep.subr.bf16.mxu0 0
    %2497 = vmatpush1.bf16.msra.mxu0 0
    %2498 = vmatprep.mubr.bf16.mxu0 0
    %2499 = vmatmul.mubr.bf16.gmra.mrb[0].mxu0 %v2464
    %v2500 = vpop.f32.mrb[0].mxu0
    %v2501 = vadd.f32 0.0, %v2500
    %v2502 = vpop.f32.mrb[0].mxu0
    %v2503 = vpop.f32.mrb[0].mxu0
    %v2504 = vpop.f32.mrb[0].mxu0
    %2505 = vdwg.mxu0
    %v2510 = vunpack.c.l.b16 %v2440
    %v2511 = vunpack.c.l.b16 %v2441
    %v2512 = vunpack.c.l.b16 %v2442
    %v2513 = vunpack.c.l.b16 %v2443
    %v2514 = vpack.c.b16 %v2511, %v2510
    %v2515 = vpack.c.b16 %v2513, %v2512
    %v2519 = vsel %vm109, %v2437, 0
    %2521 = vmatprep.subr.bf16.mxu0 0
    %2522 = vmatpush1.bf16.msra.mxu0 %v2514
    %2523 = vmatprep.subr.bf16.mxu0 0
    %2524 = vmatpush1.bf16.msra.mxu0 %v2515
    %2525 = vmatprep.subr.bf16.mxu0 0
    %2526 = vmatpush1.bf16.msra.mxu0 0
    %2527 = vmatprep.subr.bf16.mxu0 0
    %2528 = vmatpush1.bf16.msra.mxu0 0
    %2529 = vmatprep.subr.bf16.mxu0 0
    %2530 = vmatpush1.bf16.msra.mxu0 0
    %2531 = vmatprep.subr.bf16.mxu0 0
    %2532 = vmatpush1.bf16.msra.mxu0 0
    %2533 = vmatprep.subr.bf16.mxu0 0
    %2534 = vmatpush1.bf16.msra.mxu0 0
    %2535 = vmatprep.subr.bf16.mxu0 0
    %2536 = vmatpush1.bf16.msra.mxu0 0
    %2537 = vmatprep.subr.bf16.mxu0 0
    %2538 = vmatpush1.bf16.msra.mxu0 0
    %2539 = vmatprep.subr.bf16.mxu0 0
    %2540 = vmatpush1.bf16.msra.mxu0 0
    %2541 = vmatprep.subr.bf16.mxu0 0
    %2542 = vmatpush1.bf16.msra.mxu0 0
    %2543 = vmatprep.subr.bf16.mxu0 0
    %2544 = vmatpush1.bf16.msra.mxu0 0
    %2545 = vmatprep.subr.bf16.mxu0 0
    %2546 = vmatpush1.bf16.msra.mxu0 0
    %2547 = vmatprep.subr.bf16.mxu0 0
    %2548 = vmatpush1.bf16.msra.mxu0 0
    %2549 = vmatprep.subr.bf16.mxu0 0
    %2550 = vmatpush1.bf16.msra.mxu0 0
    %2551 = vmatprep.subr.bf16.mxu0 0
    %2552 = vmatpush1.bf16.msra.mxu0 0
    %2553 = vmatprep.mubr.bf16.mxu0 0
    %2554 = vmatmul.mubr.bf16.gmra.mrb[0].mxu0 %v2519
    %v2555 = vpop.f32.mrb[0].mxu0
    %v2556 = vadd.f32 %v2501, %v2555
    %v2557 = vpop.f32.mrb[0].mxu0
    %v2558 = vpop.f32.mrb[0].mxu0
    %v2559 = vpop.f32.mrb[0].mxu0
    %2560 = vdwg.mxu0
    %s2561 = scalar_lea.vmem %s10, 176
    %v2562 = vld [vmem:[%s2561] sm:$0xf]
    %v2563 = vld [vmem:[%s2561 + $0x4] sm:$0xf]
    %v2564 = vld [vmem:[%s2561 + $0x8] sm:$0xf]
    %v2565 = vld [vmem:[%s2561 + $0xc] sm:$0xf]
    %v2570 = vunpack.c.l.b16 %v2562
    %v2571 = vunpack.c.l.b16 %v2563
    %v2572 = vunpack.c.l.b16 %v2564
    %v2573 = vunpack.c.l.b16 %v2565
    %v2574 = vpack.c.b16 %v2571, %v2570
    %v2575 = vpack.c.b16 %v2573, %v2572
    %v2579 = vsel %vm109, %v2438, 0
    %2581 = vmatprep.subr.bf16.mxu0 0
    %2582 = vmatpush1.bf16.msra.mxu0 %v2574
    %2583 = vmatprep.subr.bf16.mxu0 0
    %2584 = vmatpush1.bf16.msra.mxu0 %v2575
    %2585 = vmatprep.subr.bf16.mxu0 0
    %2586 = vmatpush1.bf16.msra.mxu0 0
    %2587 = vmatprep.subr.bf16.mxu0 0
    %2588 = vmatpush1.bf16.msra.mxu0 0
    %2589 = vmatprep.subr.bf16.mxu0 0
    %2590 = vmatpush1.bf16.msra.mxu0 0
    %2591 = vmatprep.subr.bf16.mxu0 0
    %2592 = vmatpush1.bf16.msra.mxu0 0
    %2593 = vmatprep.subr.bf16.mxu0 0
    %2594 = vmatpush1.bf16.msra.mxu0 0
    %2595 = vmatprep.subr.bf16.mxu0 0
    %2596 = vmatpush1.bf16.msra.mxu0 0
    %2597 = vmatprep.subr.bf16.mxu0 0
    %2598 = vmatpush1.bf16.msra.mxu0 0
    %2599 = vmatprep.subr.bf16.mxu0 0
    %2600 = vmatpush1.bf16.msra.mxu0 0
    %2601 = vmatprep.subr.bf16.mxu0 0
    %2602 = vmatpush1.bf16.msra.mxu0 0
    %2603 = vmatprep.subr.bf16.mxu0 0
    %2604 = vmatpush1.bf16.msra.mxu0 0
    %2605 = vmatprep.subr.bf16.mxu0 0
    %2606 = vmatpush1.bf16.msra.mxu0 0
    %2607 = vmatprep.subr.bf16.mxu0 0
    %2608 = vmatpush1.bf16.msra.mxu0 0
    %2609 = vmatprep.subr.bf16.mxu0 0
    %2610 = vmatpush1.bf16.msra.mxu0 0
    %2611 = vmatprep.subr.bf16.mxu0 0
    %2612 = vmatpush1.bf16.msra.mxu0 0
    %2613 = vmatprep.mubr.bf16.mxu0 0
    %2614 = vmatmul.mubr.bf16.gmra.mrb[0].mxu0 %v2579
    %v2615 = vpop.f32.mrb[0].mxu0
    %v2616 = vadd.f32 0.0, %v2615
    %v2617 = vpop.f32.mrb[0].mxu0
    %v2618 = vpop.f32.mrb[0].mxu0
    %v2619 = vpop.f32.mrb[0].mxu0
    %2620 = vdwg.mxu0
    %v2621 = vadd.f32 %v2556, %v2616
    %v2622 = vlaneseq
    %v2623 = vshrl.u32 %v2622, 7
    %v2624 = vsub.s32 3, %v2623
    %v2625 = vrot.slane %v1118, %v2624
    %v2626 = vadd.f32 %v2621, %v2625
    %vm2627 = vcmp.ge.f32.partialorder %v2626, 0.0
    %v2628 = vmul.f32 %v2626, 0.01
    %v2629 = vsel %vm2627, %v2626, %v2628
    %v2630 = vld [vmem:[%s8] sm:$0xf]
    %v2631 = vld [vmem:[%s8 + $0x4] sm:$0x3]
    %v2632 = vpack.c.bf16 %v2629, %v2629
    %v2635 = vunpack.c.l.b16 %v2630
    %v2636 = vunpack.c.l.b16 %v2631
    %v2637 = vpack.c.b16 %v2636, %v2635
    %vm2638 = vcmask 64512
    %v2640 = vsel %vm2638, %v2637, 0
    %vm2642 = vcmask 1043456
    %v2644 = vsel %vm2642, %v2632, 0
    %2646 = vmatprep.subr.bf16.mxu0 0
    %2647 = vmatpush1.bf16.msra.mxu0 %v2644
    %2648 = vmatprep.subr.bf16.mxu0 0
    %2649 = vmatpush1.bf16.msra.mxu0 0
    %2650 = vmatprep.subr.bf16.mxu0 0
    %2651 = vmatpush1.bf16.msra.mxu0 0
    %2652 = vmatprep.subr.bf16.mxu0 0
    %2653 = vmatpush1.bf16.msra.mxu0 0
    %2654 = vmatprep.subr.bf16.mxu0 0
    %2655 = vmatpush1.bf16.msra.mxu0 0
    %2656 = vmatprep.subr.bf16.mxu0 0
    %2657 = vmatpush1.bf16.msra.mxu0 0
    %2658 = vmatprep.subr.bf16.mxu0 0
    %2659 = vmatpush1.bf16.msra.mxu0 0
    %2660 = vmatprep.subr.bf16.mxu0 0
    %2661 = vmatpush1.bf16.msra.mxu0 0
    %2662 = vmatprep.subr.bf16.mxu0 0
    %2663 = vmatpush1.bf16.msra.mxu0 0
    %2664 = vmatprep.subr.bf16.mxu0 0
    %2665 = vmatpush1.bf16.msra.mxu0 0
    %2666 = vmatprep.subr.bf16.mxu0 0
    %2667 = vmatpush1.bf16.msra.mxu0 0
    %2668 = vmatprep.subr.bf16.mxu0 0
    %2669 = vmatpush1.bf16.msra.mxu0 0
    %2670 = vmatprep.subr.bf16.mxu0 0
    %2671 = vmatpush1.bf16.msra.mxu0 0
    %2672 = vmatprep.subr.bf16.mxu0 0
    %2673 = vmatpush1.bf16.msra.mxu0 0
    %2674 = vmatprep.subr.bf16.mxu0 0
    %2675 = vmatpush1.bf16.msra.mxu0 0
    %2676 = vmatprep.subr.bf16.mxu0 0
    %2677 = vmatpush1.bf16.msra.mxu0 0
    %2678 = vmatprep.mubr.bf16.mxu0 0
    %2679 = vmatmul.mubr.bf16.gmra.mrb[0].mxu0 %v2640
    %v2680 = vpop.f32.mrb[0].mxu0
    %v2681 = vadd.f32 0.0, %v2680
    %v2682 = vpop.f32.mrb[0].mxu0
    %v2683 = vpop.f32.mrb[0].mxu0
    %v2684 = vadd.f32 0.0, %v2683
    %v2685 = vpop.f32.mrb[0].mxu0
    %2686 = vdwg.mxu0
    %v2687 = vpack.c.bf16 %v2684, %v2681
    %s2688 = scalar_lea.vmem %s10, 192
    %v2689 = vld [vmem:[%s2688] sm:$0xf]
    %v2690 = vld [vmem:[%s2688 + $0x4] sm:$0xf]
    %v2691 = vld [vmem:[%s2688 + $0x8] sm:$0xf]
    %v2692 = vld [vmem:[%s2688 + $0xc] sm:$0xf]
    %s2693 = scalar_lea.vmem %s10, 208
    %v2694 = vld [vmem:[%s2693] sm:$0xf]
    %v2695 = vld [vmem:[%s2693 + $0x4] sm:$0xf]
    %v2696 = vld [vmem:[%s2693 + $0x8] sm:$0xf]
    %v2697 = vld [vmem:[%s2693 + $0xc] sm:$0xf]
    %v2699 = vrot.slane %v2687, 2
    %v2704 = vunpack.c.l.b16 %v2694
    %v2705 = vunpack.c.l.b16 %v2695
    %v2706 = vunpack.c.l.b16 %v2696
    %v2707 = vunpack.c.l.b16 %v2697
    %v2708 = vpack.c.b16 %v2705, %v2704
    %v2709 = vpack.c.b16 %v2707, %v2706
    %v2713 = vsel %vm109, %v2699, 0
    %2715 = vmatprep.subr.bf16.mxu0 0
    %2716 = vmatpush1.bf16.msra.mxu0 %v2708
    %2717 = vmatprep.subr.bf16.mxu0 0
    %2718 = vmatpush1.bf16.msra.mxu0 %v2709
    %2719 = vmatprep.subr.bf16.mxu0 0
    %2720 = vmatpush1.bf16.msra.mxu0 0
    %2721 = vmatprep.subr.bf16.mxu0 0
    %2722 = vmatpush1.bf16.msra.mxu0 0
    %2723 = vmatprep.subr.bf16.mxu0 0
    %2724 = vmatpush1.bf16.msra.mxu0 0
    %2725 = vmatprep.subr.bf16.mxu0 0
    %2726 = vmatpush1.bf16.msra.mxu0 0
    %2727 = vmatprep.subr.bf16.mxu0 0
    %2728 = vmatpush1.bf16.msra.mxu0 0
    %2729 = vmatprep.subr.bf16.mxu0 0
    %2730 = vmatpush1.bf16.msra.mxu0 0
    %2731 = vmatprep.subr.bf16.mxu0 0
    %2732 = vmatpush1.bf16.msra.mxu0 0
    %2733 = vmatprep.subr.bf16.mxu0 0
    %2734 = vmatpush1.bf16.msra.mxu0 0
    %2735 = vmatprep.subr.bf16.mxu0 0
    %2736 = vmatpush1.bf16.msra.mxu0 0
    %2737 = vmatprep.subr.bf16.mxu0 0
    %2738 = vmatpush1.bf16.msra.mxu0 0
    %2739 = vmatprep.subr.bf16.mxu0 0
    %2740 = vmatpush1.bf16.msra.mxu0 0
    %2741 = vmatprep.subr.bf16.mxu0 0
    %2742 = vmatpush1.bf16.msra.mxu0 0
    %2743 = vmatprep.subr.bf16.mxu0 0
    %2744 = vmatpush1.bf16.msra.mxu0 0
    %2745 = vmatprep.subr.bf16.mxu0 0
    %2746 = vmatpush1.bf16.msra.mxu0 0
    %2747 = vmatprep.mubr.bf16.mxu0 0
    %2748 = vmatmul.mubr.bf16.gmra.mrb[0].mxu0 %v2713
    %v2749 = vpop.f32.mrb[0].mxu0
    %v2750 = vadd.f32 0.0, %v2749
    %v2751 = vpop.f32.mrb[0].mxu0
    %v2752 = vpop.f32.mrb[0].mxu0
    %v2753 = vpop.f32.mrb[0].mxu0
    %2754 = vdwg.mxu0
    %v2759 = vunpack.c.l.b16 %v2689
    %v2760 = vunpack.c.l.b16 %v2690
    %v2761 = vunpack.c.l.b16 %v2691
    %v2762 = vunpack.c.l.b16 %v2692
    %v2763 = vpack.c.b16 %v2760, %v2759
    %v2764 = vpack.c.b16 %v2762, %v2761
    %v2768 = vsel %vm109, %v2687, 0
    %2770 = vmatprep.subr.bf16.mxu0 0
    %2771 = vmatpush1.bf16.msra.mxu0 %v2763
    %2772 = vmatprep.subr.bf16.mxu0 0
    %2773 = vmatpush1.bf16.msra.mxu0 %v2764
    %2774 = vmatprep.subr.bf16.mxu0 0
    %2775 = vmatpush1.bf16.msra.mxu0 0
    %2776 = vmatprep.subr.bf16.mxu0 0
    %2777 = vmatpush1.bf16.msra.mxu0 0
    %2778 = vmatprep.subr.bf16.mxu0 0
    %2779 = vmatpush1.bf16.msra.mxu0 0
    %2780 = vmatprep.subr.bf16.mxu0 0
    %2781 = vmatpush1.bf16.msra.mxu0 0
    %2782 = vmatprep.subr.bf16.mxu0 0
    %2783 = vmatpush1.bf16.msra.mxu0 0
    %2784 = vmatprep.subr.bf16.mxu0 0
    %2785 = vmatpush1.bf16.msra.mxu0 0
    %2786 = vmatprep.subr.bf16.mxu0 0
    %2787 = vmatpush1.bf16.msra.mxu0 0
    %2788 = vmatprep.subr.bf16.mxu0 0
    %2789 = vmatpush1.bf16.msra.mxu0 0
    %2790 = vmatprep.subr.bf16.mxu0 0
    %2791 = vmatpush1.bf16.msra.mxu0 0
    %2792 = vmatprep.subr.bf16.mxu0 0
    %2793 = vmatpush1.bf16.msra.mxu0 0
    %2794 = vmatprep.subr.bf16.mxu0 0
    %2795 = vmatpush1.bf16.msra.mxu0 0
    %2796 = vmatprep.subr.bf16.mxu0 0
    %2797 = vmatpush1.bf16.msra.mxu0 0
    %2798 = vmatprep.subr.bf16.mxu0 0
    %2799 = vmatpush1.bf16.msra.mxu0 0
    %2800 = vmatprep.subr.bf16.mxu0 0
    %2801 = vmatpush1.bf16.msra.mxu0 0
    %2802 = vmatprep.mubr.bf16.mxu0 0
    %2803 = vmatmul.mubr.bf16.gmra.mrb[0].mxu0 %v2768
    %v2804 = vpop.f32.mrb[0].mxu0
    %v2805 = vadd.f32 %v2750, %v2804
    %v2806 = vpop.f32.mrb[0].mxu0
    %v2807 = vpop.f32.mrb[0].mxu0
    %v2808 = vpop.f32.mrb[0].mxu0
    %2809 = vdwg.mxu0
    %s2810 = scalar_lea.vmem %s10, 224
    %v2811 = vld [vmem:[%s2810] sm:$0xf]
    %v2812 = vld [vmem:[%s2810 + $0x4] sm:$0xf]
    %v2813 = vld [vmem:[%s2810 + $0x8] sm:$0xf]
    %v2814 = vld [vmem:[%s2810 + $0xc] sm:$0xf]
    %v2815 = vrot.slane %v2687, 4
    %v2820 = vunpack.c.l.b16 %v2811
    %v2821 = vunpack.c.l.b16 %v2812
    %v2822 = vunpack.c.l.b16 %v2813
    %v2823 = vunpack.c.l.b16 %v2814
    %v2824 = vpack.c.b16 %v2821, %v2820
    %v2825 = vpack.c.b16 %v2823, %v2822
    %v2829 = vsel %vm109, %v2815, 0
    %2831 = vmatprep.subr.bf16.mxu0 0
    %2832 = vmatpush1.bf16.msra.mxu0 %v2824
    %2833 = vmatprep.subr.bf16.mxu0 0
    %2834 = vmatpush1.bf16.msra.mxu0 %v2825
    %2835 = vmatprep.subr.bf16.mxu0 0
    %2836 = vmatpush1.bf16.msra.mxu0 0
    %2837 = vmatprep.subr.bf16.mxu0 0
    %2838 = vmatpush1.bf16.msra.mxu0 0
    %2839 = vmatprep.subr.bf16.mxu0 0
    %2840 = vmatpush1.bf16.msra.mxu0 0
    %2841 = vmatprep.subr.bf16.mxu0 0
    %2842 = vmatpush1.bf16.msra.mxu0 0
    %2843 = vmatprep.subr.bf16.mxu0 0
    %2844 = vmatpush1.bf16.msra.mxu0 0
    %2845 = vmatprep.subr.bf16.mxu0 0
    %2846 = vmatpush1.bf16.msra.mxu0 0
    %2847 = vmatprep.subr.bf16.mxu0 0
    %2848 = vmatpush1.bf16.msra.mxu0 0
    %2849 = vmatprep.subr.bf16.mxu0 0
    %2850 = vmatpush1.bf16.msra.mxu0 0
    %2851 = vmatprep.subr.bf16.mxu0 0
    %2852 = vmatpush1.bf16.msra.mxu0 0
    %2853 = vmatprep.subr.bf16.mxu0 0
    %2854 = vmatpush1.bf16.msra.mxu0 0
    %2855 = vmatprep.subr.bf16.mxu0 0
    %2856 = vmatpush1.bf16.msra.mxu0 0
    %2857 = vmatprep.subr.bf16.mxu0 0
    %2858 = vmatpush1.bf16.msra.mxu0 0
    %2859 = vmatprep.subr.bf16.mxu0 0
    %2860 = vmatpush1.bf16.msra.mxu0 0
    %2861 = vmatprep.subr.bf16.mxu0 0
    %2862 = vmatpush1.bf16.msra.mxu0 0
    %2863 = vmatprep.mubr.bf16.mxu0 0
    %2864 = vmatmul.mubr.bf16.gmra.mrb[0].mxu0 %v2829
    %v2865 = vpop.f32.mrb[0].mxu0
    %v2866 = vadd.f32 0.0, %v2865
    %v2867 = vpop.f32.mrb[0].mxu0
    %v2868 = vpop.f32.mrb[0].mxu0
    %v2869 = vpop.f32.mrb[0].mxu0
    %2870 = vdwg.mxu0
    %v2871 = vadd.f32 %v2805, %v2866
    %v2872 = vlaneseq
    %v2873 = vshrl.u32 %v2872, 7
    %v2874 = vsub.s32 4, %v2873
    %v2875 = vrot.slane %v1118, %v2874
    %v2876 = vadd.f32 %v2871, %v2875
    %vm2877 = vcmp.ge.f32.partialorder %v2876, 0.0
    %v2878 = vmul.f32 %v2876, 0.01
    %v2879 = vsel %vm2877, %v2876, %v2878
    %v2880 = vld [vmem:[%s9] sm:$0xf]
    %v2881 = vpack.c.bf16 %v2879, %v2879
    %vm2882 = vcmask 31744
    %v2884 = vsel %vm2882, %v2880, 0
    %vm2886 = vcmask 1041408
    %v2888 = vsel %vm2886, %v2881, 0
    %2890 = vmatprep.subr.bf16.mxu0 0
    %2891 = vmatpush1.bf16.msra.mxu0 %v2888
    %2892 = vmatprep.subr.bf16.mxu0 0
    %2893 = vmatpush1.bf16.msra.mxu0 0
    %2894 = vmatprep.subr.bf16.mxu0 0
    %2895 = vmatpush1.bf16.msra.mxu0 0
    %2896 = vmatprep.subr.bf16.mxu0 0
    %2897 = vmatpush1.bf16.msra.mxu0 0
    %2898 = vmatprep.subr.bf16.mxu0 0
    %2899 = vmatpush1.bf16.msra.mxu0 0
    %2900 = vmatprep.subr.bf16.mxu0 0
    %2901 = vmatpush1.bf16.msra.mxu0 0
    %2902 = vmatprep.subr.bf16.mxu0 0
    %2903 = vmatpush1.bf16.msra.mxu0 0
    %2904 = vmatprep.subr.bf16.mxu0 0
    %2905 = vmatpush1.bf16.msra.mxu0 0
    %2906 = vmatprep.subr.bf16.mxu0 0
    %2907 = vmatpush1.bf16.msra.mxu0 0
    %2908 = vmatprep.subr.bf16.mxu0 0
    %2909 = vmatpush1.bf16.msra.mxu0 0
    %2910 = vmatprep.subr.bf16.mxu0 0
    %2911 = vmatpush1.bf16.msra.mxu0 0
    %2912 = vmatprep.subr.bf16.mxu0 0
    %2913 = vmatpush1.bf16.msra.mxu0 0
    %2914 = vmatprep.subr.bf16.mxu0 0
    %2915 = vmatpush1.bf16.msra.mxu0 0
    %2916 = vmatprep.subr.bf16.mxu0 0
    %2917 = vmatpush1.bf16.msra.mxu0 0
    %2918 = vmatprep.subr.bf16.mxu0 0
    %2919 = vmatpush1.bf16.msra.mxu0 0
    %2920 = vmatprep.subr.bf16.mxu0 0
    %2921 = vmatpush1.bf16.msra.mxu0 0
    %2922 = vmatprep.mubr.bf16.mxu0 0
    %2923 = vmatmul.mubr.bf16.gmra.mrb[0].mxu0 %v2884
    %v2924 = vpop.f32.mrb[0].mxu0
    %v2925 = vadd.f32 0.0, %v2924
    %v2926 = vpop.f32.mrb[0].mxu0
    %v2927 = vpop.f32.mrb[0].mxu0
    %v2928 = vpop.f32.mrb[0].mxu0
    %2929 = vdwg.mxu0
    %v2930 = vpack.c.bf16 %v2925, %v2925
    %s2931 = scalar_lea.vmem %s10, 240
    %v2932 = vld [vmem:[%s2931] sm:$0xf]
    %v2933 = vld [vmem:[%s2931 + $0x4] sm:$0xf]
    %v2934 = vld [vmem:[%s2931 + $0x8] sm:$0xf]
    %v2935 = vld [vmem:[%s2931 + $0xc] sm:$0xf]
    %s2936 = scalar_lea.vmem %s10, 256
    %v2937 = vld [vmem:[%s2936] sm:$0xf]
    %v2938 = vld [vmem:[%s2936 + $0x4] sm:$0xf]
    %v2939 = vld [vmem:[%s2936 + $0x8] sm:$0xf]
    %v2940 = vld [vmem:[%s2936 + $0xc] sm:$0xf]
    %v2942 = vrot.slane %v2930, 1
    %v2947 = vunpack.c.l.b16 %v2937
    %v2948 = vunpack.c.l.b16 %v2938
    %v2949 = vunpack.c.l.b16 %v2939
    %v2950 = vunpack.c.l.b16 %v2940
    %v2951 = vpack.c.b16 %v2948, %v2947
    %v2952 = vpack.c.b16 %v2950, %v2949
    %v2956 = vsel %vm109, %v2942, 0
    %2958 = vmatprep.subr.bf16.mxu0 0
    %2959 = vmatpush1.bf16.msra.mxu0 %v2951
    %2960 = vmatprep.subr.bf16.mxu0 0
    %2961 = vmatpush1.bf16.msra.mxu0 %v2952
    %2962 = vmatprep.subr.bf16.mxu0 0
    %2963 = vmatpush1.bf16.msra.mxu0 0
    %2964 = vmatprep.subr.bf16.mxu0 0
    %2965 = vmatpush1.bf16.msra.mxu0 0
    %2966 = vmatprep.subr.bf16.mxu0 0
    %2967 = vmatpush1.bf16.msra.mxu0 0
    %2968 = vmatprep.subr.bf16.mxu0 0
    %2969 = vmatpush1.bf16.msra.mxu0 0
    %2970 = vmatprep.subr.bf16.mxu0 0
    %2971 = vmatpush1.bf16.msra.mxu0 0
    %2972 = vmatprep.subr.bf16.mxu0 0
    %2973 = vmatpush1.bf16.msra.mxu0 0
    %2974 = vmatprep.subr.bf16.mxu0 0
    %2975 = vmatpush1.bf16.msra.mxu0 0
    %2976 = vmatprep.subr.bf16.mxu0 0
    %2977 = vmatpush1.bf16.msra.mxu0 0
    %2978 = vmatprep.subr.bf16.mxu0 0
    %2979 = vmatpush1.bf16.msra.mxu0 0
    %2980 = vmatprep.subr.bf16.mxu0 0
    %2981 = vmatpush1.bf16.msra.mxu0 0
    %2982 = vmatprep.subr.bf16.mxu0 0
    %2983 = vmatpush1.bf16.msra.mxu0 0
    %2984 = vmatprep.subr.bf16.mxu0 0
    %2985 = vmatpush1.bf16.msra.mxu0 0
    %2986 = vmatprep.subr.bf16.mxu0 0
    %2987 = vmatpush1.bf16.msra.mxu0 0
    %2988 = vmatprep.subr.bf16.mxu0 0
    %2989 = vmatpush1.bf16.msra.mxu0 0
    %2990 = vmatprep.mubr.bf16.mxu0 0
    %2991 = vmatmul.mubr.bf16.gmra.mrb[0].mxu0 %v2956
    %v2992 = vpop.f32.mrb[0].mxu0
    %v2993 = vadd.f32 0.0, %v2992
    %v2994 = vpop.f32.mrb[0].mxu0
    %v2995 = vpop.f32.mrb[0].mxu0
    %v2996 = vpop.f32.mrb[0].mxu0
    %2997 = vdwg.mxu0
    %v3002 = vunpack.c.l.b16 %v2932
    %v3003 = vunpack.c.l.b16 %v2933
    %v3004 = vunpack.c.l.b16 %v2934
    %v3005 = vunpack.c.l.b16 %v2935
    %v3006 = vpack.c.b16 %v3003, %v3002
    %v3007 = vpack.c.b16 %v3005, %v3004
    %v3011 = vsel %vm109, %v2930, 0
    %3013 = vmatprep.subr.bf16.mxu0 0
    %3014 = vmatpush1.bf16.msra.mxu0 %v3006
    %3015 = vmatprep.subr.bf16.mxu0 0
    %3016 = vmatpush1.bf16.msra.mxu0 %v3007
    %3017 = vmatprep.subr.bf16.mxu0 0
    %3018 = vmatpush1.bf16.msra.mxu0 0
    %3019 = vmatprep.subr.bf16.mxu0 0
    %3020 = vmatpush1.bf16.msra.mxu0 0
    %3021 = vmatprep.subr.bf16.mxu0 0
    %3022 = vmatpush1.bf16.msra.mxu0 0
    %3023 = vmatprep.subr.bf16.mxu0 0
    %3024 = vmatpush1.bf16.msra.mxu0 0
    %3025 = vmatprep.subr.bf16.mxu0 0
    %3026 = vmatpush1.bf16.msra.mxu0 0
    %3027 = vmatprep.subr.bf16.mxu0 0
    %3028 = vmatpush1.bf16.msra.mxu0 0
    %3029 = vmatprep.subr.bf16.mxu0 0
    %3030 = vmatpush1.bf16.msra.mxu0 0
    %3031 = vmatprep.subr.bf16.mxu0 0
    %3032 = vmatpush1.bf16.msra.mxu0 0
    %3033 = vmatprep.subr.bf16.mxu0 0
    %3034 = vmatpush1.bf16.msra.mxu0 0
    %3035 = vmatprep.subr.bf16.mxu0 0
    %3036 = vmatpush1.bf16.msra.mxu0 0
    %3037 = vmatprep.subr.bf16.mxu0 0
    %3038 = vmatpush1.bf16.msra.mxu0 0
    %3039 = vmatprep.subr.bf16.mxu0 0
    %3040 = vmatpush1.bf16.msra.mxu0 0
    %3041 = vmatprep.subr.bf16.mxu0 0
    %3042 = vmatpush1.bf16.msra.mxu0 0
    %3043 = vmatprep.subr.bf16.mxu0 0
    %3044 = vmatpush1.bf16.msra.mxu0 0
    %3045 = vmatprep.mubr.bf16.mxu0 0
    %3046 = vmatmul.mubr.bf16.gmra.mrb[0].mxu0 %v3011
    %v3047 = vpop.f32.mrb[0].mxu0
    %v3048 = vadd.f32 %v2993, %v3047
    %v3049 = vpop.f32.mrb[0].mxu0
    %v3050 = vpop.f32.mrb[0].mxu0
    %v3051 = vpop.f32.mrb[0].mxu0
    %3052 = vdwg.mxu0
    %s3053 = scalar_lea.vmem %s10, 272
    %v3054 = vld [vmem:[%s3053] sm:$0xf]
    %v3055 = vld [vmem:[%s3053 + $0x4] sm:$0xf]
    %v3056 = vld [vmem:[%s3053 + $0x8] sm:$0xf]
    %v3057 = vld [vmem:[%s3053 + $0xc] sm:$0xf]
    %v3058 = vrot.slane %v2930, 2
    %v3063 = vunpack.c.l.b16 %v3054
    %v3064 = vunpack.c.l.b16 %v3055
    %v3065 = vunpack.c.l.b16 %v3056
    %v3066 = vunpack.c.l.b16 %v3057
    %v3067 = vpack.c.b16 %v3064, %v3063
    %v3068 = vpack.c.b16 %v3066, %v3065
    %v3072 = vsel %vm109, %v3058, 0
    %3074 = vmatprep.subr.bf16.mxu0 0
    %3075 = vmatpush1.bf16.msra.mxu0 %v3067
    %3076 = vmatprep.subr.bf16.mxu0 0
    %3077 = vmatpush1.bf16.msra.mxu0 %v3068
    %3078 = vmatprep.subr.bf16.mxu0 0
    %3079 = vmatpush1.bf16.msra.mxu0 0
    %3080 = vmatprep.subr.bf16.mxu0 0
    %3081 = vmatpush1.bf16.msra.mxu0 0
    %3082 = vmatprep.subr.bf16.mxu0 0
    %3083 = vmatpush1.bf16.msra.mxu0 0
    %3084 = vmatprep.subr.bf16.mxu0 0
    %3085 = vmatpush1.bf16.msra.mxu0 0
    %3086 = vmatprep.subr.bf16.mxu0 0
    %3087 = vmatpush1.bf16.msra.mxu0 0
    %3088 = vmatprep.subr.bf16.mxu0 0
    %3089 = vmatpush1.bf16.msra.mxu0 0
    %3090 = vmatprep.subr.bf16.mxu0 0
    %3091 = vmatpush1.bf16.msra.mxu0 0
    %3092 = vmatprep.subr.bf16.mxu0 0
    %3093 = vmatpush1.bf16.msra.mxu0 0
    %3094 = vmatprep.subr.bf16.mxu0 0
    %3095 = vmatpush1.bf16.msra.mxu0 0
    %3096 = vmatprep.subr.bf16.mxu0 0
    %3097 = vmatpush1.bf16.msra.mxu0 0
    %3098 = vmatprep.subr.bf16.mxu0 0
    %3099 = vmatpush1.bf16.msra.mxu0 0
    %3100 = vmatprep.subr.bf16.mxu0 0
    %3101 = vmatpush1.bf16.msra.mxu0 0
    %3102 = vmatprep.subr.bf16.mxu0 0
    %3103 = vmatpush1.bf16.msra.mxu0 0
    %3104 = vmatprep.subr.bf16.mxu0 0
    %3105 = vmatpush1.bf16.msra.mxu0 0
    %3106 = vmatprep.mubr.bf16.mxu0 0
    %3107 = vmatmul.mubr.bf16.gmra.mrb[0].mxu0 %v3072
    %v3108 = vpop.f32.mrb[0].mxu0
    %v3109 = vadd.f32 0.0, %v3108
    %v3110 = vpop.f32.mrb[0].mxu0
    %v3111 = vpop.f32.mrb[0].mxu0
    %v3112 = vpop.f32.mrb[0].mxu0
    %3113 = vdwg.mxu0
    %v3114 = vadd.f32 %v3048, %v3109
    %s3115 = scalar_lea.vmem %s10, 288
    %v3116 = vld [vmem:[%s3115] sm:$0xf]
    %v3117 = vld [vmem:[%s3115 + $0x4] sm:$0xf]
    %v3118 = vld [vmem:[%s3115 + $0x8] sm:$0xf]
    %v3119 = vld [vmem:[%s3115 + $0xc] sm:$0xf]
    %v3120 = vrot.slane %v2930, 3
    %v3125 = vunpack.c.l.b16 %v3116
    %v3126 = vunpack.c.l.b16 %v3117
    %v3127 = vunpack.c.l.b16 %v3118
    %v3128 = vunpack.c.l.b16 %v3119
    %v3129 = vpack.c.b16 %v3126, %v3125
    %v3130 = vpack.c.b16 %v3128, %v3127
    %v3134 = vsel %vm109, %v3120, 0
    %3136 = vmatprep.subr.bf16.mxu0 0
    %3137 = vmatpush1.bf16.msra.mxu0 %v3129
    %3138 = vmatprep.subr.bf16.mxu0 0
    %3139 = vmatpush1.bf16.msra.mxu0 %v3130
    %3140 = vmatprep.subr.bf16.mxu0 0
    %3141 = vmatpush1.bf16.msra.mxu0 0
    %3142 = vmatprep.subr.bf16.mxu0 0
    %3143 = vmatpush1.bf16.msra.mxu0 0
    %3144 = vmatprep.subr.bf16.mxu0 0
    %3145 = vmatpush1.bf16.msra.mxu0 0
    %3146 = vmatprep.subr.bf16.mxu0 0
    %3147 = vmatpush1.bf16.msra.mxu0 0
    %3148 = vmatprep.subr.bf16.mxu0 0
    %3149 = vmatpush1.bf16.msra.mxu0 0
    %3150 = vmatprep.subr.bf16.mxu0 0
    %3151 = vmatpush1.bf16.msra.mxu0 0
    %3152 = vmatprep.subr.bf16.mxu0 0
    %3153 = vmatpush1.bf16.msra.mxu0 0
    %3154 = vmatprep.subr.bf16.mxu0 0
    %3155 = vmatpush1.bf16.msra.mxu0 0
    %3156 = vmatprep.subr.bf16.mxu0 0
    %3157 = vmatpush1.bf16.msra.mxu0 0
    %3158 = vmatprep.subr.bf16.mxu0 0
    %3159 = vmatpush1.bf16.msra.mxu0 0
    %3160 = vmatprep.subr.bf16.mxu0 0
    %3161 = vmatpush1.bf16.msra.mxu0 0
    %3162 = vmatprep.subr.bf16.mxu0 0
    %3163 = vmatpush1.bf16.msra.mxu0 0
    %3164 = vmatprep.subr.bf16.mxu0 0
    %3165 = vmatpush1.bf16.msra.mxu0 0
    %3166 = vmatprep.subr.bf16.mxu0 0
    %3167 = vmatpush1.bf16.msra.mxu0 0
    %3168 = vmatprep.mubr.bf16.mxu0 0
    %3169 = vmatmul.mubr.bf16.gmra.mrb[0].mxu0 %v3134
    %v3170 = vpop.f32.mrb[0].mxu0
    %v3171 = vadd.f32 0.0, %v3170
    %v3172 = vpop.f32.mrb[0].mxu0
    %v3173 = vpop.f32.mrb[0].mxu0
    %v3174 = vpop.f32.mrb[0].mxu0
    %3175 = vdwg.mxu0
    %v3176 = vadd.f32 %v3114, %v3171
    %v3177 = vlaneseq
    %v3178 = vshrl.u32 %v3177, 7
    %v3179 = vsub.s32 5, %v3178
    %v3180 = vrot.slane %v1118, %v3179
    %v3181 = vadd.f32 %v3176, %v3180
    %v3182 = vld [vmem:[%s18] sm:$0xff]
    %v3183 = vld [vmem:[%s18 + $0x8] sm:$0xff]
    %v3184 = vld [vmem:[%s18 + $0x10] sm:$0xff]
    %v3185 = vld [vmem:[%s18 + $0x18] sm:$0xff]
    %v3186 = vld [vmem:[%s12] sm:$0xff]
    %v3187 = vld [vmem:[%s12 + $0x8] sm:$0xff]
    %v3188 = vld [vmem:[%s12 + $0x10] sm:$0xff]
    %v3189 = vld [vmem:[%s12 + $0x18] sm:$0xff]
    %v3190 = vld [vmem:[%s12 + $0x20] sm:$0xff]
    %v3191 = vld [vmem:[%s12 + $0x28] sm:$0xff]
    %v3192 = vld [vmem:[%s12 + $0x30] sm:$0xff]
    %v3193 = vld [vmem:[%s12 + $0x38] sm:$0xff]
    %v3194 = vpack.c.bf16 %v3181, %v3181
    %v3195 = vlaneseq
    %v3196 = vshrl.u32 %v3195, 7
    %v3197 = vsub.s32 0, %v3196
    %v3198 = vrot.slane %v3182, %v3197
    %v3199 = vlaneseq
    %v3200 = vshrl.u32 %v3199, 7
    %v3201 = vsub.s32 0, %v3200
    %v3202 = vrot.slane %v3183, %v3201
    %v3203 = vlaneseq
    %v3204 = vshrl.u32 %v3203, 7
    %v3205 = vsub.s32 0, %v3204
    %v3206 = vrot.slane %v3184, %v3205
    %v3207 = vlaneseq
    %v3208 = vshrl.u32 %v3207, 7
    %v3209 = vsub.s32 0, %v3208
    %v3210 = vrot.slane %v3185, %v3209
    %v3219 = vunpack.c.l.b16 %v3186
    %v3220 = vunpack.c.h.b16 %v3186
    %v3221 = vunpack.c.l.b16 %v3187
    %v3222 = vunpack.c.h.b16 %v3187
    %v3223 = vunpack.c.l.b16 %v3188
    %v3224 = vunpack.c.h.b16 %v3188
    %v3225 = vunpack.c.l.b16 %v3189
    %v3226 = vunpack.c.h.b16 %v3189
    %v3227 = vunpack.c.l.b16 %v3190
    %v3228 = vunpack.c.h.b16 %v3190
    %v3229 = vunpack.c.l.b16 %v3191
    %v3230 = vunpack.c.h.b16 %v3191
    %v3231 = vunpack.c.l.b16 %v3192
    %v3232 = vunpack.c.h.b16 %v3192
    %v3233 = vunpack.c.l.b16 %v3193
    %v3234 = vunpack.c.h.b16 %v3193
    %v3235 = vpack.c.b16 %v3223, %v3219
    %v3236 = vpack.c.b16 %v3224, %v3220
    %v3237 = vpack.c.b16 %v3225, %v3221
    %v3238 = vpack.c.b16 %v3226, %v3222
    %v3239 = vpack.c.b16 %v3231, %v3227
    %v3240 = vpack.c.b16 %v3232, %v3228
    %v3241 = vpack.c.b16 %v3233, %v3229
    %v3242 = vpack.c.b16 %v3234, %v3230
    %v3252 = vsel %vm109, %v3194, 0
    %3254 = vmatprep.subr.bf16.mxu0 %v3236
    %3255 = vmatpush1.bf16.msra.mxu0 %v3235
    %3256 = vmatprep.subr.bf16.mxu0 %v3240
    %3257 = vmatpush1.bf16.msra.mxu0 %v3239
    %3258 = vmatprep.subr.bf16.mxu0 0
    %3259 = vmatpush1.bf16.msra.mxu0 0
    %3260 = vmatprep.subr.bf16.mxu0 0
    %3261 = vmatpush1.bf16.msra.mxu0 0
    %3262 = vmatprep.subr.bf16.mxu0 0
    %3263 = vmatpush1.bf16.msra.mxu0 0
    %3264 = vmatprep.subr.bf16.mxu0 0
    %3265 = vmatpush1.bf16.msra.mxu0 0
    %3266 = vmatprep.subr.bf16.mxu0 0
    %3267 = vmatpush1.bf16.msra.mxu0 0
    %3268 = vmatprep.subr.bf16.mxu0 0
    %3269 = vmatpush1.bf16.msra.mxu0 0
    %3270 = vmatprep.subr.bf16.mxu0 0
    %3271 = vmatpush1.bf16.msra.mxu0 0
    %3272 = vmatprep.subr.bf16.mxu0 0
    %3273 = vmatpush1.bf16.msra.mxu0 0
    %3274 = vmatprep.subr.bf16.mxu0 0
    %3275 = vmatpush1.bf16.msra.mxu0 0
    %3276 = vmatprep.subr.bf16.mxu0 0
    %3277 = vmatpush1.bf16.msra.mxu0 0
    %3278 = vmatprep.subr.bf16.mxu0 0
    %3279 = vmatpush1.bf16.msra.mxu0 0
    %3280 = vmatprep.subr.bf16.mxu0 0
    %3281 = vmatpush1.bf16.msra.mxu0 0
    %3282 = vmatprep.subr.bf16.mxu0 0
    %3283 = vmatpush1.bf16.msra.mxu0 0
    %3284 = vmatprep.subr.bf16.mxu0 0
    %3285 = vmatpush1.bf16.msra.mxu0 0
    %3286 = vmatprep.mubr.bf16.mxu0 0
    %3287 = vmatmul.mubr.bf16.gmra.mrb[0].mxu0 %v3252
    %v3288 = vpop.f32.mrb[0].mxu0
    %v3289 = vadd.f32 %v3198, %v3288
    %v3290 = vpop.f32.mrb[0].mxu0
    %v3291 = vadd.f32 %v3202, %v3290
    %v3292 = vpop.f32.mrb[0].mxu0
    %v3293 = vpop.f32.mrb[0].mxu0
    %3294 = vdwg.mxu0
    %3295 = vmatprep.subr.bf16.mxu0 %v3238
    %3296 = vmatpush1.bf16.msra.mxu0 %v3237
    %3297 = vmatprep.subr.bf16.mxu0 %v3242
    %3298 = vmatpush1.bf16.msra.mxu0 %v3241
    %3299 = vmatprep.subr.bf16.mxu0 0
    %3300 = vmatpush1.bf16.msra.mxu0 0
    %3301 = vmatprep.subr.bf16.mxu0 0
    %3302 = vmatpush1.bf16.msra.mxu0 0
    %3303 = vmatprep.subr.bf16.mxu0 0
    %3304 = vmatpush1.bf16.msra.mxu0 0
    %3305 = vmatprep.subr.bf16.mxu0 0
    %3306 = vmatpush1.bf16.msra.mxu0 0
    %3307 = vmatprep.subr.bf16.mxu0 0
    %3308 = vmatpush1.bf16.msra.mxu0 0
    %3309 = vmatprep.subr.bf16.mxu0 0
    %3310 = vmatpush1.bf16.msra.mxu0 0
    %3311 = vmatprep.subr.bf16.mxu0 0
    %3312 = vmatpush1.bf16.msra.mxu0 0
    %3313 = vmatprep.subr.bf16.mxu0 0
    %3314 = vmatpush1.bf16.msra.mxu0 0
    %3315 = vmatprep.subr.bf16.mxu0 0
    %3316 = vmatpush1.bf16.msra.mxu0 0
    %3317 = vmatprep.subr.bf16.mxu0 0
    %3318 = vmatpush1.bf16.msra.mxu0 0
    %3319 = vmatprep.subr.bf16.mxu0 0
    %3320 = vmatpush1.bf16.msra.mxu0 0
    %3321 = vmatprep.subr.bf16.mxu0 0
    %3322 = vmatpush1.bf16.msra.mxu0 0
    %3323 = vmatprep.subr.bf16.mxu0 0
    %3324 = vmatpush1.bf16.msra.mxu0 0
    %3325 = vmatprep.subr.bf16.mxu0 0
    %3326 = vmatpush1.bf16.msra.mxu0 0
    %3327 = vmatprep.mubr.bf16.mxu0 0
    %3328 = vmatmul.mubr.bf16.gmra.mrb[0].mxu0 %v3252
    %v3329 = vpop.f32.mrb[0].mxu0
    %v3330 = vadd.f32 %v3206, %v3329
    %v3331 = vpop.f32.mrb[0].mxu0
    %v3332 = vadd.f32 %v3210, %v3331
    %v3333 = vpop.f32.mrb[0].mxu0
    %v3334 = vpop.f32.mrb[0].mxu0
    %3335 = vdwg.mxu0
    %vm3336 = vcmp.ge.f32.partialorder %v3289, 0.0
    %vm3337 = vcmp.ge.f32.partialorder %v3291, 0.0
    %vm3338 = vcmp.ge.f32.partialorder %v3330, 0.0
    %vm3339 = vcmp.ge.f32.partialorder %v3332, 0.0
    %v3340 = vmul.f32 %v3289, 0.01
    %v3341 = vmul.f32 %v3291, 0.01
    %v3342 = vmul.f32 %v3330, 0.01
    %v3343 = vmul.f32 %v3332, 0.01
    %v3344 = vsel %vm3336, %v3289, %v3340
    %v3345 = vsel %vm3337, %v3291, %v3341
    %v3346 = vsel %vm3338, %v3330, %v3342
    %v3347 = vsel %vm3339, %v3332, %v3343
    %v3348 = vld [vmem:[%s13] sm:$0xff]
    %v3349 = vld [vmem:[%s13 + $0x8] sm:$0xff]
    %v3350 = vld [vmem:[%s13 + $0x10] sm:$0xff]
    %v3351 = vld [vmem:[%s13 + $0x18] sm:$0xff]
    %v3352 = vld [vmem:[%s13 + $0x20] sm:$0xff]
    %v3353 = vld [vmem:[%s13 + $0x28] sm:$0xff]
    %v3354 = vld [vmem:[%s13 + $0x30] sm:$0xff]
    %v3355 = vld [vmem:[%s13 + $0x38] sm:$0xff]
    %v3356 = vld [vmem:[%s13 + $0x40] sm:$0xff]
    %v3357 = vld [vmem:[%s13 + $0x48] sm:$0xff]
    %v3358 = vld [vmem:[%s13 + $0x50] sm:$0xff]
    %v3359 = vld [vmem:[%s13 + $0x58] sm:$0xff]
    %v3360 = vld [vmem:[%s13 + $0x60] sm:$0xff]
    %v3361 = vld [vmem:[%s13 + $0x68] sm:$0xff]
    %v3362 = vld [vmem:[%s13 + $0x70] sm:$0xff]
    %v3363 = vld [vmem:[%s13 + $0x78] sm:$0xff]
    %v3364 = vld [vmem:[%s13 + $0x80] sm:$0xff]
    %v3365 = vld [vmem:[%s13 + $0x88] sm:$0xff]
    %v3366 = vld [vmem:[%s13 + $0x90] sm:$0xff]
    %v3367 = vld [vmem:[%s13 + $0x98] sm:$0xff]
    %v3368 = vld [vmem:[%s13 + $0xa0] sm:$0xff]
    %v3369 = vld [vmem:[%s13 + $0xa8] sm:$0xff]
    %v3370 = vld [vmem:[%s13 + $0xb0] sm:$0xff]
    %v3371 = vld [vmem:[%s13 + $0xb8] sm:$0xff]
    %v3372 = vld [vmem:[%s13 + $0xc0] sm:$0xff]
    %v3373 = vld [vmem:[%s13 + $0xc8] sm:$0xff]
    %v3374 = vld [vmem:[%s13 + $0xd0] sm:$0xff]
    %v3375 = vld [vmem:[%s13 + $0xd8] sm:$0xff]
    %v3376 = vld [vmem:[%s13 + $0xe0] sm:$0xff]
    %v3377 = vld [vmem:[%s13 + $0xe8] sm:$0xff]
    %v3378 = vld [vmem:[%s13 + $0xf0] sm:$0xff]
    %v3379 = vld [vmem:[%s13 + $0xf8] sm:$0xff]
    %v3380 = vld [vmem:[%s13 + $0x100] sm:$0xff]
    %v3381 = vld [vmem:[%s13 + $0x108] sm:$0xff]
    %v3382 = vld [vmem:[%s13 + $0x110] sm:$0xff]
    %v3383 = vld [vmem:[%s13 + $0x118] sm:$0xff]
    %v3384 = vld [vmem:[%s13 + $0x120] sm:$0xff]
    %v3385 = vld [vmem:[%s13 + $0x128] sm:$0xff]
    %v3386 = vld [vmem:[%s13 + $0x130] sm:$0xff]
    %v3387 = vld [vmem:[%s13 + $0x138] sm:$0xff]
    %v3388 = vld [vmem:[%s13 + $0x140] sm:$0xff]
    %v3389 = vld [vmem:[%s13 + $0x148] sm:$0xff]
    %v3390 = vld [vmem:[%s13 + $0x150] sm:$0xff]
    %v3391 = vld [vmem:[%s13 + $0x158] sm:$0xff]
    %v3392 = vld [vmem:[%s13 + $0x160] sm:$0xff]
    %v3393 = vld [vmem:[%s13 + $0x168] sm:$0xff]
    %v3394 = vld [vmem:[%s13 + $0x170] sm:$0xff]
    %v3395 = vld [vmem:[%s13 + $0x178] sm:$0xff]
    %v3396 = vld [vmem:[%s13 + $0x180] sm:$0xff]
    %v3397 = vld [vmem:[%s13 + $0x188] sm:$0xff]
    %v3398 = vld [vmem:[%s13 + $0x190] sm:$0xff]
    %v3399 = vld [vmem:[%s13 + $0x198] sm:$0xff]
    %v3400 = vld [vmem:[%s13 + $0x1a0] sm:$0xff]
    %v3401 = vld [vmem:[%s13 + $0x1a8] sm:$0xff]
    %v3402 = vld [vmem:[%s13 + $0x1b0] sm:$0xff]
    %v3403 = vld [vmem:[%s13 + $0x1b8] sm:$0xff]
    %v3404 = vld [vmem:[%s13 + $0x1c0] sm:$0xff]
    %v3405 = vld [vmem:[%s13 + $0x1c8] sm:$0xff]
    %v3406 = vld [vmem:[%s13 + $0x1d0] sm:$0xff]
    %v3407 = vld [vmem:[%s13 + $0x1d8] sm:$0xff]
    %v3408 = vld [vmem:[%s13 + $0x1e0] sm:$0xff]
    %v3409 = vld [vmem:[%s13 + $0x1e8] sm:$0xff]
    %v3410 = vld [vmem:[%s13 + $0x1f0] sm:$0xff]
    %v3411 = vld [vmem:[%s13 + $0x1f8] sm:$0xff]
    %v3412 = vld [vmem:[%s13 + $0x200] sm:$0xff]
    %v3413 = vld [vmem:[%s13 + $0x208] sm:$0xff]
    %v3414 = vld [vmem:[%s13 + $0x210] sm:$0xff]
    %v3415 = vld [vmem:[%s13 + $0x218] sm:$0xff]
    %v3416 = vld [vmem:[%s13 + $0x220] sm:$0xff]
    %v3417 = vld [vmem:[%s13 + $0x228] sm:$0xff]
    %v3418 = vld [vmem:[%s13 + $0x230] sm:$0xff]
    %v3419 = vld [vmem:[%s13 + $0x238] sm:$0xff]
    %v3420 = vld [vmem:[%s13 + $0x240] sm:$0xff]
    %v3421 = vld [vmem:[%s13 + $0x248] sm:$0xff]
    %v3422 = vld [vmem:[%s13 + $0x250] sm:$0xff]
    %v3423 = vld [vmem:[%s13 + $0x258] sm:$0xff]
    %v3424 = vld [vmem:[%s13 + $0x260] sm:$0xff]
    %v3425 = vld [vmem:[%s13 + $0x268] sm:$0xff]
    %v3426 = vld [vmem:[%s13 + $0x270] sm:$0xff]
    %v3427 = vld [vmem:[%s13 + $0x278] sm:$0xff]
    %v3428 = vld [vmem:[%s13 + $0x280] sm:$0xff]
    %v3429 = vld [vmem:[%s13 + $0x288] sm:$0xff]
    %v3430 = vld [vmem:[%s13 + $0x290] sm:$0xff]
    %v3431 = vld [vmem:[%s13 + $0x298] sm:$0xff]
    %v3432 = vld [vmem:[%s13 + $0x2a0] sm:$0xff]
    %v3433 = vld [vmem:[%s13 + $0x2a8] sm:$0xff]
    %v3434 = vld [vmem:[%s13 + $0x2b0] sm:$0xff]
    %v3435 = vld [vmem:[%s13 + $0x2b8] sm:$0xff]
    %v3436 = vld [vmem:[%s13 + $0x2c0] sm:$0xff]
    %v3437 = vld [vmem:[%s13 + $0x2c8] sm:$0xff]
    %v3438 = vld [vmem:[%s13 + $0x2d0] sm:$0xff]
    %v3439 = vld [vmem:[%s13 + $0x2d8] sm:$0xff]
    %v3440 = vld [vmem:[%s13 + $0x2e0] sm:$0xff]
    %v3441 = vld [vmem:[%s13 + $0x2e8] sm:$0xff]
    %v3442 = vld [vmem:[%s13 + $0x2f0] sm:$0xff]
    %v3443 = vld [vmem:[%s13 + $0x2f8] sm:$0xff]
    %v3444 = vld [vmem:[%s13 + $0x300] sm:$0xff]
    %v3445 = vld [vmem:[%s13 + $0x308] sm:$0xff]
    %v3446 = vld [vmem:[%s13 + $0x310] sm:$0xff]
    %v3447 = vld [vmem:[%s13 + $0x318] sm:$0xff]
    %v3448 = vld [vmem:[%s13 + $0x320] sm:$0xff]
    %v3449 = vld [vmem:[%s13 + $0x328] sm:$0xff]
    %v3450 = vld [vmem:[%s13 + $0x330] sm:$0xff]
    %v3451 = vld [vmem:[%s13 + $0x338] sm:$0xff]
    %v3452 = vld [vmem:[%s13 + $0x340] sm:$0xff]
    %v3453 = vld [vmem:[%s13 + $0x348] sm:$0xff]
    %v3454 = vld [vmem:[%s13 + $0x350] sm:$0xff]
    %v3455 = vld [vmem:[%s13 + $0x358] sm:$0xff]
    %v3456 = vld [vmem:[%s13 + $0x360] sm:$0xff]
    %v3457 = vld [vmem:[%s13 + $0x368] sm:$0xff]
    %v3458 = vld [vmem:[%s13 + $0x370] sm:$0xff]
    %v3459 = vld [vmem:[%s13 + $0x378] sm:$0xff]
    %v3460 = vld [vmem:[%s13 + $0x380] sm:$0xff]
    %v3461 = vld [vmem:[%s13 + $0x388] sm:$0xff]
    %v3462 = vld [vmem:[%s13 + $0x390] sm:$0xff]
    %v3463 = vld [vmem:[%s13 + $0x398] sm:$0xff]
    %v3464 = vld [vmem:[%s13 + $0x3a0] sm:$0xff]
    %v3465 = vld [vmem:[%s13 + $0x3a8] sm:$0xff]
    %v3466 = vld [vmem:[%s13 + $0x3b0] sm:$0xff]
    %v3467 = vld [vmem:[%s13 + $0x3b8] sm:$0xff]
    %v3468 = vld [vmem:[%s13 + $0x3c0] sm:$0xff]
    %v3469 = vld [vmem:[%s13 + $0x3c8] sm:$0xff]
    %v3470 = vld [vmem:[%s13 + $0x3d0] sm:$0xff]
    %v3471 = vld [vmem:[%s13 + $0x3d8] sm:$0xff]
    %v3472 = vld [vmem:[%s13 + $0x3e0] sm:$0xff]
    %v3473 = vld [vmem:[%s13 + $0x3e8] sm:$0xff]
    %v3474 = vld [vmem:[%s13 + $0x3f0] sm:$0xff]
    %v3475 = vld [vmem:[%s13 + $0x3f8] sm:$0xff]
    %v3476 = vpack.c.bf16 %v3344, %v3344
    %v3477 = vpack.c.bf16 %v3345, %v3345
    %v3478 = vpack.c.bf16 %v3346, %v3346
    %v3479 = vpack.c.bf16 %v3347, %v3347
    %v3480 = vlaneseq
    %v3481 = vshrl.u32 %v3480, 7
    %v3482 = vsub.s32 1, %v3481
    %v3483 = vrot.slane %v3182, %v3482
    %v3484 = vlaneseq
    %v3485 = vshrl.u32 %v3484, 7
    %v3486 = vsub.s32 1, %v3485
    %v3487 = vrot.slane %v3183, %v3486
    %v3488 = vlaneseq
    %v3489 = vshrl.u32 %v3488, 7
    %v3490 = vsub.s32 1, %v3489
    %v3491 = vrot.slane %v3184, %v3490
    %v3492 = vlaneseq
    %v3493 = vshrl.u32 %v3492, 7
    %v3494 = vsub.s32 1, %v3493
    %v3495 = vrot.slane %v3185, %v3494
    %v3624 = vunpack.c.l.b16 %v3348
    %v3625 = vunpack.c.h.b16 %v3348
    %v3626 = vunpack.c.l.b16 %v3349
    %v3627 = vunpack.c.h.b16 %v3349
    %v3628 = vunpack.c.l.b16 %v3350
    %v3629 = vunpack.c.h.b16 %v3350
    %v3630 = vunpack.c.l.b16 %v3351
    %v3631 = vunpack.c.h.b16 %v3351
    %v3632 = vunpack.c.l.b16 %v3352
    %v3633 = vunpack.c.h.b16 %v3352
    %v3634 = vunpack.c.l.b16 %v3353
    %v3635 = vunpack.c.h.b16 %v3353
    %v3636 = vunpack.c.l.b16 %v3354
    %v3637 = vunpack.c.h.b16 %v3354
    %v3638 = vunpack.c.l.b16 %v3355
    %v3639 = vunpack.c.h.b16 %v3355
    %v3640 = vunpack.c.l.b16 %v3356
    %v3641 = vunpack.c.h.b16 %v3356
    %v3642 = vunpack.c.l.b16 %v3357
    %v3643 = vunpack.c.h.b16 %v3357
    %v3644 = vunpack.c.l.b16 %v3358
    %v3645 = vunpack.c.h.b16 %v3358
    %v3646 = vunpack.c.l.b16 %v3359
    %v3647 = vunpack.c.h.b16 %v3359
    %v3648 = vunpack.c.l.b16 %v3360
    %v3649 = vunpack.c.h.b16 %v3360
    %v3650 = vunpack.c.l.b16 %v3361
    %v3651 = vunpack.c.h.b16 %v3361
    %v3652 = vunpack.c.l.b16 %v3362
    %v3653 = vunpack.c.h.b16 %v3362
    %v3654 = vunpack.c.l.b16 %v3363
    %v3655 = vunpack.c.h.b16 %v3363
    %v3656 = vunpack.c.l.b16 %v3364
    %v3657 = vunpack.c.h.b16 %v3364
    %v3658 = vunpack.c.l.b16 %v3365
    %v3659 = vunpack.c.h.b16 %v3365
    %v3660 = vunpack.c.l.b16 %v3366
    %v3661 = vunpack.c.h.b16 %v3366
    %v3662 = vunpack.c.l.b16 %v3367
    %v3663 = vunpack.c.h.b16 %v3367
    %v3664 = vunpack.c.l.b16 %v3368
    %v3665 = vunpack.c.h.b16 %v3368
    %v3666 = vunpack.c.l.b16 %v3369
    %v3667 = vunpack.c.h.b16 %v3369
    %v3668 = vunpack.c.l.b16 %v3370
    %v3669 = vunpack.c.h.b16 %v3370
    %v3670 = vunpack.c.l.b16 %v3371
    %v3671 = vunpack.c.h.b16 %v3371
    %v3672 = vunpack.c.l.b16 %v3372
    %v3673 = vunpack.c.h.b16 %v3372
    %v3674 = vunpack.c.l.b16 %v3373
    %v3675 = vunpack.c.h.b16 %v3373
    %v3676 = vunpack.c.l.b16 %v3374
    %v3677 = vunpack.c.h.b16 %v3374
    %v3678 = vunpack.c.l.b16 %v3375
    %v3679 = vunpack.c.h.b16 %v3375
    %v3680 = vunpack.c.l.b16 %v3376
    %v3681 = vunpack.c.h.b16 %v3376
    %v3682 = vunpack.c.l.b16 %v3377
    %v3683 = vunpack.c.h.b16 %v3377
    %v3684 = vunpack.c.l.b16 %v3378
    %v3685 = vunpack.c.h.b16 %v3378
    %v3686 = vunpack.c.l.b16 %v3379
    %v3687 = vunpack.c.h.b16 %v3379
    %v3688 = vunpack.c.l.b16 %v3380
    %v3689 = vunpack.c.h.b16 %v3380
    %v3690 = vunpack.c.l.b16 %v3381
    %v3691 = vunpack.c.h.b16 %v3381
    %v3692 = vunpack.c.l.b16 %v3382
    %v3693 = vunpack.c.h.b16 %v3382
    %v3694 = vunpack.c.l.b16 %v3383
    %v3695 = vunpack.c.h.b16 %v3383
    %v3696 = vunpack.c.l.b16 %v3384
    %v3697 = vunpack.c.h.b16 %v3384
    %v3698 = vunpack.c.l.b16 %v3385
    %v3699 = vunpack.c.h.b16 %v3385
    %v3700 = vunpack.c.l.b16 %v3386
    %v3701 = vunpack.c.h.b16 %v3386
    %v3702 = vunpack.c.l.b16 %v3387
    %v3703 = vunpack.c.h.b16 %v3387
    %v3704 = vunpack.c.l.b16 %v3388
    %v3705 = vunpack.c.h.b16 %v3388
    %v3706 = vunpack.c.l.b16 %v3389
    %v3707 = vunpack.c.h.b16 %v3389
    %v3708 = vunpack.c.l.b16 %v3390
    %v3709 = vunpack.c.h.b16 %v3390
    %v3710 = vunpack.c.l.b16 %v3391
    %v3711 = vunpack.c.h.b16 %v3391
    %v3712 = vunpack.c.l.b16 %v3392
    %v3713 = vunpack.c.h.b16 %v3392
    %v3714 = vunpack.c.l.b16 %v3393
    %v3715 = vunpack.c.h.b16 %v3393
    %v3716 = vunpack.c.l.b16 %v3394
    %v3717 = vunpack.c.h.b16 %v3394
    %v3718 = vunpack.c.l.b16 %v3395
    %v3719 = vunpack.c.h.b16 %v3395
    %v3720 = vunpack.c.l.b16 %v3396
    %v3721 = vunpack.c.h.b16 %v3396
    %v3722 = vunpack.c.l.b16 %v3397
    %v3723 = vunpack.c.h.b16 %v3397
    %v3724 = vunpack.c.l.b16 %v3398
    %v3725 = vunpack.c.h.b16 %v3398
    %v3726 = vunpack.c.l.b16 %v3399
    %v3727 = vunpack.c.h.b16 %v3399
    %v3728 = vunpack.c.l.b16 %v3400
    %v3729 = vunpack.c.h.b16 %v3400
    %v3730 = vunpack.c.l.b16 %v3401
    %v3731 = vunpack.c.h.b16 %v3401
    %v3732 = vunpack.c.l.b16 %v3402
    %v3733 = vunpack.c.h.b16 %v3402
    %v3734 = vunpack.c.l.b16 %v3403
    %v3735 = vunpack.c.h.b16 %v3403
    %v3736 = vunpack.c.l.b16 %v3404
    %v3737 = vunpack.c.h.b16 %v3404
    %v3738 = vunpack.c.l.b16 %v3405
    %v3739 = vunpack.c.h.b16 %v3405
    %v3740 = vunpack.c.l.b16 %v3406
    %v3741 = vunpack.c.h.b16 %v3406
    %v3742 = vunpack.c.l.b16 %v3407
    %v3743 = vunpack.c.h.b16 %v3407
    %v3744 = vunpack.c.l.b16 %v3408
    %v3745 = vunpack.c.h.b16 %v3408
    %v3746 = vunpack.c.l.b16 %v3409
    %v3747 = vunpack.c.h.b16 %v3409
    %v3748 = vunpack.c.l.b16 %v3410
    %v3749 = vunpack.c.h.b16 %v3410
    %v3750 = vunpack.c.l.b16 %v3411
    %v3751 = vunpack.c.h.b16 %v3411
    %v3752 = vunpack.c.l.b16 %v3412
    %v3753 = vunpack.c.h.b16 %v3412
    %v3754 = vunpack.c.l.b16 %v3413
    %v3755 = vunpack.c.h.b16 %v3413
    %v3756 = vunpack.c.l.b16 %v3414
    %v3757 = vunpack.c.h.b16 %v3414
    %v3758 = vunpack.c.l.b16 %v3415
    %v3759 = vunpack.c.h.b16 %v3415
    %v3760 = vunpack.c.l.b16 %v3416
    %v3761 = vunpack.c.h.b16 %v3416
    %v3762 = vunpack.c.l.b16 %v3417
    %v3763 = vunpack.c.h.b16 %v3417
    %v3764 = vunpack.c.l.b16 %v3418
    %v3765 = vunpack.c.h.b16 %v3418
    %v3766 = vunpack.c.l.b16 %v3419
    %v3767 = vunpack.c.h.b16 %v3419
    %v3768 = vunpack.c.l.b16 %v3420
    %v3769 = vunpack.c.h.b16 %v3420
    %v3770 = vunpack.c.l.b16 %v3421
    %v3771 = vunpack.c.h.b16 %v3421
    %v3772 = vunpack.c.l.b16 %v3422
    %v3773 = vunpack.c.h.b16 %v3422
    %v3774 = vunpack.c.l.b16 %v3423
    %v3775 = vunpack.c.h.b16 %v3423
    %v3776 = vunpack.c.l.b16 %v3424
    %v3777 = vunpack.c.h.b16 %v3424
    %v3778 = vunpack.c.l.b16 %v3425
    %v3779 = vunpack.c.h.b16 %v3425
    %v3780 = vunpack.c.l.b16 %v3426
    %v3781 = vunpack.c.h.b16 %v3426
    %v3782 = vunpack.c.l.b16 %v3427
    %v3783 = vunpack.c.h.b16 %v3427
    %v3784 = vunpack.c.l.b16 %v3428
    %v3785 = vunpack.c.h.b16 %v3428
    %v3786 = vunpack.c.l.b16 %v3429
    %v3787 = vunpack.c.h.b16 %v3429
    %v3788 = vunpack.c.l.b16 %v3430
    %v3789 = vunpack.c.h.b16 %v3430
    %v3790 = vunpack.c.l.b16 %v3431
    %v3791 = vunpack.c.h.b16 %v3431
    %v3792 = vunpack.c.l.b16 %v3432
    %v3793 = vunpack.c.h.b16 %v3432
    %v3794 = vunpack.c.l.b16 %v3433
    %v3795 = vunpack.c.h.b16 %v3433
    %v3796 = vunpack.c.l.b16 %v3434
    %v3797 = vunpack.c.h.b16 %v3434
    %v3798 = vunpack.c.l.b16 %v3435
    %v3799 = vunpack.c.h.b16 %v3435
    %v3800 = vunpack.c.l.b16 %v3436
    %v3801 = vunpack.c.h.b16 %v3436
    %v3802 = vunpack.c.l.b16 %v3437
    %v3803 = vunpack.c.h.b16 %v3437
    %v3804 = vunpack.c.l.b16 %v3438
    %v3805 = vunpack.c.h.b16 %v3438
    %v3806 = vunpack.c.l.b16 %v3439
    %v3807 = vunpack.c.h.b16 %v3439
    %v3808 = vunpack.c.l.b16 %v3440
    %v3809 = vunpack.c.h.b16 %v3440
    %v3810 = vunpack.c.l.b16 %v3441
    %v3811 = vunpack.c.h.b16 %v3441
    %v3812 = vunpack.c.l.b16 %v3442
    %v3813 = vunpack.c.h.b16 %v3442
    %v3814 = vunpack.c.l.b16 %v3443
    %v3815 = vunpack.c.h.b16 %v3443
    %v3816 = vunpack.c.l.b16 %v3444
    %v3817 = vunpack.c.h.b16 %v3444
    %v3818 = vunpack.c.l.b16 %v3445
    %v3819 = vunpack.c.h.b16 %v3445
    %v3820 = vunpack.c.l.b16 %v3446
    %v3821 = vunpack.c.h.b16 %v3446
    %v3822 = vunpack.c.l.b16 %v3447
    %v3823 = vunpack.c.h.b16 %v3447
    %v3824 = vunpack.c.l.b16 %v3448
    %v3825 = vunpack.c.h.b16 %v3448
    %v3826 = vunpack.c.l.b16 %v3449
    %v3827 = vunpack.c.h.b16 %v3449
    %v3828 = vunpack.c.l.b16 %v3450
    %v3829 = vunpack.c.h.b16 %v3450
    %v3830 = vunpack.c.l.b16 %v3451
    %v3831 = vunpack.c.h.b16 %v3451
    %v3832 = vunpack.c.l.b16 %v3452
    %v3833 = vunpack.c.h.b16 %v3452
    %v3834 = vunpack.c.l.b16 %v3453
    %v3835 = vunpack.c.h.b16 %v3453
    %v3836 = vunpack.c.l.b16 %v3454
    %v3837 = vunpack.c.h.b16 %v3454
    %v3838 = vunpack.c.l.b16 %v3455
    %v3839 = vunpack.c.h.b16 %v3455
    %v3840 = vunpack.c.l.b16 %v3456
    %v3841 = vunpack.c.h.b16 %v3456
    %v3842 = vunpack.c.l.b16 %v3457
    %v3843 = vunpack.c.h.b16 %v3457
    %v3844 = vunpack.c.l.b16 %v3458
    %v3845 = vunpack.c.h.b16 %v3458
    %v3846 = vunpack.c.l.b16 %v3459
    %v3847 = vunpack.c.h.b16 %v3459
    %v3848 = vunpack.c.l.b16 %v3460
    %v3849 = vunpack.c.h.b16 %v3460
    %v3850 = vunpack.c.l.b16 %v3461
    %v3851 = vunpack.c.h.b16 %v3461
    %v3852 = vunpack.c.l.b16 %v3462
    %v3853 = vunpack.c.h.b16 %v3462
    %v3854 = vunpack.c.l.b16 %v3463
    %v3855 = vunpack.c.h.b16 %v3463
    %v3856 = vunpack.c.l.b16 %v3464
    %v3857 = vunpack.c.h.b16 %v3464
    %v3858 = vunpack.c.l.b16 %v3465
    %v3859 = vunpack.c.h.b16 %v3465
    %v3860 = vunpack.c.l.b16 %v3466
    %v3861 = vunpack.c.h.b16 %v3466
    %v3862 = vunpack.c.l.b16 %v3467
    %v3863 = vunpack.c.h.b16 %v3467
    %v3864 = vunpack.c.l.b16 %v3468
    %v3865 = vunpack.c.h.b16 %v3468
    %v3866 = vunpack.c.l.b16 %v3469
    %v3867 = vunpack.c.h.b16 %v3469
    %v3868 = vunpack.c.l.b16 %v3470
    %v3869 = vunpack.c.h.b16 %v3470
    %v3870 = vunpack.c.l.b16 %v3471
    %v3871 = vunpack.c.h.b16 %v3471
    %v3872 = vunpack.c.l.b16 %v3472
    %v3873 = vunpack.c.h.b16 %v3472
    %v3874 = vunpack.c.l.b16 %v3473
    %v3875 = vunpack.c.h.b16 %v3473
    %v3876 = vunpack.c.l.b16 %v3474
    %v3877 = vunpack.c.h.b16 %v3474
    %v3878 = vunpack.c.l.b16 %v3475
    %v3879 = vunpack.c.h.b16 %v3475
    %v3880 = vpack.c.b16 %v3628, %v3624
    %v3881 = vpack.c.b16 %v3629, %v3625
    %v3882 = vpack.c.b16 %v3630, %v3626
    %v3883 = vpack.c.b16 %v3631, %v3627
    %v3884 = vpack.c.b16 %v3636, %v3632
    %v3885 = vpack.c.b16 %v3637, %v3633
    %v3886 = vpack.c.b16 %v3638, %v3634
    %v3887 = vpack.c.b16 %v3639, %v3635
    %v3888 = vpack.c.b16 %v3644, %v3640
    %v3889 = vpack.c.b16 %v3645, %v3641
    %v3890 = vpack.c.b16 %v3646, %v3642
    %v3891 = vpack.c.b16 %v3647, %v3643
    %v3892 = vpack.c.b16 %v3652, %v3648
    %v3893 = vpack.c.b16 %v3653, %v3649
    %v3894 = vpack.c.b16 %v3654, %v3650
    %v3895 = vpack.c.b16 %v3655, %v3651
    %v3896 = vpack.c.b16 %v3660, %v3656
    %v3897 = vpack.c.b16 %v3661, %v3657
    %v3898 = vpack.c.b16 %v3662, %v3658
    %v3899 = vpack.c.b16 %v3663, %v3659
    %v3900 = vpack.c.b16 %v3668, %v3664
    %v3901 = vpack.c.b16 %v3669, %v3665
    %v3902 = vpack.c.b16 %v3670, %v3666
    %v3903 = vpack.c.b16 %v3671, %v3667
    %v3904 = vpack.c.b16 %v3676, %v3672
    %v3905 = vpack.c.b16 %v3677, %v3673
    %v3906 = vpack.c.b16 %v3678, %v3674
    %v3907 = vpack.c.b16 %v3679, %v3675
    %v3908 = vpack.c.b16 %v3684, %v3680
    %v3909 = vpack.c.b16 %v3685, %v3681
    %v3910 = vpack.c.b16 %v3686, %v3682
    %v3911 = vpack.c.b16 %v3687, %v3683
    %v3912 = vpack.c.b16 %v3692, %v3688
    %v3913 = vpack.c.b16 %v3693, %v3689
    %v3914 = vpack.c.b16 %v3694, %v3690
    %v3915 = vpack.c.b16 %v3695, %v3691
    %v3916 = vpack.c.b16 %v3700, %v3696
    %v3917 = vpack.c.b16 %v3701, %v3697
    %v3918 = vpack.c.b16 %v3702, %v3698
    %v3919 = vpack.c.b16 %v3703, %v3699
    %v3920 = vpack.c.b16 %v3708, %v3704
    %v3921 = vpack.c.b16 %v3709, %v3705
    %v3922 = vpack.c.b16 %v3710, %v3706
    %v3923 = vpack.c.b16 %v3711, %v3707
    %v3924 = vpack.c.b16 %v3716, %v3712
    %v3925 = vpack.c.b16 %v3717, %v3713
    %v3926 = vpack.c.b16 %v3718, %v3714
    %v3927 = vpack.c.b16 %v3719, %v3715
    %v3928 = vpack.c.b16 %v3724, %v3720
    %v3929 = vpack.c.b16 %v3725, %v3721
    %v3930 = vpack.c.b16 %v3726, %v3722
    %v3931 = vpack.c.b16 %v3727, %v3723
    %v3932 = vpack.c.b16 %v3732, %v3728
    %v3933 = vpack.c.b16 %v3733, %v3729
    %v3934 = vpack.c.b16 %v3734, %v3730
    %v3935 = vpack.c.b16 %v3735, %v3731
    %v3936 = vpack.c.b16 %v3740, %v3736
    %v3937 = vpack.c.b16 %v3741, %v3737
    %v3938 = vpack.c.b16 %v3742, %v3738
    %v3939 = vpack.c.b16 %v3743, %v3739
    %v3940 = vpack.c.b16 %v3748, %v3744
    %v3941 = vpack.c.b16 %v3749, %v3745
    %v3942 = vpack.c.b16 %v3750, %v3746
    %v3943 = vpack.c.b16 %v3751, %v3747
    %v3944 = vpack.c.b16 %v3756, %v3752
    %v3945 = vpack.c.b16 %v3757, %v3753
    %v3946 = vpack.c.b16 %v3758, %v3754
    %v3947 = vpack.c.b16 %v3759, %v3755
    %v3948 = vpack.c.b16 %v3764, %v3760
    %v3949 = vpack.c.b16 %v3765, %v3761
    %v3950 = vpack.c.b16 %v3766, %v3762
    %v3951 = vpack.c.b16 %v3767, %v3763
    %v3952 = vpack.c.b16 %v3772, %v3768
    %v3953 = vpack.c.b16 %v3773, %v3769
    %v3954 = vpack.c.b16 %v3774, %v3770
    %v3955 = vpack.c.b16 %v3775, %v3771
    %v3956 = vpack.c.b16 %v3780, %v3776
    %v3957 = vpack.c.b16 %v3781, %v3777
    %v3958 = vpack.c.b16 %v3782, %v3778
    %v3959 = vpack.c.b16 %v3783, %v3779
    %v3960 = vpack.c.b16 %v3788, %v3784
    %v3961 = vpack.c.b16 %v3789, %v3785
    %v3962 = vpack.c.b16 %v3790, %v3786
    %v3963 = vpack.c.b16 %v3791, %v3787
    %v3964 = vpack.c.b16 %v3796, %v3792
    %v3965 = vpack.c.b16 %v3797, %v3793
    %v3966 = vpack.c.b16 %v3798, %v3794
    %v3967 = vpack.c.b16 %v3799, %v3795
    %v3968 = vpack.c.b16 %v3804, %v3800
    %v3969 = vpack.c.b16 %v3805, %v3801
    %v3970 = vpack.c.b16 %v3806, %v3802
    %v3971 = vpack.c.b16 %v3807, %v3803
    %v3972 = vpack.c.b16 %v3812, %v3808
    %v3973 = vpack.c.b16 %v3813, %v3809
    %v3974 = vpack.c.b16 %v3814, %v3810
    %v3975 = vpack.c.b16 %v3815, %v3811
    %v3976 = vpack.c.b16 %v3820, %v3816
    %v3977 = vpack.c.b16 %v3821, %v3817
    %v3978 = vpack.c.b16 %v3822, %v3818
    %v3979 = vpack.c.b16 %v3823, %v3819
    %v3980 = vpack.c.b16 %v3828, %v3824
    %v3981 = vpack.c.b16 %v3829, %v3825
    %v3982 = vpack.c.b16 %v3830, %v3826
    %v3983 = vpack.c.b16 %v3831, %v3827
    %v3984 = vpack.c.b16 %v3836, %v3832
    %v3985 = vpack.c.b16 %v3837, %v3833
    %v3986 = vpack.c.b16 %v3838, %v3834
    %v3987 = vpack.c.b16 %v3839, %v3835
    %v3988 = vpack.c.b16 %v3844, %v3840
    %v3989 = vpack.c.b16 %v3845, %v3841
    %v3990 = vpack.c.b16 %v3846, %v3842
    %v3991 = vpack.c.b16 %v3847, %v3843
    %v3992 = vpack.c.b16 %v3852, %v3848
    %v3993 = vpack.c.b16 %v3853, %v3849
    %v3994 = vpack.c.b16 %v3854, %v3850
    %v3995 = vpack.c.b16 %v3855, %v3851
    %v3996 = vpack.c.b16 %v3860, %v3856
    %v3997 = vpack.c.b16 %v3861, %v3857
    %v3998 = vpack.c.b16 %v3862, %v3858
    %v3999 = vpack.c.b16 %v3863, %v3859
    %v4000 = vpack.c.b16 %v3868, %v3864
    %v4001 = vpack.c.b16 %v3869, %v3865
    %v4002 = vpack.c.b16 %v3870, %v3866
    %v4003 = vpack.c.b16 %v3871, %v3867
    %v4004 = vpack.c.b16 %v3876, %v3872
    %v4005 = vpack.c.b16 %v3877, %v3873
    %v4006 = vpack.c.b16 %v3878, %v3874
    %v4007 = vpack.c.b16 %v3879, %v3875
    %4136 = vmatprep.subr.bf16.mxu0 %v3881
    %4137 = vmatpush1.bf16.msra.mxu0 %v3880
    %4138 = vmatprep.subr.bf16.mxu0 %v3885
    %4139 = vmatpush1.bf16.msra.mxu0 %v3884
    %4140 = vmatprep.subr.bf16.mxu0 %v3889
    %4141 = vmatpush1.bf16.msra.mxu0 %v3888
    %4142 = vmatprep.subr.bf16.mxu0 %v3893
    %4143 = vmatpush1.bf16.msra.mxu0 %v3892
    %4144 = vmatprep.subr.bf16.mxu0 %v3897
    %4145 = vmatpush1.bf16.msra.mxu0 %v3896
    %4146 = vmatprep.subr.bf16.mxu0 %v3901
    %4147 = vmatpush1.bf16.msra.mxu0 %v3900
    %4148 = vmatprep.subr.bf16.mxu0 %v3905
    %4149 = vmatpush1.bf16.msra.mxu0 %v3904
    %4150 = vmatprep.subr.bf16.mxu0 %v3909
    %4151 = vmatpush1.bf16.msra.mxu0 %v3908
    %4152 = vmatprep.subr.bf16.mxu0 %v3913
    %4153 = vmatpush1.bf16.msra.mxu0 %v3912
    %4154 = vmatprep.subr.bf16.mxu0 %v3917
    %4155 = vmatpush1.bf16.msra.mxu0 %v3916
    %4156 = vmatprep.subr.bf16.mxu0 %v3921
    %4157 = vmatpush1.bf16.msra.mxu0 %v3920
    %4158 = vmatprep.subr.bf16.mxu0 %v3925
    %4159 = vmatpush1.bf16.msra.mxu0 %v3924
    %4160 = vmatprep.subr.bf16.mxu0 %v3929
    %4161 = vmatpush1.bf16.msra.mxu0 %v3928
    %4162 = vmatprep.subr.bf16.mxu0 %v3933
    %4163 = vmatpush1.bf16.msra.mxu0 %v3932
    %4164 = vmatprep.subr.bf16.mxu0 %v3937
    %4165 = vmatpush1.bf16.msra.mxu0 %v3936
    %4166 = vmatprep.subr.bf16.mxu0 %v3941
    %4167 = vmatpush1.bf16.msra.mxu0 %v3940
    %4168 = vmatprep.mubr.bf16.mxu0 %v3477
    %4169 = vmatmul.mubr.bf16.gmra.mrb[0].mxu0 %v3476
    %v4170 = vpop.f32.mrb[0].mxu0
    %v4171 = vadd.f32 %v3483, %v4170
    %v4172 = vpop.f32.mrb[0].mxu0
    %v4173 = vadd.f32 %v3487, %v4172
    %v4174 = vpop.f32.mrb[0].mxu0
    %v4175 = vpop.f32.mrb[0].mxu0
    %4176 = vdwg.mxu0
    %4177 = vmatprep.subr.bf16.mxu0 %v3945
    %4178 = vmatpush1.bf16.msra.mxu0 %v3944
    %4179 = vmatprep.subr.bf16.mxu0 %v3949
    %4180 = vmatpush1.bf16.msra.mxu0 %v3948
    %4181 = vmatprep.subr.bf16.mxu0 %v3953
    %4182 = vmatpush1.bf16.msra.mxu0 %v3952
    %4183 = vmatprep.subr.bf16.mxu0 %v3957
    %4184 = vmatpush1.bf16.msra.mxu0 %v3956
    %4185 = vmatprep.subr.bf16.mxu0 %v3961
    %4186 = vmatpush1.bf16.msra.mxu0 %v3960
    %4187 = vmatprep.subr.bf16.mxu0 %v3965
    %4188 = vmatpush1.bf16.msra.mxu0 %v3964
    %4189 = vmatprep.subr.bf16.mxu0 %v3969
    %4190 = vmatpush1.bf16.msra.mxu0 %v3968
    %4191 = vmatprep.subr.bf16.mxu0 %v3973
    %4192 = vmatpush1.bf16.msra.mxu0 %v3972
    %4193 = vmatprep.subr.bf16.mxu0 %v3977
    %4194 = vmatpush1.bf16.msra.mxu0 %v3976
    %4195 = vmatprep.subr.bf16.mxu0 %v3981
    %4196 = vmatpush1.bf16.msra.mxu0 %v3980
    %4197 = vmatprep.subr.bf16.mxu0 %v3985
    %4198 = vmatpush1.bf16.msra.mxu0 %v3984
    %4199 = vmatprep.subr.bf16.mxu0 %v3989
    %4200 = vmatpush1.bf16.msra.mxu0 %v3988
    %4201 = vmatprep.subr.bf16.mxu0 %v3993
    %4202 = vmatpush1.bf16.msra.mxu0 %v3992
    %4203 = vmatprep.subr.bf16.mxu0 %v3997
    %4204 = vmatpush1.bf16.msra.mxu0 %v3996
    %4205 = vmatprep.subr.bf16.mxu0 %v4001
    %4206 = vmatpush1.bf16.msra.mxu0 %v4000
    %4207 = vmatprep.subr.bf16.mxu0 %v4005
    %4208 = vmatpush1.bf16.msra.mxu0 %v4004
    %4209 = vmatprep.mubr.bf16.mxu0 %v3479
    %4210 = vmatmul.mubr.bf16.gmra.mrb[0].mxu0 %v3478
    %v4211 = vpop.f32.mrb[0].mxu0
    %v4212 = vadd.f32 %v4171, %v4211
    %v4213 = vpop.f32.mrb[0].mxu0
    %v4214 = vadd.f32 %v4173, %v4213
    %v4215 = vpop.f32.mrb[0].mxu0
    %v4216 = vpop.f32.mrb[0].mxu0
    %4217 = vdwg.mxu0
    %4218 = vmatprep.subr.bf16.mxu0 %v3883
    %4219 = vmatpush1.bf16.msra.mxu0 %v3882
    %4220 = vmatprep.subr.bf16.mxu0 %v3887
    %4221 = vmatpush1.bf16.msra.mxu0 %v3886
    %4222 = vmatprep.subr.bf16.mxu0 %v3891
    %4223 = vmatpush1.bf16.msra.mxu0 %v3890
    %4224 = vmatprep.subr.bf16.mxu0 %v3895
    %4225 = vmatpush1.bf16.msra.mxu0 %v3894
    %4226 = vmatprep.subr.bf16.mxu0 %v3899
    %4227 = vmatpush1.bf16.msra.mxu0 %v3898
    %4228 = vmatprep.subr.bf16.mxu0 %v3903
    %4229 = vmatpush1.bf16.msra.mxu0 %v3902
    %4230 = vmatprep.subr.bf16.mxu0 %v3907
    %4231 = vmatpush1.bf16.msra.mxu0 %v3906
    %4232 = vmatprep.subr.bf16.mxu0 %v3911
    %4233 = vmatpush1.bf16.msra.mxu0 %v3910
    %4234 = vmatprep.subr.bf16.mxu0 %v3915
    %4235 = vmatpush1.bf16.msra.mxu0 %v3914
    %4236 = vmatprep.subr.bf16.mxu0 %v3919
    %4237 = vmatpush1.bf16.msra.mxu0 %v3918
    %4238 = vmatprep.subr.bf16.mxu0 %v3923
    %4239 = vmatpush1.bf16.msra.mxu0 %v3922
    %4240 = vmatprep.subr.bf16.mxu0 %v3927
    %4241 = vmatpush1.bf16.msra.mxu0 %v3926
    %4242 = vmatprep.subr.bf16.mxu0 %v3931
    %4243 = vmatpush1.bf16.msra.mxu0 %v3930
    %4244 = vmatprep.subr.bf16.mxu0 %v3935
    %4245 = vmatpush1.bf16.msra.mxu0 %v3934
    %4246 = vmatprep.subr.bf16.mxu0 %v3939
    %4247 = vmatpush1.bf16.msra.mxu0 %v3938
    %4248 = vmatprep.subr.bf16.mxu0 %v3943
    %4249 = vmatpush1.bf16.msra.mxu0 %v3942
    %4250 = vmatprep.mubr.bf16.mxu0 %v3477
    %4251 = vmatmul.mubr.bf16.gmra.mrb[0].mxu0 %v3476
    %v4252 = vpop.f32.mrb[0].mxu0
    %v4253 = vadd.f32 %v3491, %v4252
    %v4254 = vpop.f32.mrb[0].mxu0
    %v4255 = vadd.f32 %v3495, %v4254
    %v4256 = vpop.f32.mrb[0].mxu0
    %v4257 = vpop.f32.mrb[0].mxu0
    %4258 = vdwg.mxu0
    %4259 = vmatprep.subr.bf16.mxu0 %v3947
    %4260 = vmatpush1.bf16.msra.mxu0 %v3946
    %4261 = vmatprep.subr.bf16.mxu0 %v3951
    %4262 = vmatpush1.bf16.msra.mxu0 %v3950
    %4263 = vmatprep.subr.bf16.mxu0 %v3955
    %4264 = vmatpush1.bf16.msra.mxu0 %v3954
    %4265 = vmatprep.subr.bf16.mxu0 %v3959
    %4266 = vmatpush1.bf16.msra.mxu0 %v3958
    %4267 = vmatprep.subr.bf16.mxu0 %v3963
    %4268 = vmatpush1.bf16.msra.mxu0 %v3962
    %4269 = vmatprep.subr.bf16.mxu0 %v3967
    %4270 = vmatpush1.bf16.msra.mxu0 %v3966
    %4271 = vmatprep.subr.bf16.mxu0 %v3971
    %4272 = vmatpush1.bf16.msra.mxu0 %v3970
    %4273 = vmatprep.subr.bf16.mxu0 %v3975
    %4274 = vmatpush1.bf16.msra.mxu0 %v3974
    %4275 = vmatprep.subr.bf16.mxu0 %v3979
    %4276 = vmatpush1.bf16.msra.mxu0 %v3978
    %4277 = vmatprep.subr.bf16.mxu0 %v3983
    %4278 = vmatpush1.bf16.msra.mxu0 %v3982
    %4279 = vmatprep.subr.bf16.mxu0 %v3987
    %4280 = vmatpush1.bf16.msra.mxu0 %v3986
    %4281 = vmatprep.subr.bf16.mxu0 %v3991
    %4282 = vmatpush1.bf16.msra.mxu0 %v3990
    %4283 = vmatprep.subr.bf16.mxu0 %v3995
    %4284 = vmatpush1.bf16.msra.mxu0 %v3994
    %4285 = vmatprep.subr.bf16.mxu0 %v3999
    %4286 = vmatpush1.bf16.msra.mxu0 %v3998
    %4287 = vmatprep.subr.bf16.mxu0 %v4003
    %4288 = vmatpush1.bf16.msra.mxu0 %v4002
    %4289 = vmatprep.subr.bf16.mxu0 %v4007
    %4290 = vmatpush1.bf16.msra.mxu0 %v4006
    %4291 = vmatprep.mubr.bf16.mxu0 %v3479
    %4292 = vmatmul.mubr.bf16.gmra.mrb[0].mxu0 %v3478
    %v4293 = vpop.f32.mrb[0].mxu0
    %v4294 = vadd.f32 %v4253, %v4293
    %v4295 = vpop.f32.mrb[0].mxu0
    %v4296 = vadd.f32 %v4255, %v4295
    %v4297 = vpop.f32.mrb[0].mxu0
    %v4298 = vpop.f32.mrb[0].mxu0
    %4299 = vdwg.mxu0
    %vm4300 = vcmp.ge.f32.partialorder %v4212, 0.0
    %vm4301 = vcmp.ge.f32.partialorder %v4214, 0.0
    %vm4302 = vcmp.ge.f32.partialorder %v4294, 0.0
    %vm4303 = vcmp.ge.f32.partialorder %v4296, 0.0
    %v4304 = vmul.f32 %v4212, 0.01
    %v4305 = vmul.f32 %v4214, 0.01
    %v4306 = vmul.f32 %v4294, 0.01
    %v4307 = vmul.f32 %v4296, 0.01
    %v4308 = vsel %vm4300, %v4212, %v4304
    %v4309 = vsel %vm4301, %v4214, %v4305
    %v4310 = vsel %vm4302, %v4294, %v4306
    %v4311 = vsel %vm4303, %v4296, %v4307
    %v4312 = vld [vmem:[%s14] sm:$0xff]
    %v4313 = vld [vmem:[%s14 + $0x8] sm:$0xff]
    %v4314 = vld [vmem:[%s14 + $0x10] sm:$0xff]
    %v4315 = vld [vmem:[%s14 + $0x18] sm:$0xff]
    %v4316 = vld [vmem:[%s14 + $0x20] sm:$0xff]
    %v4317 = vld [vmem:[%s14 + $0x28] sm:$0xff]
    %v4318 = vld [vmem:[%s14 + $0x30] sm:$0xff]
    %v4319 = vld [vmem:[%s14 + $0x38] sm:$0xff]
    %v4320 = vld [vmem:[%s14 + $0x40] sm:$0xff]
    %v4321 = vld [vmem:[%s14 + $0x48] sm:$0xff]
    %v4322 = vld [vmem:[%s14 + $0x50] sm:$0xff]
    %v4323 = vld [vmem:[%s14 + $0x58] sm:$0xff]
    %v4324 = vld [vmem:[%s14 + $0x60] sm:$0xff]
    %v4325 = vld [vmem:[%s14 + $0x68] sm:$0xff]
    %v4326 = vld [vmem:[%s14 + $0x70] sm:$0xff]
    %v4327 = vld [vmem:[%s14 + $0x78] sm:$0xff]
    %v4328 = vld [vmem:[%s14 + $0x80] sm:$0xff]
    %v4329 = vld [vmem:[%s14 + $0x88] sm:$0xff]
    %v4330 = vld [vmem:[%s14 + $0x90] sm:$0xff]
    %v4331 = vld [vmem:[%s14 + $0x98] sm:$0xff]
    %v4332 = vld [vmem:[%s14 + $0xa0] sm:$0xff]
    %v4333 = vld [vmem:[%s14 + $0xa8] sm:$0xff]
    %v4334 = vld [vmem:[%s14 + $0xb0] sm:$0xff]
    %v4335 = vld [vmem:[%s14 + $0xb8] sm:$0xff]
    %v4336 = vld [vmem:[%s14 + $0xc0] sm:$0xff]
    %v4337 = vld [vmem:[%s14 + $0xc8] sm:$0xff]
    %v4338 = vld [vmem:[%s14 + $0xd0] sm:$0xff]
    %v4339 = vld [vmem:[%s14 + $0xd8] sm:$0xff]
    %v4340 = vld [vmem:[%s14 + $0xe0] sm:$0xff]
    %v4341 = vld [vmem:[%s14 + $0xe8] sm:$0xff]
    %v4342 = vld [vmem:[%s14 + $0xf0] sm:$0xff]
    %v4343 = vld [vmem:[%s14 + $0xf8] sm:$0xff]
    %v4344 = vld [vmem:[%s14 + $0x100] sm:$0xff]
    %v4345 = vld [vmem:[%s14 + $0x108] sm:$0xff]
    %v4346 = vld [vmem:[%s14 + $0x110] sm:$0xff]
    %v4347 = vld [vmem:[%s14 + $0x118] sm:$0xff]
    %v4348 = vld [vmem:[%s14 + $0x120] sm:$0xff]
    %v4349 = vld [vmem:[%s14 + $0x128] sm:$0xff]
    %v4350 = vld [vmem:[%s14 + $0x130] sm:$0xff]
    %v4351 = vld [vmem:[%s14 + $0x138] sm:$0xff]
    %v4352 = vld [vmem:[%s14 + $0x140] sm:$0xff]
    %v4353 = vld [vmem:[%s14 + $0x148] sm:$0xff]
    %v4354 = vld [vmem:[%s14 + $0x150] sm:$0xff]
    %v4355 = vld [vmem:[%s14 + $0x158] sm:$0xff]
    %v4356 = vld [vmem:[%s14 + $0x160] sm:$0xff]
    %v4357 = vld [vmem:[%s14 + $0x168] sm:$0xff]
    %v4358 = vld [vmem:[%s14 + $0x170] sm:$0xff]
    %v4359 = vld [vmem:[%s14 + $0x178] sm:$0xff]
    %v4360 = vld [vmem:[%s14 + $0x180] sm:$0xff]
    %v4361 = vld [vmem:[%s14 + $0x188] sm:$0xff]
    %v4362 = vld [vmem:[%s14 + $0x190] sm:$0xff]
    %v4363 = vld [vmem:[%s14 + $0x198] sm:$0xff]
    %v4364 = vld [vmem:[%s14 + $0x1a0] sm:$0xff]
    %v4365 = vld [vmem:[%s14 + $0x1a8] sm:$0xff]
    %v4366 = vld [vmem:[%s14 + $0x1b0] sm:$0xff]
    %v4367 = vld [vmem:[%s14 + $0x1b8] sm:$0xff]
    %v4368 = vld [vmem:[%s14 + $0x1c0] sm:$0xff]
    %v4369 = vld [vmem:[%s14 + $0x1c8] sm:$0xff]
    %v4370 = vld [vmem:[%s14 + $0x1d0] sm:$0xff]
    %v4371 = vld [vmem:[%s14 + $0x1d8] sm:$0xff]
    %v4372 = vld [vmem:[%s14 + $0x1e0] sm:$0xff]
    %v4373 = vld [vmem:[%s14 + $0x1e8] sm:$0xff]
    %v4374 = vld [vmem:[%s14 + $0x1f0] sm:$0xff]
    %v4375 = vld [vmem:[%s14 + $0x1f8] sm:$0xff]
    %v4376 = vld [vmem:[%s14 + $0x200] sm:$0xff]
    %v4377 = vld [vmem:[%s14 + $0x208] sm:$0xff]
    %v4378 = vld [vmem:[%s14 + $0x210] sm:$0xff]
    %v4379 = vld [vmem:[%s14 + $0x218] sm:$0xff]
    %v4380 = vld [vmem:[%s14 + $0x220] sm:$0xff]
    %v4381 = vld [vmem:[%s14 + $0x228] sm:$0xff]
    %v4382 = vld [vmem:[%s14 + $0x230] sm:$0xff]
    %v4383 = vld [vmem:[%s14 + $0x238] sm:$0xff]
    %v4384 = vld [vmem:[%s14 + $0x240] sm:$0xff]
    %v4385 = vld [vmem:[%s14 + $0x248] sm:$0xff]
    %v4386 = vld [vmem:[%s14 + $0x250] sm:$0xff]
    %v4387 = vld [vmem:[%s14 + $0x258] sm:$0xff]
    %v4388 = vld [vmem:[%s14 + $0x260] sm:$0xff]
    %v4389 = vld [vmem:[%s14 + $0x268] sm:$0xff]
    %v4390 = vld [vmem:[%s14 + $0x270] sm:$0xff]
    %v4391 = vld [vmem:[%s14 + $0x278] sm:$0xff]
    %v4392 = vld [vmem:[%s14 + $0x280] sm:$0xff]
    %v4393 = vld [vmem:[%s14 + $0x288] sm:$0xff]
    %v4394 = vld [vmem:[%s14 + $0x290] sm:$0xff]
    %v4395 = vld [vmem:[%s14 + $0x298] sm:$0xff]
    %v4396 = vld [vmem:[%s14 + $0x2a0] sm:$0xff]
    %v4397 = vld [vmem:[%s14 + $0x2a8] sm:$0xff]
    %v4398 = vld [vmem:[%s14 + $0x2b0] sm:$0xff]
    %v4399 = vld [vmem:[%s14 + $0x2b8] sm:$0xff]
    %v4400 = vld [vmem:[%s14 + $0x2c0] sm:$0xff]
    %v4401 = vld [vmem:[%s14 + $0x2c8] sm:$0xff]
    %v4402 = vld [vmem:[%s14 + $0x2d0] sm:$0xff]
    %v4403 = vld [vmem:[%s14 + $0x2d8] sm:$0xff]
    %v4404 = vld [vmem:[%s14 + $0x2e0] sm:$0xff]
    %v4405 = vld [vmem:[%s14 + $0x2e8] sm:$0xff]
    %v4406 = vld [vmem:[%s14 + $0x2f0] sm:$0xff]
    %v4407 = vld [vmem:[%s14 + $0x2f8] sm:$0xff]
    %v4408 = vld [vmem:[%s14 + $0x300] sm:$0xff]
    %v4409 = vld [vmem:[%s14 + $0x308] sm:$0xff]
    %v4410 = vld [vmem:[%s14 + $0x310] sm:$0xff]
    %v4411 = vld [vmem:[%s14 + $0x318] sm:$0xff]
    %v4412 = vld [vmem:[%s14 + $0x320] sm:$0xff]
    %v4413 = vld [vmem:[%s14 + $0x328] sm:$0xff]
    %v4414 = vld [vmem:[%s14 + $0x330] sm:$0xff]
    %v4415 = vld [vmem:[%s14 + $0x338] sm:$0xff]
    %v4416 = vld [vmem:[%s14 + $0x340] sm:$0xff]
    %v4417 = vld [vmem:[%s14 + $0x348] sm:$0xff]
    %v4418 = vld [vmem:[%s14 + $0x350] sm:$0xff]
    %v4419 = vld [vmem:[%s14 + $0x358] sm:$0xff]
    %v4420 = vld [vmem:[%s14 + $0x360] sm:$0xff]
    %v4421 = vld [vmem:[%s14 + $0x368] sm:$0xff]
    %v4422 = vld [vmem:[%s14 + $0x370] sm:$0xff]
    %v4423 = vld [vmem:[%s14 + $0x378] sm:$0xff]
    %v4424 = vld [vmem:[%s14 + $0x380] sm:$0xff]
    %v4425 = vld [vmem:[%s14 + $0x388] sm:$0xff]
    %v4426 = vld [vmem:[%s14 + $0x390] sm:$0xff]
    %v4427 = vld [vmem:[%s14 + $0x398] sm:$0xff]
    %v4428 = vld [vmem:[%s14 + $0x3a0] sm:$0xff]
    %v4429 = vld [vmem:[%s14 + $0x3a8] sm:$0xff]
    %v4430 = vld [vmem:[%s14 + $0x3b0] sm:$0xff]
    %v4431 = vld [vmem:[%s14 + $0x3b8] sm:$0xff]
    %v4432 = vld [vmem:[%s14 + $0x3c0] sm:$0xff]
    %v4433 = vld [vmem:[%s14 + $0x3c8] sm:$0xff]
    %v4434 = vld [vmem:[%s14 + $0x3d0] sm:$0xff]
    %v4435 = vld [vmem:[%s14 + $0x3d8] sm:$0xff]
    %v4436 = vld [vmem:[%s14 + $0x3e0] sm:$0xff]
    %v4437 = vld [vmem:[%s14 + $0x3e8] sm:$0xff]
    %v4438 = vld [vmem:[%s14 + $0x3f0] sm:$0xff]
    %v4439 = vld [vmem:[%s14 + $0x3f8] sm:$0xff]
    %v4440 = vpack.c.bf16 %v4308, %v4308
    %v4441 = vpack.c.bf16 %v4309, %v4309
    %v4442 = vpack.c.bf16 %v4310, %v4310
    %v4443 = vpack.c.bf16 %v4311, %v4311
    %v4444 = vlaneseq
    %v4445 = vshrl.u32 %v4444, 7
    %v4446 = vsub.s32 2, %v4445
    %v4447 = vrot.slane %v3182, %v4446
    %v4448 = vlaneseq
    %v4449 = vshrl.u32 %v4448, 7
    %v4450 = vsub.s32 2, %v4449
    %v4451 = vrot.slane %v3183, %v4450
    %v4452 = vlaneseq
    %v4453 = vshrl.u32 %v4452, 7
    %v4454 = vsub.s32 2, %v4453
    %v4455 = vrot.slane %v3184, %v4454
    %v4456 = vlaneseq
    %v4457 = vshrl.u32 %v4456, 7
    %v4458 = vsub.s32 2, %v4457
    %v4459 = vrot.slane %v3185, %v4458
    %v4588 = vunpack.c.l.b16 %v4312
    %v4589 = vunpack.c.h.b16 %v4312
    %v4590 = vunpack.c.l.b16 %v4313
    %v4591 = vunpack.c.h.b16 %v4313
    %v4592 = vunpack.c.l.b16 %v4314
    %v4593 = vunpack.c.h.b16 %v4314
    %v4594 = vunpack.c.l.b16 %v4315
    %v4595 = vunpack.c.h.b16 %v4315
    %v4596 = vunpack.c.l.b16 %v4316
    %v4597 = vunpack.c.h.b16 %v4316
    %v4598 = vunpack.c.l.b16 %v4317
    %v4599 = vunpack.c.h.b16 %v4317
    %v4600 = vunpack.c.l.b16 %v4318
    %v4601 = vunpack.c.h.b16 %v4318
    %v4602 = vunpack.c.l.b16 %v4319
    %v4603 = vunpack.c.h.b16 %v4319
    %v4604 = vunpack.c.l.b16 %v4320
    %v4605 = vunpack.c.h.b16 %v4320
    %v4606 = vunpack.c.l.b16 %v4321
    %v4607 = vunpack.c.h.b16 %v4321
    %v4608 = vunpack.c.l.b16 %v4322
    %v4609 = vunpack.c.h.b16 %v4322
    %v4610 = vunpack.c.l.b16 %v4323
    %v4611 = vunpack.c.h.b16 %v4323
    %v4612 = vunpack.c.l.b16 %v4324
    %v4613 = vunpack.c.h.b16 %v4324
    %v4614 = vunpack.c.l.b16 %v4325
    %v4615 = vunpack.c.h.b16 %v4325
    %v4616 = vunpack.c.l.b16 %v4326
    %v4617 = vunpack.c.h.b16 %v4326
    %v4618 = vunpack.c.l.b16 %v4327
    %v4619 = vunpack.c.h.b16 %v4327
    %v4620 = vunpack.c.l.b16 %v4328
    %v4621 = vunpack.c.h.b16 %v4328
    %v4622 = vunpack.c.l.b16 %v4329
    %v4623 = vunpack.c.h.b16 %v4329
    %v4624 = vunpack.c.l.b16 %v4330
    %v4625 = vunpack.c.h.b16 %v4330
    %v4626 = vunpack.c.l.b16 %v4331
    %v4627 = vunpack.c.h.b16 %v4331
    %v4628 = vunpack.c.l.b16 %v4332
    %v4629 = vunpack.c.h.b16 %v4332
    %v4630 = vunpack.c.l.b16 %v4333
    %v4631 = vunpack.c.h.b16 %v4333
    %v4632 = vunpack.c.l.b16 %v4334
    %v4633 = vunpack.c.h.b16 %v4334
    %v4634 = vunpack.c.l.b16 %v4335
    %v4635 = vunpack.c.h.b16 %v4335
    %v4636 = vunpack.c.l.b16 %v4336
    %v4637 = vunpack.c.h.b16 %v4336
    %v4638 = vunpack.c.l.b16 %v4337
    %v4639 = vunpack.c.h.b16 %v4337
    %v4640 = vunpack.c.l.b16 %v4338
    %v4641 = vunpack.c.h.b16 %v4338
    %v4642 = vunpack.c.l.b16 %v4339
    %v4643 = vunpack.c.h.b16 %v4339
    %v4644 = vunpack.c.l.b16 %v4340
    %v4645 = vunpack.c.h.b16 %v4340
    %v4646 = vunpack.c.l.b16 %v4341
    %v4647 = vunpack.c.h.b16 %v4341
    %v4648 = vunpack.c.l.b16 %v4342
    %v4649 = vunpack.c.h.b16 %v4342
    %v4650 = vunpack.c.l.b16 %v4343
    %v4651 = vunpack.c.h.b16 %v4343
    %v4652 = vunpack.c.l.b16 %v4344
    %v4653 = vunpack.c.h.b16 %v4344
    %v4654 = vunpack.c.l.b16 %v4345
    %v4655 = vunpack.c.h.b16 %v4345
    %v4656 = vunpack.c.l.b16 %v4346
    %v4657 = vunpack.c.h.b16 %v4346
    %v4658 = vunpack.c.l.b16 %v4347
    %v4659 = vunpack.c.h.b16 %v4347
    %v4660 = vunpack.c.l.b16 %v4348
    %v4661 = vunpack.c.h.b16 %v4348
    %v4662 = vunpack.c.l.b16 %v4349
    %v4663 = vunpack.c.h.b16 %v4349
    %v4664 = vunpack.c.l.b16 %v4350
    %v4665 = vunpack.c.h.b16 %v4350
    %v4666 = vunpack.c.l.b16 %v4351
    %v4667 = vunpack.c.h.b16 %v4351
    %v4668 = vunpack.c.l.b16 %v4352
    %v4669 = vunpack.c.h.b16 %v4352
    %v4670 = vunpack.c.l.b16 %v4353
    %v4671 = vunpack.c.h.b16 %v4353
    %v4672 = vunpack.c.l.b16 %v4354
    %v4673 = vunpack.c.h.b16 %v4354
    %v4674 = vunpack.c.l.b16 %v4355
    %v4675 = vunpack.c.h.b16 %v4355
    %v4676 = vunpack.c.l.b16 %v4356
    %v4677 = vunpack.c.h.b16 %v4356
    %v4678 = vunpack.c.l.b16 %v4357
    %v4679 = vunpack.c.h.b16 %v4357
    %v4680 = vunpack.c.l.b16 %v4358
    %v4681 = vunpack.c.h.b16 %v4358
    %v4682 = vunpack.c.l.b16 %v4359
    %v4683 = vunpack.c.h.b16 %v4359
    %v4684 = vunpack.c.l.b16 %v4360
    %v4685 = vunpack.c.h.b16 %v4360
    %v4686 = vunpack.c.l.b16 %v4361
    %v4687 = vunpack.c.h.b16 %v4361
    %v4688 = vunpack.c.l.b16 %v4362
    %v4689 = vunpack.c.h.b16 %v4362
    %v4690 = vunpack.c.l.b16 %v4363
    %v4691 = vunpack.c.h.b16 %v4363
    %v4692 = vunpack.c.l.b16 %v4364
    %v4693 = vunpack.c.h.b16 %v4364
    %v4694 = vunpack.c.l.b16 %v4365
    %v4695 = vunpack.c.h.b16 %v4365
    %v4696 = vunpack.c.l.b16 %v4366
    %v4697 = vunpack.c.h.b16 %v4366
    %v4698 = vunpack.c.l.b16 %v4367
    %v4699 = vunpack.c.h.b16 %v4367
    %v4700 = vunpack.c.l.b16 %v4368
    %v4701 = vunpack.c.h.b16 %v4368
    %v4702 = vunpack.c.l.b16 %v4369
    %v4703 = vunpack.c.h.b16 %v4369
    %v4704 = vunpack.c.l.b16 %v4370
    %v4705 = vunpack.c.h.b16 %v4370
    %v4706 = vunpack.c.l.b16 %v4371
    %v4707 = vunpack.c.h.b16 %v4371
    %v4708 = vunpack.c.l.b16 %v4372
    %v4709 = vunpack.c.h.b16 %v4372
    %v4710 = vunpack.c.l.b16 %v4373
    %v4711 = vunpack.c.h.b16 %v4373
    %v4712 = vunpack.c.l.b16 %v4374
    %v4713 = vunpack.c.h.b16 %v4374
    %v4714 = vunpack.c.l.b16 %v4375
    %v4715 = vunpack.c.h.b16 %v4375
    %v4716 = vunpack.c.l.b16 %v4376
    %v4717 = vunpack.c.h.b16 %v4376
    %v4718 = vunpack.c.l.b16 %v4377
    %v4719 = vunpack.c.h.b16 %v4377
    %v4720 = vunpack.c.l.b16 %v4378
    %v4721 = vunpack.c.h.b16 %v4378
    %v4722 = vunpack.c.l.b16 %v4379
    %v4723 = vunpack.c.h.b16 %v4379
    %v4724 = vunpack.c.l.b16 %v4380
    %v4725 = vunpack.c.h.b16 %v4380
    %v4726 = vunpack.c.l.b16 %v4381
    %v4727 = vunpack.c.h.b16 %v4381
    %v4728 = vunpack.c.l.b16 %v4382
    %v4729 = vunpack.c.h.b16 %v4382
    %v4730 = vunpack.c.l.b16 %v4383
    %v4731 = vunpack.c.h.b16 %v4383
    %v4732 = vunpack.c.l.b16 %v4384
    %v4733 = vunpack.c.h.b16 %v4384
    %v4734 = vunpack.c.l.b16 %v4385
    %v4735 = vunpack.c.h.b16 %v4385
    %v4736 = vunpack.c.l.b16 %v4386
    %v4737 = vunpack.c.h.b16 %v4386
    %v4738 = vunpack.c.l.b16 %v4387
    %v4739 = vunpack.c.h.b16 %v4387
    %v4740 = vunpack.c.l.b16 %v4388
    %v4741 = vunpack.c.h.b16 %v4388
    %v4742 = vunpack.c.l.b16 %v4389
    %v4743 = vunpack.c.h.b16 %v4389
    %v4744 = vunpack.c.l.b16 %v4390
    %v4745 = vunpack.c.h.b16 %v4390
    %v4746 = vunpack.c.l.b16 %v4391
    %v4747 = vunpack.c.h.b16 %v4391
    %v4748 = vunpack.c.l.b16 %v4392
    %v4749 = vunpack.c.h.b16 %v4392
    %v4750 = vunpack.c.l.b16 %v4393
    %v4751 = vunpack.c.h.b16 %v4393
    %v4752 = vunpack.c.l.b16 %v4394
    %v4753 = vunpack.c.h.b16 %v4394
    %v4754 = vunpack.c.l.b16 %v4395
    %v4755 = vunpack.c.h.b16 %v4395
    %v4756 = vunpack.c.l.b16 %v4396
    %v4757 = vunpack.c.h.b16 %v4396
    %v4758 = vunpack.c.l.b16 %v4397
    %v4759 = vunpack.c.h.b16 %v4397
    %v4760 = vunpack.c.l.b16 %v4398
    %v4761 = vunpack.c.h.b16 %v4398
    %v4762 = vunpack.c.l.b16 %v4399
    %v4763 = vunpack.c.h.b16 %v4399
    %v4764 = vunpack.c.l.b16 %v4400
    %v4765 = vunpack.c.h.b16 %v4400
    %v4766 = vunpack.c.l.b16 %v4401
    %v4767 = vunpack.c.h.b16 %v4401
    %v4768 = vunpack.c.l.b16 %v4402
    %v4769 = vunpack.c.h.b16 %v4402
    %v4770 = vunpack.c.l.b16 %v4403
    %v4771 = vunpack.c.h.b16 %v4403
    %v4772 = vunpack.c.l.b16 %v4404
    %v4773 = vunpack.c.h.b16 %v4404
    %v4774 = vunpack.c.l.b16 %v4405
    %v4775 = vunpack.c.h.b16 %v4405
    %v4776 = vunpack.c.l.b16 %v4406
    %v4777 = vunpack.c.h.b16 %v4406
    %v4778 = vunpack.c.l.b16 %v4407
    %v4779 = vunpack.c.h.b16 %v4407
    %v4780 = vunpack.c.l.b16 %v4408
    %v4781 = vunpack.c.h.b16 %v4408
    %v4782 = vunpack.c.l.b16 %v4409
    %v4783 = vunpack.c.h.b16 %v4409
    %v4784 = vunpack.c.l.b16 %v4410
    %v4785 = vunpack.c.h.b16 %v4410
    %v4786 = vunpack.c.l.b16 %v4411
    %v4787 = vunpack.c.h.b16 %v4411
    %v4788 = vunpack.c.l.b16 %v4412
    %v4789 = vunpack.c.h.b16 %v4412
    %v4790 = vunpack.c.l.b16 %v4413
    %v4791 = vunpack.c.h.b16 %v4413
    %v4792 = vunpack.c.l.b16 %v4414
    %v4793 = vunpack.c.h.b16 %v4414
    %v4794 = vunpack.c.l.b16 %v4415
    %v4795 = vunpack.c.h.b16 %v4415
    %v4796 = vunpack.c.l.b16 %v4416
    %v4797 = vunpack.c.h.b16 %v4416
    %v4798 = vunpack.c.l.b16 %v4417
    %v4799 = vunpack.c.h.b16 %v4417
    %v4800 = vunpack.c.l.b16 %v4418
    %v4801 = vunpack.c.h.b16 %v4418
    %v4802 = vunpack.c.l.b16 %v4419
    %v4803 = vunpack.c.h.b16 %v4419
    %v4804 = vunpack.c.l.b16 %v4420
    %v4805 = vunpack.c.h.b16 %v4420
    %v4806 = vunpack.c.l.b16 %v4421
    %v4807 = vunpack.c.h.b16 %v4421
    %v4808 = vunpack.c.l.b16 %v4422
    %v4809 = vunpack.c.h.b16 %v4422
    %v4810 = vunpack.c.l.b16 %v4423
    %v4811 = vunpack.c.h.b16 %v4423
    %v4812 = vunpack.c.l.b16 %v4424
    %v4813 = vunpack.c.h.b16 %v4424
    %v4814 = vunpack.c.l.b16 %v4425
    %v4815 = vunpack.c.h.b16 %v4425
    %v4816 = vunpack.c.l.b16 %v4426
    %v4817 = vunpack.c.h.b16 %v4426
    %v4818 = vunpack.c.l.b16 %v4427
    %v4819 = vunpack.c.h.b16 %v4427
    %v4820 = vunpack.c.l.b16 %v4428
    %v4821 = vunpack.c.h.b16 %v4428
    %v4822 = vunpack.c.l.b16 %v4429
    %v4823 = vunpack.c.h.b16 %v4429
    %v4824 = vunpack.c.l.b16 %v4430
    %v4825 = vunpack.c.h.b16 %v4430
    %v4826 = vunpack.c.l.b16 %v4431
    %v4827 = vunpack.c.h.b16 %v4431
    %v4828 = vunpack.c.l.b16 %v4432
    %v4829 = vunpack.c.h.b16 %v4432
    %v4830 = vunpack.c.l.b16 %v4433
    %v4831 = vunpack.c.h.b16 %v4433
    %v4832 = vunpack.c.l.b16 %v4434
    %v4833 = vunpack.c.h.b16 %v4434
    %v4834 = vunpack.c.l.b16 %v4435
    %v4835 = vunpack.c.h.b16 %v4435
    %v4836 = vunpack.c.l.b16 %v4436
    %v4837 = vunpack.c.h.b16 %v4436
    %v4838 = vunpack.c.l.b16 %v4437
    %v4839 = vunpack.c.h.b16 %v4437
    %v4840 = vunpack.c.l.b16 %v4438
    %v4841 = vunpack.c.h.b16 %v4438
    %v4842 = vunpack.c.l.b16 %v4439
    %v4843 = vunpack.c.h.b16 %v4439
    %v4844 = vpack.c.b16 %v4592, %v4588
    %v4845 = vpack.c.b16 %v4593, %v4589
    %v4846 = vpack.c.b16 %v4594, %v4590
    %v4847 = vpack.c.b16 %v4595, %v4591
    %v4848 = vpack.c.b16 %v4600, %v4596
    %v4849 = vpack.c.b16 %v4601, %v4597
    %v4850 = vpack.c.b16 %v4602, %v4598
    %v4851 = vpack.c.b16 %v4603, %v4599
    %v4852 = vpack.c.b16 %v4608, %v4604
    %v4853 = vpack.c.b16 %v4609, %v4605
    %v4854 = vpack.c.b16 %v4610, %v4606
    %v4855 = vpack.c.b16 %v4611, %v4607
    %v4856 = vpack.c.b16 %v4616, %v4612
    %v4857 = vpack.c.b16 %v4617, %v4613
    %v4858 = vpack.c.b16 %v4618, %v4614
    %v4859 = vpack.c.b16 %v4619, %v4615
    %v4860 = vpack.c.b16 %v4624, %v4620
    %v4861 = vpack.c.b16 %v4625, %v4621
    %v4862 = vpack.c.b16 %v4626, %v4622
    %v4863 = vpack.c.b16 %v4627, %v4623
    %v4864 = vpack.c.b16 %v4632, %v4628
    %v4865 = vpack.c.b16 %v4633, %v4629
    %v4866 = vpack.c.b16 %v4634, %v4630
    %v4867 = vpack.c.b16 %v4635, %v4631
    %v4868 = vpack.c.b16 %v4640, %v4636
    %v4869 = vpack.c.b16 %v4641, %v4637
    %v4870 = vpack.c.b16 %v4642, %v4638
    %v4871 = vpack.c.b16 %v4643, %v4639
    %v4872 = vpack.c.b16 %v4648, %v4644
    %v4873 = vpack.c.b16 %v4649, %v4645
    %v4874 = vpack.c.b16 %v4650, %v4646
    %v4875 = vpack.c.b16 %v4651, %v4647
    %v4876 = vpack.c.b16 %v4656, %v4652
    %v4877 = vpack.c.b16 %v4657, %v4653
    %v4878 = vpack.c.b16 %v4658, %v4654
    %v4879 = vpack.c.b16 %v4659, %v4655
    %v4880 = vpack.c.b16 %v4664, %v4660
    %v4881 = vpack.c.b16 %v4665, %v4661
    %v4882 = vpack.c.b16 %v4666, %v4662
    %v4883 = vpack.c.b16 %v4667, %v4663
    %v4884 = vpack.c.b16 %v4672, %v4668
    %v4885 = vpack.c.b16 %v4673, %v4669
    %v4886 = vpack.c.b16 %v4674, %v4670
    %v4887 = vpack.c.b16 %v4675, %v4671
    %v4888 = vpack.c.b16 %v4680, %v4676
    %v4889 = vpack.c.b16 %v4681, %v4677
    %v4890 = vpack.c.b16 %v4682, %v4678
    %v4891 = vpack.c.b16 %v4683, %v4679
    %v4892 = vpack.c.b16 %v4688, %v4684
    %v4893 = vpack.c.b16 %v4689, %v4685
    %v4894 = vpack.c.b16 %v4690, %v4686
    %v4895 = vpack.c.b16 %v4691, %v4687
    %v4896 = vpack.c.b16 %v4696, %v4692
    %v4897 = vpack.c.b16 %v4697, %v4693
    %v4898 = vpack.c.b16 %v4698, %v4694
    %v4899 = vpack.c.b16 %v4699, %v4695
    %v4900 = vpack.c.b16 %v4704, %v4700
    %v4901 = vpack.c.b16 %v4705, %v4701
    %v4902 = vpack.c.b16 %v4706, %v4702
    %v4903 = vpack.c.b16 %v4707, %v4703
    %v4904 = vpack.c.b16 %v4712, %v4708
    %v4905 = vpack.c.b16 %v4713, %v4709
    %v4906 = vpack.c.b16 %v4714, %v4710
    %v4907 = vpack.c.b16 %v4715, %v4711
    %v4908 = vpack.c.b16 %v4720, %v4716
    %v4909 = vpack.c.b16 %v4721, %v4717
    %v4910 = vpack.c.b16 %v4722, %v4718
    %v4911 = vpack.c.b16 %v4723, %v4719
    %v4912 = vpack.c.b16 %v4728, %v4724
    %v4913 = vpack.c.b16 %v4729, %v4725
    %v4914 = vpack.c.b16 %v4730, %v4726
    %v4915 = vpack.c.b16 %v4731, %v4727
    %v4916 = vpack.c.b16 %v4736, %v4732
    %v4917 = vpack.c.b16 %v4737, %v4733
    %v4918 = vpack.c.b16 %v4738, %v4734
    %v4919 = vpack.c.b16 %v4739, %v4735
    %v4920 = vpack.c.b16 %v4744, %v4740
    %v4921 = vpack.c.b16 %v4745, %v4741
    %v4922 = vpack.c.b16 %v4746, %v4742
    %v4923 = vpack.c.b16 %v4747, %v4743
    %v4924 = vpack.c.b16 %v4752, %v4748
    %v4925 = vpack.c.b16 %v4753, %v4749
    %v4926 = vpack.c.b16 %v4754, %v4750
    %v4927 = vpack.c.b16 %v4755, %v4751
    %v4928 = vpack.c.b16 %v4760, %v4756
    %v4929 = vpack.c.b16 %v4761, %v4757
    %v4930 = vpack.c.b16 %v4762, %v4758
    %v4931 = vpack.c.b16 %v4763, %v4759
    %v4932 = vpack.c.b16 %v4768, %v4764
    %v4933 = vpack.c.b16 %v4769, %v4765
    %v4934 = vpack.c.b16 %v4770, %v4766
    %v4935 = vpack.c.b16 %v4771, %v4767
    %v4936 = vpack.c.b16 %v4776, %v4772
    %v4937 = vpack.c.b16 %v4777, %v4773
    %v4938 = vpack.c.b16 %v4778, %v4774
    %v4939 = vpack.c.b16 %v4779, %v4775
    %v4940 = vpack.c.b16 %v4784, %v4780
    %v4941 = vpack.c.b16 %v4785, %v4781
    %v4942 = vpack.c.b16 %v4786, %v4782
    %v4943 = vpack.c.b16 %v4787, %v4783
    %v4944 = vpack.c.b16 %v4792, %v4788
    %v4945 = vpack.c.b16 %v4793, %v4789
    %v4946 = vpack.c.b16 %v4794, %v4790
    %v4947 = vpack.c.b16 %v4795, %v4791
    %v4948 = vpack.c.b16 %v4800, %v4796
    %v4949 = vpack.c.b16 %v4801, %v4797
    %v4950 = vpack.c.b16 %v4802, %v4798
    %v4951 = vpack.c.b16 %v4803, %v4799
    %v4952 = vpack.c.b16 %v4808, %v4804
    %v4953 = vpack.c.b16 %v4809, %v4805
    %v4954 = vpack.c.b16 %v4810, %v4806
    %v4955 = vpack.c.b16 %v4811, %v4807
    %v4956 = vpack.c.b16 %v4816, %v4812
    %v4957 = vpack.c.b16 %v4817, %v4813
    %v4958 = vpack.c.b16 %v4818, %v4814
    %v4959 = vpack.c.b16 %v4819, %v4815
    %v4960 = vpack.c.b16 %v4824, %v4820
    %v4961 = vpack.c.b16 %v4825, %v4821
    %v4962 = vpack.c.b16 %v4826, %v4822
    %v4963 = vpack.c.b16 %v4827, %v4823
    %v4964 = vpack.c.b16 %v4832, %v4828
    %v4965 = vpack.c.b16 %v4833, %v4829
    %v4966 = vpack.c.b16 %v4834, %v4830
    %v4967 = vpack.c.b16 %v4835, %v4831
    %v4968 = vpack.c.b16 %v4840, %v4836
    %v4969 = vpack.c.b16 %v4841, %v4837
    %v4970 = vpack.c.b16 %v4842, %v4838
    %v4971 = vpack.c.b16 %v4843, %v4839
    %5100 = vmatprep.subr.bf16.mxu0 %v4845
    %5101 = vmatpush1.bf16.msra.mxu0 %v4844
    %5102 = vmatprep.subr.bf16.mxu0 %v4849
    %5103 = vmatpush1.bf16.msra.mxu0 %v4848
    %5104 = vmatprep.subr.bf16.mxu0 %v4853
    %5105 = vmatpush1.bf16.msra.mxu0 %v4852
    %5106 = vmatprep.subr.bf16.mxu0 %v4857
    %5107 = vmatpush1.bf16.msra.mxu0 %v4856
    %5108 = vmatprep.subr.bf16.mxu0 %v4861
    %5109 = vmatpush1.bf16.msra.mxu0 %v4860
    %5110 = vmatprep.subr.bf16.mxu0 %v4865
    %5111 = vmatpush1.bf16.msra.mxu0 %v4864
    %5112 = vmatprep.subr.bf16.mxu0 %v4869
    %5113 = vmatpush1.bf16.msra.mxu0 %v4868
    %5114 = vmatprep.subr.bf16.mxu0 %v4873
    %5115 = vmatpush1.bf16.msra.mxu0 %v4872
    %5116 = vmatprep.subr.bf16.mxu0 %v4877
    %5117 = vmatpush1.bf16.msra.mxu0 %v4876
    %5118 = vmatprep.subr.bf16.mxu0 %v4881
    %5119 = vmatpush1.bf16.msra.mxu0 %v4880
    %5120 = vmatprep.subr.bf16.mxu0 %v4885
    %5121 = vmatpush1.bf16.msra.mxu0 %v4884
    %5122 = vmatprep.subr.bf16.mxu0 %v4889
    %5123 = vmatpush1.bf16.msra.mxu0 %v4888
    %5124 = vmatprep.subr.bf16.mxu0 %v4893
    %5125 = vmatpush1.bf16.msra.mxu0 %v4892
    %5126 = vmatprep.subr.bf16.mxu0 %v4897
    %5127 = vmatpush1.bf16.msra.mxu0 %v4896
    %5128 = vmatprep.subr.bf16.mxu0 %v4901
    %5129 = vmatpush1.bf16.msra.mxu0 %v4900
    %5130 = vmatprep.subr.bf16.mxu0 %v4905
    %5131 = vmatpush1.bf16.msra.mxu0 %v4904
    %5132 = vmatprep.mubr.bf16.mxu0 %v4441
    %5133 = vmatmul.mubr.bf16.gmra.mrb[0].mxu0 %v4440
    %v5134 = vpop.f32.mrb[0].mxu0
    %v5135 = vadd.f32 %v4447, %v5134
    %v5136 = vpop.f32.mrb[0].mxu0
    %v5137 = vadd.f32 %v4451, %v5136
    %v5138 = vpop.f32.mrb[0].mxu0
    %v5139 = vpop.f32.mrb[0].mxu0
    %5140 = vdwg.mxu0
    %5141 = vmatprep.subr.bf16.mxu0 %v4909
    %5142 = vmatpush1.bf16.msra.mxu0 %v4908
    %5143 = vmatprep.subr.bf16.mxu0 %v4913
    %5144 = vmatpush1.bf16.msra.mxu0 %v4912
    %5145 = vmatprep.subr.bf16.mxu0 %v4917
    %5146 = vmatpush1.bf16.msra.mxu0 %v4916
    %5147 = vmatprep.subr.bf16.mxu0 %v4921
    %5148 = vmatpush1.bf16.msra.mxu0 %v4920
    %5149 = vmatprep.subr.bf16.mxu0 %v4925
    %5150 = vmatpush1.bf16.msra.mxu0 %v4924
    %5151 = vmatprep.subr.bf16.mxu0 %v4929
    %5152 = vmatpush1.bf16.msra.mxu0 %v4928
    %5153 = vmatprep.subr.bf16.mxu0 %v4933
    %5154 = vmatpush1.bf16.msra.mxu0 %v4932
    %5155 = vmatprep.subr.bf16.mxu0 %v4937
    %5156 = vmatpush1.bf16.msra.mxu0 %v4936
    %5157 = vmatprep.subr.bf16.mxu0 %v4941
    %5158 = vmatpush1.bf16.msra.mxu0 %v4940
    %5159 = vmatprep.subr.bf16.mxu0 %v4945
    %5160 = vmatpush1.bf16.msra.mxu0 %v4944
    %5161 = vmatprep.subr.bf16.mxu0 %v4949
    %5162 = vmatpush1.bf16.msra.mxu0 %v4948
    %5163 = vmatprep.subr.bf16.mxu0 %v4953
    %5164 = vmatpush1.bf16.msra.mxu0 %v4952
    %5165 = vmatprep.subr.bf16.mxu0 %v4957
    %5166 = vmatpush1.bf16.msra.mxu0 %v4956
    %5167 = vmatprep.subr.bf16.mxu0 %v4961
    %5168 = vmatpush1.bf16.msra.mxu0 %v4960
    %5169 = vmatprep.subr.bf16.mxu0 %v4965
    %5170 = vmatpush1.bf16.msra.mxu0 %v4964
    %5171 = vmatprep.subr.bf16.mxu0 %v4969
    %5172 = vmatpush1.bf16.msra.mxu0 %v4968
    %5173 = vmatprep.mubr.bf16.mxu0 %v4443
    %5174 = vmatmul.mubr.bf16.gmra.mrb[0].mxu0 %v4442
    %v5175 = vpop.f32.mrb[0].mxu0
    %v5176 = vadd.f32 %v5135, %v5175
    %v5177 = vpop.f32.mrb[0].mxu0
    %v5178 = vadd.f32 %v5137, %v5177
    %v5179 = vpop.f32.mrb[0].mxu0
    %v5180 = vpop.f32.mrb[0].mxu0
    %5181 = vdwg.mxu0
    %5182 = vmatprep.subr.bf16.mxu0 %v4847
    %5183 = vmatpush1.bf16.msra.mxu0 %v4846
    %5184 = vmatprep.subr.bf16.mxu0 %v4851
    %5185 = vmatpush1.bf16.msra.mxu0 %v4850
    %5186 = vmatprep.subr.bf16.mxu0 %v4855
    %5187 = vmatpush1.bf16.msra.mxu0 %v4854
    %5188 = vmatprep.subr.bf16.mxu0 %v4859
    %5189 = vmatpush1.bf16.msra.mxu0 %v4858
    %5190 = vmatprep.subr.bf16.mxu0 %v4863
    %5191 = vmatpush1.bf16.msra.mxu0 %v4862
    %5192 = vmatprep.subr.bf16.mxu0 %v4867
    %5193 = vmatpush1.bf16.msra.mxu0 %v4866
    %5194 = vmatprep.subr.bf16.mxu0 %v4871
    %5195 = vmatpush1.bf16.msra.mxu0 %v4870
    %5196 = vmatprep.subr.bf16.mxu0 %v4875
    %5197 = vmatpush1.bf16.msra.mxu0 %v4874
    %5198 = vmatprep.subr.bf16.mxu0 %v4879
    %5199 = vmatpush1.bf16.msra.mxu0 %v4878
    %5200 = vmatprep.subr.bf16.mxu0 %v4883
    %5201 = vmatpush1.bf16.msra.mxu0 %v4882
    %5202 = vmatprep.subr.bf16.mxu0 %v4887
    %5203 = vmatpush1.bf16.msra.mxu0 %v4886
    %5204 = vmatprep.subr.bf16.mxu0 %v4891
    %5205 = vmatpush1.bf16.msra.mxu0 %v4890
    %5206 = vmatprep.subr.bf16.mxu0 %v4895
    %5207 = vmatpush1.bf16.msra.mxu0 %v4894
    %5208 = vmatprep.subr.bf16.mxu0 %v4899
    %5209 = vmatpush1.bf16.msra.mxu0 %v4898
    %5210 = vmatprep.subr.bf16.mxu0 %v4903
    %5211 = vmatpush1.bf16.msra.mxu0 %v4902
    %5212 = vmatprep.subr.bf16.mxu0 %v4907
    %5213 = vmatpush1.bf16.msra.mxu0 %v4906
    %5214 = vmatprep.mubr.bf16.mxu0 %v4441
    %5215 = vmatmul.mubr.bf16.gmra.mrb[0].mxu0 %v4440
    %v5216 = vpop.f32.mrb[0].mxu0
    %v5217 = vadd.f32 %v4455, %v5216
    %v5218 = vpop.f32.mrb[0].mxu0
    %v5219 = vadd.f32 %v4459, %v5218
    %v5220 = vpop.f32.mrb[0].mxu0
    %v5221 = vpop.f32.mrb[0].mxu0
    %5222 = vdwg.mxu0
    %5223 = vmatprep.subr.bf16.mxu0 %v4911
    %5224 = vmatpush1.bf16.msra.mxu0 %v4910
    %5225 = vmatprep.subr.bf16.mxu0 %v4915
    %5226 = vmatpush1.bf16.msra.mxu0 %v4914
    %5227 = vmatprep.subr.bf16.mxu0 %v4919
    %5228 = vmatpush1.bf16.msra.mxu0 %v4918
    %5229 = vmatprep.subr.bf16.mxu0 %v4923
    %5230 = vmatpush1.bf16.msra.mxu0 %v4922
    %5231 = vmatprep.subr.bf16.mxu0 %v4927
    %5232 = vmatpush1.bf16.msra.mxu0 %v4926
    %5233 = vmatprep.subr.bf16.mxu0 %v4931
    %5234 = vmatpush1.bf16.msra.mxu0 %v4930
    %5235 = vmatprep.subr.bf16.mxu0 %v4935
    %5236 = vmatpush1.bf16.msra.mxu0 %v4934
    %5237 = vmatprep.subr.bf16.mxu0 %v4939
    %5238 = vmatpush1.bf16.msra.mxu0 %v4938
    %5239 = vmatprep.subr.bf16.mxu0 %v4943
    %5240 = vmatpush1.bf16.msra.mxu0 %v4942
    %5241 = vmatprep.subr.bf16.mxu0 %v4947
    %5242 = vmatpush1.bf16.msra.mxu0 %v4946
    %5243 = vmatprep.subr.bf16.mxu0 %v4951
    %5244 = vmatpush1.bf16.msra.mxu0 %v4950
    %5245 = vmatprep.subr.bf16.mxu0 %v4955
    %5246 = vmatpush1.bf16.msra.mxu0 %v4954
    %5247 = vmatprep.subr.bf16.mxu0 %v4959
    %5248 = vmatpush1.bf16.msra.mxu0 %v4958
    %5249 = vmatprep.subr.bf16.mxu0 %v4963
    %5250 = vmatpush1.bf16.msra.mxu0 %v4962
    %5251 = vmatprep.subr.bf16.mxu0 %v4967
    %5252 = vmatpush1.bf16.msra.mxu0 %v4966
    %5253 = vmatprep.subr.bf16.mxu0 %v4971
    %5254 = vmatpush1.bf16.msra.mxu0 %v4970
    %5255 = vmatprep.mubr.bf16.mxu0 %v4443
    %5256 = vmatmul.mubr.bf16.gmra.mrb[0].mxu0 %v4442
    %v5257 = vpop.f32.mrb[0].mxu0
    %v5258 = vadd.f32 %v5217, %v5257
    %v5259 = vpop.f32.mrb[0].mxu0
    %v5260 = vadd.f32 %v5219, %v5259
    %v5261 = vpop.f32.mrb[0].mxu0
    %v5262 = vpop.f32.mrb[0].mxu0
    %5263 = vdwg.mxu0
    %vm5264 = vcmp.ge.f32.partialorder %v5176, 0.0
    %vm5265 = vcmp.ge.f32.partialorder %v5178, 0.0
    %vm5266 = vcmp.ge.f32.partialorder %v5258, 0.0
    %vm5267 = vcmp.ge.f32.partialorder %v5260, 0.0
    %v5268 = vmul.f32 %v5176, 0.01
    %v5269 = vmul.f32 %v5178, 0.01
    %v5270 = vmul.f32 %v5258, 0.01
    %v5271 = vmul.f32 %v5260, 0.01
    %v5272 = vsel %vm5264, %v5176, %v5268
    %v5273 = vsel %vm5265, %v5178, %v5269
    %v5274 = vsel %vm5266, %v5258, %v5270
    %v5275 = vsel %vm5267, %v5260, %v5271
    %v5276 = vld [vmem:[%s15] sm:$0xff]
    %v5277 = vld [vmem:[%s15 + $0x8] sm:$0xff]
    %v5278 = vld [vmem:[%s15 + $0x10] sm:$0xff]
    %v5279 = vld [vmem:[%s15 + $0x18] sm:$0xff]
    %v5280 = vld [vmem:[%s15 + $0x20] sm:$0xff]
    %v5281 = vld [vmem:[%s15 + $0x28] sm:$0xff]
    %v5282 = vld [vmem:[%s15 + $0x30] sm:$0xff]
    %v5283 = vld [vmem:[%s15 + $0x38] sm:$0xff]
    %v5284 = vld [vmem:[%s15 + $0x40] sm:$0xff]
    %v5285 = vld [vmem:[%s15 + $0x48] sm:$0xff]
    %v5286 = vld [vmem:[%s15 + $0x50] sm:$0xff]
    %v5287 = vld [vmem:[%s15 + $0x58] sm:$0xff]
    %v5288 = vld [vmem:[%s15 + $0x60] sm:$0xff]
    %v5289 = vld [vmem:[%s15 + $0x68] sm:$0xff]
    %v5290 = vld [vmem:[%s15 + $0x70] sm:$0xff]
    %v5291 = vld [vmem:[%s15 + $0x78] sm:$0xff]
    %v5292 = vld [vmem:[%s15 + $0x80] sm:$0xff]
    %v5293 = vld [vmem:[%s15 + $0x88] sm:$0xff]
    %v5294 = vld [vmem:[%s15 + $0x90] sm:$0xff]
    %v5295 = vld [vmem:[%s15 + $0x98] sm:$0xff]
    %v5296 = vld [vmem:[%s15 + $0xa0] sm:$0xff]
    %v5297 = vld [vmem:[%s15 + $0xa8] sm:$0xff]
    %v5298 = vld [vmem:[%s15 + $0xb0] sm:$0xff]
    %v5299 = vld [vmem:[%s15 + $0xb8] sm:$0xff]
    %v5300 = vld [vmem:[%s15 + $0xc0] sm:$0xff]
    %v5301 = vld [vmem:[%s15 + $0xc8] sm:$0xff]
    %v5302 = vld [vmem:[%s15 + $0xd0] sm:$0xff]
    %v5303 = vld [vmem:[%s15 + $0xd8] sm:$0xff]
    %v5304 = vld [vmem:[%s15 + $0xe0] sm:$0xff]
    %v5305 = vld [vmem:[%s15 + $0xe8] sm:$0xff]
    %v5306 = vld [vmem:[%s15 + $0xf0] sm:$0xff]
    %v5307 = vld [vmem:[%s15 + $0xf8] sm:$0xff]
    %v5308 = vld [vmem:[%s15 + $0x100] sm:$0xff]
    %v5309 = vld [vmem:[%s15 + $0x108] sm:$0xff]
    %v5310 = vld [vmem:[%s15 + $0x110] sm:$0xff]
    %v5311 = vld [vmem:[%s15 + $0x118] sm:$0xff]
    %v5312 = vld [vmem:[%s15 + $0x120] sm:$0xff]
    %v5313 = vld [vmem:[%s15 + $0x128] sm:$0xff]
    %v5314 = vld [vmem:[%s15 + $0x130] sm:$0xff]
    %v5315 = vld [vmem:[%s15 + $0x138] sm:$0xff]
    %v5316 = vld [vmem:[%s15 + $0x140] sm:$0xff]
    %v5317 = vld [vmem:[%s15 + $0x148] sm:$0xff]
    %v5318 = vld [vmem:[%s15 + $0x150] sm:$0xff]
    %v5319 = vld [vmem:[%s15 + $0x158] sm:$0xff]
    %v5320 = vld [vmem:[%s15 + $0x160] sm:$0xff]
    %v5321 = vld [vmem:[%s15 + $0x168] sm:$0xff]
    %v5322 = vld [vmem:[%s15 + $0x170] sm:$0xff]
    %v5323 = vld [vmem:[%s15 + $0x178] sm:$0xff]
    %v5324 = vld [vmem:[%s15 + $0x180] sm:$0xff]
    %v5325 = vld [vmem:[%s15 + $0x188] sm:$0xff]
    %v5326 = vld [vmem:[%s15 + $0x190] sm:$0xff]
    %v5327 = vld [vmem:[%s15 + $0x198] sm:$0xff]
    %v5328 = vld [vmem:[%s15 + $0x1a0] sm:$0xff]
    %v5329 = vld [vmem:[%s15 + $0x1a8] sm:$0xff]
    %v5330 = vld [vmem:[%s15 + $0x1b0] sm:$0xff]
    %v5331 = vld [vmem:[%s15 + $0x1b8] sm:$0xff]
    %v5332 = vld [vmem:[%s15 + $0x1c0] sm:$0xff]
    %v5333 = vld [vmem:[%s15 + $0x1c8] sm:$0xff]
    %v5334 = vld [vmem:[%s15 + $0x1d0] sm:$0xff]
    %v5335 = vld [vmem:[%s15 + $0x1d8] sm:$0xff]
    %v5336 = vld [vmem:[%s15 + $0x1e0] sm:$0xff]
    %v5337 = vld [vmem:[%s15 + $0x1e8] sm:$0xff]
    %v5338 = vld [vmem:[%s15 + $0x1f0] sm:$0xff]
    %v5339 = vld [vmem:[%s15 + $0x1f8] sm:$0xff]
    %v5340 = vld [vmem:[%s15 + $0x200] sm:$0xff]
    %v5341 = vld [vmem:[%s15 + $0x208] sm:$0xff]
    %v5342 = vld [vmem:[%s15 + $0x210] sm:$0xff]
    %v5343 = vld [vmem:[%s15 + $0x218] sm:$0xff]
    %v5344 = vld [vmem:[%s15 + $0x220] sm:$0xff]
    %v5345 = vld [vmem:[%s15 + $0x228] sm:$0xff]
    %v5346 = vld [vmem:[%s15 + $0x230] sm:$0xff]
    %v5347 = vld [vmem:[%s15 + $0x238] sm:$0xff]
    %v5348 = vld [vmem:[%s15 + $0x240] sm:$0xff]
    %v5349 = vld [vmem:[%s15 + $0x248] sm:$0xff]
    %v5350 = vld [vmem:[%s15 + $0x250] sm:$0xff]
    %v5351 = vld [vmem:[%s15 + $0x258] sm:$0xff]
    %v5352 = vld [vmem:[%s15 + $0x260] sm:$0xff]
    %v5353 = vld [vmem:[%s15 + $0x268] sm:$0xff]
    %v5354 = vld [vmem:[%s15 + $0x270] sm:$0xff]
    %v5355 = vld [vmem:[%s15 + $0x278] sm:$0xff]
    %v5356 = vld [vmem:[%s15 + $0x280] sm:$0xff]
    %v5357 = vld [vmem:[%s15 + $0x288] sm:$0xff]
    %v5358 = vld [vmem:[%s15 + $0x290] sm:$0xff]
    %v5359 = vld [vmem:[%s15 + $0x298] sm:$0xff]
    %v5360 = vld [vmem:[%s15 + $0x2a0] sm:$0xff]
    %v5361 = vld [vmem:[%s15 + $0x2a8] sm:$0xff]
    %v5362 = vld [vmem:[%s15 + $0x2b0] sm:$0xff]
    %v5363 = vld [vmem:[%s15 + $0x2b8] sm:$0xff]
    %v5364 = vld [vmem:[%s15 + $0x2c0] sm:$0xff]
    %v5365 = vld [vmem:[%s15 + $0x2c8] sm:$0xff]
    %v5366 = vld [vmem:[%s15 + $0x2d0] sm:$0xff]
    %v5367 = vld [vmem:[%s15 + $0x2d8] sm:$0xff]
    %v5368 = vld [vmem:[%s15 + $0x2e0] sm:$0xff]
    %v5369 = vld [vmem:[%s15 + $0x2e8] sm:$0xff]
    %v5370 = vld [vmem:[%s15 + $0x2f0] sm:$0xff]
    %v5371 = vld [vmem:[%s15 + $0x2f8] sm:$0xff]
    %v5372 = vld [vmem:[%s15 + $0x300] sm:$0xff]
    %v5373 = vld [vmem:[%s15 + $0x308] sm:$0xff]
    %v5374 = vld [vmem:[%s15 + $0x310] sm:$0xff]
    %v5375 = vld [vmem:[%s15 + $0x318] sm:$0xff]
    %v5376 = vld [vmem:[%s15 + $0x320] sm:$0xff]
    %v5377 = vld [vmem:[%s15 + $0x328] sm:$0xff]
    %v5378 = vld [vmem:[%s15 + $0x330] sm:$0xff]
    %v5379 = vld [vmem:[%s15 + $0x338] sm:$0xff]
    %v5380 = vld [vmem:[%s15 + $0x340] sm:$0xff]
    %v5381 = vld [vmem:[%s15 + $0x348] sm:$0xff]
    %v5382 = vld [vmem:[%s15 + $0x350] sm:$0xff]
    %v5383 = vld [vmem:[%s15 + $0x358] sm:$0xff]
    %v5384 = vld [vmem:[%s15 + $0x360] sm:$0xff]
    %v5385 = vld [vmem:[%s15 + $0x368] sm:$0xff]
    %v5386 = vld [vmem:[%s15 + $0x370] sm:$0xff]
    %v5387 = vld [vmem:[%s15 + $0x378] sm:$0xff]
    %v5388 = vld [vmem:[%s15 + $0x380] sm:$0xff]
    %v5389 = vld [vmem:[%s15 + $0x388] sm:$0xff]
    %v5390 = vld [vmem:[%s15 + $0x390] sm:$0xff]
    %v5391 = vld [vmem:[%s15 + $0x398] sm:$0xff]
    %v5392 = vld [vmem:[%s15 + $0x3a0] sm:$0xff]
    %v5393 = vld [vmem:[%s15 + $0x3a8] sm:$0xff]
    %v5394 = vld [vmem:[%s15 + $0x3b0] sm:$0xff]
    %v5395 = vld [vmem:[%s15 + $0x3b8] sm:$0xff]
    %v5396 = vld [vmem:[%s15 + $0x3c0] sm:$0xff]
    %v5397 = vld [vmem:[%s15 + $0x3c8] sm:$0xff]
    %v5398 = vld [vmem:[%s15 + $0x3d0] sm:$0xff]
    %v5399 = vld [vmem:[%s15 + $0x3d8] sm:$0xff]
    %v5400 = vld [vmem:[%s15 + $0x3e0] sm:$0xff]
    %v5401 = vld [vmem:[%s15 + $0x3e8] sm:$0xff]
    %v5402 = vld [vmem:[%s15 + $0x3f0] sm:$0xff]
    %v5403 = vld [vmem:[%s15 + $0x3f8] sm:$0xff]
    %v5404 = vpack.c.bf16 %v5272, %v5272
    %v5405 = vpack.c.bf16 %v5273, %v5273
    %v5406 = vpack.c.bf16 %v5274, %v5274
    %v5407 = vpack.c.bf16 %v5275, %v5275
    %v5408 = vlaneseq
    %v5409 = vshrl.u32 %v5408, 7
    %v5410 = vsub.s32 3, %v5409
    %v5411 = vrot.slane %v3182, %v5410
    %v5412 = vlaneseq
    %v5413 = vshrl.u32 %v5412, 7
    %v5414 = vsub.s32 3, %v5413
    %v5415 = vrot.slane %v3183, %v5414
    %v5416 = vlaneseq
    %v5417 = vshrl.u32 %v5416, 7
    %v5418 = vsub.s32 3, %v5417
    %v5419 = vrot.slane %v3184, %v5418
    %v5420 = vlaneseq
    %v5421 = vshrl.u32 %v5420, 7
    %v5422 = vsub.s32 3, %v5421
    %v5423 = vrot.slane %v3185, %v5422
    %v5552 = vunpack.c.l.b16 %v5276
    %v5553 = vunpack.c.h.b16 %v5276
    %v5554 = vunpack.c.l.b16 %v5277
    %v5555 = vunpack.c.h.b16 %v5277
    %v5556 = vunpack.c.l.b16 %v5278
    %v5557 = vunpack.c.h.b16 %v5278
    %v5558 = vunpack.c.l.b16 %v5279
    %v5559 = vunpack.c.h.b16 %v5279
    %v5560 = vunpack.c.l.b16 %v5280
    %v5561 = vunpack.c.h.b16 %v5280
    %v5562 = vunpack.c.l.b16 %v5281
    %v5563 = vunpack.c.h.b16 %v5281
    %v5564 = vunpack.c.l.b16 %v5282
    %v5565 = vunpack.c.h.b16 %v5282
    %v5566 = vunpack.c.l.b16 %v5283
    %v5567 = vunpack.c.h.b16 %v5283
    %v5568 = vunpack.c.l.b16 %v5284
    %v5569 = vunpack.c.h.b16 %v5284
    %v5570 = vunpack.c.l.b16 %v5285
    %v5571 = vunpack.c.h.b16 %v5285
    %v5572 = vunpack.c.l.b16 %v5286
    %v5573 = vunpack.c.h.b16 %v5286
    %v5574 = vunpack.c.l.b16 %v5287
    %v5575 = vunpack.c.h.b16 %v5287
    %v5576 = vunpack.c.l.b16 %v5288
    %v5577 = vunpack.c.h.b16 %v5288
    %v5578 = vunpack.c.l.b16 %v5289
    %v5579 = vunpack.c.h.b16 %v5289
    %v5580 = vunpack.c.l.b16 %v5290
    %v5581 = vunpack.c.h.b16 %v5290
    %v5582 = vunpack.c.l.b16 %v5291
    %v5583 = vunpack.c.h.b16 %v5291
    %v5584 = vunpack.c.l.b16 %v5292
    %v5585 = vunpack.c.h.b16 %v5292
    %v5586 = vunpack.c.l.b16 %v5293
    %v5587 = vunpack.c.h.b16 %v5293
    %v5588 = vunpack.c.l.b16 %v5294
    %v5589 = vunpack.c.h.b16 %v5294
    %v5590 = vunpack.c.l.b16 %v5295
    %v5591 = vunpack.c.h.b16 %v5295
    %v5592 = vunpack.c.l.b16 %v5296
    %v5593 = vunpack.c.h.b16 %v5296
    %v5594 = vunpack.c.l.b16 %v5297
    %v5595 = vunpack.c.h.b16 %v5297
    %v5596 = vunpack.c.l.b16 %v5298
    %v5597 = vunpack.c.h.b16 %v5298
    %v5598 = vunpack.c.l.b16 %v5299
    %v5599 = vunpack.c.h.b16 %v5299
    %v5600 = vunpack.c.l.b16 %v5300
    %v5601 = vunpack.c.h.b16 %v5300
    %v5602 = vunpack.c.l.b16 %v5301
    %v5603 = vunpack.c.h.b16 %v5301
    %v5604 = vunpack.c.l.b16 %v5302
    %v5605 = vunpack.c.h.b16 %v5302
    %v5606 = vunpack.c.l.b16 %v5303
    %v5607 = vunpack.c.h.b16 %v5303
    %v5608 = vunpack.c.l.b16 %v5304
    %v5609 = vunpack.c.h.b16 %v5304
    %v5610 = vunpack.c.l.b16 %v5305
    %v5611 = vunpack.c.h.b16 %v5305
    %v5612 = vunpack.c.l.b16 %v5306
    %v5613 = vunpack.c.h.b16 %v5306
    %v5614 = vunpack.c.l.b16 %v5307
    %v5615 = vunpack.c.h.b16 %v5307
    %v5616 = vunpack.c.l.b16 %v5308
    %v5617 = vunpack.c.h.b16 %v5308
    %v5618 = vunpack.c.l.b16 %v5309
    %v5619 = vunpack.c.h.b16 %v5309
    %v5620 = vunpack.c.l.b16 %v5310
    %v5621 = vunpack.c.h.b16 %v5310
    %v5622 = vunpack.c.l.b16 %v5311
    %v5623 = vunpack.c.h.b16 %v5311
    %v5624 = vunpack.c.l.b16 %v5312
    %v5625 = vunpack.c.h.b16 %v5312
    %v5626 = vunpack.c.l.b16 %v5313
    %v5627 = vunpack.c.h.b16 %v5313
    %v5628 = vunpack.c.l.b16 %v5314
    %v5629 = vunpack.c.h.b16 %v5314
    %v5630 = vunpack.c.l.b16 %v5315
    %v5631 = vunpack.c.h.b16 %v5315
    %v5632 = vunpack.c.l.b16 %v5316
    %v5633 = vunpack.c.h.b16 %v5316
    %v5634 = vunpack.c.l.b16 %v5317
    %v5635 = vunpack.c.h.b16 %v5317
    %v5636 = vunpack.c.l.b16 %v5318
    %v5637 = vunpack.c.h.b16 %v5318
    %v5638 = vunpack.c.l.b16 %v5319
    %v5639 = vunpack.c.h.b16 %v5319
    %v5640 = vunpack.c.l.b16 %v5320
    %v5641 = vunpack.c.h.b16 %v5320
    %v5642 = vunpack.c.l.b16 %v5321
    %v5643 = vunpack.c.h.b16 %v5321
    %v5644 = vunpack.c.l.b16 %v5322
    %v5645 = vunpack.c.h.b16 %v5322
    %v5646 = vunpack.c.l.b16 %v5323
    %v5647 = vunpack.c.h.b16 %v5323
    %v5648 = vunpack.c.l.b16 %v5324
    %v5649 = vunpack.c.h.b16 %v5324
    %v5650 = vunpack.c.l.b16 %v5325
    %v5651 = vunpack.c.h.b16 %v5325
    %v5652 = vunpack.c.l.b16 %v5326
    %v5653 = vunpack.c.h.b16 %v5326
    %v5654 = vunpack.c.l.b16 %v5327
    %v5655 = vunpack.c.h.b16 %v5327
    %v5656 = vunpack.c.l.b16 %v5328
    %v5657 = vunpack.c.h.b16 %v5328
    %v5658 = vunpack.c.l.b16 %v5329
    %v5659 = vunpack.c.h.b16 %v5329
    %v5660 = vunpack.c.l.b16 %v5330
    %v5661 = vunpack.c.h.b16 %v5330
    %v5662 = vunpack.c.l.b16 %v5331
    %v5663 = vunpack.c.h.b16 %v5331
    %v5664 = vunpack.c.l.b16 %v5332
    %v5665 = vunpack.c.h.b16 %v5332
    %v5666 = vunpack.c.l.b16 %v5333
    %v5667 = vunpack.c.h.b16 %v5333
    %v5668 = vunpack.c.l.b16 %v5334
    %v5669 = vunpack.c.h.b16 %v5334
    %v5670 = vunpack.c.l.b16 %v5335
    %v5671 = vunpack.c.h.b16 %v5335
    %v5672 = vunpack.c.l.b16 %v5336
    %v5673 = vunpack.c.h.b16 %v5336
    %v5674 = vunpack.c.l.b16 %v5337
    %v5675 = vunpack.c.h.b16 %v5337
    %v5676 = vunpack.c.l.b16 %v5338
    %v5677 = vunpack.c.h.b16 %v5338
    %v5678 = vunpack.c.l.b16 %v5339
    %v5679 = vunpack.c.h.b16 %v5339
    %v5680 = vunpack.c.l.b16 %v5340
    %v5681 = vunpack.c.h.b16 %v5340
    %v5682 = vunpack.c.l.b16 %v5341
    %v5683 = vunpack.c.h.b16 %v5341
    %v5684 = vunpack.c.l.b16 %v5342
    %v5685 = vunpack.c.h.b16 %v5342
    %v5686 = vunpack.c.l.b16 %v5343
    %v5687 = vunpack.c.h.b16 %v5343
    %v5688 = vunpack.c.l.b16 %v5344
    %v5689 = vunpack.c.h.b16 %v5344
    %v5690 = vunpack.c.l.b16 %v5345
    %v5691 = vunpack.c.h.b16 %v5345
    %v5692 = vunpack.c.l.b16 %v5346
    %v5693 = vunpack.c.h.b16 %v5346
    %v5694 = vunpack.c.l.b16 %v5347
    %v5695 = vunpack.c.h.b16 %v5347
    %v5696 = vunpack.c.l.b16 %v5348
    %v5697 = vunpack.c.h.b16 %v5348
    %v5698 = vunpack.c.l.b16 %v5349
    %v5699 = vunpack.c.h.b16 %v5349
    %v5700 = vunpack.c.l.b16 %v5350
    %v5701 = vunpack.c.h.b16 %v5350
    %v5702 = vunpack.c.l.b16 %v5351
    %v5703 = vunpack.c.h.b16 %v5351
    %v5704 = vunpack.c.l.b16 %v5352
    %v5705 = vunpack.c.h.b16 %v5352
    %v5706 = vunpack.c.l.b16 %v5353
    %v5707 = vunpack.c.h.b16 %v5353
    %v5708 = vunpack.c.l.b16 %v5354
    %v5709 = vunpack.c.h.b16 %v5354
    %v5710 = vunpack.c.l.b16 %v5355
    %v5711 = vunpack.c.h.b16 %v5355
    %v5712 = vunpack.c.l.b16 %v5356
    %v5713 = vunpack.c.h.b16 %v5356
    %v5714 = vunpack.c.l.b16 %v5357
    %v5715 = vunpack.c.h.b16 %v5357
    %v5716 = vunpack.c.l.b16 %v5358
    %v5717 = vunpack.c.h.b16 %v5358
    %v5718 = vunpack.c.l.b16 %v5359
    %v5719 = vunpack.c.h.b16 %v5359
    %v5720 = vunpack.c.l.b16 %v5360
    %v5721 = vunpack.c.h.b16 %v5360
    %v5722 = vunpack.c.l.b16 %v5361
    %v5723 = vunpack.c.h.b16 %v5361
    %v5724 = vunpack.c.l.b16 %v5362
    %v5725 = vunpack.c.h.b16 %v5362
    %v5726 = vunpack.c.l.b16 %v5363
    %v5727 = vunpack.c.h.b16 %v5363
    %v5728 = vunpack.c.l.b16 %v5364
    %v5729 = vunpack.c.h.b16 %v5364
    %v5730 = vunpack.c.l.b16 %v5365
    %v5731 = vunpack.c.h.b16 %v5365
    %v5732 = vunpack.c.l.b16 %v5366
    %v5733 = vunpack.c.h.b16 %v5366
    %v5734 = vunpack.c.l.b16 %v5367
    %v5735 = vunpack.c.h.b16 %v5367
    %v5736 = vunpack.c.l.b16 %v5368
    %v5737 = vunpack.c.h.b16 %v5368
    %v5738 = vunpack.c.l.b16 %v5369
    %v5739 = vunpack.c.h.b16 %v5369
    %v5740 = vunpack.c.l.b16 %v5370
    %v5741 = vunpack.c.h.b16 %v5370
    %v5742 = vunpack.c.l.b16 %v5371
    %v5743 = vunpack.c.h.b16 %v5371
    %v5744 = vunpack.c.l.b16 %v5372
    %v5745 = vunpack.c.h.b16 %v5372
    %v5746 = vunpack.c.l.b16 %v5373
    %v5747 = vunpack.c.h.b16 %v5373
    %v5748 = vunpack.c.l.b16 %v5374
    %v5749 = vunpack.c.h.b16 %v5374
    %v5750 = vunpack.c.l.b16 %v5375
    %v5751 = vunpack.c.h.b16 %v5375
    %v5752 = vunpack.c.l.b16 %v5376
    %v5753 = vunpack.c.h.b16 %v5376
    %v5754 = vunpack.c.l.b16 %v5377
    %v5755 = vunpack.c.h.b16 %v5377
    %v5756 = vunpack.c.l.b16 %v5378
    %v5757 = vunpack.c.h.b16 %v5378
    %v5758 = vunpack.c.l.b16 %v5379
    %v5759 = vunpack.c.h.b16 %v5379
    %v5760 = vunpack.c.l.b16 %v5380
    %v5761 = vunpack.c.h.b16 %v5380
    %v5762 = vunpack.c.l.b16 %v5381
    %v5763 = vunpack.c.h.b16 %v5381
    %v5764 = vunpack.c.l.b16 %v5382
    %v5765 = vunpack.c.h.b16 %v5382
    %v5766 = vunpack.c.l.b16 %v5383
    %v5767 = vunpack.c.h.b16 %v5383
    %v5768 = vunpack.c.l.b16 %v5384
    %v5769 = vunpack.c.h.b16 %v5384
    %v5770 = vunpack.c.l.b16 %v5385
    %v5771 = vunpack.c.h.b16 %v5385
    %v5772 = vunpack.c.l.b16 %v5386
    %v5773 = vunpack.c.h.b16 %v5386
    %v5774 = vunpack.c.l.b16 %v5387
    %v5775 = vunpack.c.h.b16 %v5387
    %v5776 = vunpack.c.l.b16 %v5388
    %v5777 = vunpack.c.h.b16 %v5388
    %v5778 = vunpack.c.l.b16 %v5389
    %v5779 = vunpack.c.h.b16 %v5389
    %v5780 = vunpack.c.l.b16 %v5390
    %v5781 = vunpack.c.h.b16 %v5390
    %v5782 = vunpack.c.l.b16 %v5391
    %v5783 = vunpack.c.h.b16 %v5391
    %v5784 = vunpack.c.l.b16 %v5392
    %v5785 = vunpack.c.h.b16 %v5392
    %v5786 = vunpack.c.l.b16 %v5393
    %v5787 = vunpack.c.h.b16 %v5393
    %v5788 = vunpack.c.l.b16 %v5394
    %v5789 = vunpack.c.h.b16 %v5394
    %v5790 = vunpack.c.l.b16 %v5395
    %v5791 = vunpack.c.h.b16 %v5395
    %v5792 = vunpack.c.l.b16 %v5396
    %v5793 = vunpack.c.h.b16 %v5396
    %v5794 = vunpack.c.l.b16 %v5397
    %v5795 = vunpack.c.h.b16 %v5397
    %v5796 = vunpack.c.l.b16 %v5398
    %v5797 = vunpack.c.h.b16 %v5398
    %v5798 = vunpack.c.l.b16 %v5399
    %v5799 = vunpack.c.h.b16 %v5399
    %v5800 = vunpack.c.l.b16 %v5400
    %v5801 = vunpack.c.h.b16 %v5400
    %v5802 = vunpack.c.l.b16 %v5401
    %v5803 = vunpack.c.h.b16 %v5401
    %v5804 = vunpack.c.l.b16 %v5402
    %v5805 = vunpack.c.h.b16 %v5402
    %v5806 = vunpack.c.l.b16 %v5403
    %v5807 = vunpack.c.h.b16 %v5403
    %v5808 = vpack.c.b16 %v5556, %v5552
    %v5809 = vpack.c.b16 %v5557, %v5553
    %v5810 = vpack.c.b16 %v5558, %v5554
    %v5811 = vpack.c.b16 %v5559, %v5555
    %v5812 = vpack.c.b16 %v5564, %v5560
    %v5813 = vpack.c.b16 %v5565, %v5561
    %v5814 = vpack.c.b16 %v5566, %v5562
    %v5815 = vpack.c.b16 %v5567, %v5563
    %v5816 = vpack.c.b16 %v5572, %v5568
    %v5817 = vpack.c.b16 %v5573, %v5569
    %v5818 = vpack.c.b16 %v5574, %v5570
    %v5819 = vpack.c.b16 %v5575, %v5571
    %v5820 = vpack.c.b16 %v5580, %v5576
    %v5821 = vpack.c.b16 %v5581, %v5577
    %v5822 = vpack.c.b16 %v5582, %v5578
    %v5823 = vpack.c.b16 %v5583, %v5579
    %v5824 = vpack.c.b16 %v5588, %v5584
    %v5825 = vpack.c.b16 %v5589, %v5585
    %v5826 = vpack.c.b16 %v5590, %v5586
    %v5827 = vpack.c.b16 %v5591, %v5587
    %v5828 = vpack.c.b16 %v5596, %v5592
    %v5829 = vpack.c.b16 %v5597, %v5593
    %v5830 = vpack.c.b16 %v5598, %v5594
    %v5831 = vpack.c.b16 %v5599, %v5595
    %v5832 = vpack.c.b16 %v5604, %v5600
    %v5833 = vpack.c.b16 %v5605, %v5601
    %v5834 = vpack.c.b16 %v5606, %v5602
    %v5835 = vpack.c.b16 %v5607, %v5603
    %v5836 = vpack.c.b16 %v5612, %v5608
    %v5837 = vpack.c.b16 %v5613, %v5609
    %v5838 = vpack.c.b16 %v5614, %v5610
    %v5839 = vpack.c.b16 %v5615, %v5611
    %v5840 = vpack.c.b16 %v5620, %v5616
    %v5841 = vpack.c.b16 %v5621, %v5617
    %v5842 = vpack.c.b16 %v5622, %v5618
    %v5843 = vpack.c.b16 %v5623, %v5619
    %v5844 = vpack.c.b16 %v5628, %v5624
    %v5845 = vpack.c.b16 %v5629, %v5625
    %v5846 = vpack.c.b16 %v5630, %v5626
    %v5847 = vpack.c.b16 %v5631, %v5627
    %v5848 = vpack.c.b16 %v5636, %v5632
    %v5849 = vpack.c.b16 %v5637, %v5633
    %v5850 = vpack.c.b16 %v5638, %v5634
    %v5851 = vpack.c.b16 %v5639, %v5635
    %v5852 = vpack.c.b16 %v5644, %v5640
    %v5853 = vpack.c.b16 %v5645, %v5641
    %v5854 = vpack.c.b16 %v5646, %v5642
    %v5855 = vpack.c.b16 %v5647, %v5643
    %v5856 = vpack.c.b16 %v5652, %v5648
    %v5857 = vpack.c.b16 %v5653, %v5649
    %v5858 = vpack.c.b16 %v5654, %v5650
    %v5859 = vpack.c.b16 %v5655, %v5651
    %v5860 = vpack.c.b16 %v5660, %v5656
    %v5861 = vpack.c.b16 %v5661, %v5657
    %v5862 = vpack.c.b16 %v5662, %v5658
    %v5863 = vpack.c.b16 %v5663, %v5659
    %v5864 = vpack.c.b16 %v5668, %v5664
    %v5865 = vpack.c.b16 %v5669, %v5665
    %v5866 = vpack.c.b16 %v5670, %v5666
    %v5867 = vpack.c.b16 %v5671, %v5667
    %v5868 = vpack.c.b16 %v5676, %v5672
    %v5869 = vpack.c.b16 %v5677, %v5673
    %v5870 = vpack.c.b16 %v5678, %v5674
    %v5871 = vpack.c.b16 %v5679, %v5675
    %v5872 = vpack.c.b16 %v5684, %v5680
    %v5873 = vpack.c.b16 %v5685, %v5681
    %v5874 = vpack.c.b16 %v5686, %v5682
    %v5875 = vpack.c.b16 %v5687, %v5683
    %v5876 = vpack.c.b16 %v5692, %v5688
    %v5877 = vpack.c.b16 %v5693, %v5689
    %v5878 = vpack.c.b16 %v5694, %v5690
    %v5879 = vpack.c.b16 %v5695, %v5691
    %v5880 = vpack.c.b16 %v5700, %v5696
    %v5881 = vpack.c.b16 %v5701, %v5697
    %v5882 = vpack.c.b16 %v5702, %v5698
    %v5883 = vpack.c.b16 %v5703, %v5699
    %v5884 = vpack.c.b16 %v5708, %v5704
    %v5885 = vpack.c.b16 %v5709, %v5705
    %v5886 = vpack.c.b16 %v5710, %v5706
    %v5887 = vpack.c.b16 %v5711, %v5707
    %v5888 = vpack.c.b16 %v5716, %v5712
    %v5889 = vpack.c.b16 %v5717, %v5713
    %v5890 = vpack.c.b16 %v5718, %v5714
    %v5891 = vpack.c.b16 %v5719, %v5715
    %v5892 = vpack.c.b16 %v5724, %v5720
    %v5893 = vpack.c.b16 %v5725, %v5721
    %v5894 = vpack.c.b16 %v5726, %v5722
    %v5895 = vpack.c.b16 %v5727, %v5723
    %v5896 = vpack.c.b16 %v5732, %v5728
    %v5897 = vpack.c.b16 %v5733, %v5729
    %v5898 = vpack.c.b16 %v5734, %v5730
    %v5899 = vpack.c.b16 %v5735, %v5731
    %v5900 = vpack.c.b16 %v5740, %v5736
    %v5901 = vpack.c.b16 %v5741, %v5737
    %v5902 = vpack.c.b16 %v5742, %v5738
    %v5903 = vpack.c.b16 %v5743, %v5739
    %v5904 = vpack.c.b16 %v5748, %v5744
    %v5905 = vpack.c.b16 %v5749, %v5745
    %v5906 = vpack.c.b16 %v5750, %v5746
    %v5907 = vpack.c.b16 %v5751, %v5747
    %v5908 = vpack.c.b16 %v5756, %v5752
    %v5909 = vpack.c.b16 %v5757, %v5753
    %v5910 = vpack.c.b16 %v5758, %v5754
    %v5911 = vpack.c.b16 %v5759, %v5755
    %v5912 = vpack.c.b16 %v5764, %v5760
    %v5913 = vpack.c.b16 %v5765, %v5761
    %v5914 = vpack.c.b16 %v5766, %v5762
    %v5915 = vpack.c.b16 %v5767, %v5763
    %v5916 = vpack.c.b16 %v5772, %v5768
    %v5917 = vpack.c.b16 %v5773, %v5769
    %v5918 = vpack.c.b16 %v5774, %v5770
    %v5919 = vpack.c.b16 %v5775, %v5771
    %v5920 = vpack.c.b16 %v5780, %v5776
    %v5921 = vpack.c.b16 %v5781, %v5777
    %v5922 = vpack.c.b16 %v5782, %v5778
    %v5923 = vpack.c.b16 %v5783, %v5779
    %v5924 = vpack.c.b16 %v5788, %v5784
    %v5925 = vpack.c.b16 %v5789, %v5785
    %v5926 = vpack.c.b16 %v5790, %v5786
    %v5927 = vpack.c.b16 %v5791, %v5787
    %v5928 = vpack.c.b16 %v5796, %v5792
    %v5929 = vpack.c.b16 %v5797, %v5793
    %v5930 = vpack.c.b16 %v5798, %v5794
    %v5931 = vpack.c.b16 %v5799, %v5795
    %v5932 = vpack.c.b16 %v5804, %v5800
    %v5933 = vpack.c.b16 %v5805, %v5801
    %v5934 = vpack.c.b16 %v5806, %v5802
    %v5935 = vpack.c.b16 %v5807, %v5803
    %6064 = vmatprep.subr.bf16.mxu0 %v5809
    %6065 = vmatpush1.bf16.msra.mxu0 %v5808
    %6066 = vmatprep.subr.bf16.mxu0 %v5813
    %6067 = vmatpush1.bf16.msra.mxu0 %v5812
    %6068 = vmatprep.subr.bf16.mxu0 %v5817
    %6069 = vmatpush1.bf16.msra.mxu0 %v5816
    %6070 = vmatprep.subr.bf16.mxu0 %v5821
    %6071 = vmatpush1.bf16.msra.mxu0 %v5820
    %6072 = vmatprep.subr.bf16.mxu0 %v5825
    %6073 = vmatpush1.bf16.msra.mxu0 %v5824
    %6074 = vmatprep.subr.bf16.mxu0 %v5829
    %6075 = vmatpush1.bf16.msra.mxu0 %v5828
    %6076 = vmatprep.subr.bf16.mxu0 %v5833
    %6077 = vmatpush1.bf16.msra.mxu0 %v5832
    %6078 = vmatprep.subr.bf16.mxu0 %v5837
    %6079 = vmatpush1.bf16.msra.mxu0 %v5836
    %6080 = vmatprep.subr.bf16.mxu0 %v5841
    %6081 = vmatpush1.bf16.msra.mxu0 %v5840
    %6082 = vmatprep.subr.bf16.mxu0 %v5845
    %6083 = vmatpush1.bf16.msra.mxu0 %v5844
    %6084 = vmatprep.subr.bf16.mxu0 %v5849
    %6085 = vmatpush1.bf16.msra.mxu0 %v5848
    %6086 = vmatprep.subr.bf16.mxu0 %v5853
    %6087 = vmatpush1.bf16.msra.mxu0 %v5852
    %6088 = vmatprep.subr.bf16.mxu0 %v5857
    %6089 = vmatpush1.bf16.msra.mxu0 %v5856
    %6090 = vmatprep.subr.bf16.mxu0 %v5861
    %6091 = vmatpush1.bf16.msra.mxu0 %v5860
    %6092 = vmatprep.subr.bf16.mxu0 %v5865
    %6093 = vmatpush1.bf16.msra.mxu0 %v5864
    %6094 = vmatprep.subr.bf16.mxu0 %v5869
    %6095 = vmatpush1.bf16.msra.mxu0 %v5868
    %6096 = vmatprep.mubr.bf16.mxu0 %v5405
    %6097 = vmatmul.mubr.bf16.gmra.mrb[0].mxu0 %v5404
    %v6098 = vpop.f32.mrb[0].mxu0
    %v6099 = vadd.f32 %v5411, %v6098
    %v6100 = vpop.f32.mrb[0].mxu0
    %v6101 = vadd.f32 %v5415, %v6100
    %v6102 = vpop.f32.mrb[0].mxu0
    %v6103 = vpop.f32.mrb[0].mxu0
    %6104 = vdwg.mxu0
    %6105 = vmatprep.subr.bf16.mxu0 %v5873
    %6106 = vmatpush1.bf16.msra.mxu0 %v5872
    %6107 = vmatprep.subr.bf16.mxu0 %v5877
    %6108 = vmatpush1.bf16.msra.mxu0 %v5876
    %6109 = vmatprep.subr.bf16.mxu0 %v5881
    %6110 = vmatpush1.bf16.msra.mxu0 %v5880
    %6111 = vmatprep.subr.bf16.mxu0 %v5885
    %6112 = vmatpush1.bf16.msra.mxu0 %v5884
    %6113 = vmatprep.subr.bf16.mxu0 %v5889
    %6114 = vmatpush1.bf16.msra.mxu0 %v5888
    %6115 = vmatprep.subr.bf16.mxu0 %v5893
    %6116 = vmatpush1.bf16.msra.mxu0 %v5892
    %6117 = vmatprep.subr.bf16.mxu0 %v5897
    %6118 = vmatpush1.bf16.msra.mxu0 %v5896
    %6119 = vmatprep.subr.bf16.mxu0 %v5901
    %6120 = vmatpush1.bf16.msra.mxu0 %v5900
    %6121 = vmatprep.subr.bf16.mxu0 %v5905
    %6122 = vmatpush1.bf16.msra.mxu0 %v5904
    %6123 = vmatprep.subr.bf16.mxu0 %v5909
    %6124 = vmatpush1.bf16.msra.mxu0 %v5908
    %6125 = vmatprep.subr.bf16.mxu0 %v5913
    %6126 = vmatpush1.bf16.msra.mxu0 %v5912
    %6127 = vmatprep.subr.bf16.mxu0 %v5917
    %6128 = vmatpush1.bf16.msra.mxu0 %v5916
    %6129 = vmatprep.subr.bf16.mxu0 %v5921
    %6130 = vmatpush1.bf16.msra.mxu0 %v5920
    %6131 = vmatprep.subr.bf16.mxu0 %v5925
    %6132 = vmatpush1.bf16.msra.mxu0 %v5924
    %6133 = vmatprep.subr.bf16.mxu0 %v5929
    %6134 = vmatpush1.bf16.msra.mxu0 %v5928
    %6135 = vmatprep.subr.bf16.mxu0 %v5933
    %6136 = vmatpush1.bf16.msra.mxu0 %v5932
    %6137 = vmatprep.mubr.bf16.mxu0 %v5407
    %6138 = vmatmul.mubr.bf16.gmra.mrb[0].mxu0 %v5406
    %v6139 = vpop.f32.mrb[0].mxu0
    %v6140 = vadd.f32 %v6099, %v6139
    %v6141 = vpop.f32.mrb[0].mxu0
    %v6142 = vadd.f32 %v6101, %v6141
    %v6143 = vpop.f32.mrb[0].mxu0
    %v6144 = vpop.f32.mrb[0].mxu0
    %6145 = vdwg.mxu0
    %6146 = vmatprep.subr.bf16.mxu0 %v5811
    %6147 = vmatpush1.bf16.msra.mxu0 %v5810
    %6148 = vmatprep.subr.bf16.mxu0 %v5815
    %6149 = vmatpush1.bf16.msra.mxu0 %v5814
    %6150 = vmatprep.subr.bf16.mxu0 %v5819
    %6151 = vmatpush1.bf16.msra.mxu0 %v5818
    %6152 = vmatprep.subr.bf16.mxu0 %v5823
    %6153 = vmatpush1.bf16.msra.mxu0 %v5822
    %6154 = vmatprep.subr.bf16.mxu0 %v5827
    %6155 = vmatpush1.bf16.msra.mxu0 %v5826
    %6156 = vmatprep.subr.bf16.mxu0 %v5831
    %6157 = vmatpush1.bf16.msra.mxu0 %v5830
    %6158 = vmatprep.subr.bf16.mxu0 %v5835
    %6159 = vmatpush1.bf16.msra.mxu0 %v5834
    %6160 = vmatprep.subr.bf16.mxu0 %v5839
    %6161 = vmatpush1.bf16.msra.mxu0 %v5838
    %6162 = vmatprep.subr.bf16.mxu0 %v5843
    %6163 = vmatpush1.bf16.msra.mxu0 %v5842
    %6164 = vmatprep.subr.bf16.mxu0 %v5847
    %6165 = vmatpush1.bf16.msra.mxu0 %v5846
    %6166 = vmatprep.subr.bf16.mxu0 %v5851
    %6167 = vmatpush1.bf16.msra.mxu0 %v5850
    %6168 = vmatprep.subr.bf16.mxu0 %v5855
    %6169 = vmatpush1.bf16.msra.mxu0 %v5854
    %6170 = vmatprep.subr.bf16.mxu0 %v5859
    %6171 = vmatpush1.bf16.msra.mxu0 %v5858
    %6172 = vmatprep.subr.bf16.mxu0 %v5863
    %6173 = vmatpush1.bf16.msra.mxu0 %v5862
    %6174 = vmatprep.subr.bf16.mxu0 %v5867
    %6175 = vmatpush1.bf16.msra.mxu0 %v5866
    %6176 = vmatprep.subr.bf16.mxu0 %v5871
    %6177 = vmatpush1.bf16.msra.mxu0 %v5870
    %6178 = vmatprep.mubr.bf16.mxu0 %v5405
    %6179 = vmatmul.mubr.bf16.gmra.mrb[0].mxu0 %v5404
    %v6180 = vpop.f32.mrb[0].mxu0
    %v6181 = vadd.f32 %v5419, %v6180
    %v6182 = vpop.f32.mrb[0].mxu0
    %v6183 = vadd.f32 %v5423, %v6182
    %v6184 = vpop.f32.mrb[0].mxu0
    %v6185 = vpop.f32.mrb[0].mxu0
    %6186 = vdwg.mxu0
    %6187 = vmatprep.subr.bf16.mxu0 %v5875
    %6188 = vmatpush1.bf16.msra.mxu0 %v5874
    %6189 = vmatprep.subr.bf16.mxu0 %v5879
    %6190 = vmatpush1.bf16.msra.mxu0 %v5878
    %6191 = vmatprep.subr.bf16.mxu0 %v5883
    %6192 = vmatpush1.bf16.msra.mxu0 %v5882
    %6193 = vmatprep.subr.bf16.mxu0 %v5887
    %6194 = vmatpush1.bf16.msra.mxu0 %v5886
    %6195 = vmatprep.subr.bf16.mxu0 %v5891
    %6196 = vmatpush1.bf16.msra.mxu0 %v5890
    %6197 = vmatprep.subr.bf16.mxu0 %v5895
    %6198 = vmatpush1.bf16.msra.mxu0 %v5894
    %6199 = vmatprep.subr.bf16.mxu0 %v5899
    %6200 = vmatpush1.bf16.msra.mxu0 %v5898
    %6201 = vmatprep.subr.bf16.mxu0 %v5903
    %6202 = vmatpush1.bf16.msra.mxu0 %v5902
    %6203 = vmatprep.subr.bf16.mxu0 %v5907
    %6204 = vmatpush1.bf16.msra.mxu0 %v5906
    %6205 = vmatprep.subr.bf16.mxu0 %v5911
    %6206 = vmatpush1.bf16.msra.mxu0 %v5910
    %6207 = vmatprep.subr.bf16.mxu0 %v5915
    %6208 = vmatpush1.bf16.msra.mxu0 %v5914
    %6209 = vmatprep.subr.bf16.mxu0 %v5919
    %6210 = vmatpush1.bf16.msra.mxu0 %v5918
    %6211 = vmatprep.subr.bf16.mxu0 %v5923
    %6212 = vmatpush1.bf16.msra.mxu0 %v5922
    %6213 = vmatprep.subr.bf16.mxu0 %v5927
    %6214 = vmatpush1.bf16.msra.mxu0 %v5926
    %6215 = vmatprep.subr.bf16.mxu0 %v5931
    %6216 = vmatpush1.bf16.msra.mxu0 %v5930
    %6217 = vmatprep.subr.bf16.mxu0 %v5935
    %6218 = vmatpush1.bf16.msra.mxu0 %v5934
    %6219 = vmatprep.mubr.bf16.mxu0 %v5407
    %6220 = vmatmul.mubr.bf16.gmra.mrb[0].mxu0 %v5406
    %v6221 = vpop.f32.mrb[0].mxu0
    %v6222 = vadd.f32 %v6181, %v6221
    %v6223 = vpop.f32.mrb[0].mxu0
    %v6224 = vadd.f32 %v6183, %v6223
    %v6225 = vpop.f32.mrb[0].mxu0
    %v6226 = vpop.f32.mrb[0].mxu0
    %6227 = vdwg.mxu0
    %vm6228 = vcmp.ge.f32.partialorder %v6140, 0.0
    %vm6229 = vcmp.ge.f32.partialorder %v6142, 0.0
    %vm6230 = vcmp.ge.f32.partialorder %v6222, 0.0
    %vm6231 = vcmp.ge.f32.partialorder %v6224, 0.0
    %v6232 = vmul.f32 %v6140, 0.01
    %v6233 = vmul.f32 %v6142, 0.01
    %v6234 = vmul.f32 %v6222, 0.01
    %v6235 = vmul.f32 %v6224, 0.01
    %v6236 = vsel %vm6228, %v6140, %v6232
    %v6237 = vsel %vm6229, %v6142, %v6233
    %v6238 = vsel %vm6230, %v6222, %v6234
    %v6239 = vsel %vm6231, %v6224, %v6235
    %v6240 = vld [vmem:[%s16] sm:$0xff]
    %v6241 = vld [vmem:[%s16 + $0x8] sm:$0xff]
    %v6242 = vld [vmem:[%s16 + $0x10] sm:$0xff]
    %v6243 = vld [vmem:[%s16 + $0x18] sm:$0xff]
    %v6244 = vld [vmem:[%s16 + $0x20] sm:$0xff]
    %v6245 = vld [vmem:[%s16 + $0x28] sm:$0xff]
    %v6246 = vld [vmem:[%s16 + $0x30] sm:$0xff]
    %v6247 = vld [vmem:[%s16 + $0x38] sm:$0xff]
    %v6248 = vld [vmem:[%s16 + $0x40] sm:$0xff]
    %v6249 = vld [vmem:[%s16 + $0x48] sm:$0xff]
    %v6250 = vld [vmem:[%s16 + $0x50] sm:$0xff]
    %v6251 = vld [vmem:[%s16 + $0x58] sm:$0xff]
    %v6252 = vld [vmem:[%s16 + $0x60] sm:$0xff]
    %v6253 = vld [vmem:[%s16 + $0x68] sm:$0xff]
    %v6254 = vld [vmem:[%s16 + $0x70] sm:$0xff]
    %v6255 = vld [vmem:[%s16 + $0x78] sm:$0xff]
    %v6256 = vld [vmem:[%s16 + $0x80] sm:$0xff]
    %v6257 = vld [vmem:[%s16 + $0x88] sm:$0xff]
    %v6258 = vld [vmem:[%s16 + $0x90] sm:$0xff]
    %v6259 = vld [vmem:[%s16 + $0x98] sm:$0xff]
    %v6260 = vld [vmem:[%s16 + $0xa0] sm:$0xff]
    %v6261 = vld [vmem:[%s16 + $0xa8] sm:$0xff]
    %v6262 = vld [vmem:[%s16 + $0xb0] sm:$0xff]
    %v6263 = vld [vmem:[%s16 + $0xb8] sm:$0xff]
    %v6264 = vld [vmem:[%s16 + $0xc0] sm:$0xff]
    %v6265 = vld [vmem:[%s16 + $0xc8] sm:$0xff]
    %v6266 = vld [vmem:[%s16 + $0xd0] sm:$0xff]
    %v6267 = vld [vmem:[%s16 + $0xd8] sm:$0xff]
    %v6268 = vld [vmem:[%s16 + $0xe0] sm:$0xff]
    %v6269 = vld [vmem:[%s16 + $0xe8] sm:$0xff]
    %v6270 = vld [vmem:[%s16 + $0xf0] sm:$0xff]
    %v6271 = vld [vmem:[%s16 + $0xf8] sm:$0xff]
    %v6272 = vld [vmem:[%s16 + $0x100] sm:$0xff]
    %v6273 = vld [vmem:[%s16 + $0x108] sm:$0xff]
    %v6274 = vld [vmem:[%s16 + $0x110] sm:$0xff]
    %v6275 = vld [vmem:[%s16 + $0x118] sm:$0xff]
    %v6276 = vld [vmem:[%s16 + $0x120] sm:$0xff]
    %v6277 = vld [vmem:[%s16 + $0x128] sm:$0xff]
    %v6278 = vld [vmem:[%s16 + $0x130] sm:$0xff]
    %v6279 = vld [vmem:[%s16 + $0x138] sm:$0xff]
    %v6280 = vld [vmem:[%s16 + $0x140] sm:$0xff]
    %v6281 = vld [vmem:[%s16 + $0x148] sm:$0xff]
    %v6282 = vld [vmem:[%s16 + $0x150] sm:$0xff]
    %v6283 = vld [vmem:[%s16 + $0x158] sm:$0xff]
    %v6284 = vld [vmem:[%s16 + $0x160] sm:$0xff]
    %v6285 = vld [vmem:[%s16 + $0x168] sm:$0xff]
    %v6286 = vld [vmem:[%s16 + $0x170] sm:$0xff]
    %v6287 = vld [vmem:[%s16 + $0x178] sm:$0xff]
    %v6288 = vld [vmem:[%s16 + $0x180] sm:$0xff]
    %v6289 = vld [vmem:[%s16 + $0x188] sm:$0xff]
    %v6290 = vld [vmem:[%s16 + $0x190] sm:$0xff]
    %v6291 = vld [vmem:[%s16 + $0x198] sm:$0xff]
    %v6292 = vld [vmem:[%s16 + $0x1a0] sm:$0xff]
    %v6293 = vld [vmem:[%s16 + $0x1a8] sm:$0xff]
    %v6294 = vld [vmem:[%s16 + $0x1b0] sm:$0xff]
    %v6295 = vld [vmem:[%s16 + $0x1b8] sm:$0xff]
    %v6296 = vld [vmem:[%s16 + $0x1c0] sm:$0xff]
    %v6297 = vld [vmem:[%s16 + $0x1c8] sm:$0xff]
    %v6298 = vld [vmem:[%s16 + $0x1d0] sm:$0xff]
    %v6299 = vld [vmem:[%s16 + $0x1d8] sm:$0xff]
    %v6300 = vld [vmem:[%s16 + $0x1e0] sm:$0xff]
    %v6301 = vld [vmem:[%s16 + $0x1e8] sm:$0xff]
    %v6302 = vld [vmem:[%s16 + $0x1f0] sm:$0xff]
    %v6303 = vld [vmem:[%s16 + $0x1f8] sm:$0xff]
    %v6304 = vld [vmem:[%s16 + $0x200] sm:$0xff]
    %v6305 = vld [vmem:[%s16 + $0x208] sm:$0xff]
    %v6306 = vld [vmem:[%s16 + $0x210] sm:$0xff]
    %v6307 = vld [vmem:[%s16 + $0x218] sm:$0xff]
    %v6308 = vld [vmem:[%s16 + $0x220] sm:$0xff]
    %v6309 = vld [vmem:[%s16 + $0x228] sm:$0xff]
    %v6310 = vld [vmem:[%s16 + $0x230] sm:$0xff]
    %v6311 = vld [vmem:[%s16 + $0x238] sm:$0xff]
    %v6312 = vld [vmem:[%s16 + $0x240] sm:$0xff]
    %v6313 = vld [vmem:[%s16 + $0x248] sm:$0xff]
    %v6314 = vld [vmem:[%s16 + $0x250] sm:$0xff]
    %v6315 = vld [vmem:[%s16 + $0x258] sm:$0xff]
    %v6316 = vld [vmem:[%s16 + $0x260] sm:$0xff]
    %v6317 = vld [vmem:[%s16 + $0x268] sm:$0xff]
    %v6318 = vld [vmem:[%s16 + $0x270] sm:$0xff]
    %v6319 = vld [vmem:[%s16 + $0x278] sm:$0xff]
    %v6320 = vld [vmem:[%s16 + $0x280] sm:$0xff]
    %v6321 = vld [vmem:[%s16 + $0x288] sm:$0xff]
    %v6322 = vld [vmem:[%s16 + $0x290] sm:$0xff]
    %v6323 = vld [vmem:[%s16 + $0x298] sm:$0xff]
    %v6324 = vld [vmem:[%s16 + $0x2a0] sm:$0xff]
    %v6325 = vld [vmem:[%s16 + $0x2a8] sm:$0xff]
    %v6326 = vld [vmem:[%s16 + $0x2b0] sm:$0xff]
    %v6327 = vld [vmem:[%s16 + $0x2b8] sm:$0xff]
    %v6328 = vld [vmem:[%s16 + $0x2c0] sm:$0xff]
    %v6329 = vld [vmem:[%s16 + $0x2c8] sm:$0xff]
    %v6330 = vld [vmem:[%s16 + $0x2d0] sm:$0xff]
    %v6331 = vld [vmem:[%s16 + $0x2d8] sm:$0xff]
    %v6332 = vld [vmem:[%s16 + $0x2e0] sm:$0xff]
    %v6333 = vld [vmem:[%s16 + $0x2e8] sm:$0xff]
    %v6334 = vld [vmem:[%s16 + $0x2f0] sm:$0xff]
    %v6335 = vld [vmem:[%s16 + $0x2f8] sm:$0xff]
    %v6336 = vld [vmem:[%s16 + $0x300] sm:$0xff]
    %v6337 = vld [vmem:[%s16 + $0x308] sm:$0xff]
    %v6338 = vld [vmem:[%s16 + $0x310] sm:$0xff]
    %v6339 = vld [vmem:[%s16 + $0x318] sm:$0xff]
    %v6340 = vld [vmem:[%s16 + $0x320] sm:$0xff]
    %v6341 = vld [vmem:[%s16 + $0x328] sm:$0xff]
    %v6342 = vld [vmem:[%s16 + $0x330] sm:$0xff]
    %v6343 = vld [vmem:[%s16 + $0x338] sm:$0xff]
    %v6344 = vld [vmem:[%s16 + $0x340] sm:$0xff]
    %v6345 = vld [vmem:[%s16 + $0x348] sm:$0xff]
    %v6346 = vld [vmem:[%s16 + $0x350] sm:$0xff]
    %v6347 = vld [vmem:[%s16 + $0x358] sm:$0xff]
    %v6348 = vld [vmem:[%s16 + $0x360] sm:$0xff]
    %v6349 = vld [vmem:[%s16 + $0x368] sm:$0xff]
    %v6350 = vld [vmem:[%s16 + $0x370] sm:$0xff]
    %v6351 = vld [vmem:[%s16 + $0x378] sm:$0xff]
    %v6352 = vld [vmem:[%s16 + $0x380] sm:$0xff]
    %v6353 = vld [vmem:[%s16 + $0x388] sm:$0xff]
    %v6354 = vld [vmem:[%s16 + $0x390] sm:$0xff]
    %v6355 = vld [vmem:[%s16 + $0x398] sm:$0xff]
    %v6356 = vld [vmem:[%s16 + $0x3a0] sm:$0xff]
    %v6357 = vld [vmem:[%s16 + $0x3a8] sm:$0xff]
    %v6358 = vld [vmem:[%s16 + $0x3b0] sm:$0xff]
    %v6359 = vld [vmem:[%s16 + $0x3b8] sm:$0xff]
    %v6360 = vld [vmem:[%s16 + $0x3c0] sm:$0xff]
    %v6361 = vld [vmem:[%s16 + $0x3c8] sm:$0xff]
    %v6362 = vld [vmem:[%s16 + $0x3d0] sm:$0xff]
    %v6363 = vld [vmem:[%s16 + $0x3d8] sm:$0xff]
    %v6364 = vld [vmem:[%s16 + $0x3e0] sm:$0xff]
    %v6365 = vld [vmem:[%s16 + $0x3e8] sm:$0xff]
    %v6366 = vld [vmem:[%s16 + $0x3f0] sm:$0xff]
    %v6367 = vld [vmem:[%s16 + $0x3f8] sm:$0xff]
    %v6368 = vpack.c.bf16 %v6236, %v6236
    %v6369 = vpack.c.bf16 %v6237, %v6237
    %v6370 = vpack.c.bf16 %v6238, %v6238
    %v6371 = vpack.c.bf16 %v6239, %v6239
    %v6372 = vlaneseq
    %v6373 = vshrl.u32 %v6372, 7
    %v6374 = vsub.s32 4, %v6373
    %v6375 = vrot.slane %v3182, %v6374
    %v6376 = vlaneseq
    %v6377 = vshrl.u32 %v6376, 7
    %v6378 = vsub.s32 4, %v6377
    %v6379 = vrot.slane %v3183, %v6378
    %v6380 = vlaneseq
    %v6381 = vshrl.u32 %v6380, 7
    %v6382 = vsub.s32 4, %v6381
    %v6383 = vrot.slane %v3184, %v6382
    %v6384 = vlaneseq
    %v6385 = vshrl.u32 %v6384, 7
    %v6386 = vsub.s32 4, %v6385
    %v6387 = vrot.slane %v3185, %v6386
    %v6516 = vunpack.c.l.b16 %v6240
    %v6517 = vunpack.c.h.b16 %v6240
    %v6518 = vunpack.c.l.b16 %v6241
    %v6519 = vunpack.c.h.b16 %v6241
    %v6520 = vunpack.c.l.b16 %v6242
    %v6521 = vunpack.c.h.b16 %v6242
    %v6522 = vunpack.c.l.b16 %v6243
    %v6523 = vunpack.c.h.b16 %v6243
    %v6524 = vunpack.c.l.b16 %v6244
    %v6525 = vunpack.c.h.b16 %v6244
    %v6526 = vunpack.c.l.b16 %v6245
    %v6527 = vunpack.c.h.b16 %v6245
    %v6528 = vunpack.c.l.b16 %v6246
    %v6529 = vunpack.c.h.b16 %v6246
    %v6530 = vunpack.c.l.b16 %v6247
    %v6531 = vunpack.c.h.b16 %v6247
    %v6532 = vunpack.c.l.b16 %v6248
    %v6533 = vunpack.c.h.b16 %v6248
    %v6534 = vunpack.c.l.b16 %v6249
    %v6535 = vunpack.c.h.b16 %v6249
    %v6536 = vunpack.c.l.b16 %v6250
    %v6537 = vunpack.c.h.b16 %v6250
    %v6538 = vunpack.c.l.b16 %v6251
    %v6539 = vunpack.c.h.b16 %v6251
    %v6540 = vunpack.c.l.b16 %v6252
    %v6541 = vunpack.c.h.b16 %v6252
    %v6542 = vunpack.c.l.b16 %v6253
    %v6543 = vunpack.c.h.b16 %v6253
    %v6544 = vunpack.c.l.b16 %v6254
    %v6545 = vunpack.c.h.b16 %v6254
    %v6546 = vunpack.c.l.b16 %v6255
    %v6547 = vunpack.c.h.b16 %v6255
    %v6548 = vunpack.c.l.b16 %v6256
    %v6549 = vunpack.c.h.b16 %v6256
    %v6550 = vunpack.c.l.b16 %v6257
    %v6551 = vunpack.c.h.b16 %v6257
    %v6552 = vunpack.c.l.b16 %v6258
    %v6553 = vunpack.c.h.b16 %v6258
    %v6554 = vunpack.c.l.b16 %v6259
    %v6555 = vunpack.c.h.b16 %v6259
    %v6556 = vunpack.c.l.b16 %v6260
    %v6557 = vunpack.c.h.b16 %v6260
    %v6558 = vunpack.c.l.b16 %v6261
    %v6559 = vunpack.c.h.b16 %v6261
    %v6560 = vunpack.c.l.b16 %v6262
    %v6561 = vunpack.c.h.b16 %v6262
    %v6562 = vunpack.c.l.b16 %v6263
    %v6563 = vunpack.c.h.b16 %v6263
    %v6564 = vunpack.c.l.b16 %v6264
    %v6565 = vunpack.c.h.b16 %v6264
    %v6566 = vunpack.c.l.b16 %v6265
    %v6567 = vunpack.c.h.b16 %v6265
    %v6568 = vunpack.c.l.b16 %v6266
    %v6569 = vunpack.c.h.b16 %v6266
    %v6570 = vunpack.c.l.b16 %v6267
    %v6571 = vunpack.c.h.b16 %v6267
    %v6572 = vunpack.c.l.b16 %v6268
    %v6573 = vunpack.c.h.b16 %v6268
    %v6574 = vunpack.c.l.b16 %v6269
    %v6575 = vunpack.c.h.b16 %v6269
    %v6576 = vunpack.c.l.b16 %v6270
    %v6577 = vunpack.c.h.b16 %v6270
    %v6578 = vunpack.c.l.b16 %v6271
    %v6579 = vunpack.c.h.b16 %v6271
    %v6580 = vunpack.c.l.b16 %v6272
    %v6581 = vunpack.c.h.b16 %v6272
    %v6582 = vunpack.c.l.b16 %v6273
    %v6583 = vunpack.c.h.b16 %v6273
    %v6584 = vunpack.c.l.b16 %v6274
    %v6585 = vunpack.c.h.b16 %v6274
    %v6586 = vunpack.c.l.b16 %v6275
    %v6587 = vunpack.c.h.b16 %v6275
    %v6588 = vunpack.c.l.b16 %v6276
    %v6589 = vunpack.c.h.b16 %v6276
    %v6590 = vunpack.c.l.b16 %v6277
    %v6591 = vunpack.c.h.b16 %v6277
    %v6592 = vunpack.c.l.b16 %v6278
    %v6593 = vunpack.c.h.b16 %v6278
    %v6594 = vunpack.c.l.b16 %v6279
    %v6595 = vunpack.c.h.b16 %v6279
    %v6596 = vunpack.c.l.b16 %v6280
    %v6597 = vunpack.c.h.b16 %v6280
    %v6598 = vunpack.c.l.b16 %v6281
    %v6599 = vunpack.c.h.b16 %v6281
    %v6600 = vunpack.c.l.b16 %v6282
    %v6601 = vunpack.c.h.b16 %v6282
    %v6602 = vunpack.c.l.b16 %v6283
    %v6603 = vunpack.c.h.b16 %v6283
    %v6604 = vunpack.c.l.b16 %v6284
    %v6605 = vunpack.c.h.b16 %v6284
    %v6606 = vunpack.c.l.b16 %v6285
    %v6607 = vunpack.c.h.b16 %v6285
    %v6608 = vunpack.c.l.b16 %v6286
    %v6609 = vunpack.c.h.b16 %v6286
    %v6610 = vunpack.c.l.b16 %v6287
    %v6611 = vunpack.c.h.b16 %v6287
    %v6612 = vunpack.c.l.b16 %v6288
    %v6613 = vunpack.c.h.b16 %v6288
    %v6614 = vunpack.c.l.b16 %v6289
    %v6615 = vunpack.c.h.b16 %v6289
    %v6616 = vunpack.c.l.b16 %v6290
    %v6617 = vunpack.c.h.b16 %v6290
    %v6618 = vunpack.c.l.b16 %v6291
    %v6619 = vunpack.c.h.b16 %v6291
    %v6620 = vunpack.c.l.b16 %v6292
    %v6621 = vunpack.c.h.b16 %v6292
    %v6622 = vunpack.c.l.b16 %v6293
    %v6623 = vunpack.c.h.b16 %v6293
    %v6624 = vunpack.c.l.b16 %v6294
    %v6625 = vunpack.c.h.b16 %v6294
    %v6626 = vunpack.c.l.b16 %v6295
    %v6627 = vunpack.c.h.b16 %v6295
    %v6628 = vunpack.c.l.b16 %v6296
    %v6629 = vunpack.c.h.b16 %v6296
    %v6630 = vunpack.c.l.b16 %v6297
    %v6631 = vunpack.c.h.b16 %v6297
    %v6632 = vunpack.c.l.b16 %v6298
    %v6633 = vunpack.c.h.b16 %v6298
    %v6634 = vunpack.c.l.b16 %v6299
    %v6635 = vunpack.c.h.b16 %v6299
    %v6636 = vunpack.c.l.b16 %v6300
    %v6637 = vunpack.c.h.b16 %v6300
    %v6638 = vunpack.c.l.b16 %v6301
    %v6639 = vunpack.c.h.b16 %v6301
    %v6640 = vunpack.c.l.b16 %v6302
    %v6641 = vunpack.c.h.b16 %v6302
    %v6642 = vunpack.c.l.b16 %v6303
    %v6643 = vunpack.c.h.b16 %v6303
    %v6644 = vunpack.c.l.b16 %v6304
    %v6645 = vunpack.c.h.b16 %v6304
    %v6646 = vunpack.c.l.b16 %v6305
    %v6647 = vunpack.c.h.b16 %v6305
    %v6648 = vunpack.c.l.b16 %v6306
    %v6649 = vunpack.c.h.b16 %v6306
    %v6650 = vunpack.c.l.b16 %v6307
    %v6651 = vunpack.c.h.b16 %v6307
    %v6652 = vunpack.c.l.b16 %v6308
    %v6653 = vunpack.c.h.b16 %v6308
    %v6654 = vunpack.c.l.b16 %v6309
    %v6655 = vunpack.c.h.b16 %v6309
    %v6656 = vunpack.c.l.b16 %v6310
    %v6657 = vunpack.c.h.b16 %v6310
    %v6658 = vunpack.c.l.b16 %v6311
    %v6659 = vunpack.c.h.b16 %v6311
    %v6660 = vunpack.c.l.b16 %v6312
    %v6661 = vunpack.c.h.b16 %v6312
    %v6662 = vunpack.c.l.b16 %v6313
    %v6663 = vunpack.c.h.b16 %v6313
    %v6664 = vunpack.c.l.b16 %v6314
    %v6665 = vunpack.c.h.b16 %v6314
    %v6666 = vunpack.c.l.b16 %v6315
    %v6667 = vunpack.c.h.b16 %v6315
    %v6668 = vunpack.c.l.b16 %v6316
    %v6669 = vunpack.c.h.b16 %v6316
    %v6670 = vunpack.c.l.b16 %v6317
    %v6671 = vunpack.c.h.b16 %v6317
    %v6672 = vunpack.c.l.b16 %v6318
    %v6673 = vunpack.c.h.b16 %v6318
    %v6674 = vunpack.c.l.b16 %v6319
    %v6675 = vunpack.c.h.b16 %v6319
    %v6676 = vunpack.c.l.b16 %v6320
    %v6677 = vunpack.c.h.b16 %v6320
    %v6678 = vunpack.c.l.b16 %v6321
    %v6679 = vunpack.c.h.b16 %v6321
    %v6680 = vunpack.c.l.b16 %v6322
    %v6681 = vunpack.c.h.b16 %v6322
    %v6682 = vunpack.c.l.b16 %v6323
    %v6683 = vunpack.c.h.b16 %v6323
    %v6684 = vunpack.c.l.b16 %v6324
    %v6685 = vunpack.c.h.b16 %v6324
    %v6686 = vunpack.c.l.b16 %v6325
    %v6687 = vunpack.c.h.b16 %v6325
    %v6688 = vunpack.c.l.b16 %v6326
    %v6689 = vunpack.c.h.b16 %v6326
    %v6690 = vunpack.c.l.b16 %v6327
    %v6691 = vunpack.c.h.b16 %v6327
    %v6692 = vunpack.c.l.b16 %v6328
    %v6693 = vunpack.c.h.b16 %v6328
    %v6694 = vunpack.c.l.b16 %v6329
    %v6695 = vunpack.c.h.b16 %v6329
    %v6696 = vunpack.c.l.b16 %v6330
    %v6697 = vunpack.c.h.b16 %v6330
    %v6698 = vunpack.c.l.b16 %v6331
    %v6699 = vunpack.c.h.b16 %v6331
    %v6700 = vunpack.c.l.b16 %v6332
    %v6701 = vunpack.c.h.b16 %v6332
    %v6702 = vunpack.c.l.b16 %v6333
    %v6703 = vunpack.c.h.b16 %v6333
    %v6704 = vunpack.c.l.b16 %v6334
    %v6705 = vunpack.c.h.b16 %v6334
    %v6706 = vunpack.c.l.b16 %v6335
    %v6707 = vunpack.c.h.b16 %v6335
    %v6708 = vunpack.c.l.b16 %v6336
    %v6709 = vunpack.c.h.b16 %v6336
    %v6710 = vunpack.c.l.b16 %v6337
    %v6711 = vunpack.c.h.b16 %v6337
    %v6712 = vunpack.c.l.b16 %v6338
    %v6713 = vunpack.c.h.b16 %v6338
    %v6714 = vunpack.c.l.b16 %v6339
    %v6715 = vunpack.c.h.b16 %v6339
    %v6716 = vunpack.c.l.b16 %v6340
    %v6717 = vunpack.c.h.b16 %v6340
    %v6718 = vunpack.c.l.b16 %v6341
    %v6719 = vunpack.c.h.b16 %v6341
    %v6720 = vunpack.c.l.b16 %v6342
    %v6721 = vunpack.c.h.b16 %v6342
    %v6722 = vunpack.c.l.b16 %v6343
    %v6723 = vunpack.c.h.b16 %v6343
    %v6724 = vunpack.c.l.b16 %v6344
    %v6725 = vunpack.c.h.b16 %v6344
    %v6726 = vunpack.c.l.b16 %v6345
    %v6727 = vunpack.c.h.b16 %v6345
    %v6728 = vunpack.c.l.b16 %v6346
    %v6729 = vunpack.c.h.b16 %v6346
    %v6730 = vunpack.c.l.b16 %v6347
    %v6731 = vunpack.c.h.b16 %v6347
    %v6732 = vunpack.c.l.b16 %v6348
    %v6733 = vunpack.c.h.b16 %v6348
    %v6734 = vunpack.c.l.b16 %v6349
    %v6735 = vunpack.c.h.b16 %v6349
    %v6736 = vunpack.c.l.b16 %v6350
    %v6737 = vunpack.c.h.b16 %v6350
    %v6738 = vunpack.c.l.b16 %v6351
    %v6739 = vunpack.c.h.b16 %v6351
    %v6740 = vunpack.c.l.b16 %v6352
    %v6741 = vunpack.c.h.b16 %v6352
    %v6742 = vunpack.c.l.b16 %v6353
    %v6743 = vunpack.c.h.b16 %v6353
    %v6744 = vunpack.c.l.b16 %v6354
    %v6745 = vunpack.c.h.b16 %v6354
    %v6746 = vunpack.c.l.b16 %v6355
    %v6747 = vunpack.c.h.b16 %v6355
    %v6748 = vunpack.c.l.b16 %v6356
    %v6749 = vunpack.c.h.b16 %v6356
    %v6750 = vunpack.c.l.b16 %v6357
    %v6751 = vunpack.c.h.b16 %v6357
    %v6752 = vunpack.c.l.b16 %v6358
    %v6753 = vunpack.c.h.b16 %v6358
    %v6754 = vunpack.c.l.b16 %v6359
    %v6755 = vunpack.c.h.b16 %v6359
    %v6756 = vunpack.c.l.b16 %v6360
    %v6757 = vunpack.c.h.b16 %v6360
    %v6758 = vunpack.c.l.b16 %v6361
    %v6759 = vunpack.c.h.b16 %v6361
    %v6760 = vunpack.c.l.b16 %v6362
    %v6761 = vunpack.c.h.b16 %v6362
    %v6762 = vunpack.c.l.b16 %v6363
    %v6763 = vunpack.c.h.b16 %v6363
    %v6764 = vunpack.c.l.b16 %v6364
    %v6765 = vunpack.c.h.b16 %v6364
    %v6766 = vunpack.c.l.b16 %v6365
    %v6767 = vunpack.c.h.b16 %v6365
    %v6768 = vunpack.c.l.b16 %v6366
    %v6769 = vunpack.c.h.b16 %v6366
    %v6770 = vunpack.c.l.b16 %v6367
    %v6771 = vunpack.c.h.b16 %v6367
    %v6772 = vpack.c.b16 %v6520, %v6516
    %v6773 = vpack.c.b16 %v6521, %v6517
    %v6774 = vpack.c.b16 %v6522, %v6518
    %v6775 = vpack.c.b16 %v6523, %v6519
    %v6776 = vpack.c.b16 %v6528, %v6524
    %v6777 = vpack.c.b16 %v6529, %v6525
    %v6778 = vpack.c.b16 %v6530, %v6526
    %v6779 = vpack.c.b16 %v6531, %v6527
    %v6780 = vpack.c.b16 %v6536, %v6532
    %v6781 = vpack.c.b16 %v6537, %v6533
    %v6782 = vpack.c.b16 %v6538, %v6534
    %v6783 = vpack.c.b16 %v6539, %v6535
    %v6784 = vpack.c.b16 %v6544, %v6540
    %v6785 = vpack.c.b16 %v6545, %v6541
    %v6786 = vpack.c.b16 %v6546, %v6542
    %v6787 = vpack.c.b16 %v6547, %v6543
    %v6788 = vpack.c.b16 %v6552, %v6548
    %v6789 = vpack.c.b16 %v6553, %v6549
    %v6790 = vpack.c.b16 %v6554, %v6550
    %v6791 = vpack.c.b16 %v6555, %v6551
    %v6792 = vpack.c.b16 %v6560, %v6556
    %v6793 = vpack.c.b16 %v6561, %v6557
    %v6794 = vpack.c.b16 %v6562, %v6558
    %v6795 = vpack.c.b16 %v6563, %v6559
    %v6796 = vpack.c.b16 %v6568, %v6564
    %v6797 = vpack.c.b16 %v6569, %v6565
    %v6798 = vpack.c.b16 %v6570, %v6566
    %v6799 = vpack.c.b16 %v6571, %v6567
    %v6800 = vpack.c.b16 %v6576, %v6572
    %v6801 = vpack.c.b16 %v6577, %v6573
    %v6802 = vpack.c.b16 %v6578, %v6574
    %v6803 = vpack.c.b16 %v6579, %v6575
    %v6804 = vpack.c.b16 %v6584, %v6580
    %v6805 = vpack.c.b16 %v6585, %v6581
    %v6806 = vpack.c.b16 %v6586, %v6582
    %v6807 = vpack.c.b16 %v6587, %v6583
    %v6808 = vpack.c.b16 %v6592, %v6588
    %v6809 = vpack.c.b16 %v6593, %v6589
    %v6810 = vpack.c.b16 %v6594, %v6590
    %v6811 = vpack.c.b16 %v6595, %v6591
    %v6812 = vpack.c.b16 %v6600, %v6596
    %v6813 = vpack.c.b16 %v6601, %v6597
    %v6814 = vpack.c.b16 %v6602, %v6598
    %v6815 = vpack.c.b16 %v6603, %v6599
    %v6816 = vpack.c.b16 %v6608, %v6604
    %v6817 = vpack.c.b16 %v6609, %v6605
    %v6818 = vpack.c.b16 %v6610, %v6606
    %v6819 = vpack.c.b16 %v6611, %v6607
    %v6820 = vpack.c.b16 %v6616, %v6612
    %v6821 = vpack.c.b16 %v6617, %v6613
    %v6822 = vpack.c.b16 %v6618, %v6614
    %v6823 = vpack.c.b16 %v6619, %v6615
    %v6824 = vpack.c.b16 %v6624, %v6620
    %v6825 = vpack.c.b16 %v6625, %v6621
    %v6826 = vpack.c.b16 %v6626, %v6622
    %v6827 = vpack.c.b16 %v6627, %v6623
    %v6828 = vpack.c.b16 %v6632, %v6628
    %v6829 = vpack.c.b16 %v6633, %v6629
    %v6830 = vpack.c.b16 %v6634, %v6630
    %v6831 = vpack.c.b16 %v6635, %v6631
    %v6832 = vpack.c.b16 %v6640, %v6636
    %v6833 = vpack.c.b16 %v6641, %v6637
    %v6834 = vpack.c.b16 %v6642, %v6638
    %v6835 = vpack.c.b16 %v6643, %v6639
    %v6836 = vpack.c.b16 %v6648, %v6644
    %v6837 = vpack.c.b16 %v6649, %v6645
    %v6838 = vpack.c.b16 %v6650, %v6646
    %v6839 = vpack.c.b16 %v6651, %v6647
    %v6840 = vpack.c.b16 %v6656, %v6652
    %v6841 = vpack.c.b16 %v6657, %v6653
    %v6842 = vpack.c.b16 %v6658, %v6654
    %v6843 = vpack.c.b16 %v6659, %v6655
    %v6844 = vpack.c.b16 %v6664, %v6660
    %v6845 = vpack.c.b16 %v6665, %v6661
    %v6846 = vpack.c.b16 %v6666, %v6662
    %v6847 = vpack.c.b16 %v6667, %v6663
    %v6848 = vpack.c.b16 %v6672, %v6668
    %v6849 = vpack.c.b16 %v6673, %v6669
    %v6850 = vpack.c.b16 %v6674, %v6670
    %v6851 = vpack.c.b16 %v6675, %v6671
    %v6852 = vpack.c.b16 %v6680, %v6676
    %v6853 = vpack.c.b16 %v6681, %v6677
    %v6854 = vpack.c.b16 %v6682, %v6678
    %v6855 = vpack.c.b16 %v6683, %v6679
    %v6856 = vpack.c.b16 %v6688, %v6684
    %v6857 = vpack.c.b16 %v6689, %v6685
    %v6858 = vpack.c.b16 %v6690, %v6686
    %v6859 = vpack.c.b16 %v6691, %v6687
    %v6860 = vpack.c.b16 %v6696, %v6692
    %v6861 = vpack.c.b16 %v6697, %v6693
    %v6862 = vpack.c.b16 %v6698, %v6694
    %v6863 = vpack.c.b16 %v6699, %v6695
    %v6864 = vpack.c.b16 %v6704, %v6700
    %v6865 = vpack.c.b16 %v6705, %v6701
    %v6866 = vpack.c.b16 %v6706, %v6702
    %v6867 = vpack.c.b16 %v6707, %v6703
    %v6868 = vpack.c.b16 %v6712, %v6708
    %v6869 = vpack.c.b16 %v6713, %v6709
    %v6870 = vpack.c.b16 %v6714, %v6710
    %v6871 = vpack.c.b16 %v6715, %v6711
    %v6872 = vpack.c.b16 %v6720, %v6716
    %v6873 = vpack.c.b16 %v6721, %v6717
    %v6874 = vpack.c.b16 %v6722, %v6718
    %v6875 = vpack.c.b16 %v6723, %v6719
    %v6876 = vpack.c.b16 %v6728, %v6724
    %v6877 = vpack.c.b16 %v6729, %v6725
    %v6878 = vpack.c.b16 %v6730, %v6726
    %v6879 = vpack.c.b16 %v6731, %v6727
    %v6880 = vpack.c.b16 %v6736, %v6732
    %v6881 = vpack.c.b16 %v6737, %v6733
    %v6882 = vpack.c.b16 %v6738, %v6734
    %v6883 = vpack.c.b16 %v6739, %v6735
    %v6884 = vpack.c.b16 %v6744, %v6740
    %v6885 = vpack.c.b16 %v6745, %v6741
    %v6886 = vpack.c.b16 %v6746, %v6742
    %v6887 = vpack.c.b16 %v6747, %v6743
    %v6888 = vpack.c.b16 %v6752, %v6748
    %v6889 = vpack.c.b16 %v6753, %v6749
    %v6890 = vpack.c.b16 %v6754, %v6750
    %v6891 = vpack.c.b16 %v6755, %v6751
    %v6892 = vpack.c.b16 %v6760, %v6756
    %v6893 = vpack.c.b16 %v6761, %v6757
    %v6894 = vpack.c.b16 %v6762, %v6758
    %v6895 = vpack.c.b16 %v6763, %v6759
    %v6896 = vpack.c.b16 %v6768, %v6764
    %v6897 = vpack.c.b16 %v6769, %v6765
    %v6898 = vpack.c.b16 %v6770, %v6766
    %v6899 = vpack.c.b16 %v6771, %v6767
    %7028 = vmatprep.subr.bf16.mxu0 %v6773
    %7029 = vmatpush1.bf16.msra.mxu0 %v6772
    %7030 = vmatprep.subr.bf16.mxu0 %v6777
    %7031 = vmatpush1.bf16.msra.mxu0 %v6776
    %7032 = vmatprep.subr.bf16.mxu0 %v6781
    %7033 = vmatpush1.bf16.msra.mxu0 %v6780
    %7034 = vmatprep.subr.bf16.mxu0 %v6785
    %7035 = vmatpush1.bf16.msra.mxu0 %v6784
    %7036 = vmatprep.subr.bf16.mxu0 %v6789
    %7037 = vmatpush1.bf16.msra.mxu0 %v6788
    %7038 = vmatprep.subr.bf16.mxu0 %v6793
    %7039 = vmatpush1.bf16.msra.mxu0 %v6792
    %7040 = vmatprep.subr.bf16.mxu0 %v6797
    %7041 = vmatpush1.bf16.msra.mxu0 %v6796
    %7042 = vmatprep.subr.bf16.mxu0 %v6801
    %7043 = vmatpush1.bf16.msra.mxu0 %v6800
    %7044 = vmatprep.subr.bf16.mxu0 %v6805
    %7045 = vmatpush1.bf16.msra.mxu0 %v6804
    %7046 = vmatprep.subr.bf16.mxu0 %v6809
    %7047 = vmatpush1.bf16.msra.mxu0 %v6808
    %7048 = vmatprep.subr.bf16.mxu0 %v6813
    %7049 = vmatpush1.bf16.msra.mxu0 %v6812
    %7050 = vmatprep.subr.bf16.mxu0 %v6817
    %7051 = vmatpush1.bf16.msra.mxu0 %v6816
    %7052 = vmatprep.subr.bf16.mxu0 %v6821
    %7053 = vmatpush1.bf16.msra.mxu0 %v6820
    %7054 = vmatprep.subr.bf16.mxu0 %v6825
    %7055 = vmatpush1.bf16.msra.mxu0 %v6824
    %7056 = vmatprep.subr.bf16.mxu0 %v6829
    %7057 = vmatpush1.bf16.msra.mxu0 %v6828
    %7058 = vmatprep.subr.bf16.mxu0 %v6833
    %7059 = vmatpush1.bf16.msra.mxu0 %v6832
    %7060 = vmatprep.mubr.bf16.mxu0 %v6369
    %7061 = vmatmul.mubr.bf16.gmra.mrb[0].mxu0 %v6368
    %v7062 = vpop.f32.mrb[0].mxu0
    %v7063 = vadd.f32 %v6375, %v7062
    %v7064 = vpop.f32.mrb[0].mxu0
    %v7065 = vadd.f32 %v6379, %v7064
    %v7066 = vpop.f32.mrb[0].mxu0
    %v7067 = vpop.f32.mrb[0].mxu0
    %7068 = vdwg.mxu0
    %7069 = vmatprep.subr.bf16.mxu0 %v6837
    %7070 = vmatpush1.bf16.msra.mxu0 %v6836
    %7071 = vmatprep.subr.bf16.mxu0 %v6841
    %7072 = vmatpush1.bf16.msra.mxu0 %v6840
    %7073 = vmatprep.subr.bf16.mxu0 %v6845
    %7074 = vmatpush1.bf16.msra.mxu0 %v6844
    %7075 = vmatprep.subr.bf16.mxu0 %v6849
    %7076 = vmatpush1.bf16.msra.mxu0 %v6848
    %7077 = vmatprep.subr.bf16.mxu0 %v6853
    %7078 = vmatpush1.bf16.msra.mxu0 %v6852
    %7079 = vmatprep.subr.bf16.mxu0 %v6857
    %7080 = vmatpush1.bf16.msra.mxu0 %v6856
    %7081 = vmatprep.subr.bf16.mxu0 %v6861
    %7082 = vmatpush1.bf16.msra.mxu0 %v6860
    %7083 = vmatprep.subr.bf16.mxu0 %v6865
    %7084 = vmatpush1.bf16.msra.mxu0 %v6864
    %7085 = vmatprep.subr.bf16.mxu0 %v6869
    %7086 = vmatpush1.bf16.msra.mxu0 %v6868
    %7087 = vmatprep.subr.bf16.mxu0 %v6873
    %7088 = vmatpush1.bf16.msra.mxu0 %v6872
    %7089 = vmatprep.subr.bf16.mxu0 %v6877
    %7090 = vmatpush1.bf16.msra.mxu0 %v6876
    %7091 = vmatprep.subr.bf16.mxu0 %v6881
    %7092 = vmatpush1.bf16.msra.mxu0 %v6880
    %7093 = vmatprep.subr.bf16.mxu0 %v6885
    %7094 = vmatpush1.bf16.msra.mxu0 %v6884
    %7095 = vmatprep.subr.bf16.mxu0 %v6889
    %7096 = vmatpush1.bf16.msra.mxu0 %v6888
    %7097 = vmatprep.subr.bf16.mxu0 %v6893
    %7098 = vmatpush1.bf16.msra.mxu0 %v6892
    %7099 = vmatprep.subr.bf16.mxu0 %v6897
    %7100 = vmatpush1.bf16.msra.mxu0 %v6896
    %7101 = vmatprep.mubr.bf16.mxu0 %v6371
    %7102 = vmatmul.mubr.bf16.gmra.mrb[0].mxu0 %v6370
    %v7103 = vpop.f32.mrb[0].mxu0
    %v7104 = vadd.f32 %v7063, %v7103
    %v7105 = vpop.f32.mrb[0].mxu0
    %v7106 = vadd.f32 %v7065, %v7105
    %v7107 = vpop.f32.mrb[0].mxu0
    %v7108 = vpop.f32.mrb[0].mxu0
    %7109 = vdwg.mxu0
    %7110 = vmatprep.subr.bf16.mxu0 %v6775
    %7111 = vmatpush1.bf16.msra.mxu0 %v6774
    %7112 = vmatprep.subr.bf16.mxu0 %v6779
    %7113 = vmatpush1.bf16.msra.mxu0 %v6778
    %7114 = vmatprep.subr.bf16.mxu0 %v6783
    %7115 = vmatpush1.bf16.msra.mxu0 %v6782
    %7116 = vmatprep.subr.bf16.mxu0 %v6787
    %7117 = vmatpush1.bf16.msra.mxu0 %v6786
    %7118 = vmatprep.subr.bf16.mxu0 %v6791
    %7119 = vmatpush1.bf16.msra.mxu0 %v6790
    %7120 = vmatprep.subr.bf16.mxu0 %v6795
    %7121 = vmatpush1.bf16.msra.mxu0 %v6794
    %7122 = vmatprep.subr.bf16.mxu0 %v6799
    %7123 = vmatpush1.bf16.msra.mxu0 %v6798
    %7124 = vmatprep.subr.bf16.mxu0 %v6803
    %7125 = vmatpush1.bf16.msra.mxu0 %v6802
    %7126 = vmatprep.subr.bf16.mxu0 %v6807
    %7127 = vmatpush1.bf16.msra.mxu0 %v6806
    %7128 = vmatprep.subr.bf16.mxu0 %v6811
    %7129 = vmatpush1.bf16.msra.mxu0 %v6810
    %7130 = vmatprep.subr.bf16.mxu0 %v6815
    %7131 = vmatpush1.bf16.msra.mxu0 %v6814
    %7132 = vmatprep.subr.bf16.mxu0 %v6819
    %7133 = vmatpush1.bf16.msra.mxu0 %v6818
    %7134 = vmatprep.subr.bf16.mxu0 %v6823
    %7135 = vmatpush1.bf16.msra.mxu0 %v6822
    %7136 = vmatprep.subr.bf16.mxu0 %v6827
    %7137 = vmatpush1.bf16.msra.mxu0 %v6826
    %7138 = vmatprep.subr.bf16.mxu0 %v6831
    %7139 = vmatpush1.bf16.msra.mxu0 %v6830
    %7140 = vmatprep.subr.bf16.mxu0 %v6835
    %7141 = vmatpush1.bf16.msra.mxu0 %v6834
    %7142 = vmatprep.mubr.bf16.mxu0 %v6369
    %7143 = vmatmul.mubr.bf16.gmra.mrb[0].mxu0 %v6368
    %v7144 = vpop.f32.mrb[0].mxu0
    %v7145 = vadd.f32 %v6383, %v7144
    %v7146 = vpop.f32.mrb[0].mxu0
    %v7147 = vadd.f32 %v6387, %v7146
    %v7148 = vpop.f32.mrb[0].mxu0
    %v7149 = vpop.f32.mrb[0].mxu0
    %7150 = vdwg.mxu0
    %7151 = vmatprep.subr.bf16.mxu0 %v6839
    %7152 = vmatpush1.bf16.msra.mxu0 %v6838
    %7153 = vmatprep.subr.bf16.mxu0 %v6843
    %7154 = vmatpush1.bf16.msra.mxu0 %v6842
    %7155 = vmatprep.subr.bf16.mxu0 %v6847
    %7156 = vmatpush1.bf16.msra.mxu0 %v6846
    %7157 = vmatprep.subr.bf16.mxu0 %v6851
    %7158 = vmatpush1.bf16.msra.mxu0 %v6850
    %7159 = vmatprep.subr.bf16.mxu0 %v6855
    %7160 = vmatpush1.bf16.msra.mxu0 %v6854
    %7161 = vmatprep.subr.bf16.mxu0 %v6859
    %7162 = vmatpush1.bf16.msra.mxu0 %v6858
    %7163 = vmatprep.subr.bf16.mxu0 %v6863
    %7164 = vmatpush1.bf16.msra.mxu0 %v6862
    %7165 = vmatprep.subr.bf16.mxu0 %v6867
    %7166 = vmatpush1.bf16.msra.mxu0 %v6866
    %7167 = vmatprep.subr.bf16.mxu0 %v6871
    %7168 = vmatpush1.bf16.msra.mxu0 %v6870
    %7169 = vmatprep.subr.bf16.mxu0 %v6875
    %7170 = vmatpush1.bf16.msra.mxu0 %v6874
    %7171 = vmatprep.subr.bf16.mxu0 %v6879
    %7172 = vmatpush1.bf16.msra.mxu0 %v6878
    %7173 = vmatprep.subr.bf16.mxu0 %v6883
    %7174 = vmatpush1.bf16.msra.mxu0 %v6882
    %7175 = vmatprep.subr.bf16.mxu0 %v6887
    %7176 = vmatpush1.bf16.msra.mxu0 %v6886
    %7177 = vmatprep.subr.bf16.mxu0 %v6891
    %7178 = vmatpush1.bf16.msra.mxu0 %v6890
    %7179 = vmatprep.subr.bf16.mxu0 %v6895
    %7180 = vmatpush1.bf16.msra.mxu0 %v6894
    %7181 = vmatprep.subr.bf16.mxu0 %v6899
    %7182 = vmatpush1.bf16.msra.mxu0 %v6898
    %7183 = vmatprep.mubr.bf16.mxu0 %v6371
    %7184 = vmatmul.mubr.bf16.gmra.mrb[0].mxu0 %v6370
    %v7185 = vpop.f32.mrb[0].mxu0
    %v7186 = vadd.f32 %v7145, %v7185
    %v7187 = vpop.f32.mrb[0].mxu0
    %v7188 = vadd.f32 %v7147, %v7187
    %v7189 = vpop.f32.mrb[0].mxu0
    %v7190 = vpop.f32.mrb[0].mxu0
    %7191 = vdwg.mxu0
    %vm7192 = vcmp.ge.f32.partialorder %v7104, 0.0
    %vm7193 = vcmp.ge.f32.partialorder %v7106, 0.0
    %vm7194 = vcmp.ge.f32.partialorder %v7186, 0.0
    %vm7195 = vcmp.ge.f32.partialorder %v7188, 0.0
    %v7196 = vmul.f32 %v7104, 0.01
    %v7197 = vmul.f32 %v7106, 0.01
    %v7198 = vmul.f32 %v7186, 0.01
    %v7199 = vmul.f32 %v7188, 0.01
    %v7200 = vsel %vm7192, %v7104, %v7196
    %v7201 = vsel %vm7193, %v7106, %v7197
    %v7202 = vsel %vm7194, %v7186, %v7198
    %v7203 = vsel %vm7195, %v7188, %v7199
    %v7204 = vld [vmem:[%s17] sm:$0xf]
    %v7205 = vld [vmem:[%s17 + $0x4] sm:$0xf]
    %v7206 = vld [vmem:[%s17 + $0x8] sm:$0xf]
    %v7207 = vld [vmem:[%s17 + $0xc] sm:$0xf]
    %v7208 = vld [vmem:[%s17 + $0x10] sm:$0xf]
    %v7209 = vld [vmem:[%s17 + $0x14] sm:$0xf]
    %v7210 = vld [vmem:[%s17 + $0x18] sm:$0xf]
    %v7211 = vld [vmem:[%s17 + $0x1c] sm:$0xf]
    %v7212 = vld [vmem:[%s17 + $0x20] sm:$0xf]
    %v7213 = vld [vmem:[%s17 + $0x24] sm:$0xf]
    %v7214 = vld [vmem:[%s17 + $0x28] sm:$0xf]
    %v7215 = vld [vmem:[%s17 + $0x2c] sm:$0xf]
    %v7216 = vld [vmem:[%s17 + $0x30] sm:$0xf]
    %v7217 = vld [vmem:[%s17 + $0x34] sm:$0xf]
    %v7218 = vld [vmem:[%s17 + $0x38] sm:$0xf]
    %v7219 = vld [vmem:[%s17 + $0x3c] sm:$0xf]
    %v7220 = vld [vmem:[%s17 + $0x40] sm:$0xf]
    %v7221 = vld [vmem:[%s17 + $0x44] sm:$0xf]
    %v7222 = vld [vmem:[%s17 + $0x48] sm:$0xf]
    %v7223 = vld [vmem:[%s17 + $0x4c] sm:$0xf]
    %v7224 = vld [vmem:[%s17 + $0x50] sm:$0xf]
    %v7225 = vld [vmem:[%s17 + $0x54] sm:$0xf]
    %v7226 = vld [vmem:[%s17 + $0x58] sm:$0xf]
    %v7227 = vld [vmem:[%s17 + $0x5c] sm:$0xf]
    %v7228 = vld [vmem:[%s17 + $0x60] sm:$0xf]
    %v7229 = vld [vmem:[%s17 + $0x64] sm:$0xf]
    %v7230 = vld [vmem:[%s17 + $0x68] sm:$0xf]
    %v7231 = vld [vmem:[%s17 + $0x6c] sm:$0xf]
    %v7232 = vld [vmem:[%s17 + $0x70] sm:$0xf]
    %v7233 = vld [vmem:[%s17 + $0x74] sm:$0xf]
    %v7234 = vld [vmem:[%s17 + $0x78] sm:$0xf]
    %v7235 = vld [vmem:[%s17 + $0x7c] sm:$0xf]
    %v7236 = vld [vmem:[%s17 + $0x80] sm:$0xf]
    %v7237 = vld [vmem:[%s17 + $0x84] sm:$0xf]
    %v7238 = vld [vmem:[%s17 + $0x88] sm:$0xf]
    %v7239 = vld [vmem:[%s17 + $0x8c] sm:$0xf]
    %v7240 = vld [vmem:[%s17 + $0x90] sm:$0xf]
    %v7241 = vld [vmem:[%s17 + $0x94] sm:$0xf]
    %v7242 = vld [vmem:[%s17 + $0x98] sm:$0xf]
    %v7243 = vld [vmem:[%s17 + $0x9c] sm:$0xf]
    %v7244 = vld [vmem:[%s17 + $0xa0] sm:$0xf]
    %v7245 = vld [vmem:[%s17 + $0xa4] sm:$0xf]
    %v7246 = vld [vmem:[%s17 + $0xa8] sm:$0xf]
    %v7247 = vld [vmem:[%s17 + $0xac] sm:$0xf]
    %v7248 = vld [vmem:[%s17 + $0xb0] sm:$0xf]
    %v7249 = vld [vmem:[%s17 + $0xb4] sm:$0xf]
    %v7250 = vld [vmem:[%s17 + $0xb8] sm:$0xf]
    %v7251 = vld [vmem:[%s17 + $0xbc] sm:$0xf]
    %v7252 = vld [vmem:[%s17 + $0xc0] sm:$0xf]
    %v7253 = vld [vmem:[%s17 + $0xc4] sm:$0xf]
    %v7254 = vld [vmem:[%s17 + $0xc8] sm:$0xf]
    %v7255 = vld [vmem:[%s17 + $0xcc] sm:$0xf]
    %v7256 = vld [vmem:[%s17 + $0xd0] sm:$0xf]
    %v7257 = vld [vmem:[%s17 + $0xd4] sm:$0xf]
    %v7258 = vld [vmem:[%s17 + $0xd8] sm:$0xf]
    %v7259 = vld [vmem:[%s17 + $0xdc] sm:$0xf]
    %v7260 = vld [vmem:[%s17 + $0xe0] sm:$0xf]
    %v7261 = vld [vmem:[%s17 + $0xe4] sm:$0xf]
    %v7262 = vld [vmem:[%s17 + $0xe8] sm:$0xf]
    %v7263 = vld [vmem:[%s17 + $0xec] sm:$0xf]
    %v7264 = vld [vmem:[%s17 + $0xf0] sm:$0xf]
    %v7265 = vld [vmem:[%s17 + $0xf4] sm:$0xf]
    %v7266 = vld [vmem:[%s17 + $0xf8] sm:$0xf]
    %v7267 = vld [vmem:[%s17 + $0xfc] sm:$0xf]
    %v7268 = vpack.c.bf16 %v7200, %v7200
    %v7269 = vpack.c.bf16 %v7201, %v7201
    %v7270 = vpack.c.bf16 %v7202, %v7202
    %v7271 = vpack.c.bf16 %v7203, %v7203
    %v7272 = vlaneseq
    %v7273 = vshrl.u32 %v7272, 7
    %v7274 = vsub.s32 5, %v7273
    %v7275 = vrot.slane %v3182, %v7274
    %v7340 = vunpack.c.l.b16 %v7204
    %v7341 = vunpack.c.l.b16 %v7205
    %v7342 = vunpack.c.l.b16 %v7206
    %v7343 = vunpack.c.l.b16 %v7207
    %v7344 = vunpack.c.l.b16 %v7208
    %v7345 = vunpack.c.l.b16 %v7209
    %v7346 = vunpack.c.l.b16 %v7210
    %v7347 = vunpack.c.l.b16 %v7211
    %v7348 = vunpack.c.l.b16 %v7212
    %v7349 = vunpack.c.l.b16 %v7213
    %v7350 = vunpack.c.l.b16 %v7214
    %v7351 = vunpack.c.l.b16 %v7215
    %v7352 = vunpack.c.l.b16 %v7216
    %v7353 = vunpack.c.l.b16 %v7217
    %v7354 = vunpack.c.l.b16 %v7218
    %v7355 = vunpack.c.l.b16 %v7219
    %v7356 = vunpack.c.l.b16 %v7220
    %v7357 = vunpack.c.l.b16 %v7221
    %v7358 = vunpack.c.l.b16 %v7222
    %v7359 = vunpack.c.l.b16 %v7223
    %v7360 = vunpack.c.l.b16 %v7224
    %v7361 = vunpack.c.l.b16 %v7225
    %v7362 = vunpack.c.l.b16 %v7226
    %v7363 = vunpack.c.l.b16 %v7227
    %v7364 = vunpack.c.l.b16 %v7228
    %v7365 = vunpack.c.l.b16 %v7229
    %v7366 = vunpack.c.l.b16 %v7230
    %v7367 = vunpack.c.l.b16 %v7231
    %v7368 = vunpack.c.l.b16 %v7232
    %v7369 = vunpack.c.l.b16 %v7233
    %v7370 = vunpack.c.l.b16 %v7234
    %v7371 = vunpack.c.l.b16 %v7235
    %v7372 = vunpack.c.l.b16 %v7236
    %v7373 = vunpack.c.l.b16 %v7237
    %v7374 = vunpack.c.l.b16 %v7238
    %v7375 = vunpack.c.l.b16 %v7239
    %v7376 = vunpack.c.l.b16 %v7240
    %v7377 = vunpack.c.l.b16 %v7241
    %v7378 = vunpack.c.l.b16 %v7242
    %v7379 = vunpack.c.l.b16 %v7243
    %v7380 = vunpack.c.l.b16 %v7244
    %v7381 = vunpack.c.l.b16 %v7245
    %v7382 = vunpack.c.l.b16 %v7246
    %v7383 = vunpack.c.l.b16 %v7247
    %v7384 = vunpack.c.l.b16 %v7248
    %v7385 = vunpack.c.l.b16 %v7249
    %v7386 = vunpack.c.l.b16 %v7250
    %v7387 = vunpack.c.l.b16 %v7251
    %v7388 = vunpack.c.l.b16 %v7252
    %v7389 = vunpack.c.l.b16 %v7253
    %v7390 = vunpack.c.l.b16 %v7254
    %v7391 = vunpack.c.l.b16 %v7255
    %v7392 = vunpack.c.l.b16 %v7256
    %v7393 = vunpack.c.l.b16 %v7257
    %v7394 = vunpack.c.l.b16 %v7258
    %v7395 = vunpack.c.l.b16 %v7259
    %v7396 = vunpack.c.l.b16 %v7260
    %v7397 = vunpack.c.l.b16 %v7261
    %v7398 = vunpack.c.l.b16 %v7262
    %v7399 = vunpack.c.l.b16 %v7263
    %v7400 = vunpack.c.l.b16 %v7264
    %v7401 = vunpack.c.l.b16 %v7265
    %v7402 = vunpack.c.l.b16 %v7266
    %v7403 = vunpack.c.l.b16 %v7267
    %v7404 = vpack.c.b16 %v7341, %v7340
    %v7405 = vpack.c.b16 %v7343, %v7342
    %v7406 = vpack.c.b16 %v7345, %v7344
    %v7407 = vpack.c.b16 %v7347, %v7346
    %v7408 = vpack.c.b16 %v7349, %v7348
    %v7409 = vpack.c.b16 %v7351, %v7350
    %v7410 = vpack.c.b16 %v7353, %v7352
    %v7411 = vpack.c.b16 %v7355, %v7354
    %v7412 = vpack.c.b16 %v7357, %v7356
    %v7413 = vpack.c.b16 %v7359, %v7358
    %v7414 = vpack.c.b16 %v7361, %v7360
    %v7415 = vpack.c.b16 %v7363, %v7362
    %v7416 = vpack.c.b16 %v7365, %v7364
    %v7417 = vpack.c.b16 %v7367, %v7366
    %v7418 = vpack.c.b16 %v7369, %v7368
    %v7419 = vpack.c.b16 %v7371, %v7370
    %v7420 = vpack.c.b16 %v7373, %v7372
    %v7421 = vpack.c.b16 %v7375, %v7374
    %v7422 = vpack.c.b16 %v7377, %v7376
    %v7423 = vpack.c.b16 %v7379, %v7378
    %v7424 = vpack.c.b16 %v7381, %v7380
    %v7425 = vpack.c.b16 %v7383, %v7382
    %v7426 = vpack.c.b16 %v7385, %v7384
    %v7427 = vpack.c.b16 %v7387, %v7386
    %v7428 = vpack.c.b16 %v7389, %v7388
    %v7429 = vpack.c.b16 %v7391, %v7390
    %v7430 = vpack.c.b16 %v7393, %v7392
    %v7431 = vpack.c.b16 %v7395, %v7394
    %v7432 = vpack.c.b16 %v7397, %v7396
    %v7433 = vpack.c.b16 %v7399, %v7398
    %v7434 = vpack.c.b16 %v7401, %v7400
    %v7435 = vpack.c.b16 %v7403, %v7402
    %7468 = vmatprep.subr.bf16.mxu0 0
    %7469 = vmatpush1.bf16.msra.mxu0 %v7404
    %7470 = vmatprep.subr.bf16.mxu0 0
    %7471 = vmatpush1.bf16.msra.mxu0 %v7405
    %7472 = vmatprep.subr.bf16.mxu0 0
    %7473 = vmatpush1.bf16.msra.mxu0 %v7406
    %7474 = vmatprep.subr.bf16.mxu0 0
    %7475 = vmatpush1.bf16.msra.mxu0 %v7407
    %7476 = vmatprep.subr.bf16.mxu0 0
    %7477 = vmatpush1.bf16.msra.mxu0 %v7408
    %7478 = vmatprep.subr.bf16.mxu0 0
    %7479 = vmatpush1.bf16.msra.mxu0 %v7409
    %7480 = vmatprep.subr.bf16.mxu0 0
    %7481 = vmatpush1.bf16.msra.mxu0 %v7410
    %7482 = vmatprep.subr.bf16.mxu0 0
    %7483 = vmatpush1.bf16.msra.mxu0 %v7411
    %7484 = vmatprep.subr.bf16.mxu0 0
    %7485 = vmatpush1.bf16.msra.mxu0 %v7412
    %7486 = vmatprep.subr.bf16.mxu0 0
    %7487 = vmatpush1.bf16.msra.mxu0 %v7413
    %7488 = vmatprep.subr.bf16.mxu0 0
    %7489 = vmatpush1.bf16.msra.mxu0 %v7414
    %7490 = vmatprep.subr.bf16.mxu0 0
    %7491 = vmatpush1.bf16.msra.mxu0 %v7415
    %7492 = vmatprep.subr.bf16.mxu0 0
    %7493 = vmatpush1.bf16.msra.mxu0 %v7416
    %7494 = vmatprep.subr.bf16.mxu0 0
    %7495 = vmatpush1.bf16.msra.mxu0 %v7417
    %7496 = vmatprep.subr.bf16.mxu0 0
    %7497 = vmatpush1.bf16.msra.mxu0 %v7418
    %7498 = vmatprep.subr.bf16.mxu0 0
    %7499 = vmatpush1.bf16.msra.mxu0 %v7419
    %7500 = vmatprep.mubr.bf16.mxu0 %v7269
    %7501 = vmatmul.mubr.bf16.gmra.mrb[0].mxu0 %v7268
    %v7502 = vpop.f32.mrb[0].mxu0
    %v7503 = vadd.f32 %v7275, %v7502
    %v7504 = vpop.f32.mrb[0].mxu0
    %v7505 = vpop.f32.mrb[0].mxu0
    %v7506 = vpop.f32.mrb[0].mxu0
    %7507 = vdwg.mxu0
    %7508 = vmatprep.subr.bf16.mxu0 0
    %7509 = vmatpush1.bf16.msra.mxu0 %v7420
    %7510 = vmatprep.subr.bf16.mxu0 0
    %7511 = vmatpush1.bf16.msra.mxu0 %v7421
    %7512 = vmatprep.subr.bf16.mxu0 0
    %7513 = vmatpush1.bf16.msra.mxu0 %v7422
    %7514 = vmatprep.subr.bf16.mxu0 0
    %7515 = vmatpush1.bf16.msra.mxu0 %v7423
    %7516 = vmatprep.subr.bf16.mxu0 0
    %7517 = vmatpush1.bf16.msra.mxu0 %v7424
    %7518 = vmatprep.subr.bf16.mxu0 0
    %7519 = vmatpush1.bf16.msra.mxu0 %v7425
    %7520 = vmatprep.subr.bf16.mxu0 0
    %7521 = vmatpush1.bf16.msra.mxu0 %v7426
    %7522 = vmatprep.subr.bf16.mxu0 0
    %7523 = vmatpush1.bf16.msra.mxu0 %v7427
    %7524 = vmatprep.subr.bf16.mxu0 0
    %7525 = vmatpush1.bf16.msra.mxu0 %v7428
    %7526 = vmatprep.subr.bf16.mxu0 0
    %7527 = vmatpush1.bf16.msra.mxu0 %v7429
    %7528 = vmatprep.subr.bf16.mxu0 0
    %7529 = vmatpush1.bf16.msra.mxu0 %v7430
    %7530 = vmatprep.subr.bf16.mxu0 0
    %7531 = vmatpush1.bf16.msra.mxu0 %v7431
    %7532 = vmatprep.subr.bf16.mxu0 0
    %7533 = vmatpush1.bf16.msra.mxu0 %v7432
    %7534 = vmatprep.subr.bf16.mxu0 0
    %7535 = vmatpush1.bf16.msra.mxu0 %v7433
    %7536 = vmatprep.subr.bf16.mxu0 0
    %7537 = vmatpush1.bf16.msra.mxu0 %v7434
    %7538 = vmatprep.subr.bf16.mxu0 0
    %7539 = vmatpush1.bf16.msra.mxu0 %v7435
    %7540 = vmatprep.mubr.bf16.mxu0 %v7271
    %7541 = vmatmul.mubr.bf16.gmra.mrb[0].mxu0 %v7270
    %v7542 = vpop.f32.mrb[0].mxu0
    %v7543 = vadd.f32 %v7503, %v7542
    %v7544 = vpop.f32.mrb[0].mxu0
    %v7545 = vpop.f32.mrb[0].mxu0
    %v7546 = vpop.f32.mrb[0].mxu0
    %7547 = vdwg.mxu0
    %v7548 = vand.u32 2147483647, %v7543
    %v7549 = vsub.f32 0.0, %v7548
    %v7550 = vmul.f32 %v7549, 1.442695
    %v7551 = vpow.pop %v7550
    %vm7552 = vcmp.ge.f32.partialorder %v7543, 0.0
    %v7553 = vadd.f32 %v7551, 1.0
    %v7554 = vrcp.pop %v7553
    %v7555 = vmul.f32 1.0, %v7554
    %v7556 = vmul.f32 %v7551, %v7554
    %v7557 = vsel %vm7552, %v7555, %v7556
    %7558 = vst [vmem:[#allocation2] sm:$0x3] %v7557
    // Predicated region
    $region78: #{_lambda_.1} parent=1 // pred_check
      _
    $region79: #{_lambda_.1} parent=1 // pred_check_branch
      %7560 = sbr.rel (0) target = $region81
    $region80: #{_lambda_.1} parent=1 // pred_region
      %s7562 = ssub.s32 32, 32
      %7563 = vsyncadd [#allocation3], %s7562
      %s7565 = sshll.u32 [#allocation2], 4
      %s7566 = int_to_ptr.vmem [resolvable:$true] %s7565
      %7568 = dma.vmem_to_hbm [thread:$0]  %s7566, 32, %s19, [#allocation3]
    $region81: #{_lambda_.1} parent=1 // pred_fallthru
      _
    // Predicated region
    $region82: #{_lambda_.1} parent=1 // pred_check
      _
    $region83: #{_lambda_.1} parent=1 // pred_check_branch
      %7570 = sbr.rel (0) target = $region85
    $region84: #{_lambda_.1} parent=1 // pred_region
      %7571 = dma.done [#allocation3], 32
    $region85: #{_lambda_.1} parent=1 // pred_fallthru
      _
    %7572 = vsyncpa [#allocation3], 1

</llo_original>
